<compile_context>
chip_gen: v7x
topology: tpu7x:2x2x1
jax: 0.10.0
libtpu: 0.0.40
codegen_flags: <defaults>
</compile_context>

<pallas_src>
import jax
import jax.numpy as jnp
from jax import lax
from jax.experimental import pallas as pl
from jax.experimental.pallas import tpu as pltpu

# ---- small, lane-aligned config (module hardcodes word_dim=300, embed=1024; scaled down) ----
B = 8                  # batch
T = 8                  # sequence length (EmbeddingBag bags per sample)
K = 3                  # tokens per bag (uniform offsets)
V = 64                 # vocab size
VP = 128               # vocab padded to 128 lanes for the bag matmul
D = 128                # word_dim
H = 128                # embed_size (per-stream GRU hidden)
HH = H // 2            # BiLSTM per-direction hidden
SG = 3 * H             # stacked GRU state width  [h_cap|h_tit|h_lead]        = 384
SL = 2 * HH            # packed BiLSTM state width [h_f|h_b]                  = 128
SW = SG + SL           # merged recurrent state width                         = 512
GT = 3 * SG + 4 * SL   # merged gate width (r,z,n x 3 streams + i,f,g,o LSTM) = 1664
WDT = jnp.bfloat16     # MXU operand dtype (accumulation is f32)


def _sig(x):
    # sigmoid(x) == 0.5*tanh(0.5*x) + 0.5 : transcendental stays on the EUP slot,
    # no exp + true-divide decomposition on the recurrence critical chain.
    return 0.5 * jnp.tanh(0.5 * x) + 0.5


# ------------------------------- fused kernel --------------------------------

def encoder_text_kernel(counts_ref, emb_ref,
                        wih_g_ref, b_gru_ref, b_hn_ref,
                        wih_l_ref, b_lstm_ref,
                        whh_hbm, w1_hbm, w2_hbm,
                        b1_ref, b2_ref,
                        out_ref,
                        gi_ref, whh_ref, w1_ref, w2_ref, dma_sem):
    f32 = jnp.float32

    # -- 0. start DMAs for weights not needed yet: whh hides under the prologue,
    #       w1/w2 hide under the whole recurrence.
    whh_cp = pltpu.make_async_copy(whh_hbm, whh_ref, dma_sem.at[0])
    w1_cp = pltpu.make_async_copy(w1_hbm, w1_ref, dma_sem.at[1])
    w2_cp = pltpu.make_async_copy(w2_hbm, w2_ref, dma_sem.at[2])
    whh_cp.start()
    w1_cp.start()
    w2_cp.start()

    # -- 1. EmbeddingBag(mode='sum') for all 4 streams: counts are built on the
    #       XLA side (bf16, vocab padded to 128) -> one (4*T*B, VP)@(VP, D) matmul.
    bags = jnp.dot(counts_ref[...], emb_ref[...], preferred_element_type=f32)  # (4*T*B, D)
    x_art = bags[3 * T * B:]                                                    # (T*B, D)

    # -- 2. hoisted input projections with foldable biases folded in.
    #       GRU: bih+bhh folded for r,z; only bih for n (bhh_n stays inside the
    #       r-gated term, matching PyTorch). Stored gate-major so per-step slices
    #       line up with the merged block-diag recurrent matmul.
    for s in range(3):                                   # streams: cap, title, lead
        x_s = bags[s * T * B:(s + 1) * T * B]            # (T*B, D)
        gi_s = jnp.dot(x_s.astype(WDT), wih_g_ref[s],
                       preferred_element_type=f32) + b_gru_ref[s]    # (T*B, 3H) [r|z|n]
        for g in range(3):                               # gates: r, z, n
            c0 = (g * 3 + s) * H
            gi_ref[:, :, c0:c0 + H] = gi_s[:, g * H:(g + 1) * H].reshape(T, B, H)

    #       BiLSTM: per-gate [fwd|bwd] lane packing; bwd lanes stored with
    #       time-reversed rows ONCE here (no select in the recurrence).
    gi_art = (jnp.dot(x_art.astype(WDT), wih_l_ref[...],
                      preferred_element_type=f32) + b_lstm_ref[...]).reshape(T, B, 4 * SL)
    fwd_lane = (lax.broadcasted_iota(jnp.int32, (B, 4 * SL), 1) % SL) < HH
    for t in range(T):
        gi_ref[t, :, 3 * SG:] = jnp.where(fwd_lane, gi_art[t], gi_art[T - 1 - t])

    whh_cp.wait()                                        # recurrent weight now in VMEM
    b_hn = b_hn_ref[...]                                 # (1, 3H) = [bhh_n cap|tit|lead]

    # -- 3. fused recurrence, statically unrolled over T: ONE block-diagonal
    #       (B,512)@(512,1664) hidden matmul per step feeds all 3 GRUs and both
    #       LSTM directions; gate math on 128-aligned lane slices.
    h = jnp.zeros((B, SW), f32)                          # [h_cap|h_tit|h_lead|h_f|h_b]
    c = jnp.zeros((B, SL), f32)                          # [c_f|c_b]
    m = None                                             # max-over-time accumulator
    for t in range(T):
        gh = jnp.dot(h.astype(WDT), whh_ref[...], preferred_element_type=f32)  # (B, GT)
        gi = gi_ref[t]                                                          # (B, GT)
        # 3 stacked GRUs (PyTorch gate order r, z, n)
        r = _sig(gi[:, 0:SG] + gh[:, 0:SG])
        z = _sig(gi[:, SG:2 * SG] + gh[:, SG:2 * SG])
        n = jnp.tanh(gi[:, 2 * SG:3 * SG] + r * (gh[:, 2 * SG:3 * SG] + b_hn))
        h_gru = n + z * (h[:, 0:SG] - n)                 # == (1-z)*n + z*h
        # BiLSTM, both directions in the same step (PyTorch gate order i, f, g, o)
        lg = gi[:, 3 * SG:] + gh[:, 3 * SG:]             # (B, 4*SL)
        i_ = _sig(lg[:, 0:SL])
        f_ = _sig(lg[:, SL:2 * SL])
        g_ = jnp.tanh(lg[:, 2 * SL:3 * SL])
        o_ = _sig(lg[:, 3 * SL:4 * SL])
        c = f_ * c + i_ * g_
        h_lstm = o_ * jnp.tanh(c)
        h = jnp.concatenate([h_gru, h_lstm], axis=1)
        m = h if m is None else jnp.maximum(m, h)

    # -- 4. epilogue: max-over-time features are already packed [cap|tit|lead|art]
    #       (w1 rows follow the same order) -> Linear/ReLU x2 -> l2norm.
    w1_cp.wait()
    w2_cp.wait()
    h1 = jnp.maximum(jnp.dot(m.astype(WDT), w1_ref[...],
                             preferred_element_type=f32) + b1_ref[...], 0.0)
    h2 = jnp.maximum(jnp.dot(h1.astype(WDT), w2_ref[...],
                             preferred_element_type=f32) + b2_ref[...], 0.0)
    inv_norm = lax.rsqrt(jnp.sum(h2 * h2, axis=1, keepdims=True) + 1e-12)
    out_ref[...] = h2 * inv_norm


# ------------------------------ glue / wrapper --------------------------------

def _encoder_fused(counts, p):
    args = (counts, p["emb"], p["wih_g"], p["b_gru"], p["b_hn"],
            p["wih_l"], p["b_lstm"], p["whh_blk"], p["w1"], p["w2"],
            p["b1"], p["b2"])
    vmem = lambda: pl.BlockSpec(memory_space=pltpu.MemorySpace.VMEM)
    hbm = lambda: pl.BlockSpec(memory_space=pl.ANY)
    in_specs = [vmem() for _ in range(7)] + [hbm() for _ in range(3)] + [vmem(), vmem()]

    flops = (2 * (4 * T * B) * VP * D                     # bag sums
             + 2 * 3 * (T * B) * D * 3 * H                # GRU input projections
             + 2 * (T * B) * D * 4 * SL                   # BiLSTM input projection
             + 2 * T * B * SW * GT                        # merged recurrent matmuls
             + 2 * B * (4 * H) * (4 * H) + 2 * B * (4 * H) * H)   # MLP
    transcendentals = T * B * (3 * SG + 5 * SL) + B
    bytes_accessed = sum(int(a.size) * a.dtype.itemsize for a in args) + B * H * 4

    return pl.pallas_call(
        encoder_text_kernel,
        out_shape=jax.ShapeDtypeStruct((B, H), jnp.float32),
        in_specs=in_specs,
        out_specs=pl.BlockSpec(memory_space=pltpu.MemorySpace.VMEM),
        scratch_shapes=[
            pltpu.VMEM((T, B, GT), jnp.float32),   # hoisted, bias-folded gate inputs
            pltpu.VMEM((SW, GT), WDT),             # block-diag recurrent weight (DMA'd under prologue)
            pltpu.VMEM((4 * H, 4 * H), WDT),       # MLP w1 (DMA'd under recurrence)
            pltpu.VMEM((4 * H, H), WDT),           # MLP w2 (DMA'd under recurrence)
            pltpu.SemaphoreType.DMA((3,)),
        ],
        cost_estimate=pl.CostEstimate(flops=flops, transcendentals=transcendentals,
                                      bytes_accessed=bytes_accessed),
    )(*args)


@jax.jit
def encoder_text_forward(params, idx_cap, idx_art, idx_tit, idx_led):
    # EmbeddingBag(mode='sum') bag-count matrix built on the XLA side (review item):
    # streams stacked [cap|tit|lead|art], (t, b) row order within each stream,
    # vocab one-hot padded to 128 lanes, bf16 (counts <= K = 3, exact in bf16).
    ids = jnp.stack([idx_cap, idx_tit, idx_led, idx_art], axis=0)     # (4, B, T, K)
    ids = ids.transpose(0, 2, 1, 3)                                   # (4, T, B, K)
    counts = jax.nn.one_hot(ids, VP, dtype=WDT).sum(axis=3)           # (4, T, B, VP)
    return _encoder_fused(counts.reshape(4 * T * B, VP), params)      # (B, H), l2-normalized


def init_params(key):
    keys = iter(jax.random.split(key, 32))

    def u(shape, scale=0.08):
        return jax.random.uniform(next(keys), shape, jnp.float32, -scale, scale)

    # ---- PyTorch-layout module weights (weights stored (in, out)) ----
    emb = u((V, D), 0.1)                                  # EmbeddingBag weight
    wih_g = jnp.stack([u((D, 3 * H)) for _ in range(3)])  # 3 GRUs: cap, title, lead (gates r,z,n)
    whh_g = jnp.stack([u((H, 3 * H)) for _ in range(3)])
    bih_g = jnp.stack([u((1, 3 * H)) for _ in range(3)])
    bhh_g = jnp.stack([u((1, 3 * H)) for _ in range(3)])
    wih_f, whh_f, bih_f, bhh_f = u((D, 4 * HH)), u((HH, 4 * HH)), u((1, 4 * HH)), u((1, 4 * HH))
    wih_b, whh_b, bih_b, bhh_b = u((D, 4 * HH)), u((HH, 4 * HH)), u((1, 4 * HH)), u((1, 4 * HH))
    # MLP; w1 rows follow the kernel's feature packing [cap | title | lead | article]
    w1, b1 = u((4 * H, 4 * H)), u((1, 4 * H))
    w2, b2 = u((4 * H, H)), u((1, H))

    # ---- kernel-layout packing ----
    emb_p = jnp.zeros((VP, D), jnp.float32).at[:V].set(emb)           # pad vocab to 128 lanes

    def pack_dirs(a, b):
        # per gate k: [fwd HH cols | bwd HH cols] -> (rows, 8*HH)
        return jnp.concatenate(
            [jnp.concatenate([a[:, k * HH:(k + 1) * HH],
                              b[:, k * HH:(k + 1) * HH]], axis=1) for k in range(4)], axis=1)

    wih_l = pack_dirs(wih_f, wih_b)                                   # (D, 8*HH)
    b_lstm = pack_dirs(bih_f + bhh_f, bih_b + bhh_b)                  # (1, 8*HH), bhh folded
    zeros = jnp.zeros((HH, 4 * HH), jnp.float32)
    whh_l = pack_dirs(jnp.concatenate([whh_f, zeros], axis=0),        # block-diag over directions
                      jnp.concatenate([zeros, whh_b], axis=0))        # (2*HH, 8*HH)

    # GRU biases: fold bhh into r,z; keep bhh_n separate (sits inside r-gated term)
    b_gru = jnp.concatenate([bih_g[:, :, 0:2 * H] + bhh_g[:, :, 0:2 * H],
                             bih_g[:, :, 2 * H:3 * H]], axis=2)       # (3, 1, 3H)
    b_hn = jnp.concatenate([bhh_g[s, :, 2 * H:3 * H] for s in range(3)], axis=1)  # (1, 3H)

    # ONE block-diagonal recurrent weight:
    #   rows    [h_cap | h_tit | h_lead | h_lstm(=[h_f|h_b])]                = 4H
    #   columns [r_cap r_tit r_lead | z_* | n_* | i f g o (dir-packed)]      = 9H + 8HH
    whh_blk = jnp.zeros((4 * H, GT), jnp.float32)
    for s in range(3):
        for g in range(3):
            whh_blk = whh_blk.at[s * H:(s + 1) * H,
                                 (g * 3 + s) * H:(g * 3 + s + 1) * H].set(
                whh_g[s, :, g * H:(g + 1) * H])
    whh_blk = whh_blk.at[3 * H:4 * H, 3 * SG:].set(whh_l)

    return {
        "emb": emb_p.astype(WDT),
        "wih_g": wih_g.astype(WDT), "b_gru": b_gru, "b_hn": b_hn,
        "wih_l": wih_l.astype(WDT), "b_lstm": b_lstm,
        "whh_blk": whh_blk.astype(WDT),
        "w1": w1.astype(WDT), "b1": b1,
        "w2": w2.astype(WDT), "b2": b2,
    }


if __name__ == "__main__":
    key = jax.random.PRNGKey(0)
    kp, k1, k2, k3, k4 = jax.random.split(key, 5)
    params = init_params(kp)

    idx_cap = jax.random.randint(k1, (B, T, K), 0, V)
    idx_art = jax.random.randint(k2, (B, T, K), 0, V)
    idx_tit = jax.random.randint(k3, (B, T, K), 0, V)
    idx_led = jax.random.randint(k4, (B, T, K), 0, V)

    out = encoder_text_forward(params, idx_cap, idx_art, idx_tit, idx_led)
    out = jax.block_until_ready(out)
    assert out.shape == (B, H) and out.dtype == jnp.float32
    print("KERNEL_OK")
</pallas_src>

<mosaic_0001>
module attributes {stable_mosaic.version = 11 : i64} {
  func.func @encoder_text_kernel(%arg0: memref<256x128xbf16, #tpu.memory_space<vmem>>, %arg1: memref<128x128xbf16, #tpu.memory_space<vmem>>, %arg2: memref<3x128x384xbf16, #tpu.memory_space<vmem>>, %arg3: memref<3x1x384xf32, #tpu.memory_space<vmem>>, %arg4: memref<1x384xf32, #tpu.memory_space<vmem>>, %arg5: memref<128x512xbf16, #tpu.memory_space<vmem>>, %arg6: memref<1x512xf32, #tpu.memory_space<vmem>>, %arg7: memref<512x1664xbf16, #tpu.memory_space<any>>, %arg8: memref<512x512xbf16, #tpu.memory_space<any>>, %arg9: memref<512x128xbf16, #tpu.memory_space<any>>, %arg10: memref<1x512xf32, #tpu.memory_space<vmem>>, %arg11: memref<1x128xf32, #tpu.memory_space<vmem>>, %arg12: memref<8x128xf32, #tpu.memory_space<vmem>>, %arg13: memref<8x8x1664xf32, #tpu.memory_space<vmem>>, %arg14: memref<512x1664xbf16, #tpu.memory_space<vmem>>, %arg15: memref<512x512xbf16, #tpu.memory_space<vmem>>, %arg16: memref<512x128xbf16, #tpu.memory_space<vmem>>, %arg17: memref<3x!tpu.dma_semaphore, #tpu.memory_space<semaphore_mem>>) attributes {dimension_semantics = [], scalar_prefetch = 0 : i64, scratch_operands = 5 : i64, tpu.core_type = #tpu.core_type<tc>} {
    %c0_i32 = arith.constant 0 : i32
    %0 = tpu.memref_slice %arg17[%c0_i32] : memref<3x!tpu.dma_semaphore, #tpu.memory_space<semaphore_mem>> -> memref<1x!tpu.dma_semaphore, #tpu.memory_space<semaphore_mem>>
    %1 = tpu.memref_squeeze %0 : memref<1x!tpu.dma_semaphore, #tpu.memory_space<semaphore_mem>> -> memref<!tpu.dma_semaphore, #tpu.memory_space<semaphore_mem>>
    tpu.enqueue_dma source(%arg7 : memref<512x1664xbf16, #tpu.memory_space<any>>) target(%arg14 : memref<512x1664xbf16, #tpu.memory_space<vmem>>) target_semaphore(%1 : memref<!tpu.dma_semaphore, #tpu.memory_space<semaphore_mem>>)
    %c1_i32 = arith.constant 1 : i32
    %2 = tpu.memref_slice %arg17[%c1_i32] : memref<3x!tpu.dma_semaphore, #tpu.memory_space<semaphore_mem>> -> memref<1x!tpu.dma_semaphore, #tpu.memory_space<semaphore_mem>>
    %3 = tpu.memref_squeeze %2 : memref<1x!tpu.dma_semaphore, #tpu.memory_space<semaphore_mem>> -> memref<!tpu.dma_semaphore, #tpu.memory_space<semaphore_mem>>
    tpu.enqueue_dma source(%arg8 : memref<512x512xbf16, #tpu.memory_space<any>>) target(%arg15 : memref<512x512xbf16, #tpu.memory_space<vmem>>) target_semaphore(%3 : memref<!tpu.dma_semaphore, #tpu.memory_space<semaphore_mem>>)
    %c2_i32 = arith.constant 2 : i32
    %4 = tpu.memref_slice %arg17[%c2_i32] : memref<3x!tpu.dma_semaphore, #tpu.memory_space<semaphore_mem>> -> memref<1x!tpu.dma_semaphore, #tpu.memory_space<semaphore_mem>>
    %5 = tpu.memref_squeeze %4 : memref<1x!tpu.dma_semaphore, #tpu.memory_space<semaphore_mem>> -> memref<!tpu.dma_semaphore, #tpu.memory_space<semaphore_mem>>
    tpu.enqueue_dma source(%arg9 : memref<512x128xbf16, #tpu.memory_space<any>>) target(%arg16 : memref<512x128xbf16, #tpu.memory_space<vmem>>) target_semaphore(%5 : memref<!tpu.dma_semaphore, #tpu.memory_space<semaphore_mem>>)
    %c0 = arith.constant 0 : index
    %c0_0 = arith.constant 0 : index
    %6 = vector.load %arg0[%c0, %c0_0] : memref<256x128xbf16, #tpu.memory_space<vmem>>, vector<256x128xbf16>
    %c0_1 = arith.constant 0 : index
    %c0_2 = arith.constant 0 : index
    %7 = vector.load %arg1[%c0_1, %c0_2] : memref<128x128xbf16, #tpu.memory_space<vmem>>, vector<128x128xbf16>
    %cst = arith.constant dense<0.000000e+00> : vector<256x128xf32>
    %8 = tpu.matmul %6, %7, %cst {dimension_numbers = #tpu.dot_dimension_numbers<[1], [0], [0], [1], [0, 0, 1, 1], [], []>} : vector<256x128xbf16>, vector<128x128xbf16>, vector<256x128xf32> -> vector<256x128xf32>
    %9 = vector.extract_strided_slice %8 {offsets = [192, 0], sizes = [64, 128], strides = [1, 1]} : vector<256x128xf32> to vector<64x128xf32>
    %10 = vector.extract_strided_slice %8 {offsets = [0, 0], sizes = [64, 128], strides = [1, 1]} : vector<256x128xf32> to vector<64x128xf32>
    %11 = arith.truncf %10 : vector<64x128xf32> to vector<64x128xbf16>
    %c0_3 = arith.constant 0 : index
    %c0_4 = arith.constant 0 : index
    %c0_5 = arith.constant 0 : index
    %12 = vector.load %arg2[%c0_3, %c0_4, %c0_5] : memref<3x128x384xbf16, #tpu.memory_space<vmem>>, vector<1x128x384xbf16>
    %13 = vector.shape_cast %12 : vector<1x128x384xbf16> to vector<128x384xbf16>
    %cst_6 = arith.constant dense<0.000000e+00> : vector<64x384xf32>
    %14 = tpu.matmul %11, %13, %cst_6 {dimension_numbers = #tpu.dot_dimension_numbers<[1], [0], [0], [1], [0, 0, 1, 1], [], []>} : vector<64x128xbf16>, vector<128x384xbf16>, vector<64x384xf32> -> vector<64x384xf32>
    %c0_7 = arith.constant 0 : index
    %c0_8 = arith.constant 0 : index
    %c0_9 = arith.constant 0 : index
    %15 = vector.load %arg3[%c0_7, %c0_8, %c0_9] : memref<3x1x384xf32, #tpu.memory_space<vmem>>, vector<1x1x384xf32>
    %16 = vector.shape_cast %15 : vector<1x1x384xf32> to vector<1x384xf32>
    %17 = vector.broadcast %16 : vector<1x384xf32> to vector<64x384xf32>
    %18 = arith.addf %14, %17 : vector<64x384xf32>
    %19 = vector.extract_strided_slice %18 {offsets = [0, 0], sizes = [64, 128], strides = [1, 1]} : vector<64x384xf32> to vector<64x128xf32>
    %20 = vector.shape_cast %19 : vector<64x128xf32> to vector<8x8x128xf32>
    %c0_10 = arith.constant 0 : index
    %c0_11 = arith.constant 0 : index
    %c0_12 = arith.constant 0 : index
    %21 = vector.load %arg13[%c0_10, %c0_11, %c0_12] : memref<8x8x1664xf32, #tpu.memory_space<vmem>>, vector<8x8x128xf32>
    tpu.vector_store %arg13[%c0_10, %c0_11, %c0_12], %20 {strides = array<i32>} : memref<8x8x1664xf32, #tpu.memory_space<vmem>>, vector<8x8x128xf32>,
    %22 = vector.extract_strided_slice %18 {offsets = [0, 128], sizes = [64, 128], strides = [1, 1]} : vector<64x384xf32> to vector<64x128xf32>
    %23 = vector.shape_cast %22 : vector<64x128xf32> to vector<8x8x128xf32>
    %c0_13 = arith.constant 0 : index
    %c0_14 = arith.constant 0 : index
    %c384 = arith.constant 384 : index
    %24 = vector.load %arg13[%c0_13, %c0_14, %c384] : memref<8x8x1664xf32, #tpu.memory_space<vmem>>, vector<8x8x128xf32>
    tpu.vector_store %arg13[%c0_13, %c0_14, %c384], %23 {strides = array<i32>} : memref<8x8x1664xf32, #tpu.memory_space<vmem>>, vector<8x8x128xf32>,
    %25 = vector.extract_strided_slice %18 {offsets = [0, 256], sizes = [64, 128], strides = [1, 1]} : vector<64x384xf32> to vector<64x128xf32>
    %26 = vector.shape_cast %25 : vector<64x128xf32> to vector<8x8x128xf32>
    %c0_15 = arith.constant 0 : index
    %c0_16 = arith.constant 0 : index
    %c768 = arith.constant 768 : index
    %27 = vector.load %arg13[%c0_15, %c0_16, %c768] : memref<8x8x1664xf32, #tpu.memory_space<vmem>>, vector<8x8x128xf32>
    tpu.vector_store %arg13[%c0_15, %c0_16, %c768], %26 {strides = array<i32>} : memref<8x8x1664xf32, #tpu.memory_space<vmem>>, vector<8x8x128xf32>,
    %28 = vector.extract_strided_slice %8 {offsets = [64, 0], sizes = [64, 128], strides = [1, 1]} : vector<256x128xf32> to vector<64x128xf32>
    %29 = arith.truncf %28 : vector<64x128xf32> to vector<64x128xbf16>
    %c1 = arith.constant 1 : index
    %c0_17 = arith.constant 0 : index
    %c0_18 = arith.constant 0 : index
    %30 = vector.load %arg2[%c1, %c0_17, %c0_18] : memref<3x128x384xbf16, #tpu.memory_space<vmem>>, vector<1x128x384xbf16>
    %31 = vector.shape_cast %30 : vector<1x128x384xbf16> to vector<128x384xbf16>
    %cst_19 = arith.constant dense<0.000000e+00> : vector<64x384xf32>
    %32 = tpu.matmul %29, %31, %cst_19 {dimension_numbers = #tpu.dot_dimension_numbers<[1], [0], [0], [1], [0, 0, 1, 1], [], []>} : vector<64x128xbf16>, vector<128x384xbf16>, vector<64x384xf32> -> vector<64x384xf32>
    %c1_20 = arith.constant 1 : index
    %c0_21 = arith.constant 0 : index
    %c0_22 = arith.constant 0 : index
    %33 = vector.load %arg3[%c1_20, %c0_21, %c0_22] : memref<3x1x384xf32, #tpu.memory_space<vmem>>, vector<1x1x384xf32>
    %34 = vector.shape_cast %33 : vector<1x1x384xf32> to vector<1x384xf32>
    %35 = vector.broadcast %34 : vector<1x384xf32> to vector<64x384xf32>
    %36 = arith.addf %32, %35 : vector<64x384xf32>
    %37 = vector.extract_strided_slice %36 {offsets = [0, 0], sizes = [64, 128], strides = [1, 1]} : vector<64x384xf32> to vector<64x128xf32>
    %38 = vector.shape_cast %37 : vector<64x128xf32> to vector<8x8x128xf32>
    %c0_23 = arith.constant 0 : index
    %c0_24 = arith.constant 0 : index
    %c128 = arith.constant 128 : index
    %39 = vector.load %arg13[%c0_23, %c0_24, %c128] : memref<8x8x1664xf32, #tpu.memory_space<vmem>>, vector<8x8x128xf32>
    tpu.vector_store %arg13[%c0_23, %c0_24, %c128], %38 {strides = array<i32>} : memref<8x8x1664xf32, #tpu.memory_space<vmem>>, vector<8x8x128xf32>,
    %40 = vector.extract_strided_slice %36 {offsets = [0, 128], sizes = [64, 128], strides = [1, 1]} : vector<64x384xf32> to vector<64x128xf32>
    %41 = vector.shape_cast %40 : vector<64x128xf32> to vector<8x8x128xf32>
    %c0_25 = arith.constant 0 : index
    %c0_26 = arith.constant 0 : index
    %c512 = arith.constant 512 : index
    %42 = vector.load %arg13[%c0_25, %c0_26, %c512] : memref<8x8x1664xf32, #tpu.memory_space<vmem>>, vector<8x8x128xf32>
    tpu.vector_store %arg13[%c0_25, %c0_26, %c512], %41 {strides = array<i32>} : memref<8x8x1664xf32, #tpu.memory_space<vmem>>, vector<8x8x128xf32>,
    %43 = vector.extract_strided_slice %36 {offsets = [0, 256], sizes = [64, 128], strides = [1, 1]} : vector<64x384xf32> to vector<64x128xf32>
    %44 = vector.shape_cast %43 : vector<64x128xf32> to vector<8x8x128xf32>
    %c0_27 = arith.constant 0 : index
    %c0_28 = arith.constant 0 : index
    %c896 = arith.constant 896 : index
    %45 = vector.load %arg13[%c0_27, %c0_28, %c896] : memref<8x8x1664xf32, #tpu.memory_space<vmem>>, vector<8x8x128xf32>
    tpu.vector_store %arg13[%c0_27, %c0_28, %c896], %44 {strides = array<i32>} : memref<8x8x1664xf32, #tpu.memory_space<vmem>>, vector<8x8x128xf32>,
    %46 = vector.extract_strided_slice %8 {offsets = [128, 0], sizes = [64, 128], strides = [1, 1]} : vector<256x128xf32> to vector<64x128xf32>
    %47 = arith.truncf %46 : vector<64x128xf32> to vector<64x128xbf16>
    %c2 = arith.constant 2 : index
    %c0_29 = arith.constant 0 : index
    %c0_30 = arith.constant 0 : index
    %48 = vector.load %arg2[%c2, %c0_29, %c0_30] : memref<3x128x384xbf16, #tpu.memory_space<vmem>>, vector<1x128x384xbf16>
    %49 = vector.shape_cast %48 : vector<1x128x384xbf16> to vector<128x384xbf16>
    %cst_31 = arith.constant dense<0.000000e+00> : vector<64x384xf32>
    %50 = tpu.matmul %47, %49, %cst_31 {dimension_numbers = #tpu.dot_dimension_numbers<[1], [0], [0], [1], [0, 0, 1, 1], [], []>} : vector<64x128xbf16>, vector<128x384xbf16>, vector<64x384xf32> -> vector<64x384xf32>
    %c2_32 = arith.constant 2 : index
    %c0_33 = arith.constant 0 : index
    %c0_34 = arith.constant 0 : index
    %51 = vector.load %arg3[%c2_32, %c0_33, %c0_34] : memref<3x1x384xf32, #tpu.memory_space<vmem>>, vector<1x1x384xf32>
    %52 = vector.shape_cast %51 : vector<1x1x384xf32> to vector<1x384xf32>
    %53 = vector.broadcast %52 : vector<1x384xf32> to vector<64x384xf32>
    %54 = arith.addf %50, %53 : vector<64x384xf32>
    %55 = vector.extract_strided_slice %54 {offsets = [0, 0], sizes = [64, 128], strides = [1, 1]} : vector<64x384xf32> to vector<64x128xf32>
    %56 = vector.shape_cast %55 : vector<64x128xf32> to vector<8x8x128xf32>
    %c0_35 = arith.constant 0 : index
    %c0_36 = arith.constant 0 : index
    %c256 = arith.constant 256 : index
    %57 = vector.load %arg13[%c0_35, %c0_36, %c256] : memref<8x8x1664xf32, #tpu.memory_space<vmem>>, vector<8x8x128xf32>
    tpu.vector_store %arg13[%c0_35, %c0_36, %c256], %56 {strides = array<i32>} : memref<8x8x1664xf32, #tpu.memory_space<vmem>>, vector<8x8x128xf32>,
    %58 = vector.extract_strided_slice %54 {offsets = [0, 128], sizes = [64, 128], strides = [1, 1]} : vector<64x384xf32> to vector<64x128xf32>
    %59 = vector.shape_cast %58 : vector<64x128xf32> to vector<8x8x128xf32>
    %c0_37 = arith.constant 0 : index
    %c0_38 = arith.constant 0 : index
    %c640 = arith.constant 640 : index
    %60 = vector.load %arg13[%c0_37, %c0_38, %c640] : memref<8x8x1664xf32, #tpu.memory_space<vmem>>, vector<8x8x128xf32>
    tpu.vector_store %arg13[%c0_37, %c0_38, %c640], %59 {strides = array<i32>} : memref<8x8x1664xf32, #tpu.memory_space<vmem>>, vector<8x8x128xf32>,
    %61 = vector.extract_strided_slice %54 {offsets = [0, 256], sizes = [64, 128], strides = [1, 1]} : vector<64x384xf32> to vector<64x128xf32>
    %62 = vector.shape_cast %61 : vector<64x128xf32> to vector<8x8x128xf32>
    %c0_39 = arith.constant 0 : index
    %c0_40 = arith.constant 0 : index
    %c1024 = arith.constant 1024 : index
    %63 = vector.load %arg13[%c0_39, %c0_40, %c1024] : memref<8x8x1664xf32, #tpu.memory_space<vmem>>, vector<8x8x128xf32>
    tpu.vector_store %arg13[%c0_39, %c0_40, %c1024], %62 {strides = array<i32>} : memref<8x8x1664xf32, #tpu.memory_space<vmem>>, vector<8x8x128xf32>,
    %64 = arith.truncf %9 : vector<64x128xf32> to vector<64x128xbf16>
    %c0_41 = arith.constant 0 : index
    %c0_42 = arith.constant 0 : index
    %65 = vector.load %arg5[%c0_41, %c0_42] : memref<128x512xbf16, #tpu.memory_space<vmem>>, vector<128x512xbf16>
    %cst_43 = arith.constant dense<0.000000e+00> : vector<64x512xf32>
    %66 = tpu.matmul %64, %65, %cst_43 {dimension_numbers = #tpu.dot_dimension_numbers<[1], [0], [0], [1], [0, 0, 1, 1], [], []>} : vector<64x128xbf16>, vector<128x512xbf16>, vector<64x512xf32> -> vector<64x512xf32>
    %c0_44 = arith.constant 0 : index
    %c0_45 = arith.constant 0 : index
    %67 = vector.load %arg6[%c0_44, %c0_45] : memref<1x512xf32, #tpu.memory_space<vmem>>, vector<1x512xf32>
    %68 = vector.broadcast %67 : vector<1x512xf32> to vector<64x512xf32>
    %69 = arith.addf %66, %68 : vector<64x512xf32>
    %70 = vector.shape_cast %69 : vector<64x512xf32> to vector<8x8x512xf32>
    %71 = tpu.iota {dimensions = array<i32: 1>} : vector<8x512xi32>
    %c128_i32 = arith.constant 128 : i32
    %c0_i32_46 = arith.constant 0 : i32
    %72 = arith.cmpi eq, %c128_i32, %c0_i32_46 : i32
    %c1_i32_47 = arith.constant 1 : i32
    %73 = arith.select %72, %c1_i32_47, %c128_i32 : i32
    %74 = vector.broadcast %73 : i32 to vector<8x512xi32>
    %75 = arith.remsi %71, %74 : vector<8x512xi32>
    %c0_i32_48 = arith.constant 0 : i32
    %76 = vector.broadcast %c0_i32_48 : i32 to vector<8x512xi32>
    %77 = arith.cmpi ne, %75, %76 : vector<8x512xi32>
    %c0_i32_49 = arith.constant 0 : i32
    %78 = vector.broadcast %c0_i32_49 : i32 to vector<8x512xi32>
    %79 = arith.cmpi slt, %75, %78 : vector<8x512xi32>
    %c0_i32_50 = arith.constant 0 : i32
    %80 = arith.cmpi slt, %73, %c0_i32_50 : i32
    %81 = vector.broadcast %80 : i1 to vector<8x512xi1>
    %82 = vector.broadcast %81 : vector<8x512xi1> to vector<8x512xi1>
    %83 = arith.xori %79, %82 : vector<8x512xi1>
    %84 = arith.andi %83, %77 : vector<8x512xi1>
    %85 = vector.broadcast %73 : i32 to vector<8x512xi32>
    %86 = arith.addi %75, %85 : vector<8x512xi32>
    %87 = arith.select %84, %86, %75 : vector<8x512xi1>, vector<8x512xi32>
    %c64_i32 = arith.constant 64 : i32
    %88 = vector.broadcast %c64_i32 : i32 to vector<8x512xi32>
    %89 = arith.cmpi slt, %87, %88 : vector<8x512xi32>
    %90 = vector.extract_strided_slice %70 {offsets = [0, 0, 0], sizes = [1, 8, 512], strides = [1, 1, 1]} : vector<8x8x512xf32> to vector<1x8x512xf32>
    %91 = vector.shape_cast %90 : vector<1x8x512xf32> to vector<8x512xf32>
    %92 = vector.extract_strided_slice %70 {offsets = [7, 0, 0], sizes = [1, 8, 512], strides = [1, 1, 1]} : vector<8x8x512xf32> to vector<1x8x512xf32>
    %93 = vector.shape_cast %92 : vector<1x8x512xf32> to vector<8x512xf32>
    %94 = arith.select %89, %91, %93 : vector<8x512xi1>, vector<8x512xf32>
    %c0_51 = arith.constant 0 : index
    %c0_52 = arith.constant 0 : index
    %c1152 = arith.constant 1152 : index
    %95 = vector.load %arg13[%c0_51, %c0_52, %c1152] : memref<8x8x1664xf32, #tpu.memory_space<vmem>>, vector<1x8x512xf32>
    %96 = vector.shape_cast %95 : vector<1x8x512xf32> to vector<8x512xf32>
    %97 = vector.shape_cast %94 : vector<8x512xf32> to vector<1x8x512xf32>
    tpu.vector_store %arg13[%c0_51, %c0_52, %c1152], %97 {strides = array<i32>} : memref<8x8x1664xf32, #tpu.memory_space<vmem>>, vector<1x8x512xf32>,
    %98 = vector.extract_strided_slice %70 {offsets = [1, 0, 0], sizes = [1, 8, 512], strides = [1, 1, 1]} : vector<8x8x512xf32> to vector<1x8x512xf32>
    %99 = vector.shape_cast %98 : vector<1x8x512xf32> to vector<8x512xf32>
    %100 = vector.extract_strided_slice %70 {offsets = [6, 0, 0], sizes = [1, 8, 512], strides = [1, 1, 1]} : vector<8x8x512xf32> to vector<1x8x512xf32>
    %101 = vector.shape_cast %100 : vector<1x8x512xf32> to vector<8x512xf32>
    %102 = arith.select %89, %99, %101 : vector<8x512xi1>, vector<8x512xf32>
    %c1_53 = arith.constant 1 : index
    %c0_54 = arith.constant 0 : index
    %c1152_55 = arith.constant 1152 : index
    %103 = vector.load %arg13[%c1_53, %c0_54, %c1152_55] : memref<8x8x1664xf32, #tpu.memory_space<vmem>>, vector<1x8x512xf32>
    %104 = vector.shape_cast %103 : vector<1x8x512xf32> to vector<8x512xf32>
    %105 = vector.shape_cast %102 : vector<8x512xf32> to vector<1x8x512xf32>
    tpu.vector_store %arg13[%c1_53, %c0_54, %c1152_55], %105 {strides = array<i32>} : memref<8x8x1664xf32, #tpu.memory_space<vmem>>, vector<1x8x512xf32>,
    %106 = vector.extract_strided_slice %70 {offsets = [2, 0, 0], sizes = [1, 8, 512], strides = [1, 1, 1]} : vector<8x8x512xf32> to vector<1x8x512xf32>
    %107 = vector.shape_cast %106 : vector<1x8x512xf32> to vector<8x512xf32>
    %108 = vector.extract_strided_slice %70 {offsets = [5, 0, 0], sizes = [1, 8, 512], strides = [1, 1, 1]} : vector<8x8x512xf32> to vector<1x8x512xf32>
    %109 = vector.shape_cast %108 : vector<1x8x512xf32> to vector<8x512xf32>
    %110 = arith.select %89, %107, %109 : vector<8x512xi1>, vector<8x512xf32>
    %c2_56 = arith.constant 2 : index
    %c0_57 = arith.constant 0 : index
    %c1152_58 = arith.constant 1152 : index
    %111 = vector.load %arg13[%c2_56, %c0_57, %c1152_58] : memref<8x8x1664xf32, #tpu.memory_space<vmem>>, vector<1x8x512xf32>
    %112 = vector.shape_cast %111 : vector<1x8x512xf32> to vector<8x512xf32>
    %113 = vector.shape_cast %110 : vector<8x512xf32> to vector<1x8x512xf32>
    tpu.vector_store %arg13[%c2_56, %c0_57, %c1152_58], %113 {strides = array<i32>} : memref<8x8x1664xf32, #tpu.memory_space<vmem>>, vector<1x8x512xf32>,
    %114 = vector.extract_strided_slice %70 {offsets = [3, 0, 0], sizes = [1, 8, 512], strides = [1, 1, 1]} : vector<8x8x512xf32> to vector<1x8x512xf32>
    %115 = vector.shape_cast %114 : vector<1x8x512xf32> to vector<8x512xf32>
    %116 = vector.extract_strided_slice %70 {offsets = [4, 0, 0], sizes = [1, 8, 512], strides = [1, 1, 1]} : vector<8x8x512xf32> to vector<1x8x512xf32>
    %117 = vector.shape_cast %116 : vector<1x8x512xf32> to vector<8x512xf32>
    %118 = arith.select %89, %115, %117 : vector<8x512xi1>, vector<8x512xf32>
    %c3 = arith.constant 3 : index
    %c0_59 = arith.constant 0 : index
    %c1152_60 = arith.constant 1152 : index
    %119 = vector.load %arg13[%c3, %c0_59, %c1152_60] : memref<8x8x1664xf32, #tpu.memory_space<vmem>>, vector<1x8x512xf32>
    %120 = vector.shape_cast %119 : vector<1x8x512xf32> to vector<8x512xf32>
    %121 = vector.shape_cast %118 : vector<8x512xf32> to vector<1x8x512xf32>
    tpu.vector_store %arg13[%c3, %c0_59, %c1152_60], %121 {strides = array<i32>} : memref<8x8x1664xf32, #tpu.memory_space<vmem>>, vector<1x8x512xf32>,
    %122 = vector.extract_strided_slice %70 {offsets = [4, 0, 0], sizes = [1, 8, 512], strides = [1, 1, 1]} : vector<8x8x512xf32> to vector<1x8x512xf32>
    %123 = vector.shape_cast %122 : vector<1x8x512xf32> to vector<8x512xf32>
    %124 = vector.extract_strided_slice %70 {offsets = [3, 0, 0], sizes = [1, 8, 512], strides = [1, 1, 1]} : vector<8x8x512xf32> to vector<1x8x512xf32>
    %125 = vector.shape_cast %124 : vector<1x8x512xf32> to vector<8x512xf32>
    %126 = arith.select %89, %123, %125 : vector<8x512xi1>, vector<8x512xf32>
    %c4 = arith.constant 4 : index
    %c0_61 = arith.constant 0 : index
    %c1152_62 = arith.constant 1152 : index
    %127 = vector.load %arg13[%c4, %c0_61, %c1152_62] : memref<8x8x1664xf32, #tpu.memory_space<vmem>>, vector<1x8x512xf32>
    %128 = vector.shape_cast %127 : vector<1x8x512xf32> to vector<8x512xf32>
    %129 = vector.shape_cast %126 : vector<8x512xf32> to vector<1x8x512xf32>
    tpu.vector_store %arg13[%c4, %c0_61, %c1152_62], %129 {strides = array<i32>} : memref<8x8x1664xf32, #tpu.memory_space<vmem>>, vector<1x8x512xf32>,
    %130 = vector.extract_strided_slice %70 {offsets = [5, 0, 0], sizes = [1, 8, 512], strides = [1, 1, 1]} : vector<8x8x512xf32> to vector<1x8x512xf32>
    %131 = vector.shape_cast %130 : vector<1x8x512xf32> to vector<8x512xf32>
    %132 = vector.extract_strided_slice %70 {offsets = [2, 0, 0], sizes = [1, 8, 512], strides = [1, 1, 1]} : vector<8x8x512xf32> to vector<1x8x512xf32>
    %133 = vector.shape_cast %132 : vector<1x8x512xf32> to vector<8x512xf32>
    %134 = arith.select %89, %131, %133 : vector<8x512xi1>, vector<8x512xf32>
    %c5 = arith.constant 5 : index
    %c0_63 = arith.constant 0 : index
    %c1152_64 = arith.constant 1152 : index
    %135 = vector.load %arg13[%c5, %c0_63, %c1152_64] : memref<8x8x1664xf32, #tpu.memory_space<vmem>>, vector<1x8x512xf32>
    %136 = vector.shape_cast %135 : vector<1x8x512xf32> to vector<8x512xf32>
    %137 = vector.shape_cast %134 : vector<8x512xf32> to vector<1x8x512xf32>
    tpu.vector_store %arg13[%c5, %c0_63, %c1152_64], %137 {strides = array<i32>} : memref<8x8x1664xf32, #tpu.memory_space<vmem>>, vector<1x8x512xf32>,
    %138 = vector.extract_strided_slice %70 {offsets = [6, 0, 0], sizes = [1, 8, 512], strides = [1, 1, 1]} : vector<8x8x512xf32> to vector<1x8x512xf32>
    %139 = vector.shape_cast %138 : vector<1x8x512xf32> to vector<8x512xf32>
    %140 = vector.extract_strided_slice %70 {offsets = [1, 0, 0], sizes = [1, 8, 512], strides = [1, 1, 1]} : vector<8x8x512xf32> to vector<1x8x512xf32>
    %141 = vector.shape_cast %140 : vector<1x8x512xf32> to vector<8x512xf32>
    %142 = arith.select %89, %139, %141 : vector<8x512xi1>, vector<8x512xf32>
    %c6 = arith.constant 6 : index
    %c0_65 = arith.constant 0 : index
    %c1152_66 = arith.constant 1152 : index
    %143 = vector.load %arg13[%c6, %c0_65, %c1152_66] : memref<8x8x1664xf32, #tpu.memory_space<vmem>>, vector<1x8x512xf32>
    %144 = vector.shape_cast %143 : vector<1x8x512xf32> to vector<8x512xf32>
    %145 = vector.shape_cast %142 : vector<8x512xf32> to vector<1x8x512xf32>
    tpu.vector_store %arg13[%c6, %c0_65, %c1152_66], %145 {strides = array<i32>} : memref<8x8x1664xf32, #tpu.memory_space<vmem>>, vector<1x8x512xf32>,
    %146 = vector.extract_strided_slice %70 {offsets = [7, 0, 0], sizes = [1, 8, 512], strides = [1, 1, 1]} : vector<8x8x512xf32> to vector<1x8x512xf32>
    %147 = vector.shape_cast %146 : vector<1x8x512xf32> to vector<8x512xf32>
    %148 = vector.extract_strided_slice %70 {offsets = [0, 0, 0], sizes = [1, 8, 512], strides = [1, 1, 1]} : vector<8x8x512xf32> to vector<1x8x512xf32>
    %149 = vector.shape_cast %148 : vector<1x8x512xf32> to vector<8x512xf32>
    %150 = arith.select %89, %147, %149 : vector<8x512xi1>, vector<8x512xf32>
    %c7 = arith.constant 7 : index
    %c0_67 = arith.constant 0 : index
    %c1152_68 = arith.constant 1152 : index
    %151 = vector.load %arg13[%c7, %c0_67, %c1152_68] : memref<8x8x1664xf32, #tpu.memory_space<vmem>>, vector<1x8x512xf32>
    %152 = vector.shape_cast %151 : vector<1x8x512xf32> to vector<8x512xf32>
    %153 = vector.shape_cast %150 : vector<8x512xf32> to vector<1x8x512xf32>
    tpu.vector_store %arg13[%c7, %c0_67, %c1152_68], %153 {strides = array<i32>} : memref<8x8x1664xf32, #tpu.memory_space<vmem>>, vector<1x8x512xf32>,
    %c0_i32_69 = arith.constant 0 : i32
    %154 = tpu.memref_slice %arg17[%c0_i32_69] : memref<3x!tpu.dma_semaphore, #tpu.memory_space<semaphore_mem>> -> memref<1x!tpu.dma_semaphore, #tpu.memory_space<semaphore_mem>>
    %155 = tpu.memref_squeeze %154 : memref<1x!tpu.dma_semaphore, #tpu.memory_space<semaphore_mem>> -> memref<!tpu.dma_semaphore, #tpu.memory_space<semaphore_mem>>
    tpu.wait_dma2 semaphore(%155 : memref<!tpu.dma_semaphore, #tpu.memory_space<semaphore_mem>>) src(%arg7 : memref<512x1664xbf16, #tpu.memory_space<any>>) dst(%arg14 : memref<512x1664xbf16, #tpu.memory_space<vmem>>)
    %c0_70 = arith.constant 0 : index
    %c0_71 = arith.constant 0 : index
    %156 = vector.load %arg4[%c0_70, %c0_71] : memref<1x384xf32, #tpu.memory_space<vmem>>, vector<1x384xf32>
    %cst_72 = arith.constant 0.000000e+00 : f32
    %157 = vector.broadcast %cst_72 : f32 to vector<8x512xf32>
    %cst_73 = arith.constant 0.000000e+00 : f32
    %158 = vector.broadcast %cst_73 : f32 to vector<8x128xf32>
    %159 = arith.truncf %157 : vector<8x512xf32> to vector<8x512xbf16>
    %c0_74 = arith.constant 0 : index
    %c0_75 = arith.constant 0 : index
    %160 = vector.load %arg14[%c0_74, %c0_75] : memref<512x1664xbf16, #tpu.memory_space<vmem>>, vector<512x1664xbf16>
    %cst_76 = arith.constant dense<0.000000e+00> : vector<8x1664xf32>
    %161 = tpu.matmul %159, %160, %cst_76 {dimension_numbers = #tpu.dot_dimension_numbers<[1], [0], [0], [1], [0, 0, 1, 1], [], []>} : vector<8x512xbf16>, vector<512x1664xbf16>, vector<8x1664xf32> -> vector<8x1664xf32>
    %c0_77 = arith.constant 0 : index
    %c0_78 = arith.constant 0 : index
    %c0_79 = arith.constant 0 : index
    %162 = vector.load %arg13[%c0_77, %c0_78, %c0_79] : memref<8x8x1664xf32, #tpu.memory_space<vmem>>, vector<1x8x1664xf32>
    %163 = vector.shape_cast %162 : vector<1x8x1664xf32> to vector<8x1664xf32>
    %164 = vector.extract_strided_slice %163 {offsets = [0, 0], sizes = [8, 384], strides = [1, 1]} : vector<8x1664xf32> to vector<8x384xf32>
    %165 = vector.extract_strided_slice %161 {offsets = [0, 0], sizes = [8, 384], strides = [1, 1]} : vector<8x1664xf32> to vector<8x384xf32>
    %166 = arith.addf %164, %165 : vector<8x384xf32>
    %cst_80 = arith.constant 5.000000e-01 : f32
    %167 = vector.broadcast %cst_80 : f32 to vector<8x384xf32>
    %168 = arith.mulf %167, %166 : vector<8x384xf32>
    %169 = math.tanh %168 : vector<8x384xf32>
    %cst_81 = arith.constant 5.000000e-01 : f32
    %170 = vector.broadcast %cst_81 : f32 to vector<8x384xf32>
    %171 = arith.mulf %170, %169 : vector<8x384xf32>
    %cst_82 = arith.constant 5.000000e-01 : f32
    %172 = vector.broadcast %cst_82 : f32 to vector<8x384xf32>
    %173 = arith.addf %171, %172 : vector<8x384xf32>
    %174 = vector.extract_strided_slice %163 {offsets = [0, 384], sizes = [8, 384], strides = [1, 1]} : vector<8x1664xf32> to vector<8x384xf32>
    %175 = vector.extract_strided_slice %161 {offsets = [0, 384], sizes = [8, 384], strides = [1, 1]} : vector<8x1664xf32> to vector<8x384xf32>
    %176 = arith.addf %174, %175 : vector<8x384xf32>
    %cst_83 = arith.constant 5.000000e-01 : f32
    %177 = vector.broadcast %cst_83 : f32 to vector<8x384xf32>
    %178 = arith.mulf %177, %176 : vector<8x384xf32>
    %179 = math.tanh %178 : vector<8x384xf32>
    %cst_84 = arith.constant 5.000000e-01 : f32
    %180 = vector.broadcast %cst_84 : f32 to vector<8x384xf32>
    %181 = arith.mulf %180, %179 : vector<8x384xf32>
    %cst_85 = arith.constant 5.000000e-01 : f32
    %182 = vector.broadcast %cst_85 : f32 to vector<8x384xf32>
    %183 = arith.addf %181, %182 : vector<8x384xf32>
    %184 = vector.extract_strided_slice %163 {offsets = [0, 768], sizes = [8, 384], strides = [1, 1]} : vector<8x1664xf32> to vector<8x384xf32>
    %185 = vector.extract_strided_slice %161 {offsets = [0, 768], sizes = [8, 384], strides = [1, 1]} : vector<8x1664xf32> to vector<8x384xf32>
    %186 = vector.broadcast %156 : vector<1x384xf32> to vector<8x384xf32>
    %187 = arith.addf %185, %186 : vector<8x384xf32>
    %188 = arith.mulf %173, %187 : vector<8x384xf32>
    %189 = arith.addf %184, %188 : vector<8x384xf32>
    %190 = math.tanh %189 : vector<8x384xf32>
    %191 = vector.extract_strided_slice %157 {offsets = [0, 0], sizes = [8, 384], strides = [1, 1]} : vector<8x512xf32> to vector<8x384xf32>
    %192 = arith.subf %191, %190 : vector<8x384xf32>
    %193 = arith.mulf %183, %192 : vector<8x384xf32>
    %194 = arith.addf %190, %193 : vector<8x384xf32>
    %195 = vector.extract_strided_slice %163 {offsets = [0, 1152], sizes = [8, 512], strides = [1, 1]} : vector<8x1664xf32> to vector<8x512xf32>
    %196 = vector.extract_strided_slice %161 {offsets = [0, 1152], sizes = [8, 512], strides = [1, 1]} : vector<8x1664xf32> to vector<8x512xf32>
    %197 = arith.addf %195, %196 : vector<8x512xf32>
    %198 = vector.extract_strided_slice %197 {offsets = [0, 0], sizes = [8, 128], strides = [1, 1]} : vector<8x512xf32> to vector<8x128xf32>
    %cst_86 = arith.constant 5.000000e-01 : f32
    %199 = vector.broadcast %cst_86 : f32 to vector<8x128xf32>
    %200 = arith.mulf %199, %198 : vector<8x128xf32>
    %201 = math.tanh %200 : vector<8x128xf32>
    %cst_87 = arith.constant 5.000000e-01 : f32
    %202 = vector.broadcast %cst_87 : f32 to vector<8x128xf32>
    %203 = arith.mulf %202, %201 : vector<8x128xf32>
    %cst_88 = arith.constant 5.000000e-01 : f32
    %204 = vector.broadcast %cst_88 : f32 to vector<8x128xf32>
    %205 = arith.addf %203, %204 : vector<8x128xf32>
    %206 = vector.extract_strided_slice %197 {offsets = [0, 128], sizes = [8, 128], strides = [1, 1]} : vector<8x512xf32> to vector<8x128xf32>
    %cst_89 = arith.constant 5.000000e-01 : f32
    %207 = vector.broadcast %cst_89 : f32 to vector<8x128xf32>
    %208 = arith.mulf %207, %206 : vector<8x128xf32>
    %209 = math.tanh %208 : vector<8x128xf32>
    %cst_90 = arith.constant 5.000000e-01 : f32
    %210 = vector.broadcast %cst_90 : f32 to vector<8x128xf32>
    %211 = arith.mulf %210, %209 : vector<8x128xf32>
    %cst_91 = arith.constant 5.000000e-01 : f32
    %212 = vector.broadcast %cst_91 : f32 to vector<8x128xf32>
    %213 = arith.addf %211, %212 : vector<8x128xf32>
    %214 = vector.extract_strided_slice %197 {offsets = [0, 256], sizes = [8, 128], strides = [1, 1]} : vector<8x512xf32> to vector<8x128xf32>
    %215 = math.tanh %214 : vector<8x128xf32>
    %216 = vector.extract_strided_slice %197 {offsets = [0, 384], sizes = [8, 128], strides = [1, 1]} : vector<8x512xf32> to vector<8x128xf32>
    %cst_92 = arith.constant 5.000000e-01 : f32
    %217 = vector.broadcast %cst_92 : f32 to vector<8x128xf32>
    %218 = arith.mulf %217, %216 : vector<8x128xf32>
    %219 = math.tanh %218 : vector<8x128xf32>
    %cst_93 = arith.constant 5.000000e-01 : f32
    %220 = vector.broadcast %cst_93 : f32 to vector<8x128xf32>
    %221 = arith.mulf %220, %219 : vector<8x128xf32>
    %cst_94 = arith.constant 5.000000e-01 : f32
    %222 = vector.broadcast %cst_94 : f32 to vector<8x128xf32>
    %223 = arith.addf %221, %222 : vector<8x128xf32>
    %224 = arith.mulf %213, %158 : vector<8x128xf32>
    %225 = arith.mulf %205, %215 : vector<8x128xf32>
    %226 = arith.addf %224, %225 : vector<8x128xf32>
    %227 = math.tanh %226 : vector<8x128xf32>
    %228 = arith.mulf %223, %227 : vector<8x128xf32>
    %229 = tpu.concatenate %194, %228 in 1 : vector<8x384xf32>, vector<8x128xf32> -> vector<8x512xf32>
    %230 = arith.truncf %229 : vector<8x512xf32> to vector<8x512xbf16>
    %c0_95 = arith.constant 0 : index
    %c0_96 = arith.constant 0 : index
    %231 = vector.load %arg14[%c0_95, %c0_96] : memref<512x1664xbf16, #tpu.memory_space<vmem>>, vector<512x1664xbf16>
    %cst_97 = arith.constant dense<0.000000e+00> : vector<8x1664xf32>
    %232 = tpu.matmul %230, %231, %cst_97 {dimension_numbers = #tpu.dot_dimension_numbers<[1], [0], [0], [1], [0, 0, 1, 1], [], []>} : vector<8x512xbf16>, vector<512x1664xbf16>, vector<8x1664xf32> -> vector<8x1664xf32>
    %c1_98 = arith.constant 1 : index
    %c0_99 = arith.constant 0 : index
    %c0_100 = arith.constant 0 : index
    %233 = vector.load %arg13[%c1_98, %c0_99, %c0_100] : memref<8x8x1664xf32, #tpu.memory_space<vmem>>, vector<1x8x1664xf32>
    %234 = vector.shape_cast %233 : vector<1x8x1664xf32> to vector<8x1664xf32>
    %235 = vector.extract_strided_slice %234 {offsets = [0, 0], sizes = [8, 384], strides = [1, 1]} : vector<8x1664xf32> to vector<8x384xf32>
    %236 = vector.extract_strided_slice %232 {offsets = [0, 0], sizes = [8, 384], strides = [1, 1]} : vector<8x1664xf32> to vector<8x384xf32>
    %237 = arith.addf %235, %236 : vector<8x384xf32>
    %cst_101 = arith.constant 5.000000e-01 : f32
    %238 = vector.broadcast %cst_101 : f32 to vector<8x384xf32>
    %239 = arith.mulf %238, %237 : vector<8x384xf32>
    %240 = math.tanh %239 : vector<8x384xf32>
    %cst_102 = arith.constant 5.000000e-01 : f32
    %241 = vector.broadcast %cst_102 : f32 to vector<8x384xf32>
    %242 = arith.mulf %241, %240 : vector<8x384xf32>
    %cst_103 = arith.constant 5.000000e-01 : f32
    %243 = vector.broadcast %cst_103 : f32 to vector<8x384xf32>
    %244 = arith.addf %242, %243 : vector<8x384xf32>
    %245 = vector.extract_strided_slice %234 {offsets = [0, 384], sizes = [8, 384], strides = [1, 1]} : vector<8x1664xf32> to vector<8x384xf32>
    %246 = vector.extract_strided_slice %232 {offsets = [0, 384], sizes = [8, 384], strides = [1, 1]} : vector<8x1664xf32> to vector<8x384xf32>
    %247 = arith.addf %245, %246 : vector<8x384xf32>
    %cst_104 = arith.constant 5.000000e-01 : f32
    %248 = vector.broadcast %cst_104 : f32 to vector<8x384xf32>
    %249 = arith.mulf %248, %247 : vector<8x384xf32>
    %250 = math.tanh %249 : vector<8x384xf32>
    %cst_105 = arith.constant 5.000000e-01 : f32
    %251 = vector.broadcast %cst_105 : f32 to vector<8x384xf32>
    %252 = arith.mulf %251, %250 : vector<8x384xf32>
    %cst_106 = arith.constant 5.000000e-01 : f32
    %253 = vector.broadcast %cst_106 : f32 to vector<8x384xf32>
    %254 = arith.addf %252, %253 : vector<8x384xf32>
    %255 = vector.extract_strided_slice %234 {offsets = [0, 768], sizes = [8, 384], strides = [1, 1]} : vector<8x1664xf32> to vector<8x384xf32>
    %256 = vector.extract_strided_slice %232 {offsets = [0, 768], sizes = [8, 384], strides = [1, 1]} : vector<8x1664xf32> to vector<8x384xf32>
    %257 = vector.broadcast %156 : vector<1x384xf32> to vector<8x384xf32>
    %258 = arith.addf %256, %257 : vector<8x384xf32>
    %259 = arith.mulf %244, %258 : vector<8x384xf32>
    %260 = arith.addf %255, %259 : vector<8x384xf32>
    %261 = math.tanh %260 : vector<8x384xf32>
    %262 = vector.extract_strided_slice %229 {offsets = [0, 0], sizes = [8, 384], strides = [1, 1]} : vector<8x512xf32> to vector<8x384xf32>
    %263 = arith.subf %262, %261 : vector<8x384xf32>
    %264 = arith.mulf %254, %263 : vector<8x384xf32>
    %265 = arith.addf %261, %264 : vector<8x384xf32>
    %266 = vector.extract_strided_slice %234 {offsets = [0, 1152], sizes = [8, 512], strides = [1, 1]} : vector<8x1664xf32> to vector<8x512xf32>
    %267 = vector.extract_strided_slice %232 {offsets = [0, 1152], sizes = [8, 512], strides = [1, 1]} : vector<8x1664xf32> to vector<8x512xf32>
    %268 = arith.addf %266, %267 : vector<8x512xf32>
    %269 = vector.extract_strided_slice %268 {offsets = [0, 0], sizes = [8, 128], strides = [1, 1]} : vector<8x512xf32> to vector<8x128xf32>
    %cst_107 = arith.constant 5.000000e-01 : f32
    %270 = vector.broadcast %cst_107 : f32 to vector<8x128xf32>
    %271 = arith.mulf %270, %269 : vector<8x128xf32>
    %272 = math.tanh %271 : vector<8x128xf32>
    %cst_108 = arith.constant 5.000000e-01 : f32
    %273 = vector.broadcast %cst_108 : f32 to vector<8x128xf32>
    %274 = arith.mulf %273, %272 : vector<8x128xf32>
    %cst_109 = arith.constant 5.000000e-01 : f32
    %275 = vector.broadcast %cst_109 : f32 to vector<8x128xf32>
    %276 = arith.addf %274, %275 : vector<8x128xf32>
    %277 = vector.extract_strided_slice %268 {offsets = [0, 128], sizes = [8, 128], strides = [1, 1]} : vector<8x512xf32> to vector<8x128xf32>
    %cst_110 = arith.constant 5.000000e-01 : f32
    %278 = vector.broadcast %cst_110 : f32 to vector<8x128xf32>
    %279 = arith.mulf %278, %277 : vector<8x128xf32>
    %280 = math.tanh %279 : vector<8x128xf32>
    %cst_111 = arith.constant 5.000000e-01 : f32
    %281 = vector.broadcast %cst_111 : f32 to vector<8x128xf32>
    %282 = arith.mulf %281, %280 : vector<8x128xf32>
    %cst_112 = arith.constant 5.000000e-01 : f32
    %283 = vector.broadcast %cst_112 : f32 to vector<8x128xf32>
    %284 = arith.addf %282, %283 : vector<8x128xf32>
    %285 = vector.extract_strided_slice %268 {offsets = [0, 256], sizes = [8, 128], strides = [1, 1]} : vector<8x512xf32> to vector<8x128xf32>
    %286 = math.tanh %285 : vector<8x128xf32>
    %287 = vector.extract_strided_slice %268 {offsets = [0, 384], sizes = [8, 128], strides = [1, 1]} : vector<8x512xf32> to vector<8x128xf32>
    %cst_113 = arith.constant 5.000000e-01 : f32
    %288 = vector.broadcast %cst_113 : f32 to vector<8x128xf32>
    %289 = arith.mulf %288, %287 : vector<8x128xf32>
    %290 = math.tanh %289 : vector<8x128xf32>
    %cst_114 = arith.constant 5.000000e-01 : f32
    %291 = vector.broadcast %cst_114 : f32 to vector<8x128xf32>
    %292 = arith.mulf %291, %290 : vector<8x128xf32>
    %cst_115 = arith.constant 5.000000e-01 : f32
    %293 = vector.broadcast %cst_115 : f32 to vector<8x128xf32>
    %294 = arith.addf %292, %293 : vector<8x128xf32>
    %295 = arith.mulf %284, %226 : vector<8x128xf32>
    %296 = arith.mulf %276, %286 : vector<8x128xf32>
    %297 = arith.addf %295, %296 : vector<8x128xf32>
    %298 = math.tanh %297 : vector<8x128xf32>
    %299 = arith.mulf %294, %298 : vector<8x128xf32>
    %300 = tpu.concatenate %265, %299 in 1 : vector<8x384xf32>, vector<8x128xf32> -> vector<8x512xf32>
    %301 = arith.maximumf %229, %300 : vector<8x512xf32>
    %302 = arith.truncf %300 : vector<8x512xf32> to vector<8x512xbf16>
    %c0_116 = arith.constant 0 : index
    %c0_117 = arith.constant 0 : index
    %303 = vector.load %arg14[%c0_116, %c0_117] : memref<512x1664xbf16, #tpu.memory_space<vmem>>, vector<512x1664xbf16>
    %cst_118 = arith.constant dense<0.000000e+00> : vector<8x1664xf32>
    %304 = tpu.matmul %302, %303, %cst_118 {dimension_numbers = #tpu.dot_dimension_numbers<[1], [0], [0], [1], [0, 0, 1, 1], [], []>} : vector<8x512xbf16>, vector<512x1664xbf16>, vector<8x1664xf32> -> vector<8x1664xf32>
    %c2_119 = arith.constant 2 : index
    %c0_120 = arith.constant 0 : index
    %c0_121 = arith.constant 0 : index
    %305 = vector.load %arg13[%c2_119, %c0_120, %c0_121] : memref<8x8x1664xf32, #tpu.memory_space<vmem>>, vector<1x8x1664xf32>
    %306 = vector.shape_cast %305 : vector<1x8x1664xf32> to vector<8x1664xf32>
    %307 = vector.extract_strided_slice %306 {offsets = [0, 0], sizes = [8, 384], strides = [1, 1]} : vector<8x1664xf32> to vector<8x384xf32>
    %308 = vector.extract_strided_slice %304 {offsets = [0, 0], sizes = [8, 384], strides = [1, 1]} : vector<8x1664xf32> to vector<8x384xf32>
    %309 = arith.addf %307, %308 : vector<8x384xf32>
    %cst_122 = arith.constant 5.000000e-01 : f32
    %310 = vector.broadcast %cst_122 : f32 to vector<8x384xf32>
    %311 = arith.mulf %310, %309 : vector<8x384xf32>
    %312 = math.tanh %311 : vector<8x384xf32>
    %cst_123 = arith.constant 5.000000e-01 : f32
    %313 = vector.broadcast %cst_123 : f32 to vector<8x384xf32>
    %314 = arith.mulf %313, %312 : vector<8x384xf32>
    %cst_124 = arith.constant 5.000000e-01 : f32
    %315 = vector.broadcast %cst_124 : f32 to vector<8x384xf32>
    %316 = arith.addf %314, %315 : vector<8x384xf32>
    %317 = vector.extract_strided_slice %306 {offsets = [0, 384], sizes = [8, 384], strides = [1, 1]} : vector<8x1664xf32> to vector<8x384xf32>
    %318 = vector.extract_strided_slice %304 {offsets = [0, 384], sizes = [8, 384], strides = [1, 1]} : vector<8x1664xf32> to vector<8x384xf32>
    %319 = arith.addf %317, %318 : vector<8x384xf32>
    %cst_125 = arith.constant 5.000000e-01 : f32
    %320 = vector.broadcast %cst_125 : f32 to vector<8x384xf32>
    %321 = arith.mulf %320, %319 : vector<8x384xf32>
    %322 = math.tanh %321 : vector<8x384xf32>
    %cst_126 = arith.constant 5.000000e-01 : f32
    %323 = vector.broadcast %cst_126 : f32 to vector<8x384xf32>
    %324 = arith.mulf %323, %322 : vector<8x384xf32>
    %cst_127 = arith.constant 5.000000e-01 : f32
    %325 = vector.broadcast %cst_127 : f32 to vector<8x384xf32>
    %326 = arith.addf %324, %325 : vector<8x384xf32>
    %327 = vector.extract_strided_slice %306 {offsets = [0, 768], sizes = [8, 384], strides = [1, 1]} : vector<8x1664xf32> to vector<8x384xf32>
    %328 = vector.extract_strided_slice %304 {offsets = [0, 768], sizes = [8, 384], strides = [1, 1]} : vector<8x1664xf32> to vector<8x384xf32>
    %329 = vector.broadcast %156 : vector<1x384xf32> to vector<8x384xf32>
    %330 = arith.addf %328, %329 : vector<8x384xf32>
    %331 = arith.mulf %316, %330 : vector<8x384xf32>
    %332 = arith.addf %327, %331 : vector<8x384xf32>
    %333 = math.tanh %332 : vector<8x384xf32>
    %334 = vector.extract_strided_slice %300 {offsets = [0, 0], sizes = [8, 384], strides = [1, 1]} : vector<8x512xf32> to vector<8x384xf32>
    %335 = arith.subf %334, %333 : vector<8x384xf32>
    %336 = arith.mulf %326, %335 : vector<8x384xf32>
    %337 = arith.addf %333, %336 : vector<8x384xf32>
    %338 = vector.extract_strided_slice %306 {offsets = [0, 1152], sizes = [8, 512], strides = [1, 1]} : vector<8x1664xf32> to vector<8x512xf32>
    %339 = vector.extract_strided_slice %304 {offsets = [0, 1152], sizes = [8, 512], strides = [1, 1]} : vector<8x1664xf32> to vector<8x512xf32>
    %340 = arith.addf %338, %339 : vector<8x512xf32>
    %341 = vector.extract_strided_slice %340 {offsets = [0, 0], sizes = [8, 128], strides = [1, 1]} : vector<8x512xf32> to vector<8x128xf32>
    %cst_128 = arith.constant 5.000000e-01 : f32
    %342 = vector.broadcast %cst_128 : f32 to vector<8x128xf32>
    %343 = arith.mulf %342, %341 : vector<8x128xf32>
    %344 = math.tanh %343 : vector<8x128xf32>
    %cst_129 = arith.constant 5.000000e-01 : f32
    %345 = vector.broadcast %cst_129 : f32 to vector<8x128xf32>
    %346 = arith.mulf %345, %344 : vector<8x128xf32>
    %cst_130 = arith.constant 5.000000e-01 : f32
    %347 = vector.broadcast %cst_130 : f32 to vector<8x128xf32>
    %348 = arith.addf %346, %347 : vector<8x128xf32>
    %349 = vector.extract_strided_slice %340 {offsets = [0, 128], sizes = [8, 128], strides = [1, 1]} : vector<8x512xf32> to vector<8x128xf32>
    %cst_131 = arith.constant 5.000000e-01 : f32
    %350 = vector.broadcast %cst_131 : f32 to vector<8x128xf32>
    %351 = arith.mulf %350, %349 : vector<8x128xf32>
    %352 = math.tanh %351 : vector<8x128xf32>
    %cst_132 = arith.constant 5.000000e-01 : f32
    %353 = vector.broadcast %cst_132 : f32 to vector<8x128xf32>
    %354 = arith.mulf %353, %352 : vector<8x128xf32>
    %cst_133 = arith.constant 5.000000e-01 : f32
    %355 = vector.broadcast %cst_133 : f32 to vector<8x128xf32>
    %356 = arith.addf %354, %355 : vector<8x128xf32>
    %357 = vector.extract_strided_slice %340 {offsets = [0, 256], sizes = [8, 128], strides = [1, 1]} : vector<8x512xf32> to vector<8x128xf32>
    %358 = math.tanh %357 : vector<8x128xf32>
    %359 = vector.extract_strided_slice %340 {offsets = [0, 384], sizes = [8, 128], strides = [1, 1]} : vector<8x512xf32> to vector<8x128xf32>
    %cst_134 = arith.constant 5.000000e-01 : f32
    %360 = vector.broadcast %cst_134 : f32 to vector<8x128xf32>
    %361 = arith.mulf %360, %359 : vector<8x128xf32>
    %362 = math.tanh %361 : vector<8x128xf32>
    %cst_135 = arith.constant 5.000000e-01 : f32
    %363 = vector.broadcast %cst_135 : f32 to vector<8x128xf32>
    %364 = arith.mulf %363, %362 : vector<8x128xf32>
    %cst_136 = arith.constant 5.000000e-01 : f32
    %365 = vector.broadcast %cst_136 : f32 to vector<8x128xf32>
    %366 = arith.addf %364, %365 : vector<8x128xf32>
    %367 = arith.mulf %356, %297 : vector<8x128xf32>
    %368 = arith.mulf %348, %358 : vector<8x128xf32>
    %369 = arith.addf %367, %368 : vector<8x128xf32>
    %370 = math.tanh %369 : vector<8x128xf32>
    %371 = arith.mulf %366, %370 : vector<8x128xf32>
    %372 = tpu.concatenate %337, %371 in 1 : vector<8x384xf32>, vector<8x128xf32> -> vector<8x512xf32>
    %373 = arith.maximumf %301, %372 : vector<8x512xf32>
    %374 = arith.truncf %372 : vector<8x512xf32> to vector<8x512xbf16>
    %c0_137 = arith.constant 0 : index
    %c0_138 = arith.constant 0 : index
    %375 = vector.load %arg14[%c0_137, %c0_138] : memref<512x1664xbf16, #tpu.memory_space<vmem>>, vector<512x1664xbf16>
    %cst_139 = arith.constant dense<0.000000e+00> : vector<8x1664xf32>
    %376 = tpu.matmul %374, %375, %cst_139 {dimension_numbers = #tpu.dot_dimension_numbers<[1], [0], [0], [1], [0, 0, 1, 1], [], []>} : vector<8x512xbf16>, vector<512x1664xbf16>, vector<8x1664xf32> -> vector<8x1664xf32>
    %c3_140 = arith.constant 3 : index
    %c0_141 = arith.constant 0 : index
    %c0_142 = arith.constant 0 : index
    %377 = vector.load %arg13[%c3_140, %c0_141, %c0_142] : memref<8x8x1664xf32, #tpu.memory_space<vmem>>, vector<1x8x1664xf32>
    %378 = vector.shape_cast %377 : vector<1x8x1664xf32> to vector<8x1664xf32>
    %379 = vector.extract_strided_slice %378 {offsets = [0, 0], sizes = [8, 384], strides = [1, 1]} : vector<8x1664xf32> to vector<8x384xf32>
    %380 = vector.extract_strided_slice %376 {offsets = [0, 0], sizes = [8, 384], strides = [1, 1]} : vector<8x1664xf32> to vector<8x384xf32>
    %381 = arith.addf %379, %380 : vector<8x384xf32>
    %cst_143 = arith.constant 5.000000e-01 : f32
    %382 = vector.broadcast %cst_143 : f32 to vector<8x384xf32>
    %383 = arith.mulf %382, %381 : vector<8x384xf32>
    %384 = math.tanh %383 : vector<8x384xf32>
    %cst_144 = arith.constant 5.000000e-01 : f32
    %385 = vector.broadcast %cst_144 : f32 to vector<8x384xf32>
    %386 = arith.mulf %385, %384 : vector<8x384xf32>
    %cst_145 = arith.constant 5.000000e-01 : f32
    %387 = vector.broadcast %cst_145 : f32 to vector<8x384xf32>
    %388 = arith.addf %386, %387 : vector<8x384xf32>
    %389 = vector.extract_strided_slice %378 {offsets = [0, 384], sizes = [8, 384], strides = [1, 1]} : vector<8x1664xf32> to vector<8x384xf32>
    %390 = vector.extract_strided_slice %376 {offsets = [0, 384], sizes = [8, 384], strides = [1, 1]} : vector<8x1664xf32> to vector<8x384xf32>
    %391 = arith.addf %389, %390 : vector<8x384xf32>
    %cst_146 = arith.constant 5.000000e-01 : f32
    %392 = vector.broadcast %cst_146 : f32 to vector<8x384xf32>
    %393 = arith.mulf %392, %391 : vector<8x384xf32>
    %394 = math.tanh %393 : vector<8x384xf32>
    %cst_147 = arith.constant 5.000000e-01 : f32
    %395 = vector.broadcast %cst_147 : f32 to vector<8x384xf32>
    %396 = arith.mulf %395, %394 : vector<8x384xf32>
    %cst_148 = arith.constant 5.000000e-01 : f32
    %397 = vector.broadcast %cst_148 : f32 to vector<8x384xf32>
    %398 = arith.addf %396, %397 : vector<8x384xf32>
    %399 = vector.extract_strided_slice %378 {offsets = [0, 768], sizes = [8, 384], strides = [1, 1]} : vector<8x1664xf32> to vector<8x384xf32>
    %400 = vector.extract_strided_slice %376 {offsets = [0, 768], sizes = [8, 384], strides = [1, 1]} : vector<8x1664xf32> to vector<8x384xf32>
    %401 = vector.broadcast %156 : vector<1x384xf32> to vector<8x384xf32>
    %402 = arith.addf %400, %401 : vector<8x384xf32>
    %403 = arith.mulf %388, %402 : vector<8x384xf32>
    %404 = arith.addf %399, %403 : vector<8x384xf32>
    %405 = math.tanh %404 : vector<8x384xf32>
    %406 = vector.extract_strided_slice %372 {offsets = [0, 0], sizes = [8, 384], strides = [1, 1]} : vector<8x512xf32> to vector<8x384xf32>
    %407 = arith.subf %406, %405 : vector<8x384xf32>
    %408 = arith.mulf %398, %407 : vector<8x384xf32>
    %409 = arith.addf %405, %408 : vector<8x384xf32>
    %410 = vector.extract_strided_slice %378 {offsets = [0, 1152], sizes = [8, 512], strides = [1, 1]} : vector<8x1664xf32> to vector<8x512xf32>
    %411 = vector.extract_strided_slice %376 {offsets = [0, 1152], sizes = [8, 512], strides = [1, 1]} : vector<8x1664xf32> to vector<8x512xf32>
    %412 = arith.addf %410, %411 : vector<8x512xf32>
    %413 = vector.extract_strided_slice %412 {offsets = [0, 0], sizes = [8, 128], strides = [1, 1]} : vector<8x512xf32> to vector<8x128xf32>
    %cst_149 = arith.constant 5.000000e-01 : f32
    %414 = vector.broadcast %cst_149 : f32 to vector<8x128xf32>
    %415 = arith.mulf %414, %413 : vector<8x128xf32>
    %416 = math.tanh %415 : vector<8x128xf32>
    %cst_150 = arith.constant 5.000000e-01 : f32
    %417 = vector.broadcast %cst_150 : f32 to vector<8x128xf32>
    %418 = arith.mulf %417, %416 : vector<8x128xf32>
    %cst_151 = arith.constant 5.000000e-01 : f32
    %419 = vector.broadcast %cst_151 : f32 to vector<8x128xf32>
    %420 = arith.addf %418, %419 : vector<8x128xf32>
    %421 = vector.extract_strided_slice %412 {offsets = [0, 128], sizes = [8, 128], strides = [1, 1]} : vector<8x512xf32> to vector<8x128xf32>
    %cst_152 = arith.constant 5.000000e-01 : f32
    %422 = vector.broadcast %cst_152 : f32 to vector<8x128xf32>
    %423 = arith.mulf %422, %421 : vector<8x128xf32>
    %424 = math.tanh %423 : vector<8x128xf32>
    %cst_153 = arith.constant 5.000000e-01 : f32
    %425 = vector.broadcast %cst_153 : f32 to vector<8x128xf32>
    %426 = arith.mulf %425, %424 : vector<8x128xf32>
    %cst_154 = arith.constant 5.000000e-01 : f32
    %427 = vector.broadcast %cst_154 : f32 to vector<8x128xf32>
    %428 = arith.addf %426, %427 : vector<8x128xf32>
    %429 = vector.extract_strided_slice %412 {offsets = [0, 256], sizes = [8, 128], strides = [1, 1]} : vector<8x512xf32> to vector<8x128xf32>
    %430 = math.tanh %429 : vector<8x128xf32>
    %431 = vector.extract_strided_slice %412 {offsets = [0, 384], sizes = [8, 128], strides = [1, 1]} : vector<8x512xf32> to vector<8x128xf32>
    %cst_155 = arith.constant 5.000000e-01 : f32
    %432 = vector.broadcast %cst_155 : f32 to vector<8x128xf32>
    %433 = arith.mulf %432, %431 : vector<8x128xf32>
    %434 = math.tanh %433 : vector<8x128xf32>
    %cst_156 = arith.constant 5.000000e-01 : f32
    %435 = vector.broadcast %cst_156 : f32 to vector<8x128xf32>
    %436 = arith.mulf %435, %434 : vector<8x128xf32>
    %cst_157 = arith.constant 5.000000e-01 : f32
    %437 = vector.broadcast %cst_157 : f32 to vector<8x128xf32>
    %438 = arith.addf %436, %437 : vector<8x128xf32>
    %439 = arith.mulf %428, %369 : vector<8x128xf32>
    %440 = arith.mulf %420, %430 : vector<8x128xf32>
    %441 = arith.addf %439, %440 : vector<8x128xf32>
    %442 = math.tanh %441 : vector<8x128xf32>
    %443 = arith.mulf %438, %442 : vector<8x128xf32>
    %444 = tpu.concatenate %409, %443 in 1 : vector<8x384xf32>, vector<8x128xf32> -> vector<8x512xf32>
    %445 = arith.maximumf %373, %444 : vector<8x512xf32>
    %446 = arith.truncf %444 : vector<8x512xf32> to vector<8x512xbf16>
    %c0_158 = arith.constant 0 : index
    %c0_159 = arith.constant 0 : index
    %447 = vector.load %arg14[%c0_158, %c0_159] : memref<512x1664xbf16, #tpu.memory_space<vmem>>, vector<512x1664xbf16>
    %cst_160 = arith.constant dense<0.000000e+00> : vector<8x1664xf32>
    %448 = tpu.matmul %446, %447, %cst_160 {dimension_numbers = #tpu.dot_dimension_numbers<[1], [0], [0], [1], [0, 0, 1, 1], [], []>} : vector<8x512xbf16>, vector<512x1664xbf16>, vector<8x1664xf32> -> vector<8x1664xf32>
    %c4_161 = arith.constant 4 : index
    %c0_162 = arith.constant 0 : index
    %c0_163 = arith.constant 0 : index
    %449 = vector.load %arg13[%c4_161, %c0_162, %c0_163] : memref<8x8x1664xf32, #tpu.memory_space<vmem>>, vector<1x8x1664xf32>
    %450 = vector.shape_cast %449 : vector<1x8x1664xf32> to vector<8x1664xf32>
    %451 = vector.extract_strided_slice %450 {offsets = [0, 0], sizes = [8, 384], strides = [1, 1]} : vector<8x1664xf32> to vector<8x384xf32>
    %452 = vector.extract_strided_slice %448 {offsets = [0, 0], sizes = [8, 384], strides = [1, 1]} : vector<8x1664xf32> to vector<8x384xf32>
    %453 = arith.addf %451, %452 : vector<8x384xf32>
    %cst_164 = arith.constant 5.000000e-01 : f32
    %454 = vector.broadcast %cst_164 : f32 to vector<8x384xf32>
    %455 = arith.mulf %454, %453 : vector<8x384xf32>
    %456 = math.tanh %455 : vector<8x384xf32>
    %cst_165 = arith.constant 5.000000e-01 : f32
    %457 = vector.broadcast %cst_165 : f32 to vector<8x384xf32>
    %458 = arith.mulf %457, %456 : vector<8x384xf32>
    %cst_166 = arith.constant 5.000000e-01 : f32
    %459 = vector.broadcast %cst_166 : f32 to vector<8x384xf32>
    %460 = arith.addf %458, %459 : vector<8x384xf32>
    %461 = vector.extract_strided_slice %450 {offsets = [0, 384], sizes = [8, 384], strides = [1, 1]} : vector<8x1664xf32> to vector<8x384xf32>
    %462 = vector.extract_strided_slice %448 {offsets = [0, 384], sizes = [8, 384], strides = [1, 1]} : vector<8x1664xf32> to vector<8x384xf32>
    %463 = arith.addf %461, %462 : vector<8x384xf32>
    %cst_167 = arith.constant 5.000000e-01 : f32
    %464 = vector.broadcast %cst_167 : f32 to vector<8x384xf32>
    %465 = arith.mulf %464, %463 : vector<8x384xf32>
    %466 = math.tanh %465 : vector<8x384xf32>
    %cst_168 = arith.constant 5.000000e-01 : f32
    %467 = vector.broadcast %cst_168 : f32 to vector<8x384xf32>
    %468 = arith.mulf %467, %466 : vector<8x384xf32>
    %cst_169 = arith.constant 5.000000e-01 : f32
    %469 = vector.broadcast %cst_169 : f32 to vector<8x384xf32>
    %470 = arith.addf %468, %469 : vector<8x384xf32>
    %471 = vector.extract_strided_slice %450 {offsets = [0, 768], sizes = [8, 384], strides = [1, 1]} : vector<8x1664xf32> to vector<8x384xf32>
    %472 = vector.extract_strided_slice %448 {offsets = [0, 768], sizes = [8, 384], strides = [1, 1]} : vector<8x1664xf32> to vector<8x384xf32>
    %473 = vector.broadcast %156 : vector<1x384xf32> to vector<8x384xf32>
    %474 = arith.addf %472, %473 : vector<8x384xf32>
    %475 = arith.mulf %460, %474 : vector<8x384xf32>
    %476 = arith.addf %471, %475 : vector<8x384xf32>
    %477 = math.tanh %476 : vector<8x384xf32>
    %478 = vector.extract_strided_slice %444 {offsets = [0, 0], sizes = [8, 384], strides = [1, 1]} : vector<8x512xf32> to vector<8x384xf32>
    %479 = arith.subf %478, %477 : vector<8x384xf32>
    %480 = arith.mulf %470, %479 : vector<8x384xf32>
    %481 = arith.addf %477, %480 : vector<8x384xf32>
    %482 = vector.extract_strided_slice %450 {offsets = [0, 1152], sizes = [8, 512], strides = [1, 1]} : vector<8x1664xf32> to vector<8x512xf32>
    %483 = vector.extract_strided_slice %448 {offsets = [0, 1152], sizes = [8, 512], strides = [1, 1]} : vector<8x1664xf32> to vector<8x512xf32>
    %484 = arith.addf %482, %483 : vector<8x512xf32>
    %485 = vector.extract_strided_slice %484 {offsets = [0, 0], sizes = [8, 128], strides = [1, 1]} : vector<8x512xf32> to vector<8x128xf32>
    %cst_170 = arith.constant 5.000000e-01 : f32
    %486 = vector.broadcast %cst_170 : f32 to vector<8x128xf32>
    %487 = arith.mulf %486, %485 : vector<8x128xf32>
    %488 = math.tanh %487 : vector<8x128xf32>
    %cst_171 = arith.constant 5.000000e-01 : f32
    %489 = vector.broadcast %cst_171 : f32 to vector<8x128xf32>
    %490 = arith.mulf %489, %488 : vector<8x128xf32>
    %cst_172 = arith.constant 5.000000e-01 : f32
    %491 = vector.broadcast %cst_172 : f32 to vector<8x128xf32>
    %492 = arith.addf %490, %491 : vector<8x128xf32>
    %493 = vector.extract_strided_slice %484 {offsets = [0, 128], sizes = [8, 128], strides = [1, 1]} : vector<8x512xf32> to vector<8x128xf32>
    %cst_173 = arith.constant 5.000000e-01 : f32
    %494 = vector.broadcast %cst_173 : f32 to vector<8x128xf32>
    %495 = arith.mulf %494, %493 : vector<8x128xf32>
    %496 = math.tanh %495 : vector<8x128xf32>
    %cst_174 = arith.constant 5.000000e-01 : f32
    %497 = vector.broadcast %cst_174 : f32 to vector<8x128xf32>
    %498 = arith.mulf %497, %496 : vector<8x128xf32>
    %cst_175 = arith.constant 5.000000e-01 : f32
    %499 = vector.broadcast %cst_175 : f32 to vector<8x128xf32>
    %500 = arith.addf %498, %499 : vector<8x128xf32>
    %501 = vector.extract_strided_slice %484 {offsets = [0, 256], sizes = [8, 128], strides = [1, 1]} : vector<8x512xf32> to vector<8x128xf32>
    %502 = math.tanh %501 : vector<8x128xf32>
    %503 = vector.extract_strided_slice %484 {offsets = [0, 384], sizes = [8, 128], strides = [1, 1]} : vector<8x512xf32> to vector<8x128xf32>
    %cst_176 = arith.constant 5.000000e-01 : f32
    %504 = vector.broadcast %cst_176 : f32 to vector<8x128xf32>
    %505 = arith.mulf %504, %503 : vector<8x128xf32>
    %506 = math.tanh %505 : vector<8x128xf32>
    %cst_177 = arith.constant 5.000000e-01 : f32
    %507 = vector.broadcast %cst_177 : f32 to vector<8x128xf32>
    %508 = arith.mulf %507, %506 : vector<8x128xf32>
    %cst_178 = arith.constant 5.000000e-01 : f32
    %509 = vector.broadcast %cst_178 : f32 to vector<8x128xf32>
    %510 = arith.addf %508, %509 : vector<8x128xf32>
    %511 = arith.mulf %500, %441 : vector<8x128xf32>
    %512 = arith.mulf %492, %502 : vector<8x128xf32>
    %513 = arith.addf %511, %512 : vector<8x128xf32>
    %514 = math.tanh %513 : vector<8x128xf32>
    %515 = arith.mulf %510, %514 : vector<8x128xf32>
    %516 = tpu.concatenate %481, %515 in 1 : vector<8x384xf32>, vector<8x128xf32> -> vector<8x512xf32>
    %517 = arith.maximumf %445, %516 : vector<8x512xf32>
    %518 = arith.truncf %516 : vector<8x512xf32> to vector<8x512xbf16>
    %c0_179 = arith.constant 0 : index
    %c0_180 = arith.constant 0 : index
    %519 = vector.load %arg14[%c0_179, %c0_180] : memref<512x1664xbf16, #tpu.memory_space<vmem>>, vector<512x1664xbf16>
    %cst_181 = arith.constant dense<0.000000e+00> : vector<8x1664xf32>
    %520 = tpu.matmul %518, %519, %cst_181 {dimension_numbers = #tpu.dot_dimension_numbers<[1], [0], [0], [1], [0, 0, 1, 1], [], []>} : vector<8x512xbf16>, vector<512x1664xbf16>, vector<8x1664xf32> -> vector<8x1664xf32>
    %c5_182 = arith.constant 5 : index
    %c0_183 = arith.constant 0 : index
    %c0_184 = arith.constant 0 : index
    %521 = vector.load %arg13[%c5_182, %c0_183, %c0_184] : memref<8x8x1664xf32, #tpu.memory_space<vmem>>, vector<1x8x1664xf32>
    %522 = vector.shape_cast %521 : vector<1x8x1664xf32> to vector<8x1664xf32>
    %523 = vector.extract_strided_slice %522 {offsets = [0, 0], sizes = [8, 384], strides = [1, 1]} : vector<8x1664xf32> to vector<8x384xf32>
    %524 = vector.extract_strided_slice %520 {offsets = [0, 0], sizes = [8, 384], strides = [1, 1]} : vector<8x1664xf32> to vector<8x384xf32>
    %525 = arith.addf %523, %524 : vector<8x384xf32>
    %cst_185 = arith.constant 5.000000e-01 : f32
    %526 = vector.broadcast %cst_185 : f32 to vector<8x384xf32>
    %527 = arith.mulf %526, %525 : vector<8x384xf32>
    %528 = math.tanh %527 : vector<8x384xf32>
    %cst_186 = arith.constant 5.000000e-01 : f32
    %529 = vector.broadcast %cst_186 : f32 to vector<8x384xf32>
    %530 = arith.mulf %529, %528 : vector<8x384xf32>
    %cst_187 = arith.constant 5.000000e-01 : f32
    %531 = vector.broadcast %cst_187 : f32 to vector<8x384xf32>
    %532 = arith.addf %530, %531 : vector<8x384xf32>
    %533 = vector.extract_strided_slice %522 {offsets = [0, 384], sizes = [8, 384], strides = [1, 1]} : vector<8x1664xf32> to vector<8x384xf32>
    %534 = vector.extract_strided_slice %520 {offsets = [0, 384], sizes = [8, 384], strides = [1, 1]} : vector<8x1664xf32> to vector<8x384xf32>
    %535 = arith.addf %533, %534 : vector<8x384xf32>
    %cst_188 = arith.constant 5.000000e-01 : f32
    %536 = vector.broadcast %cst_188 : f32 to vector<8x384xf32>
    %537 = arith.mulf %536, %535 : vector<8x384xf32>
    %538 = math.tanh %537 : vector<8x384xf32>
    %cst_189 = arith.constant 5.000000e-01 : f32
    %539 = vector.broadcast %cst_189 : f32 to vector<8x384xf32>
    %540 = arith.mulf %539, %538 : vector<8x384xf32>
    %cst_190 = arith.constant 5.000000e-01 : f32
    %541 = vector.broadcast %cst_190 : f32 to vector<8x384xf32>
    %542 = arith.addf %540, %541 : vector<8x384xf32>
    %543 = vector.extract_strided_slice %522 {offsets = [0, 768], sizes = [8, 384], strides = [1, 1]} : vector<8x1664xf32> to vector<8x384xf32>
    %544 = vector.extract_strided_slice %520 {offsets = [0, 768], sizes = [8, 384], strides = [1, 1]} : vector<8x1664xf32> to vector<8x384xf32>
    %545 = vector.broadcast %156 : vector<1x384xf32> to vector<8x384xf32>
    %546 = arith.addf %544, %545 : vector<8x384xf32>
    %547 = arith.mulf %532, %546 : vector<8x384xf32>
    %548 = arith.addf %543, %547 : vector<8x384xf32>
    %549 = math.tanh %548 : vector<8x384xf32>
    %550 = vector.extract_strided_slice %516 {offsets = [0, 0], sizes = [8, 384], strides = [1, 1]} : vector<8x512xf32> to vector<8x384xf32>
    %551 = arith.subf %550, %549 : vector<8x384xf32>
    %552 = arith.mulf %542, %551 : vector<8x384xf32>
    %553 = arith.addf %549, %552 : vector<8x384xf32>
    %554 = vector.extract_strided_slice %522 {offsets = [0, 1152], sizes = [8, 512], strides = [1, 1]} : vector<8x1664xf32> to vector<8x512xf32>
    %555 = vector.extract_strided_slice %520 {offsets = [0, 1152], sizes = [8, 512], strides = [1, 1]} : vector<8x1664xf32> to vector<8x512xf32>
    %556 = arith.addf %554, %555 : vector<8x512xf32>
    %557 = vector.extract_strided_slice %556 {offsets = [0, 0], sizes = [8, 128], strides = [1, 1]} : vector<8x512xf32> to vector<8x128xf32>
    %cst_191 = arith.constant 5.000000e-01 : f32
    %558 = vector.broadcast %cst_191 : f32 to vector<8x128xf32>
    %559 = arith.mulf %558, %557 : vector<8x128xf32>
    %560 = math.tanh %559 : vector<8x128xf32>
    %cst_192 = arith.constant 5.000000e-01 : f32
    %561 = vector.broadcast %cst_192 : f32 to vector<8x128xf32>
    %562 = arith.mulf %561, %560 : vector<8x128xf32>
    %cst_193 = arith.constant 5.000000e-01 : f32
    %563 = vector.broadcast %cst_193 : f32 to vector<8x128xf32>
    %564 = arith.addf %562, %563 : vector<8x128xf32>
    %565 = vector.extract_strided_slice %556 {offsets = [0, 128], sizes = [8, 128], strides = [1, 1]} : vector<8x512xf32> to vector<8x128xf32>
    %cst_194 = arith.constant 5.000000e-01 : f32
    %566 = vector.broadcast %cst_194 : f32 to vector<8x128xf32>
    %567 = arith.mulf %566, %565 : vector<8x128xf32>
    %568 = math.tanh %567 : vector<8x128xf32>
    %cst_195 = arith.constant 5.000000e-01 : f32
    %569 = vector.broadcast %cst_195 : f32 to vector<8x128xf32>
    %570 = arith.mulf %569, %568 : vector<8x128xf32>
    %cst_196 = arith.constant 5.000000e-01 : f32
    %571 = vector.broadcast %cst_196 : f32 to vector<8x128xf32>
    %572 = arith.addf %570, %571 : vector<8x128xf32>
    %573 = vector.extract_strided_slice %556 {offsets = [0, 256], sizes = [8, 128], strides = [1, 1]} : vector<8x512xf32> to vector<8x128xf32>
    %574 = math.tanh %573 : vector<8x128xf32>
    %575 = vector.extract_strided_slice %556 {offsets = [0, 384], sizes = [8, 128], strides = [1, 1]} : vector<8x512xf32> to vector<8x128xf32>
    %cst_197 = arith.constant 5.000000e-01 : f32
    %576 = vector.broadcast %cst_197 : f32 to vector<8x128xf32>
    %577 = arith.mulf %576, %575 : vector<8x128xf32>
    %578 = math.tanh %577 : vector<8x128xf32>
    %cst_198 = arith.constant 5.000000e-01 : f32
    %579 = vector.broadcast %cst_198 : f32 to vector<8x128xf32>
    %580 = arith.mulf %579, %578 : vector<8x128xf32>
    %cst_199 = arith.constant 5.000000e-01 : f32
    %581 = vector.broadcast %cst_199 : f32 to vector<8x128xf32>
    %582 = arith.addf %580, %581 : vector<8x128xf32>
    %583 = arith.mulf %572, %513 : vector<8x128xf32>
    %584 = arith.mulf %564, %574 : vector<8x128xf32>
    %585 = arith.addf %583, %584 : vector<8x128xf32>
    %586 = math.tanh %585 : vector<8x128xf32>
    %587 = arith.mulf %582, %586 : vector<8x128xf32>
    %588 = tpu.concatenate %553, %587 in 1 : vector<8x384xf32>, vector<8x128xf32> -> vector<8x512xf32>
    %589 = arith.maximumf %517, %588 : vector<8x512xf32>
    %590 = arith.truncf %588 : vector<8x512xf32> to vector<8x512xbf16>
    %c0_200 = arith.constant 0 : index
    %c0_201 = arith.constant 0 : index
    %591 = vector.load %arg14[%c0_200, %c0_201] : memref<512x1664xbf16, #tpu.memory_space<vmem>>, vector<512x1664xbf16>
    %cst_202 = arith.constant dense<0.000000e+00> : vector<8x1664xf32>
    %592 = tpu.matmul %590, %591, %cst_202 {dimension_numbers = #tpu.dot_dimension_numbers<[1], [0], [0], [1], [0, 0, 1, 1], [], []>} : vector<8x512xbf16>, vector<512x1664xbf16>, vector<8x1664xf32> -> vector<8x1664xf32>
    %c6_203 = arith.constant 6 : index
    %c0_204 = arith.constant 0 : index
    %c0_205 = arith.constant 0 : index
    %593 = vector.load %arg13[%c6_203, %c0_204, %c0_205] : memref<8x8x1664xf32, #tpu.memory_space<vmem>>, vector<1x8x1664xf32>
    %594 = vector.shape_cast %593 : vector<1x8x1664xf32> to vector<8x1664xf32>
    %595 = vector.extract_strided_slice %594 {offsets = [0, 0], sizes = [8, 384], strides = [1, 1]} : vector<8x1664xf32> to vector<8x384xf32>
    %596 = vector.extract_strided_slice %592 {offsets = [0, 0], sizes = [8, 384], strides = [1, 1]} : vector<8x1664xf32> to vector<8x384xf32>
    %597 = arith.addf %595, %596 : vector<8x384xf32>
    %cst_206 = arith.constant 5.000000e-01 : f32
    %598 = vector.broadcast %cst_206 : f32 to vector<8x384xf32>
    %599 = arith.mulf %598, %597 : vector<8x384xf32>
    %600 = math.tanh %599 : vector<8x384xf32>
    %cst_207 = arith.constant 5.000000e-01 : f32
    %601 = vector.broadcast %cst_207 : f32 to vector<8x384xf32>
    %602 = arith.mulf %601, %600 : vector<8x384xf32>
    %cst_208 = arith.constant 5.000000e-01 : f32
    %603 = vector.broadcast %cst_208 : f32 to vector<8x384xf32>
    %604 = arith.addf %602, %603 : vector<8x384xf32>
    %605 = vector.extract_strided_slice %594 {offsets = [0, 384], sizes = [8, 384], strides = [1, 1]} : vector<8x1664xf32> to vector<8x384xf32>
    %606 = vector.extract_strided_slice %592 {offsets = [0, 384], sizes = [8, 384], strides = [1, 1]} : vector<8x1664xf32> to vector<8x384xf32>
    %607 = arith.addf %605, %606 : vector<8x384xf32>
    %cst_209 = arith.constant 5.000000e-01 : f32
    %608 = vector.broadcast %cst_209 : f32 to vector<8x384xf32>
    %609 = arith.mulf %608, %607 : vector<8x384xf32>
    %610 = math.tanh %609 : vector<8x384xf32>
    %cst_210 = arith.constant 5.000000e-01 : f32
    %611 = vector.broadcast %cst_210 : f32 to vector<8x384xf32>
    %612 = arith.mulf %611, %610 : vector<8x384xf32>
    %cst_211 = arith.constant 5.000000e-01 : f32
    %613 = vector.broadcast %cst_211 : f32 to vector<8x384xf32>
    %614 = arith.addf %612, %613 : vector<8x384xf32>
    %615 = vector.extract_strided_slice %594 {offsets = [0, 768], sizes = [8, 384], strides = [1, 1]} : vector<8x1664xf32> to vector<8x384xf32>
    %616 = vector.extract_strided_slice %592 {offsets = [0, 768], sizes = [8, 384], strides = [1, 1]} : vector<8x1664xf32> to vector<8x384xf32>
    %617 = vector.broadcast %156 : vector<1x384xf32> to vector<8x384xf32>
    %618 = arith.addf %616, %617 : vector<8x384xf32>
    %619 = arith.mulf %604, %618 : vector<8x384xf32>
    %620 = arith.addf %615, %619 : vector<8x384xf32>
    %621 = math.tanh %620 : vector<8x384xf32>
    %622 = vector.extract_strided_slice %588 {offsets = [0, 0], sizes = [8, 384], strides = [1, 1]} : vector<8x512xf32> to vector<8x384xf32>
    %623 = arith.subf %622, %621 : vector<8x384xf32>
    %624 = arith.mulf %614, %623 : vector<8x384xf32>
    %625 = arith.addf %621, %624 : vector<8x384xf32>
    %626 = vector.extract_strided_slice %594 {offsets = [0, 1152], sizes = [8, 512], strides = [1, 1]} : vector<8x1664xf32> to vector<8x512xf32>
    %627 = vector.extract_strided_slice %592 {offsets = [0, 1152], sizes = [8, 512], strides = [1, 1]} : vector<8x1664xf32> to vector<8x512xf32>
    %628 = arith.addf %626, %627 : vector<8x512xf32>
    %629 = vector.extract_strided_slice %628 {offsets = [0, 0], sizes = [8, 128], strides = [1, 1]} : vector<8x512xf32> to vector<8x128xf32>
    %cst_212 = arith.constant 5.000000e-01 : f32
    %630 = vector.broadcast %cst_212 : f32 to vector<8x128xf32>
    %631 = arith.mulf %630, %629 : vector<8x128xf32>
    %632 = math.tanh %631 : vector<8x128xf32>
    %cst_213 = arith.constant 5.000000e-01 : f32
    %633 = vector.broadcast %cst_213 : f32 to vector<8x128xf32>
    %634 = arith.mulf %633, %632 : vector<8x128xf32>
    %cst_214 = arith.constant 5.000000e-01 : f32
    %635 = vector.broadcast %cst_214 : f32 to vector<8x128xf32>
    %636 = arith.addf %634, %635 : vector<8x128xf32>
    %637 = vector.extract_strided_slice %628 {offsets = [0, 128], sizes = [8, 128], strides = [1, 1]} : vector<8x512xf32> to vector<8x128xf32>
    %cst_215 = arith.constant 5.000000e-01 : f32
    %638 = vector.broadcast %cst_215 : f32 to vector<8x128xf32>
    %639 = arith.mulf %638, %637 : vector<8x128xf32>
    %640 = math.tanh %639 : vector<8x128xf32>
    %cst_216 = arith.constant 5.000000e-01 : f32
    %641 = vector.broadcast %cst_216 : f32 to vector<8x128xf32>
    %642 = arith.mulf %641, %640 : vector<8x128xf32>
    %cst_217 = arith.constant 5.000000e-01 : f32
    %643 = vector.broadcast %cst_217 : f32 to vector<8x128xf32>
    %644 = arith.addf %642, %643 : vector<8x128xf32>
    %645 = vector.extract_strided_slice %628 {offsets = [0, 256], sizes = [8, 128], strides = [1, 1]} : vector<8x512xf32> to vector<8x128xf32>
    %646 = math.tanh %645 : vector<8x128xf32>
    %647 = vector.extract_strided_slice %628 {offsets = [0, 384], sizes = [8, 128], strides = [1, 1]} : vector<8x512xf32> to vector<8x128xf32>
    %cst_218 = arith.constant 5.000000e-01 : f32
    %648 = vector.broadcast %cst_218 : f32 to vector<8x128xf32>
    %649 = arith.mulf %648, %647 : vector<8x128xf32>
    %650 = math.tanh %649 : vector<8x128xf32>
    %cst_219 = arith.constant 5.000000e-01 : f32
    %651 = vector.broadcast %cst_219 : f32 to vector<8x128xf32>
    %652 = arith.mulf %651, %650 : vector<8x128xf32>
    %cst_220 = arith.constant 5.000000e-01 : f32
    %653 = vector.broadcast %cst_220 : f32 to vector<8x128xf32>
    %654 = arith.addf %652, %653 : vector<8x128xf32>
    %655 = arith.mulf %644, %585 : vector<8x128xf32>
    %656 = arith.mulf %636, %646 : vector<8x128xf32>
    %657 = arith.addf %655, %656 : vector<8x128xf32>
    %658 = math.tanh %657 : vector<8x128xf32>
    %659 = arith.mulf %654, %658 : vector<8x128xf32>
    %660 = tpu.concatenate %625, %659 in 1 : vector<8x384xf32>, vector<8x128xf32> -> vector<8x512xf32>
    %661 = arith.maximumf %589, %660 : vector<8x512xf32>
    %662 = arith.truncf %660 : vector<8x512xf32> to vector<8x512xbf16>
    %c0_221 = arith.constant 0 : index
    %c0_222 = arith.constant 0 : index
    %663 = vector.load %arg14[%c0_221, %c0_222] : memref<512x1664xbf16, #tpu.memory_space<vmem>>, vector<512x1664xbf16>
    %cst_223 = arith.constant dense<0.000000e+00> : vector<8x1664xf32>
    %664 = tpu.matmul %662, %663, %cst_223 {dimension_numbers = #tpu.dot_dimension_numbers<[1], [0], [0], [1], [0, 0, 1, 1], [], []>} : vector<8x512xbf16>, vector<512x1664xbf16>, vector<8x1664xf32> -> vector<8x1664xf32>
    %c7_224 = arith.constant 7 : index
    %c0_225 = arith.constant 0 : index
    %c0_226 = arith.constant 0 : index
    %665 = vector.load %arg13[%c7_224, %c0_225, %c0_226] : memref<8x8x1664xf32, #tpu.memory_space<vmem>>, vector<1x8x1664xf32>
    %666 = vector.shape_cast %665 : vector<1x8x1664xf32> to vector<8x1664xf32>
    %667 = vector.extract_strided_slice %666 {offsets = [0, 0], sizes = [8, 384], strides = [1, 1]} : vector<8x1664xf32> to vector<8x384xf32>
    %668 = vector.extract_strided_slice %664 {offsets = [0, 0], sizes = [8, 384], strides = [1, 1]} : vector<8x1664xf32> to vector<8x384xf32>
    %669 = arith.addf %667, %668 : vector<8x384xf32>
    %cst_227 = arith.constant 5.000000e-01 : f32
    %670 = vector.broadcast %cst_227 : f32 to vector<8x384xf32>
    %671 = arith.mulf %670, %669 : vector<8x384xf32>
    %672 = math.tanh %671 : vector<8x384xf32>
    %cst_228 = arith.constant 5.000000e-01 : f32
    %673 = vector.broadcast %cst_228 : f32 to vector<8x384xf32>
    %674 = arith.mulf %673, %672 : vector<8x384xf32>
    %cst_229 = arith.constant 5.000000e-01 : f32
    %675 = vector.broadcast %cst_229 : f32 to vector<8x384xf32>
    %676 = arith.addf %674, %675 : vector<8x384xf32>
    %677 = vector.extract_strided_slice %666 {offsets = [0, 384], sizes = [8, 384], strides = [1, 1]} : vector<8x1664xf32> to vector<8x384xf32>
    %678 = vector.extract_strided_slice %664 {offsets = [0, 384], sizes = [8, 384], strides = [1, 1]} : vector<8x1664xf32> to vector<8x384xf32>
    %679 = arith.addf %677, %678 : vector<8x384xf32>
    %cst_230 = arith.constant 5.000000e-01 : f32
    %680 = vector.broadcast %cst_230 : f32 to vector<8x384xf32>
    %681 = arith.mulf %680, %679 : vector<8x384xf32>
    %682 = math.tanh %681 : vector<8x384xf32>
    %cst_231 = arith.constant 5.000000e-01 : f32
    %683 = vector.broadcast %cst_231 : f32 to vector<8x384xf32>
    %684 = arith.mulf %683, %682 : vector<8x384xf32>
    %cst_232 = arith.constant 5.000000e-01 : f32
    %685 = vector.broadcast %cst_232 : f32 to vector<8x384xf32>
    %686 = arith.addf %684, %685 : vector<8x384xf32>
    %687 = vector.extract_strided_slice %666 {offsets = [0, 768], sizes = [8, 384], strides = [1, 1]} : vector<8x1664xf32> to vector<8x384xf32>
    %688 = vector.extract_strided_slice %664 {offsets = [0, 768], sizes = [8, 384], strides = [1, 1]} : vector<8x1664xf32> to vector<8x384xf32>
    %689 = vector.broadcast %156 : vector<1x384xf32> to vector<8x384xf32>
    %690 = arith.addf %688, %689 : vector<8x384xf32>
    %691 = arith.mulf %676, %690 : vector<8x384xf32>
    %692 = arith.addf %687, %691 : vector<8x384xf32>
    %693 = math.tanh %692 : vector<8x384xf32>
    %694 = vector.extract_strided_slice %660 {offsets = [0, 0], sizes = [8, 384], strides = [1, 1]} : vector<8x512xf32> to vector<8x384xf32>
    %695 = arith.subf %694, %693 : vector<8x384xf32>
    %696 = arith.mulf %686, %695 : vector<8x384xf32>
    %697 = arith.addf %693, %696 : vector<8x384xf32>
    %698 = vector.extract_strided_slice %666 {offsets = [0, 1152], sizes = [8, 512], strides = [1, 1]} : vector<8x1664xf32> to vector<8x512xf32>
    %699 = vector.extract_strided_slice %664 {offsets = [0, 1152], sizes = [8, 512], strides = [1, 1]} : vector<8x1664xf32> to vector<8x512xf32>
    %700 = arith.addf %698, %699 : vector<8x512xf32>
    %701 = vector.extract_strided_slice %700 {offsets = [0, 0], sizes = [8, 128], strides = [1, 1]} : vector<8x512xf32> to vector<8x128xf32>
    %cst_233 = arith.constant 5.000000e-01 : f32
    %702 = vector.broadcast %cst_233 : f32 to vector<8x128xf32>
    %703 = arith.mulf %702, %701 : vector<8x128xf32>
    %704 = math.tanh %703 : vector<8x128xf32>
    %cst_234 = arith.constant 5.000000e-01 : f32
    %705 = vector.broadcast %cst_234 : f32 to vector<8x128xf32>
    %706 = arith.mulf %705, %704 : vector<8x128xf32>
    %cst_235 = arith.constant 5.000000e-01 : f32
    %707 = vector.broadcast %cst_235 : f32 to vector<8x128xf32>
    %708 = arith.addf %706, %707 : vector<8x128xf32>
    %709 = vector.extract_strided_slice %700 {offsets = [0, 128], sizes = [8, 128], strides = [1, 1]} : vector<8x512xf32> to vector<8x128xf32>
    %cst_236 = arith.constant 5.000000e-01 : f32
    %710 = vector.broadcast %cst_236 : f32 to vector<8x128xf32>
    %711 = arith.mulf %710, %709 : vector<8x128xf32>
    %712 = math.tanh %711 : vector<8x128xf32>
    %cst_237 = arith.constant 5.000000e-01 : f32
    %713 = vector.broadcast %cst_237 : f32 to vector<8x128xf32>
    %714 = arith.mulf %713, %712 : vector<8x128xf32>
    %cst_238 = arith.constant 5.000000e-01 : f32
    %715 = vector.broadcast %cst_238 : f32 to vector<8x128xf32>
    %716 = arith.addf %714, %715 : vector<8x128xf32>
    %717 = vector.extract_strided_slice %700 {offsets = [0, 256], sizes = [8, 128], strides = [1, 1]} : vector<8x512xf32> to vector<8x128xf32>
    %718 = math.tanh %717 : vector<8x128xf32>
    %719 = vector.extract_strided_slice %700 {offsets = [0, 384], sizes = [8, 128], strides = [1, 1]} : vector<8x512xf32> to vector<8x128xf32>
    %cst_239 = arith.constant 5.000000e-01 : f32
    %720 = vector.broadcast %cst_239 : f32 to vector<8x128xf32>
    %721 = arith.mulf %720, %719 : vector<8x128xf32>
    %722 = math.tanh %721 : vector<8x128xf32>
    %cst_240 = arith.constant 5.000000e-01 : f32
    %723 = vector.broadcast %cst_240 : f32 to vector<8x128xf32>
    %724 = arith.mulf %723, %722 : vector<8x128xf32>
    %cst_241 = arith.constant 5.000000e-01 : f32
    %725 = vector.broadcast %cst_241 : f32 to vector<8x128xf32>
    %726 = arith.addf %724, %725 : vector<8x128xf32>
    %727 = arith.mulf %716, %657 : vector<8x128xf32>
    %728 = arith.mulf %708, %718 : vector<8x128xf32>
    %729 = arith.addf %727, %728 : vector<8x128xf32>
    %730 = math.tanh %729 : vector<8x128xf32>
    %731 = arith.mulf %726, %730 : vector<8x128xf32>
    %732 = tpu.concatenate %697, %731 in 1 : vector<8x384xf32>, vector<8x128xf32> -> vector<8x512xf32>
    %733 = arith.maximumf %661, %732 : vector<8x512xf32>
    %c1_i32_242 = arith.constant 1 : i32
    %734 = tpu.memref_slice %arg17[%c1_i32_242] : memref<3x!tpu.dma_semaphore, #tpu.memory_space<semaphore_mem>> -> memref<1x!tpu.dma_semaphore, #tpu.memory_space<semaphore_mem>>
    %735 = tpu.memref_squeeze %734 : memref<1x!tpu.dma_semaphore, #tpu.memory_space<semaphore_mem>> -> memref<!tpu.dma_semaphore, #tpu.memory_space<semaphore_mem>>
    tpu.wait_dma2 semaphore(%735 : memref<!tpu.dma_semaphore, #tpu.memory_space<semaphore_mem>>) src(%arg8 : memref<512x512xbf16, #tpu.memory_space<any>>) dst(%arg15 : memref<512x512xbf16, #tpu.memory_space<vmem>>)
    %c2_i32_243 = arith.constant 2 : i32
    %736 = tpu.memref_slice %arg17[%c2_i32_243] : memref<3x!tpu.dma_semaphore, #tpu.memory_space<semaphore_mem>> -> memref<1x!tpu.dma_semaphore, #tpu.memory_space<semaphore_mem>>
    %737 = tpu.memref_squeeze %736 : memref<1x!tpu.dma_semaphore, #tpu.memory_space<semaphore_mem>> -> memref<!tpu.dma_semaphore, #tpu.memory_space<semaphore_mem>>
    tpu.wait_dma2 semaphore(%737 : memref<!tpu.dma_semaphore, #tpu.memory_space<semaphore_mem>>) src(%arg9 : memref<512x128xbf16, #tpu.memory_space<any>>) dst(%arg16 : memref<512x128xbf16, #tpu.memory_space<vmem>>)
    %738 = arith.truncf %733 : vector<8x512xf32> to vector<8x512xbf16>
    %c0_244 = arith.constant 0 : index
    %c0_245 = arith.constant 0 : index
    %739 = vector.load %arg15[%c0_244, %c0_245] : memref<512x512xbf16, #tpu.memory_space<vmem>>, vector<512x512xbf16>
    %cst_246 = arith.constant dense<0.000000e+00> : vector<8x512xf32>
    %740 = tpu.matmul %738, %739, %cst_246 {dimension_numbers = #tpu.dot_dimension_numbers<[1], [0], [0], [1], [0, 0, 1, 1], [], []>} : vector<8x512xbf16>, vector<512x512xbf16>, vector<8x512xf32> -> vector<8x512xf32>
    %c0_247 = arith.constant 0 : index
    %c0_248 = arith.constant 0 : index
    %741 = vector.load %arg10[%c0_247, %c0_248] : memref<1x512xf32, #tpu.memory_space<vmem>>, vector<1x512xf32>
    %742 = vector.broadcast %741 : vector<1x512xf32> to vector<8x512xf32>
    %743 = arith.addf %740, %742 : vector<8x512xf32>
    %cst_249 = arith.constant 0.000000e+00 : f32
    %744 = vector.broadcast %cst_249 : f32 to vector<8x512xf32>
    %745 = arith.maximumf %743, %744 : vector<8x512xf32>
    %746 = arith.truncf %745 : vector<8x512xf32> to vector<8x512xbf16>
    %c0_250 = arith.constant 0 : index
    %c0_251 = arith.constant 0 : index
    %747 = vector.load %arg16[%c0_250, %c0_251] : memref<512x128xbf16, #tpu.memory_space<vmem>>, vector<512x128xbf16>
    %cst_252 = arith.constant dense<0.000000e+00> : vector<8x128xf32>
    %748 = tpu.matmul %746, %747, %cst_252 {dimension_numbers = #tpu.dot_dimension_numbers<[1], [0], [0], [1], [0, 0, 1, 1], [], []>} : vector<8x512xbf16>, vector<512x128xbf16>, vector<8x128xf32> -> vector<8x128xf32>
    %c0_253 = arith.constant 0 : index
    %c0_254 = arith.constant 0 : index
    %749 = vector.load %arg11[%c0_253, %c0_254] : memref<1x128xf32, #tpu.memory_space<vmem>>, vector<1x128xf32>
    %750 = vector.broadcast %749 : vector<1x128xf32> to vector<8x128xf32>
    %751 = arith.addf %748, %750 : vector<8x128xf32>
    %cst_255 = arith.constant 0.000000e+00 : f32
    %752 = vector.broadcast %cst_255 : f32 to vector<8x128xf32>
    %753 = arith.maximumf %751, %752 : vector<8x128xf32>
    %754 = arith.mulf %753, %753 : vector<8x128xf32>
    %cst_256 = arith.constant dense<0.000000e+00> : vector<8xf32>
    %755 = vector.multi_reduction <add>, %754, %cst_256 [1] : vector<8x128xf32> to vector<8xf32>
    %756 = vector.shape_cast %755 : vector<8xf32> to vector<8x1xf32>
    %cst_257 = arith.constant 9.99999996E-13 : f32
    %757 = vector.broadcast %cst_257 : f32 to vector<8x1xf32>
    %758 = arith.addf %756, %757 : vector<8x1xf32>
    %759 = math.rsqrt %758 : vector<8x1xf32>
    %760 = vector.broadcast %759 : vector<8x1xf32> to vector<8x128xf32>
    %761 = arith.mulf %753, %760 : vector<8x128xf32>
    %c0_258 = arith.constant 0 : index
    %c0_259 = arith.constant 0 : index
    %762 = vector.load %arg12[%c0_258, %c0_259] : memref<8x128xf32, #tpu.memory_space<vmem>>, vector<8x128xf32>
    tpu.vector_store %arg12[%c0_258, %c0_259], %761 {strides = array<i32>} : memref<8x128xf32, #tpu.memory_space<vmem>>, vector<8x128xf32>,
    return
  }
}

</mosaic_0001>

<llo_original>
// kernel: encoder_text_forward.1
$region0: #{encoder_text_forward.1}
  #allocation0 [shape = 'u32[]', space=smem, size = 0x4, offset = 0x4, fixed_abs, tag = 'smem constant byte address 0x4 - core index']
  #allocation1 [shape = 'u32[144,128]{1,0:T(1,128)}', space=vmem, size = 0x12000, scoped, tag = 'internal scratch']
  #allocation2 [shape = 'f32[8,8,1664]{2,1,0:T(8,128)}', space=vmem, size = 0x68000, scoped, tag = 'scratch operand']
  #allocation3 [shape = 'bf16[512,1664]{1,0:T(16,128)(2,1)}', space=vmem, size = 0x1a0000, scoped, tag = 'scratch operand']
  #allocation4 [shape = 'bf16[512,512]{1,0:T(16,128)(2,1)}', space=vmem, size = 0x80000, scoped, tag = 'scratch operand']
  #allocation5 [shape = 'bf16[512,128]{1,0:T(16,128)(2,1)}', space=vmem, size = 0x20000, scoped, tag = 'scratch operand']
  #allocation6 [shape = 's32[3]{0}', space=sflag, size = 0xc, scoped, tag = 'scratch operand']
  #allocation22 [shape = 's32[]', space=sflag, size = 0x4, offset = 0, fixed_abs, tag = 'sflag constant byte address 0x0 - dummy sync flag']
  #allocation24 [shape = 's32[]', space=sflag, size = 0x4, offset = 0, fixed_abs, tag = 'sflag constant byte address 0x0 - dummy sync flag']
  #allocation26 [shape = 's32[]', space=sflag, size = 0x4, offset = 0, fixed_abs, tag = 'sflag constant byte address 0x0 - dummy sync flag']
  #allocation27 [shape = 's32[]', space=sflag, size = 0x4, offset = 0, fixed_abs, tag = 'sflag constant byte address 0x0 - dummy sync flag']
  #allocation28 [shape = 'u32[]', space=smem, size = 0x4, offset = 0x44, fixed_abs, tag = 'smem constant byte address 0x44 - assertion arg 0']
  #allocation29 [shape = 'u32[]', space=smem, size = 0x4, offset = 0x48, fixed_abs, tag = 'smem constant byte address 0x48 - assertion arg 1']
  %s0 = inlined_call_operand.vmem [shape: bf16[256,128], index: 0, kind: input, shape index: {}]
  %s1 = inlined_call_operand.hbm [shape: bf16[128,128], index: 1, kind: input, shape index: {}]
  %s2 = inlined_call_operand.hbm [shape: bf16[3,128,384], index: 2, kind: input, shape index: {}]
  %s3 = inlined_call_operand.hbm [shape: f32[3,1,384], index: 3, kind: input, shape index: {}]
  %s4 = inlined_call_operand.hbm [shape: f32[1,384], index: 4, kind: input, shape index: {}]
  %s5 = inlined_call_operand.hbm [shape: bf16[128,512], index: 5, kind: input, shape index: {}]
  %s6 = inlined_call_operand.hbm [shape: f32[1,512], index: 6, kind: input, shape index: {}]
  %s7 = inlined_call_operand.hbm [shape: bf16[512,1664], index: 7, kind: input, shape index: {}]
  %s8 = inlined_call_operand.hbm [shape: bf16[512,512], index: 8, kind: input, shape index: {}]
  %s9 = inlined_call_operand.hbm [shape: bf16[512,128], index: 9, kind: input, shape index: {}]
  %s10 = inlined_call_operand.hbm [shape: f32[1,512], index: 10, kind: input, shape index: {}]
  %s11 = inlined_call_operand.hbm [shape: f32[1,128], index: 11, kind: input, shape index: {}]
  %s12 = inlined_call_operand.hbm [shape: f32[8,128], index: 12, kind: output, shape index: {}]
  %s13 = sld [smem:[#allocation0]]
  $region82: #{encoder_text_forward.1} parent=0
    _
  %s15 = ssub.s32 1, %s13
  %s16 = scalar_select 0, %s15, %s13
  $region1: #{encoder_text_forward.1} parent=0
    #allocation7 [shape = 'u8[32768]{0}', space=vmem, size = 0x8000, scoped, tag = 'input window, operand 1, single buffered']
    #allocation8 [shape = 's32[1]{0}', space=sflag, size = 0x4, scoped, tag = 'scoped memory for encoder_text_forward.1']
    #allocation9 [shape = 's32[1]{0}', space=sflag, size = 0x4, scoped, tag = 'scoped memory for encoder_text_forward.1']
    #allocation10 [shape = 'u8[294912]{0}', space=vmem, size = 0x48000, scoped, tag = 'input window, operand 2, single buffered']
    #allocation11 [shape = 's32[1]{0}', space=sflag, size = 0x4, scoped, tag = 'scoped memory for encoder_text_forward.1']
    #allocation12 [shape = 'u8[4608]{0}', space=vmem, size = 0x1400, scoped, tag = 'input window, operand 3, single buffered']
    #allocation13 [shape = 'u8[1536]{0}', space=vmem, size = 0x800, scoped, tag = 'input window, operand 4, single buffered']
    #allocation14 [shape = 's32[1]{0}', space=sflag, size = 0x4, scoped, tag = 'scoped memory for encoder_text_forward.1']
    #allocation15 [shape = 'u8[131072]{0}', space=vmem, size = 0x20000, scoped, tag = 'input window, operand 5, single buffered']
    #allocation16 [shape = 'u8[2048]{0}', space=vmem, size = 0x800, scoped, tag = 'input window, operand 6, single buffered']
    #allocation17 [shape = 's32[1]{0}', space=sflag, size = 0x4, scoped, tag = 'scoped memory for encoder_text_forward.1']
    #allocation18 [shape = 'u8[2048]{0}', space=vmem, size = 0x800, scoped, tag = 'input window, operand 10, single buffered']
    #allocation19 [shape = 'u8[512]{0}', space=vmem, size = 0x400, scoped, tag = 'input window, operand 11, single buffered']
    #allocation20 [shape = 's32[1]{0}', space=sflag, size = 0x4, scoped, tag = 'scoped memory for encoder_text_forward.1']
    #allocation21 [shape = 'u8[4096]{0}', space=vmem, size = 0x1000, scoped, tag = 'output window, operand 0, single buffered']
    #allocation23 [shape = 'u32[9]{0}', space=smem, size = 0x24, scoped, tag = 'DMA stride descriptor']
    #allocation25 [shape = 'u32[9]{0}', space=smem, size = 0x24, scoped, tag = 'DMA stride descriptor']
    %17 = vsyncpa [#allocation8], 0
    %18 = vsyncpa [#allocation11], 0
    %19 = vsyncpa [#allocation14], 0
    %20 = vsyncpa [#allocation17], 0
    %21 = vsyncpa [#allocation20], 0
    %22 = vsyncpa [#allocation9], 0
    // Predicated region
    $region2: #{encoder_text_forward.1} parent=1 // pred_check
      _
    $region3: #{encoder_text_forward.1} parent=1 // pred_check_branch
      %24 = sbr.rel (0) target = $region5
    $region4: #{encoder_text_forward.1} parent=1 // pred_region
      _
    $region5: #{encoder_text_forward.1} parent=1 // pred_fallthru
      _
    // Predicated region
    $region6: #{encoder_text_forward.1} parent=1 // pred_check
      _
    $region7: #{encoder_text_forward.1} parent=1 // pred_check_branch
      %26 = sbr.rel (0) target = $region9
    $region8: #{encoder_text_forward.1} parent=1 // pred_region
      %s28 = ssub.s32 1024, 1024
      %29 = vsyncadd [#allocation8], %s28
      %s30 = sshll.u32 [#allocation7], 4
      %s31 = int_to_ptr.vmem [resolvable:$true] %s30
      %36 = dma.hbm_to_vmem [thread:$0]  %s1, 1024, %s31, [#allocation8], 64, 64, 4
    $region9: #{encoder_text_forward.1} parent=1 // pred_fallthru
      _
    // Predicated region
    $region10: #{encoder_text_forward.1} parent=1 // pred_check
      _
    $region11: #{encoder_text_forward.1} parent=1 // pred_check_branch
      %38 = sbr.rel (0) target = $region13
    $region12: #{encoder_text_forward.1} parent=1 // pred_region
      %s40 = ssub.s32 9216, 9216
      %41 = vsyncadd [#allocation11], %s40
      %s42 = sshll.u32 [#allocation10], 4
      %s43 = int_to_ptr.vmem [resolvable:$true] %s42
      %48 = dma.hbm_to_vmem [thread:$0]  %s2, 9216, %s43, [#allocation11], 192, 192, 12
    $region13: #{encoder_text_forward.1} parent=1 // pred_fallthru
      _
    // Predicated region
    $region14: #{encoder_text_forward.1} parent=1 // pred_check
      _
    $region15: #{encoder_text_forward.1} parent=1 // pred_check_branch
      %50 = sbr.rel (0) target = $region17
    $region16: #{encoder_text_forward.1} parent=1 // pred_region
      %s52 = ssub.s32 144, 144
      %53 = vsyncadd [#allocation11], %s52
      %s54 = sshll.u32 [#allocation12], 4
      %s55 = int_to_ptr.vmem [resolvable:$true] %s54
      %60 = dma.hbm_to_vmem [thread:$0]  %s3, 144, %s55, [#allocation11], 48, 48, 3
    $region17: #{encoder_text_forward.1} parent=1 // pred_fallthru
      _
    // Predicated region
    $region18: #{encoder_text_forward.1} parent=1 // pred_check
      _
    $region19: #{encoder_text_forward.1} parent=1 // pred_check_branch
      %62 = sbr.rel (0) target = $region21
    $region20: #{encoder_text_forward.1} parent=1 // pred_region
      %s64 = ssub.s32 48, 48
      %65 = vsyncadd [#allocation14], %s64
      %s67 = sshll.u32 [#allocation13], 4
      %s68 = int_to_ptr.vmem [resolvable:$true] %s67
      %70 = dma.hbm_to_vmem [thread:$0]  %s4, 48, %s68, [#allocation14]
    $region21: #{encoder_text_forward.1} parent=1 // pred_fallthru
      _
    // Predicated region
    $region22: #{encoder_text_forward.1} parent=1 // pred_check
      _
    $region23: #{encoder_text_forward.1} parent=1 // pred_check_branch
      %72 = sbr.rel (0) target = $region25
    $region24: #{encoder_text_forward.1} parent=1 // pred_region
      %s74 = ssub.s32 4096, 4096
      %75 = vsyncadd [#allocation14], %s74
      %s76 = sshll.u32 [#allocation15], 4
      %s77 = int_to_ptr.vmem [resolvable:$true] %s76
      %82 = dma.hbm_to_vmem [thread:$0]  %s5, 4096, %s77, [#allocation14], 256, 256, 16
    $region25: #{encoder_text_forward.1} parent=1 // pred_fallthru
      _
    // Predicated region
    $region26: #{encoder_text_forward.1} parent=1 // pred_check
      _
    $region27: #{encoder_text_forward.1} parent=1 // pred_check_branch
      %84 = sbr.rel (0) target = $region29
    $region28: #{encoder_text_forward.1} parent=1 // pred_region
      %s86 = ssub.s32 64, 64
      %87 = vsyncadd [#allocation17], %s86
      %s89 = sshll.u32 [#allocation16], 4
      %s90 = int_to_ptr.vmem [resolvable:$true] %s89
      %92 = dma.hbm_to_vmem [thread:$0]  %s6, 64, %s90, [#allocation17]
    $region29: #{encoder_text_forward.1} parent=1 // pred_fallthru
      _
    // Predicated region
    $region30: #{encoder_text_forward.1} parent=1 // pred_check
      _
    $region31: #{encoder_text_forward.1} parent=1 // pred_check_branch
      %94 = sbr.rel (0) target = $region33
    $region32: #{encoder_text_forward.1} parent=1 // pred_region
      %s96 = ssub.s32 64, 64
      %97 = vsyncadd [#allocation17], %s96
      %s99 = sshll.u32 [#allocation18], 4
      %s100 = int_to_ptr.vmem [resolvable:$true] %s99
      %102 = dma.hbm_to_vmem [thread:$0]  %s10, 64, %s100, [#allocation17]
    $region33: #{encoder_text_forward.1} parent=1 // pred_fallthru
      _
    // Predicated region
    $region34: #{encoder_text_forward.1} parent=1 // pred_check
      _
    $region35: #{encoder_text_forward.1} parent=1 // pred_check_branch
      %104 = sbr.rel (0) target = $region37
    $region36: #{encoder_text_forward.1} parent=1 // pred_region
      %s106 = ssub.s32 16, 16
      %107 = vsyncadd [#allocation20], %s106
      %s109 = sshll.u32 [#allocation19], 4
      %s110 = int_to_ptr.vmem [resolvable:$true] %s109
      %112 = dma.hbm_to_vmem [thread:$0]  %s11, 16, %s110, [#allocation20]
    $region37: #{encoder_text_forward.1} parent=1 // pred_fallthru
      _
    // Predicated region
    $region38: #{encoder_text_forward.1} parent=1 // pred_check
      _
    $region39: #{encoder_text_forward.1} parent=1 // pred_check_branch
      %114 = sbr.rel (0) target = $region41
    $region40: #{encoder_text_forward.1} parent=1 // pred_region
      %115 = dma.done [#allocation8], 1024
    $region41: #{encoder_text_forward.1} parent=1 // pred_fallthru
      _
    // Predicated region
    $region42: #{encoder_text_forward.1} parent=1 // pred_check
      _
    $region43: #{encoder_text_forward.1} parent=1 // pred_check_branch
      %117 = sbr.rel (0) target = $region45
    $region44: #{encoder_text_forward.1} parent=1 // pred_region
      %118 = dma.done [#allocation11], 9216
    $region45: #{encoder_text_forward.1} parent=1 // pred_fallthru
      _
    // Predicated region
    $region46: #{encoder_text_forward.1} parent=1 // pred_check
      _
    $region47: #{encoder_text_forward.1} parent=1 // pred_check_branch
      %120 = sbr.rel (0) target = $region49
    $region48: #{encoder_text_forward.1} parent=1 // pred_region
      %121 = dma.done [#allocation11], 144
    $region49: #{encoder_text_forward.1} parent=1 // pred_fallthru
      _
    // Predicated region
    $region50: #{encoder_text_forward.1} parent=1 // pred_check
      _
    $region51: #{encoder_text_forward.1} parent=1 // pred_check_branch
      %123 = sbr.rel (0) target = $region53
    $region52: #{encoder_text_forward.1} parent=1 // pred_region
      %124 = dma.done [#allocation14], 48
    $region53: #{encoder_text_forward.1} parent=1 // pred_fallthru
      _
    // Predicated region
    $region54: #{encoder_text_forward.1} parent=1 // pred_check
      _
    $region55: #{encoder_text_forward.1} parent=1 // pred_check_branch
      %126 = sbr.rel (0) target = $region57
    $region56: #{encoder_text_forward.1} parent=1 // pred_region
      %127 = dma.done [#allocation14], 4096
    $region57: #{encoder_text_forward.1} parent=1 // pred_fallthru
      _
    // Predicated region
    $region58: #{encoder_text_forward.1} parent=1 // pred_check
      _
    $region59: #{encoder_text_forward.1} parent=1 // pred_check_branch
      %129 = sbr.rel (0) target = $region61
    $region60: #{encoder_text_forward.1} parent=1 // pred_region
      %130 = dma.done [#allocation17], 64
    $region61: #{encoder_text_forward.1} parent=1 // pred_fallthru
      _
    // Predicated region
    $region62: #{encoder_text_forward.1} parent=1 // pred_check
      _
    $region63: #{encoder_text_forward.1} parent=1 // pred_check_branch
      %132 = sbr.rel (0) target = $region65
    $region64: #{encoder_text_forward.1} parent=1 // pred_region
      %133 = dma.done [#allocation17], 64
    $region65: #{encoder_text_forward.1} parent=1 // pred_fallthru
      _
    // Predicated region
    $region66: #{encoder_text_forward.1} parent=1 // pred_check
      _
    $region67: #{encoder_text_forward.1} parent=1 // pred_check_branch
      %135 = sbr.rel (0) target = $region69
    $region68: #{encoder_text_forward.1} parent=1 // pred_region
      %136 = dma.done [#allocation20], 16
    $region69: #{encoder_text_forward.1} parent=1 // pred_fallthru
      _
    %s139 = sshll.u32 1, 14
    %s140 = sxor.u32 4294967295, %s139
    %s142 = sld [smem:[#allocation0]]
    %s143 = sadd.s32 2, %s142
    %s145 = sshll.u32 7, 26
    %s146 = sxor.u32 4294967295, %s145
    %s147 = sand.u32 0, %s146
    %s148 = sshll.u32 %s143, 26
    %s149 = sor.u32 %s147, %s148
    %s150 = sshll.u32 [#allocation3], 4
    %s151 = int_to_ptr.vmem [resolvable:$true] %s150
    %154 = sst [smem:[#allocation23]] 1664
    %s155 = scalar_lea.smem [#allocation23], 1
    %156 = sst [smem:[%s155]] 1664
    %s157 = scalar_lea.smem [#allocation23], 2
    %158 = sst [smem:[%s157]] 13
    %s159 = scalar_lea.smem [#allocation23], 3
    %160 = sst [smem:[%s159]] 64
    %s161 = scalar_lea.smem [#allocation23], 4
    %162 = sst [smem:[%s161]] 128
    %s163 = scalar_lea.smem [#allocation23], 5
    %164 = sst [smem:[%s163]] 2
    %s165 = scalar_lea.smem [#allocation23], 6
    %166 = sst [smem:[%s165]] 832
    %s167 = scalar_lea.smem [#allocation23], 7
    %168 = sst [smem:[%s167]] 64
    %s169 = scalar_lea.smem [#allocation23], 8
    %170 = sst [smem:[%s169]] 4
    %172 = dma.general %s7, 53248, %s151, [#allocation6], [#allocation22], [#allocation23], %s149, 0
    %s173 = scalar_lea.sflag [#allocation6], 1
    %s175 = sshll.u32 1, 14
    %s176 = sxor.u32 4294967295, %s175
    %s178 = sadd.s32 2, %s142
    %s180 = sshll.u32 7, 26
    %s181 = sxor.u32 4294967295, %s180
    %s182 = sand.u32 0, %s181
    %s183 = sshll.u32 %s178, 26
    %s184 = sor.u32 %s182, %s183
    %s185 = sshll.u32 [#allocation4], 4
    %s186 = int_to_ptr.vmem [resolvable:$true] %s185
    %189 = sst [smem:[#allocation25]] 512
    %s190 = scalar_lea.smem [#allocation25], 1
    %191 = sst [smem:[%s190]] 512
    %s192 = scalar_lea.smem [#allocation25], 2
    %193 = sst [smem:[%s192]] 4
    %s194 = scalar_lea.smem [#allocation25], 3
    %195 = sst [smem:[%s194]] 64
    %s196 = scalar_lea.smem [#allocation25], 4
    %197 = sst [smem:[%s196]] 128
    %s198 = scalar_lea.smem [#allocation25], 5
    %199 = sst [smem:[%s198]] 2
    %s200 = scalar_lea.smem [#allocation25], 6
    %201 = sst [smem:[%s200]] 256
    %s202 = scalar_lea.smem [#allocation25], 7
    %203 = sst [smem:[%s202]] 64
    %s204 = scalar_lea.smem [#allocation25], 8
    %205 = sst [smem:[%s204]] 4
    %207 = dma.general %s8, 16384, %s186, %s173, [#allocation24], [#allocation25], %s184, 0
    %s208 = scalar_lea.sflag [#allocation6], 2
    // Predicated region
    $region70: #{encoder_text_forward.1} parent=1 // pred_check
      _
    $region71: #{encoder_text_forward.1} parent=1 // pred_check_branch
      %210 = sbr.rel target = $region73
    $region72: #{encoder_text_forward.1} parent=1 // pred_region
      %211 = sst [smem:[#allocation28]] [#allocation27]
      %212 = sst [smem:[#allocation29]] [#allocation26]
    $region73: #{encoder_text_forward.1} parent=1 // pred_fallthru
      _
    %214 = shalt.err (0)
    %s216 = sshll.u32 [#allocation5], 4
    %s217 = int_to_ptr.vmem [resolvable:$true] %s216
    %219 = dma.hbm_to_vmem [thread:$0]  %s9, 4096, %s217, %s208
    %v220 = vld [vmem:[%s0] sm:$0xf]
    %v221 = vld [vmem:[%s0 + $0x4] sm:$0xf]
    %v222 = vld [vmem:[%s0 + $0x8] sm:$0xf]
    %v223 = vld [vmem:[%s0 + $0xc] sm:$0xf]
    %v224 = vld [vmem:[%s0 + $0x10] sm:$0xf]
    %v225 = vld [vmem:[%s0 + $0x14] sm:$0xf]
    %v226 = vld [vmem:[%s0 + $0x18] sm:$0xf]
    %v227 = vld [vmem:[%s0 + $0x1c] sm:$0xf]
    %v228 = vld [vmem:[%s0 + $0x20] sm:$0xf]
    %v229 = vld [vmem:[%s0 + $0x24] sm:$0xf]
    %v230 = vld [vmem:[%s0 + $0x28] sm:$0xf]
    %v231 = vld [vmem:[%s0 + $0x2c] sm:$0xf]
    %v232 = vld [vmem:[%s0 + $0x30] sm:$0xf]
    %v233 = vld [vmem:[%s0 + $0x34] sm:$0xf]
    %v234 = vld [vmem:[%s0 + $0x38] sm:$0xf]
    %v235 = vld [vmem:[%s0 + $0x3c] sm:$0xf]
    %v236 = vld [vmem:[%s0 + $0x40] sm:$0xf]
    %v237 = vld [vmem:[%s0 + $0x44] sm:$0xf]
    %v238 = vld [vmem:[%s0 + $0x48] sm:$0xf]
    %v239 = vld [vmem:[%s0 + $0x4c] sm:$0xf]
    %v240 = vld [vmem:[%s0 + $0x50] sm:$0xf]
    %v241 = vld [vmem:[%s0 + $0x54] sm:$0xf]
    %v242 = vld [vmem:[%s0 + $0x58] sm:$0xf]
    %v243 = vld [vmem:[%s0 + $0x5c] sm:$0xf]
    %v244 = vld [vmem:[%s0 + $0x60] sm:$0xf]
    %v245 = vld [vmem:[%s0 + $0x64] sm:$0xf]
    %v246 = vld [vmem:[%s0 + $0x68] sm:$0xf]
    %v247 = vld [vmem:[%s0 + $0x6c] sm:$0xf]
    %v248 = vld [vmem:[%s0 + $0x70] sm:$0xf]
    %v249 = vld [vmem:[%s0 + $0x74] sm:$0xf]
    %v250 = vld [vmem:[%s0 + $0x78] sm:$0xf]
    %v251 = vld [vmem:[%s0 + $0x7c] sm:$0xf]
    %v252 = vld [vmem:[#allocation7] sm:$0xf]
    %v253 = vld [vmem:[#allocation7 + $0x4] sm:$0xf]
    %v254 = vld [vmem:[#allocation7 + $0x8] sm:$0xf]
    %v255 = vld [vmem:[#allocation7 + $0xc] sm:$0xf]
    %v256 = vld [vmem:[#allocation7 + $0x10] sm:$0xf]
    %v257 = vld [vmem:[#allocation7 + $0x14] sm:$0xf]
    %v258 = vld [vmem:[#allocation7 + $0x18] sm:$0xf]
    %v259 = vld [vmem:[#allocation7 + $0x1c] sm:$0xf]
    %v260 = vld [vmem:[#allocation7 + $0x20] sm:$0xf]
    %v261 = vld [vmem:[#allocation7 + $0x24] sm:$0xf]
    %v262 = vld [vmem:[#allocation7 + $0x28] sm:$0xf]
    %v263 = vld [vmem:[#allocation7 + $0x2c] sm:$0xf]
    %v264 = vld [vmem:[#allocation7 + $0x30] sm:$0xf]
    %v265 = vld [vmem:[#allocation7 + $0x34] sm:$0xf]
    %v266 = vld [vmem:[#allocation7 + $0x38] sm:$0xf]
    %v267 = vld [vmem:[#allocation7 + $0x3c] sm:$0xf]
    %v300 = vunpack.c.l.b16 %v220
    %v301 = vunpack.c.l.b16 %v221
    %v302 = vunpack.c.l.b16 %v222
    %v303 = vunpack.c.l.b16 %v223
    %v304 = vunpack.c.l.b16 %v224
    %v305 = vunpack.c.l.b16 %v225
    %v306 = vunpack.c.l.b16 %v226
    %v307 = vunpack.c.l.b16 %v227
    %v308 = vunpack.c.l.b16 %v228
    %v309 = vunpack.c.l.b16 %v229
    %v310 = vunpack.c.l.b16 %v230
    %v311 = vunpack.c.l.b16 %v231
    %v312 = vunpack.c.l.b16 %v232
    %v313 = vunpack.c.l.b16 %v233
    %v314 = vunpack.c.l.b16 %v234
    %v315 = vunpack.c.l.b16 %v235
    %v316 = vunpack.c.l.b16 %v236
    %v317 = vunpack.c.l.b16 %v237
    %v318 = vunpack.c.l.b16 %v238
    %v319 = vunpack.c.l.b16 %v239
    %v320 = vunpack.c.l.b16 %v240
    %v321 = vunpack.c.l.b16 %v241
    %v322 = vunpack.c.l.b16 %v242
    %v323 = vunpack.c.l.b16 %v243
    %v324 = vunpack.c.l.b16 %v244
    %v325 = vunpack.c.l.b16 %v245
    %v326 = vunpack.c.l.b16 %v246
    %v327 = vunpack.c.l.b16 %v247
    %v328 = vunpack.c.l.b16 %v248
    %v329 = vunpack.c.l.b16 %v249
    %v330 = vunpack.c.l.b16 %v250
    %v331 = vunpack.c.l.b16 %v251
    %v332 = vpack.c.b16 %v301, %v300
    %v333 = vpack.c.b16 %v303, %v302
    %v334 = vpack.c.b16 %v305, %v304
    %v335 = vpack.c.b16 %v307, %v306
    %v336 = vpack.c.b16 %v309, %v308
    %v337 = vpack.c.b16 %v311, %v310
    %v338 = vpack.c.b16 %v313, %v312
    %v339 = vpack.c.b16 %v315, %v314
    %v340 = vpack.c.b16 %v317, %v316
    %v341 = vpack.c.b16 %v319, %v318
    %v342 = vpack.c.b16 %v321, %v320
    %v343 = vpack.c.b16 %v323, %v322
    %v344 = vpack.c.b16 %v325, %v324
    %v345 = vpack.c.b16 %v327, %v326
    %v346 = vpack.c.b16 %v329, %v328
    %v347 = vpack.c.b16 %v331, %v330
    %v380 = vunpack.c.l.b16 %v252
    %v381 = vunpack.c.l.b16 %v253
    %v382 = vunpack.c.l.b16 %v254
    %v383 = vunpack.c.l.b16 %v255
    %v384 = vunpack.c.l.b16 %v256
    %v385 = vunpack.c.l.b16 %v257
    %v386 = vunpack.c.l.b16 %v258
    %v387 = vunpack.c.l.b16 %v259
    %v388 = vunpack.c.l.b16 %v260
    %v389 = vunpack.c.l.b16 %v261
    %v390 = vunpack.c.l.b16 %v262
    %v391 = vunpack.c.l.b16 %v263
    %v392 = vunpack.c.l.b16 %v264
    %v393 = vunpack.c.l.b16 %v265
    %v394 = vunpack.c.l.b16 %v266
    %v395 = vunpack.c.l.b16 %v267
    %v396 = vpack.c.b16 %v381, %v380
    %v397 = vpack.c.b16 %v383, %v382
    %v398 = vpack.c.b16 %v385, %v384
    %v399 = vpack.c.b16 %v387, %v386
    %v400 = vpack.c.b16 %v389, %v388
    %v401 = vpack.c.b16 %v391, %v390
    %v402 = vpack.c.b16 %v393, %v392
    %v403 = vpack.c.b16 %v395, %v394
    %412 = vmatprep.subr.bf16.mxu0 0
    %413 = vmatpush1.bf16.msra.mxu0 %v396
    %414 = vmatprep.subr.bf16.mxu0 0
    %415 = vmatpush1.bf16.msra.mxu0 %v397
    %416 = vmatprep.subr.bf16.mxu0 0
    %417 = vmatpush1.bf16.msra.mxu0 %v398
    %418 = vmatprep.subr.bf16.mxu0 0
    %419 = vmatpush1.bf16.msra.mxu0 %v399
    %420 = vmatprep.subr.bf16.mxu0 0
    %421 = vmatpush1.bf16.msra.mxu0 %v400
    %422 = vmatprep.subr.bf16.mxu0 0
    %423 = vmatpush1.bf16.msra.mxu0 %v401
    %424 = vmatprep.subr.bf16.mxu0 0
    %425 = vmatpush1.bf16.msra.mxu0 %v402
    %426 = vmatprep.subr.bf16.mxu0 0
    %427 = vmatpush1.bf16.msra.mxu0 %v403
    %428 = vmatprep.subr.bf16.mxu0 0
    %429 = vmatpush1.bf16.msra.mxu0 0
    %430 = vmatprep.subr.bf16.mxu0 0
    %431 = vmatpush1.bf16.msra.mxu0 0
    %432 = vmatprep.subr.bf16.mxu0 0
    %433 = vmatpush1.bf16.msra.mxu0 0
    %434 = vmatprep.subr.bf16.mxu0 0
    %435 = vmatpush1.bf16.msra.mxu0 0
    %436 = vmatprep.subr.bf16.mxu0 0
    %437 = vmatpush1.bf16.msra.mxu0 0
    %438 = vmatprep.subr.bf16.mxu0 0
    %439 = vmatpush1.bf16.msra.mxu0 0
    %440 = vmatprep.subr.bf16.mxu0 0
    %441 = vmatpush1.bf16.msra.mxu0 0
    %442 = vmatprep.subr.bf16.mxu0 0
    %443 = vmatpush1.bf16.msra.mxu0 0
    %444 = vmatprep.mubr.bf16.mxu0 0
    %445 = vmatmul.mubr.bf16.gmra.mrb[0].mxu0 %v332
    %v446 = vpop.f32.mrb[0].mxu0
    %v447 = vadd.f32 0.0, %v446
    %v448 = vpop.f32.mrb[0].mxu0
    %v449 = vpop.f32.mrb[0].mxu0
    %v450 = vadd.f32 0.0, %v449
    %v451 = vpop.f32.mrb[0].mxu0
    %452 = vmatprep.mubr.bf16.mxu0 0
    %453 = vmatmul.mubr.bf16.gmra.mrb[0].mxu0 %v333
    %v454 = vpop.f32.mrb[0].mxu0
    %v455 = vadd.f32 0.0, %v454
    %v456 = vpop.f32.mrb[0].mxu0
    %v457 = vpop.f32.mrb[0].mxu0
    %v458 = vadd.f32 0.0, %v457
    %v459 = vpop.f32.mrb[0].mxu0
    %460 = vmatprep.mubr.bf16.mxu0 0
    %461 = vmatmul.mubr.bf16.gmra.mrb[0].mxu0 %v334
    %v462 = vpop.f32.mrb[0].mxu0
    %v463 = vadd.f32 0.0, %v462
    %v464 = vpop.f32.mrb[0].mxu0
    %v465 = vpop.f32.mrb[0].mxu0
    %v466 = vadd.f32 0.0, %v465
    %v467 = vpop.f32.mrb[0].mxu0
    %468 = vmatprep.mubr.bf16.mxu0 0
    %469 = vmatmul.mubr.bf16.gmra.mrb[0].mxu0 %v335
    %v470 = vpop.f32.mrb[0].mxu0
    %v471 = vadd.f32 0.0, %v470
    %v472 = vpop.f32.mrb[0].mxu0
    %v473 = vpop.f32.mrb[0].mxu0
    %v474 = vadd.f32 0.0, %v473
    %v475 = vpop.f32.mrb[0].mxu0
    %476 = vmatprep.mubr.bf16.mxu0 0
    %477 = vmatmul.mubr.bf16.gmra.mrb[0].mxu0 %v336
    %v478 = vpop.f32.mrb[0].mxu0
    %v479 = vadd.f32 0.0, %v478
    %v480 = vpop.f32.mrb[0].mxu0
    %v481 = vpop.f32.mrb[0].mxu0
    %v482 = vadd.f32 0.0, %v481
    %v483 = vpop.f32.mrb[0].mxu0
    %484 = vmatprep.mubr.bf16.mxu0 0
    %485 = vmatmul.mubr.bf16.gmra.mrb[0].mxu0 %v337
    %v486 = vpop.f32.mrb[0].mxu0
    %v487 = vadd.f32 0.0, %v486
    %v488 = vpop.f32.mrb[0].mxu0
    %v489 = vpop.f32.mrb[0].mxu0
    %v490 = vadd.f32 0.0, %v489
    %v491 = vpop.f32.mrb[0].mxu0
    %492 = vmatprep.mubr.bf16.mxu0 0
    %493 = vmatmul.mubr.bf16.gmra.mrb[0].mxu0 %v338
    %v494 = vpop.f32.mrb[0].mxu0
    %v495 = vadd.f32 0.0, %v494
    %v496 = vpop.f32.mrb[0].mxu0
    %v497 = vpop.f32.mrb[0].mxu0
    %v498 = vadd.f32 0.0, %v497
    %v499 = vpop.f32.mrb[0].mxu0
    %500 = vmatprep.mubr.bf16.mxu0 0
    %501 = vmatmul.mubr.bf16.gmra.mrb[0].mxu0 %v339
    %v502 = vpop.f32.mrb[0].mxu0
    %v503 = vadd.f32 0.0, %v502
    %v504 = vpop.f32.mrb[0].mxu0
    %v505 = vpop.f32.mrb[0].mxu0
    %v506 = vadd.f32 0.0, %v505
    %v507 = vpop.f32.mrb[0].mxu0
    %508 = vmatprep.mubr.bf16.mxu0 0
    %509 = vmatmul.mubr.bf16.gmra.mrb[0].mxu0 %v340
    %v510 = vpop.f32.mrb[0].mxu0
    %v511 = vadd.f32 0.0, %v510
    %v512 = vpop.f32.mrb[0].mxu0
    %v513 = vpop.f32.mrb[0].mxu0
    %v514 = vadd.f32 0.0, %v513
    %v515 = vpop.f32.mrb[0].mxu0
    %516 = vmatprep.mubr.bf16.mxu0 0
    %517 = vmatmul.mubr.bf16.gmra.mrb[0].mxu0 %v341
    %v518 = vpop.f32.mrb[0].mxu0
    %v519 = vadd.f32 0.0, %v518
    %v520 = vpop.f32.mrb[0].mxu0
    %v521 = vpop.f32.mrb[0].mxu0
    %v522 = vadd.f32 0.0, %v521
    %v523 = vpop.f32.mrb[0].mxu0
    %524 = vmatprep.mubr.bf16.mxu0 0
    %525 = vmatmul.mubr.bf16.gmra.mrb[0].mxu0 %v342
    %v526 = vpop.f32.mrb[0].mxu0
    %v527 = vadd.f32 0.0, %v526
    %v528 = vpop.f32.mrb[0].mxu0
    %v529 = vpop.f32.mrb[0].mxu0
    %v530 = vadd.f32 0.0, %v529
    %v531 = vpop.f32.mrb[0].mxu0
    %532 = vmatprep.mubr.bf16.mxu0 0
    %533 = vmatmul.mubr.bf16.gmra.mrb[0].mxu0 %v343
    %v534 = vpop.f32.mrb[0].mxu0
    %v535 = vadd.f32 0.0, %v534
    %v536 = vpop.f32.mrb[0].mxu0
    %v537 = vpop.f32.mrb[0].mxu0
    %v538 = vadd.f32 0.0, %v537
    %v539 = vpop.f32.mrb[0].mxu0
    %540 = vmatprep.mubr.bf16.mxu0 0
    %541 = vmatmul.mubr.bf16.gmra.mrb[0].mxu0 %v344
    %v542 = vpop.f32.mrb[0].mxu0
    %v543 = vadd.f32 0.0, %v542
    %v544 = vpop.f32.mrb[0].mxu0
    %v545 = vpop.f32.mrb[0].mxu0
    %v546 = vadd.f32 0.0, %v545
    %v547 = vpop.f32.mrb[0].mxu0
    %548 = vmatprep.mubr.bf16.mxu0 0
    %549 = vmatmul.mubr.bf16.gmra.mrb[0].mxu0 %v345
    %v550 = vpop.f32.mrb[0].mxu0
    %v551 = vadd.f32 0.0, %v550
    %v552 = vpop.f32.mrb[0].mxu0
    %v553 = vpop.f32.mrb[0].mxu0
    %v554 = vadd.f32 0.0, %v553
    %v555 = vpop.f32.mrb[0].mxu0
    %556 = vmatprep.mubr.bf16.mxu0 0
    %557 = vmatmul.mubr.bf16.gmra.mrb[0].mxu0 %v346
    %v558 = vpop.f32.mrb[0].mxu0
    %v559 = vadd.f32 0.0, %v558
    %v560 = vpop.f32.mrb[0].mxu0
    %v561 = vpop.f32.mrb[0].mxu0
    %v562 = vadd.f32 0.0, %v561
    %v563 = vpop.f32.mrb[0].mxu0
    %564 = vmatprep.mubr.bf16.mxu0 0
    %565 = vmatmul.mubr.bf16.gmra.mrb[0].mxu0 %v347
    %v566 = vpop.f32.mrb[0].mxu0
    %v567 = vadd.f32 0.0, %v566
    %v568 = vpop.f32.mrb[0].mxu0
    %v569 = vpop.f32.mrb[0].mxu0
    %v570 = vadd.f32 0.0, %v569
    %v571 = vpop.f32.mrb[0].mxu0
    %572 = vdwg.mxu0
    %v573 = vpack.c.bf16 %v450, %v447
    %v574 = vpack.c.bf16 %v458, %v455
    %v575 = vpack.c.bf16 %v466, %v463
    %v576 = vpack.c.bf16 %v474, %v471
    %v577 = vld [vmem:[#allocation10] sm:$0xff]
    %v578 = vld [vmem:[#allocation10 + $0x8] sm:$0xf]
    %v579 = vld [vmem:[#allocation10 + $0xc] sm:$0xff]
    %v580 = vld [vmem:[#allocation10 + $0x14] sm:$0xf]
    %v581 = vld [vmem:[#allocation10 + $0x18] sm:$0xff]
    %v582 = vld [vmem:[#allocation10 + $0x20] sm:$0xf]
    %v583 = vld [vmem:[#allocation10 + $0x24] sm:$0xff]
    %v584 = vld [vmem:[#allocation10 + $0x2c] sm:$0xf]
    %v585 = vld [vmem:[#allocation10 + $0x30] sm:$0xff]
    %v586 = vld [vmem:[#allocation10 + $0x38] sm:$0xf]
    %v587 = vld [vmem:[#allocation10 + $0x3c] sm:$0xff]
    %v588 = vld [vmem:[#allocation10 + $0x44] sm:$0xf]
    %v589 = vld [vmem:[#allocation10 + $0x48] sm:$0xff]
    %v590 = vld [vmem:[#allocation10 + $0x50] sm:$0xf]
    %v591 = vld [vmem:[#allocation10 + $0x54] sm:$0xff]
    %v592 = vld [vmem:[#allocation10 + $0x5c] sm:$0xf]
    %v593 = vld [vmem:[#allocation10 + $0x60] sm:$0xff]
    %v594 = vld [vmem:[#allocation10 + $0x68] sm:$0xf]
    %v595 = vld [vmem:[#allocation10 + $0x6c] sm:$0xff]
    %v596 = vld [vmem:[#allocation10 + $0x74] sm:$0xf]
    %v597 = vld [vmem:[#allocation10 + $0x78] sm:$0xff]
    %v598 = vld [vmem:[#allocation10 + $0x80] sm:$0xf]
    %v599 = vld [vmem:[#allocation10 + $0x84] sm:$0xff]
    %v600 = vld [vmem:[#allocation10 + $0x8c] sm:$0xf]
    %v601 = vld [vmem:[#allocation10 + $0x90] sm:$0xff]
    %v602 = vld [vmem:[#allocation10 + $0x98] sm:$0xf]
    %v603 = vld [vmem:[#allocation10 + $0x9c] sm:$0xff]
    %v604 = vld [vmem:[#allocation10 + $0xa4] sm:$0xf]
    %v605 = vld [vmem:[#allocation10 + $0xa8] sm:$0xff]
    %v606 = vld [vmem:[#allocation10 + $0xb0] sm:$0xf]
    %v607 = vld [vmem:[#allocation10 + $0xb4] sm:$0xff]
    %v608 = vld [vmem:[#allocation10 + $0xbc] sm:$0xf]
    %v609 = vld [vmem:[#allocation12] sm:$0x7]
    %v611 = vlaneseq
    %v612 = vshrl.u32 %v611, 7
    %v613 = vsub.s32 0, %v612
    %v614 = vrot.slane %v609, %v613
    %v615 = vlaneseq
    %v616 = vshrl.u32 %v615, 7
    %v617 = vsub.s32 1, %v616
    %v618 = vrot.slane %v609, %v617
    %v619 = vlaneseq
    %v620 = vshrl.u32 %v619, 7
    %v621 = vsub.s32 2, %v620
    %v622 = vrot.slane %v609, %v621
    %v658 = vunpack.c.l.b16 %v577
    %v659 = vunpack.c.h.b16 %v577
    %v660 = vunpack.c.l.b16 %v578
    %v661 = vunpack.c.l.b16 %v579
    %v662 = vunpack.c.h.b16 %v579
    %v663 = vunpack.c.l.b16 %v580
    %v664 = vunpack.c.l.b16 %v581
    %v665 = vunpack.c.h.b16 %v581
    %v666 = vunpack.c.l.b16 %v582
    %v667 = vunpack.c.l.b16 %v583
    %v668 = vunpack.c.h.b16 %v583
    %v669 = vunpack.c.l.b16 %v584
    %v670 = vunpack.c.l.b16 %v585
    %v671 = vunpack.c.h.b16 %v585
    %v672 = vunpack.c.l.b16 %v586
    %v673 = vunpack.c.l.b16 %v587
    %v674 = vunpack.c.h.b16 %v587
    %v675 = vunpack.c.l.b16 %v588
    %v676 = vunpack.c.l.b16 %v589
    %v677 = vunpack.c.h.b16 %v589
    %v678 = vunpack.c.l.b16 %v590
    %v679 = vunpack.c.l.b16 %v591
    %v680 = vunpack.c.h.b16 %v591
    %v681 = vunpack.c.l.b16 %v592
    %v682 = vunpack.c.l.b16 %v593
    %v683 = vunpack.c.h.b16 %v593
    %v684 = vunpack.c.l.b16 %v594
    %v685 = vunpack.c.l.b16 %v595
    %v686 = vunpack.c.h.b16 %v595
    %v687 = vunpack.c.l.b16 %v596
    %v688 = vunpack.c.l.b16 %v597
    %v689 = vunpack.c.h.b16 %v597
    %v690 = vunpack.c.l.b16 %v598
    %v691 = vunpack.c.l.b16 %v599
    %v692 = vunpack.c.h.b16 %v599
    %v693 = vunpack.c.l.b16 %v600
    %v694 = vunpack.c.l.b16 %v601
    %v695 = vunpack.c.h.b16 %v601
    %v696 = vunpack.c.l.b16 %v602
    %v697 = vunpack.c.l.b16 %v603
    %v698 = vunpack.c.h.b16 %v603
    %v699 = vunpack.c.l.b16 %v604
    %v700 = vunpack.c.l.b16 %v605
    %v701 = vunpack.c.h.b16 %v605
    %v702 = vunpack.c.l.b16 %v606
    %v703 = vunpack.c.l.b16 %v607
    %v704 = vunpack.c.h.b16 %v607
    %v705 = vunpack.c.l.b16 %v608
    %v706 = vpack.c.b16 %v661, %v658
    %v707 = vpack.c.b16 %v662, %v659
    %v708 = vpack.c.b16 %v663, %v660
    %v709 = vpack.c.b16 %v667, %v664
    %v710 = vpack.c.b16 %v668, %v665
    %v711 = vpack.c.b16 %v669, %v666
    %v712 = vpack.c.b16 %v673, %v670
    %v713 = vpack.c.b16 %v674, %v671
    %v714 = vpack.c.b16 %v675, %v672
    %v715 = vpack.c.b16 %v679, %v676
    %v716 = vpack.c.b16 %v680, %v677
    %v717 = vpack.c.b16 %v681, %v678
    %v718 = vpack.c.b16 %v685, %v682
    %v719 = vpack.c.b16 %v686, %v683
    %v720 = vpack.c.b16 %v687, %v684
    %v721 = vpack.c.b16 %v691, %v688
    %v722 = vpack.c.b16 %v692, %v689
    %v723 = vpack.c.b16 %v693, %v690
    %v724 = vpack.c.b16 %v697, %v694
    %v725 = vpack.c.b16 %v698, %v695
    %v726 = vpack.c.b16 %v699, %v696
    %v727 = vpack.c.b16 %v703, %v700
    %v728 = vpack.c.b16 %v704, %v701
    %v729 = vpack.c.b16 %v705, %v702
    %754 = vmatprep.subr.bf16.mxu0 %v707
    %755 = vmatpush1.bf16.msra.mxu0 %v706
    %756 = vmatprep.subr.bf16.mxu0 %v710
    %757 = vmatpush1.bf16.msra.mxu0 %v709
    %758 = vmatprep.subr.bf16.mxu0 %v713
    %759 = vmatpush1.bf16.msra.mxu0 %v712
    %760 = vmatprep.subr.bf16.mxu0 %v716
    %761 = vmatpush1.bf16.msra.mxu0 %v715
    %762 = vmatprep.subr.bf16.mxu0 %v719
    %763 = vmatpush1.bf16.msra.mxu0 %v718
    %764 = vmatprep.subr.bf16.mxu0 %v722
    %765 = vmatpush1.bf16.msra.mxu0 %v721
    %766 = vmatprep.subr.bf16.mxu0 %v725
    %767 = vmatpush1.bf16.msra.mxu0 %v724
    %768 = vmatprep.subr.bf16.mxu0 %v728
    %769 = vmatpush1.bf16.msra.mxu0 %v727
    %770 = vmatprep.subr.bf16.mxu0 0
    %771 = vmatpush1.bf16.msra.mxu0 0
    %772 = vmatprep.subr.bf16.mxu0 0
    %773 = vmatpush1.bf16.msra.mxu0 0
    %774 = vmatprep.subr.bf16.mxu0 0
    %775 = vmatpush1.bf16.msra.mxu0 0
    %776 = vmatprep.subr.bf16.mxu0 0
    %777 = vmatpush1.bf16.msra.mxu0 0
    %778 = vmatprep.subr.bf16.mxu0 0
    %779 = vmatpush1.bf16.msra.mxu0 0
    %780 = vmatprep.subr.bf16.mxu0 0
    %781 = vmatpush1.bf16.msra.mxu0 0
    %782 = vmatprep.subr.bf16.mxu0 0
    %783 = vmatpush1.bf16.msra.mxu0 0
    %784 = vmatprep.subr.bf16.mxu0 0
    %785 = vmatpush1.bf16.msra.mxu0 0
    %786 = vmatprep.mubr.bf16.mxu0 0
    %787 = vmatmul.mubr.bf16.gmra.mrb[0].mxu0 %v573
    %v788 = vpop.f32.mrb[0].mxu0
    %v789 = vadd.f32 %v614, %v788
    %v790 = vpop.f32.mrb[0].mxu0
    %v791 = vadd.f32 %v618, %v790
    %v792 = vpop.f32.mrb[0].mxu0
    %v793 = vadd.f32 %v614, %v792
    %v794 = vpop.f32.mrb[0].mxu0
    %v795 = vadd.f32 %v618, %v794
    %796 = vmatprep.mubr.bf16.mxu0 0
    %797 = vmatmul.mubr.bf16.gmra.mrb[0].mxu0 %v574
    %v798 = vpop.f32.mrb[0].mxu0
    %v799 = vadd.f32 %v614, %v798
    %v800 = vpop.f32.mrb[0].mxu0
    %v801 = vadd.f32 %v618, %v800
    %v802 = vpop.f32.mrb[0].mxu0
    %v803 = vadd.f32 %v614, %v802
    %v804 = vpop.f32.mrb[0].mxu0
    %v805 = vadd.f32 %v618, %v804
    %806 = vmatprep.mubr.bf16.mxu0 0
    %807 = vmatmul.mubr.bf16.gmra.mrb[0].mxu0 %v575
    %v808 = vpop.f32.mrb[0].mxu0
    %v809 = vadd.f32 %v614, %v808
    %v810 = vpop.f32.mrb[0].mxu0
    %v811 = vadd.f32 %v618, %v810
    %v812 = vpop.f32.mrb[0].mxu0
    %v813 = vadd.f32 %v614, %v812
    %v814 = vpop.f32.mrb[0].mxu0
    %v815 = vadd.f32 %v618, %v814
    %816 = vmatprep.mubr.bf16.mxu0 0
    %817 = vmatmul.mubr.bf16.gmra.mrb[0].mxu0 %v576
    %v818 = vpop.f32.mrb[0].mxu0
    %v819 = vadd.f32 %v614, %v818
    %v820 = vpop.f32.mrb[0].mxu0
    %v821 = vadd.f32 %v618, %v820
    %v822 = vpop.f32.mrb[0].mxu0
    %v823 = vadd.f32 %v614, %v822
    %v824 = vpop.f32.mrb[0].mxu0
    %v825 = vadd.f32 %v618, %v824
    %826 = vdwg.mxu0
    %827 = vmatprep.subr.bf16.mxu0 0
    %828 = vmatpush1.bf16.msra.mxu0 %v708
    %829 = vmatprep.subr.bf16.mxu0 0
    %830 = vmatpush1.bf16.msra.mxu0 %v711
    %831 = vmatprep.subr.bf16.mxu0 0
    %832 = vmatpush1.bf16.msra.mxu0 %v714
    %833 = vmatprep.subr.bf16.mxu0 0
    %834 = vmatpush1.bf16.msra.mxu0 %v717
    %835 = vmatprep.subr.bf16.mxu0 0
    %836 = vmatpush1.bf16.msra.mxu0 %v720
    %837 = vmatprep.subr.bf16.mxu0 0
    %838 = vmatpush1.bf16.msra.mxu0 %v723
    %839 = vmatprep.subr.bf16.mxu0 0
    %840 = vmatpush1.bf16.msra.mxu0 %v726
    %841 = vmatprep.subr.bf16.mxu0 0
    %842 = vmatpush1.bf16.msra.mxu0 %v729
    %843 = vmatprep.subr.bf16.mxu0 0
    %844 = vmatpush1.bf16.msra.mxu0 0
    %845 = vmatprep.subr.bf16.mxu0 0
    %846 = vmatpush1.bf16.msra.mxu0 0
    %847 = vmatprep.subr.bf16.mxu0 0
    %848 = vmatpush1.bf16.msra.mxu0 0
    %849 = vmatprep.subr.bf16.mxu0 0
    %850 = vmatpush1.bf16.msra.mxu0 0
    %851 = vmatprep.subr.bf16.mxu0 0
    %852 = vmatpush1.bf16.msra.mxu0 0
    %853 = vmatprep.subr.bf16.mxu0 0
    %854 = vmatpush1.bf16.msra.mxu0 0
    %855 = vmatprep.subr.bf16.mxu0 0
    %856 = vmatpush1.bf16.msra.mxu0 0
    %857 = vmatprep.subr.bf16.mxu0 0
    %858 = vmatpush1.bf16.msra.mxu0 0
    %859 = vmatprep.mubr.bf16.mxu0 0
    %860 = vmatmul.mubr.bf16.gmra.mrb[0].mxu0 %v573
    %v861 = vpop.f32.mrb[0].mxu0
    %v862 = vadd.f32 %v622, %v861
    %v863 = vpop.f32.mrb[0].mxu0
    %v864 = vpop.f32.mrb[0].mxu0
    %v865 = vadd.f32 %v622, %v864
    %v866 = vpop.f32.mrb[0].mxu0
    %867 = vmatprep.mubr.bf16.mxu0 0
    %868 = vmatmul.mubr.bf16.gmra.mrb[0].mxu0 %v574
    %v869 = vpop.f32.mrb[0].mxu0
    %v870 = vadd.f32 %v622, %v869
    %v871 = vpop.f32.mrb[0].mxu0
    %v872 = vpop.f32.mrb[0].mxu0
    %v873 = vadd.f32 %v622, %v872
    %v874 = vpop.f32.mrb[0].mxu0
    %875 = vmatprep.mubr.bf16.mxu0 0
    %876 = vmatmul.mubr.bf16.gmra.mrb[0].mxu0 %v575
    %v877 = vpop.f32.mrb[0].mxu0
    %v878 = vadd.f32 %v622, %v877
    %v879 = vpop.f32.mrb[0].mxu0
    %v880 = vpop.f32.mrb[0].mxu0
    %v881 = vadd.f32 %v622, %v880
    %v882 = vpop.f32.mrb[0].mxu0
    %883 = vmatprep.mubr.bf16.mxu0 0
    %884 = vmatmul.mubr.bf16.gmra.mrb[0].mxu0 %v576
    %v885 = vpop.f32.mrb[0].mxu0
    %v886 = vadd.f32 %v622, %v885
    %v887 = vpop.f32.mrb[0].mxu0
    %v888 = vpop.f32.mrb[0].mxu0
    %v889 = vadd.f32 %v622, %v888
    %v890 = vpop.f32.mrb[0].mxu0
    %891 = vdwg.mxu0
    %892 = vst [vmem:[#allocation2] sm:$0xff] %v789
    %893 = vst [vmem:[#allocation2 + $0x68] sm:$0xff] %v793
    %894 = vst [vmem:[#allocation2 + $0xd0] sm:$0xff] %v799
    %895 = vst [vmem:[#allocation2 + $0x138] sm:$0xff] %v803
    %896 = vst [vmem:[#allocation2 + $0x1a0] sm:$0xff] %v809
    %897 = vst [vmem:[#allocation2 + $0x208] sm:$0xff] %v813
    %898 = vst [vmem:[#allocation2 + $0x270] sm:$0xff] %v819
    %899 = vst [vmem:[#allocation2 + $0x2d8] sm:$0xff] %v823
    %900 = vst [vmem:[#allocation2 + $0x18] sm:$0xff] %v791
    %901 = vst [vmem:[#allocation2 + $0x80] sm:$0xff] %v795
    %902 = vst [vmem:[#allocation2 + $0xe8] sm:$0xff] %v801
    %903 = vst [vmem:[#allocation2 + $0x150] sm:$0xff] %v805
    %904 = vst [vmem:[#allocation2 + $0x1b8] sm:$0xff] %v811
    %905 = vst [vmem:[#allocation2 + $0x220] sm:$0xff] %v815
    %906 = vst [vmem:[#allocation2 + $0x288] sm:$0xff] %v821
    %907 = vst [vmem:[#allocation2 + $0x2f0] sm:$0xff] %v825
    %908 = vst [vmem:[#allocation2 + $0x30] sm:$0xff] %v862
    %909 = vst [vmem:[#allocation2 + $0x98] sm:$0xff] %v865
    %910 = vst [vmem:[#allocation2 + $0x100] sm:$0xff] %v870
    %911 = vst [vmem:[#allocation2 + $0x168] sm:$0xff] %v873
    %912 = vst [vmem:[#allocation2 + $0x1d0] sm:$0xff] %v878
    %913 = vst [vmem:[#allocation2 + $0x238] sm:$0xff] %v881
    %914 = vst [vmem:[#allocation2 + $0x2a0] sm:$0xff] %v886
    %915 = vst [vmem:[#allocation2 + $0x308] sm:$0xff] %v889
    %v916 = vpack.c.bf16 %v482, %v479
    %v917 = vpack.c.bf16 %v490, %v487
    %v918 = vpack.c.bf16 %v498, %v495
    %v919 = vpack.c.bf16 %v506, %v503
    %s920 = scalar_lea.vmem [#allocation10], 192
    %v921 = vld [vmem:[%s920] sm:$0xff]
    %v922 = vld [vmem:[%s920 + $0x8] sm:$0xf]
    %v923 = vld [vmem:[%s920 + $0xc] sm:$0xff]
    %v924 = vld [vmem:[%s920 + $0x14] sm:$0xf]
    %v925 = vld [vmem:[%s920 + $0x18] sm:$0xff]
    %v926 = vld [vmem:[%s920 + $0x20] sm:$0xf]
    %v927 = vld [vmem:[%s920 + $0x24] sm:$0xff]
    %v928 = vld [vmem:[%s920 + $0x2c] sm:$0xf]
    %v929 = vld [vmem:[%s920 + $0x30] sm:$0xff]
    %v930 = vld [vmem:[%s920 + $0x38] sm:$0xf]
    %v931 = vld [vmem:[%s920 + $0x3c] sm:$0xff]
    %v932 = vld [vmem:[%s920 + $0x44] sm:$0xf]
    %v933 = vld [vmem:[%s920 + $0x48] sm:$0xff]
    %v934 = vld [vmem:[%s920 + $0x50] sm:$0xf]
    %v935 = vld [vmem:[%s920 + $0x54] sm:$0xff]
    %v936 = vld [vmem:[%s920 + $0x5c] sm:$0xf]
    %v937 = vld [vmem:[%s920 + $0x60] sm:$0xff]
    %v938 = vld [vmem:[%s920 + $0x68] sm:$0xf]
    %v939 = vld [vmem:[%s920 + $0x6c] sm:$0xff]
    %v940 = vld [vmem:[%s920 + $0x74] sm:$0xf]
    %v941 = vld [vmem:[%s920 + $0x78] sm:$0xff]
    %v942 = vld [vmem:[%s920 + $0x80] sm:$0xf]
    %v943 = vld [vmem:[%s920 + $0x84] sm:$0xff]
    %v944 = vld [vmem:[%s920 + $0x8c] sm:$0xf]
    %v945 = vld [vmem:[%s920 + $0x90] sm:$0xff]
    %v946 = vld [vmem:[%s920 + $0x98] sm:$0xf]
    %v947 = vld [vmem:[%s920 + $0x9c] sm:$0xff]
    %v948 = vld [vmem:[%s920 + $0xa4] sm:$0xf]
    %v949 = vld [vmem:[%s920 + $0xa8] sm:$0xff]
    %v950 = vld [vmem:[%s920 + $0xb0] sm:$0xf]
    %v951 = vld [vmem:[%s920 + $0xb4] sm:$0xff]
    %v952 = vld [vmem:[%s920 + $0xbc] sm:$0xf]
    %s953 = scalar_lea.vmem [#allocation12], 3
    %v954 = vld [vmem:[%s953] sm:$0x7]
    %v956 = vlaneseq
    %v957 = vshrl.u32 %v956, 7
    %v958 = vsub.s32 0, %v957
    %v959 = vrot.slane %v954, %v958
    %v960 = vlaneseq
    %v961 = vshrl.u32 %v960, 7
    %v962 = vsub.s32 1, %v961
    %v963 = vrot.slane %v954, %v962
    %v964 = vlaneseq
    %v965 = vshrl.u32 %v964, 7
    %v966 = vsub.s32 2, %v965
    %v967 = vrot.slane %v954, %v966
    %v1003 = vunpack.c.l.b16 %v921
    %v1004 = vunpack.c.h.b16 %v921
    %v1005 = vunpack.c.l.b16 %v922
    %v1006 = vunpack.c.l.b16 %v923
    %v1007 = vunpack.c.h.b16 %v923
    %v1008 = vunpack.c.l.b16 %v924
    %v1009 = vunpack.c.l.b16 %v925
    %v1010 = vunpack.c.h.b16 %v925
    %v1011 = vunpack.c.l.b16 %v926
    %v1012 = vunpack.c.l.b16 %v927
    %v1013 = vunpack.c.h.b16 %v927
    %v1014 = vunpack.c.l.b16 %v928
    %v1015 = vunpack.c.l.b16 %v929
    %v1016 = vunpack.c.h.b16 %v929
    %v1017 = vunpack.c.l.b16 %v930
    %v1018 = vunpack.c.l.b16 %v931
    %v1019 = vunpack.c.h.b16 %v931
    %v1020 = vunpack.c.l.b16 %v932
    %v1021 = vunpack.c.l.b16 %v933
    %v1022 = vunpack.c.h.b16 %v933
    %v1023 = vunpack.c.l.b16 %v934
    %v1024 = vunpack.c.l.b16 %v935
    %v1025 = vunpack.c.h.b16 %v935
    %v1026 = vunpack.c.l.b16 %v936
    %v1027 = vunpack.c.l.b16 %v937
    %v1028 = vunpack.c.h.b16 %v937
    %v1029 = vunpack.c.l.b16 %v938
    %v1030 = vunpack.c.l.b16 %v939
    %v1031 = vunpack.c.h.b16 %v939
    %v1032 = vunpack.c.l.b16 %v940
    %v1033 = vunpack.c.l.b16 %v941
    %v1034 = vunpack.c.h.b16 %v941
    %v1035 = vunpack.c.l.b16 %v942
    %v1036 = vunpack.c.l.b16 %v943
    %v1037 = vunpack.c.h.b16 %v943
    %v1038 = vunpack.c.l.b16 %v944
    %v1039 = vunpack.c.l.b16 %v945
    %v1040 = vunpack.c.h.b16 %v945
    %v1041 = vunpack.c.l.b16 %v946
    %v1042 = vunpack.c.l.b16 %v947
    %v1043 = vunpack.c.h.b16 %v947
    %v1044 = vunpack.c.l.b16 %v948
    %v1045 = vunpack.c.l.b16 %v949
    %v1046 = vunpack.c.h.b16 %v949
    %v1047 = vunpack.c.l.b16 %v950
    %v1048 = vunpack.c.l.b16 %v951
    %v1049 = vunpack.c.h.b16 %v951
    %v1050 = vunpack.c.l.b16 %v952
    %v1051 = vpack.c.b16 %v1006, %v1003
    %v1052 = vpack.c.b16 %v1007, %v1004
    %v1053 = vpack.c.b16 %v1008, %v1005
    %v1054 = vpack.c.b16 %v1012, %v1009
    %v1055 = vpack.c.b16 %v1013, %v1010
    %v1056 = vpack.c.b16 %v1014, %v1011
    %v1057 = vpack.c.b16 %v1018, %v1015
    %v1058 = vpack.c.b16 %v1019, %v1016
    %v1059 = vpack.c.b16 %v1020, %v1017
    %v1060 = vpack.c.b16 %v1024, %v1021
    %v1061 = vpack.c.b16 %v1025, %v1022
    %v1062 = vpack.c.b16 %v1026, %v1023
    %v1063 = vpack.c.b16 %v1030, %v1027
    %v1064 = vpack.c.b16 %v1031, %v1028
    %v1065 = vpack.c.b16 %v1032, %v1029
    %v1066 = vpack.c.b16 %v1036, %v1033
    %v1067 = vpack.c.b16 %v1037, %v1034
    %v1068 = vpack.c.b16 %v1038, %v1035
    %v1069 = vpack.c.b16 %v1042, %v1039
    %v1070 = vpack.c.b16 %v1043, %v1040
    %v1071 = vpack.c.b16 %v1044, %v1041
    %v1072 = vpack.c.b16 %v1048, %v1045
    %v1073 = vpack.c.b16 %v1049, %v1046
    %v1074 = vpack.c.b16 %v1050, %v1047
    %1099 = vmatprep.subr.bf16.mxu0 %v1052
    %1100 = vmatpush1.bf16.msra.mxu0 %v1051
    %1101 = vmatprep.subr.bf16.mxu0 %v1055
    %1102 = vmatpush1.bf16.msra.mxu0 %v1054
    %1103 = vmatprep.subr.bf16.mxu0 %v1058
    %1104 = vmatpush1.bf16.msra.mxu0 %v1057
    %1105 = vmatprep.subr.bf16.mxu0 %v1061
    %1106 = vmatpush1.bf16.msra.mxu0 %v1060
    %1107 = vmatprep.subr.bf16.mxu0 %v1064
    %1108 = vmatpush1.bf16.msra.mxu0 %v1063
    %1109 = vmatprep.subr.bf16.mxu0 %v1067
    %1110 = vmatpush1.bf16.msra.mxu0 %v1066
    %1111 = vmatprep.subr.bf16.mxu0 %v1070
    %1112 = vmatpush1.bf16.msra.mxu0 %v1069
    %1113 = vmatprep.subr.bf16.mxu0 %v1073
    %1114 = vmatpush1.bf16.msra.mxu0 %v1072
    %1115 = vmatprep.subr.bf16.mxu0 0
    %1116 = vmatpush1.bf16.msra.mxu0 0
    %1117 = vmatprep.subr.bf16.mxu0 0
    %1118 = vmatpush1.bf16.msra.mxu0 0
    %1119 = vmatprep.subr.bf16.mxu0 0
    %1120 = vmatpush1.bf16.msra.mxu0 0
    %1121 = vmatprep.subr.bf16.mxu0 0
    %1122 = vmatpush1.bf16.msra.mxu0 0
    %1123 = vmatprep.subr.bf16.mxu0 0
    %1124 = vmatpush1.bf16.msra.mxu0 0
    %1125 = vmatprep.subr.bf16.mxu0 0
    %1126 = vmatpush1.bf16.msra.mxu0 0
    %1127 = vmatprep.subr.bf16.mxu0 0
    %1128 = vmatpush1.bf16.msra.mxu0 0
    %1129 = vmatprep.subr.bf16.mxu0 0
    %1130 = vmatpush1.bf16.msra.mxu0 0
    %1131 = vmatprep.mubr.bf16.mxu0 0
    %1132 = vmatmul.mubr.bf16.gmra.mrb[0].mxu0 %v916
    %v1133 = vpop.f32.mrb[0].mxu0
    %v1134 = vadd.f32 %v959, %v1133
    %v1135 = vpop.f32.mrb[0].mxu0
    %v1136 = vadd.f32 %v963, %v1135
    %v1137 = vpop.f32.mrb[0].mxu0
    %v1138 = vadd.f32 %v959, %v1137
    %v1139 = vpop.f32.mrb[0].mxu0
    %v1140 = vadd.f32 %v963, %v1139
    %1141 = vmatprep.mubr.bf16.mxu0 0
    %1142 = vmatmul.mubr.bf16.gmra.mrb[0].mxu0 %v917
    %v1143 = vpop.f32.mrb[0].mxu0
    %v1144 = vadd.f32 %v959, %v1143
    %v1145 = vpop.f32.mrb[0].mxu0
    %v1146 = vadd.f32 %v963, %v1145
    %v1147 = vpop.f32.mrb[0].mxu0
    %v1148 = vadd.f32 %v959, %v1147
    %v1149 = vpop.f32.mrb[0].mxu0
    %v1150 = vadd.f32 %v963, %v1149
    %1151 = vmatprep.mubr.bf16.mxu0 0
    %1152 = vmatmul.mubr.bf16.gmra.mrb[0].mxu0 %v918
    %v1153 = vpop.f32.mrb[0].mxu0
    %v1154 = vadd.f32 %v959, %v1153
    %v1155 = vpop.f32.mrb[0].mxu0
    %v1156 = vadd.f32 %v963, %v1155
    %v1157 = vpop.f32.mrb[0].mxu0
    %v1158 = vadd.f32 %v959, %v1157
    %v1159 = vpop.f32.mrb[0].mxu0
    %v1160 = vadd.f32 %v963, %v1159
    %1161 = vmatprep.mubr.bf16.mxu0 0
    %1162 = vmatmul.mubr.bf16.gmra.mrb[0].mxu0 %v919
    %v1163 = vpop.f32.mrb[0].mxu0
    %v1164 = vadd.f32 %v959, %v1163
    %v1165 = vpop.f32.mrb[0].mxu0
    %v1166 = vadd.f32 %v963, %v1165
    %v1167 = vpop.f32.mrb[0].mxu0
    %v1168 = vadd.f32 %v959, %v1167
    %v1169 = vpop.f32.mrb[0].mxu0
    %v1170 = vadd.f32 %v963, %v1169
    %1171 = vdwg.mxu0
    %1172 = vmatprep.subr.bf16.mxu0 0
    %1173 = vmatpush1.bf16.msra.mxu0 %v1053
    %1174 = vmatprep.subr.bf16.mxu0 0
    %1175 = vmatpush1.bf16.msra.mxu0 %v1056
    %1176 = vmatprep.subr.bf16.mxu0 0
    %1177 = vmatpush1.bf16.msra.mxu0 %v1059
    %1178 = vmatprep.subr.bf16.mxu0 0
    %1179 = vmatpush1.bf16.msra.mxu0 %v1062
    %1180 = vmatprep.subr.bf16.mxu0 0
    %1181 = vmatpush1.bf16.msra.mxu0 %v1065
    %1182 = vmatprep.subr.bf16.mxu0 0
    %1183 = vmatpush1.bf16.msra.mxu0 %v1068
    %1184 = vmatprep.subr.bf16.mxu0 0
    %1185 = vmatpush1.bf16.msra.mxu0 %v1071
    %1186 = vmatprep.subr.bf16.mxu0 0
    %1187 = vmatpush1.bf16.msra.mxu0 %v1074
    %1188 = vmatprep.subr.bf16.mxu0 0
    %1189 = vmatpush1.bf16.msra.mxu0 0
    %1190 = vmatprep.subr.bf16.mxu0 0
    %1191 = vmatpush1.bf16.msra.mxu0 0
    %1192 = vmatprep.subr.bf16.mxu0 0
    %1193 = vmatpush1.bf16.msra.mxu0 0
    %1194 = vmatprep.subr.bf16.mxu0 0
    %1195 = vmatpush1.bf16.msra.mxu0 0
    %1196 = vmatprep.subr.bf16.mxu0 0
    %1197 = vmatpush1.bf16.msra.mxu0 0
    %1198 = vmatprep.subr.bf16.mxu0 0
    %1199 = vmatpush1.bf16.msra.mxu0 0
    %1200 = vmatprep.subr.bf16.mxu0 0
    %1201 = vmatpush1.bf16.msra.mxu0 0
    %1202 = vmatprep.subr.bf16.mxu0 0
    %1203 = vmatpush1.bf16.msra.mxu0 0
    %1204 = vmatprep.mubr.bf16.mxu0 0
    %1205 = vmatmul.mubr.bf16.gmra.mrb[0].mxu0 %v916
    %v1206 = vpop.f32.mrb[0].mxu0
    %v1207 = vadd.f32 %v967, %v1206
    %v1208 = vpop.f32.mrb[0].mxu0
    %v1209 = vpop.f32.mrb[0].mxu0
    %v1210 = vadd.f32 %v967, %v1209
    %v1211 = vpop.f32.mrb[0].mxu0
    %1212 = vmatprep.mubr.bf16.mxu0 0
    %1213 = vmatmul.mubr.bf16.gmra.mrb[0].mxu0 %v917
    %v1214 = vpop.f32.mrb[0].mxu0
    %v1215 = vadd.f32 %v967, %v1214
    %v1216 = vpop.f32.mrb[0].mxu0
    %v1217 = vpop.f32.mrb[0].mxu0
    %v1218 = vadd.f32 %v967, %v1217
    %v1219 = vpop.f32.mrb[0].mxu0
    %1220 = vmatprep.mubr.bf16.mxu0 0
    %1221 = vmatmul.mubr.bf16.gmra.mrb[0].mxu0 %v918
    %v1222 = vpop.f32.mrb[0].mxu0
    %v1223 = vadd.f32 %v967, %v1222
    %v1224 = vpop.f32.mrb[0].mxu0
    %v1225 = vpop.f32.mrb[0].mxu0
    %v1226 = vadd.f32 %v967, %v1225
    %v1227 = vpop.f32.mrb[0].mxu0
    %1228 = vmatprep.mubr.bf16.mxu0 0
    %1229 = vmatmul.mubr.bf16.gmra.mrb[0].mxu0 %v919
    %v1230 = vpop.f32.mrb[0].mxu0
    %v1231 = vadd.f32 %v967, %v1230
    %v1232 = vpop.f32.mrb[0].mxu0
    %v1233 = vpop.f32.mrb[0].mxu0
    %v1234 = vadd.f32 %v967, %v1233
    %v1235 = vpop.f32.mrb[0].mxu0
    %1236 = vdwg.mxu0
    %1237 = vst [vmem:[#allocation2 + $0x8] sm:$0xff] %v1134
    %1238 = vst [vmem:[#allocation2 + $0x70] sm:$0xff] %v1138
    %1239 = vst [vmem:[#allocation2 + $0xd8] sm:$0xff] %v1144
    %1240 = vst [vmem:[#allocation2 + $0x140] sm:$0xff] %v1148
    %1241 = vst [vmem:[#allocation2 + $0x1a8] sm:$0xff] %v1154
    %1242 = vst [vmem:[#allocation2 + $0x210] sm:$0xff] %v1158
    %1243 = vst [vmem:[#allocation2 + $0x278] sm:$0xff] %v1164
    %1244 = vst [vmem:[#allocation2 + $0x2e0] sm:$0xff] %v1168
    %1245 = vst [vmem:[#allocation2 + $0x20] sm:$0xff] %v1136
    %1246 = vst [vmem:[#allocation2 + $0x88] sm:$0xff] %v1140
    %1247 = vst [vmem:[#allocation2 + $0xf0] sm:$0xff] %v1146
    %1248 = vst [vmem:[#allocation2 + $0x158] sm:$0xff] %v1150
    %1249 = vst [vmem:[#allocation2 + $0x1c0] sm:$0xff] %v1156
    %1250 = vst [vmem:[#allocation2 + $0x228] sm:$0xff] %v1160
    %1251 = vst [vmem:[#allocation2 + $0x290] sm:$0xff] %v1166
    %1252 = vst [vmem:[#allocation2 + $0x2f8] sm:$0xff] %v1170
    %1253 = vst [vmem:[#allocation2 + $0x38] sm:$0xff] %v1207
    %1254 = vst [vmem:[#allocation2 + $0xa0] sm:$0xff] %v1210
    %1255 = vst [vmem:[#allocation2 + $0x108] sm:$0xff] %v1215
    %1256 = vst [vmem:[#allocation2 + $0x170] sm:$0xff] %v1218
    %1257 = vst [vmem:[#allocation2 + $0x1d8] sm:$0xff] %v1223
    %1258 = vst [vmem:[#allocation2 + $0x240] sm:$0xff] %v1226
    %1259 = vst [vmem:[#allocation2 + $0x2a8] sm:$0xff] %v1231
    %1260 = vst [vmem:[#allocation2 + $0x310] sm:$0xff] %v1234
    %v1261 = vpack.c.bf16 %v514, %v511
    %v1262 = vpack.c.bf16 %v522, %v519
    %v1263 = vpack.c.bf16 %v530, %v527
    %v1264 = vpack.c.bf16 %v538, %v535
    %s1265 = scalar_lea.vmem [#allocation10], 384
    %v1266 = vld [vmem:[%s1265] sm:$0xff]
    %v1267 = vld [vmem:[%s1265 + $0x8] sm:$0xf]
    %v1268 = vld [vmem:[%s1265 + $0xc] sm:$0xff]
    %v1269 = vld [vmem:[%s1265 + $0x14] sm:$0xf]
    %v1270 = vld [vmem:[%s1265 + $0x18] sm:$0xff]
    %v1271 = vld [vmem:[%s1265 + $0x20] sm:$0xf]
    %v1272 = vld [vmem:[%s1265 + $0x24] sm:$0xff]
    %v1273 = vld [vmem:[%s1265 + $0x2c] sm:$0xf]
    %v1274 = vld [vmem:[%s1265 + $0x30] sm:$0xff]
    %v1275 = vld [vmem:[%s1265 + $0x38] sm:$0xf]
    %v1276 = vld [vmem:[%s1265 + $0x3c] sm:$0xff]
    %v1277 = vld [vmem:[%s1265 + $0x44] sm:$0xf]
    %v1278 = vld [vmem:[%s1265 + $0x48] sm:$0xff]
    %v1279 = vld [vmem:[%s1265 + $0x50] sm:$0xf]
    %v1280 = vld [vmem:[%s1265 + $0x54] sm:$0xff]
    %v1281 = vld [vmem:[%s1265 + $0x5c] sm:$0xf]
    %v1282 = vld [vmem:[%s1265 + $0x60] sm:$0xff]
    %v1283 = vld [vmem:[%s1265 + $0x68] sm:$0xf]
    %v1284 = vld [vmem:[%s1265 + $0x6c] sm:$0xff]
    %v1285 = vld [vmem:[%s1265 + $0x74] sm:$0xf]
    %v1286 = vld [vmem:[%s1265 + $0x78] sm:$0xff]
    %v1287 = vld [vmem:[%s1265 + $0x80] sm:$0xf]
    %v1288 = vld [vmem:[%s1265 + $0x84] sm:$0xff]
    %v1289 = vld [vmem:[%s1265 + $0x8c] sm:$0xf]
    %v1290 = vld [vmem:[%s1265 + $0x90] sm:$0xff]
    %v1291 = vld [vmem:[%s1265 + $0x98] sm:$0xf]
    %v1292 = vld [vmem:[%s1265 + $0x9c] sm:$0xff]
    %v1293 = vld [vmem:[%s1265 + $0xa4] sm:$0xf]
    %v1294 = vld [vmem:[%s1265 + $0xa8] sm:$0xff]
    %v1295 = vld [vmem:[%s1265 + $0xb0] sm:$0xf]
    %v1296 = vld [vmem:[%s1265 + $0xb4] sm:$0xff]
    %v1297 = vld [vmem:[%s1265 + $0xbc] sm:$0xf]
    %s1298 = scalar_lea.vmem [#allocation12], 6
    %v1299 = vld [vmem:[%s1298] sm:$0x7]
    %v1301 = vlaneseq
    %v1302 = vshrl.u32 %v1301, 7
    %v1303 = vsub.s32 0, %v1302
    %v1304 = vrot.slane %v1299, %v1303
    %v1305 = vlaneseq
    %v1306 = vshrl.u32 %v1305, 7
    %v1307 = vsub.s32 1, %v1306
    %v1308 = vrot.slane %v1299, %v1307
    %v1309 = vlaneseq
    %v1310 = vshrl.u32 %v1309, 7
    %v1311 = vsub.s32 2, %v1310
    %v1312 = vrot.slane %v1299, %v1311
    %v1348 = vunpack.c.l.b16 %v1266
    %v1349 = vunpack.c.h.b16 %v1266
    %v1350 = vunpack.c.l.b16 %v1267
    %v1351 = vunpack.c.l.b16 %v1268
    %v1352 = vunpack.c.h.b16 %v1268
    %v1353 = vunpack.c.l.b16 %v1269
    %v1354 = vunpack.c.l.b16 %v1270
    %v1355 = vunpack.c.h.b16 %v1270
    %v1356 = vunpack.c.l.b16 %v1271
    %v1357 = vunpack.c.l.b16 %v1272
    %v1358 = vunpack.c.h.b16 %v1272
    %v1359 = vunpack.c.l.b16 %v1273
    %v1360 = vunpack.c.l.b16 %v1274
    %v1361 = vunpack.c.h.b16 %v1274
    %v1362 = vunpack.c.l.b16 %v1275
    %v1363 = vunpack.c.l.b16 %v1276
    %v1364 = vunpack.c.h.b16 %v1276
    %v1365 = vunpack.c.l.b16 %v1277
    %v1366 = vunpack.c.l.b16 %v1278
    %v1367 = vunpack.c.h.b16 %v1278
    %v1368 = vunpack.c.l.b16 %v1279
    %v1369 = vunpack.c.l.b16 %v1280
    %v1370 = vunpack.c.h.b16 %v1280
    %v1371 = vunpack.c.l.b16 %v1281
    %v1372 = vunpack.c.l.b16 %v1282
    %v1373 = vunpack.c.h.b16 %v1282
    %v1374 = vunpack.c.l.b16 %v1283
    %v1375 = vunpack.c.l.b16 %v1284
    %v1376 = vunpack.c.h.b16 %v1284
    %v1377 = vunpack.c.l.b16 %v1285
    %v1378 = vunpack.c.l.b16 %v1286
    %v1379 = vunpack.c.h.b16 %v1286
    %v1380 = vunpack.c.l.b16 %v1287
    %v1381 = vunpack.c.l.b16 %v1288
    %v1382 = vunpack.c.h.b16 %v1288
    %v1383 = vunpack.c.l.b16 %v1289
    %v1384 = vunpack.c.l.b16 %v1290
    %v1385 = vunpack.c.h.b16 %v1290
    %v1386 = vunpack.c.l.b16 %v1291
    %v1387 = vunpack.c.l.b16 %v1292
    %v1388 = vunpack.c.h.b16 %v1292
    %v1389 = vunpack.c.l.b16 %v1293
    %v1390 = vunpack.c.l.b16 %v1294
    %v1391 = vunpack.c.h.b16 %v1294
    %v1392 = vunpack.c.l.b16 %v1295
    %v1393 = vunpack.c.l.b16 %v1296
    %v1394 = vunpack.c.h.b16 %v1296
    %v1395 = vunpack.c.l.b16 %v1297
    %v1396 = vpack.c.b16 %v1351, %v1348
    %v1397 = vpack.c.b16 %v1352, %v1349
    %v1398 = vpack.c.b16 %v1353, %v1350
    %v1399 = vpack.c.b16 %v1357, %v1354
    %v1400 = vpack.c.b16 %v1358, %v1355
    %v1401 = vpack.c.b16 %v1359, %v1356
    %v1402 = vpack.c.b16 %v1363, %v1360
    %v1403 = vpack.c.b16 %v1364, %v1361
    %v1404 = vpack.c.b16 %v1365, %v1362
    %v1405 = vpack.c.b16 %v1369, %v1366
    %v1406 = vpack.c.b16 %v1370, %v1367
    %v1407 = vpack.c.b16 %v1371, %v1368
    %v1408 = vpack.c.b16 %v1375, %v1372
    %v1409 = vpack.c.b16 %v1376, %v1373
    %v1410 = vpack.c.b16 %v1377, %v1374
    %v1411 = vpack.c.b16 %v1381, %v1378
    %v1412 = vpack.c.b16 %v1382, %v1379
    %v1413 = vpack.c.b16 %v1383, %v1380
    %v1414 = vpack.c.b16 %v1387, %v1384
    %v1415 = vpack.c.b16 %v1388, %v1385
    %v1416 = vpack.c.b16 %v1389, %v1386
    %v1417 = vpack.c.b16 %v1393, %v1390
    %v1418 = vpack.c.b16 %v1394, %v1391
    %v1419 = vpack.c.b16 %v1395, %v1392
    %1444 = vmatprep.subr.bf16.mxu0 %v1397
    %1445 = vmatpush1.bf16.msra.mxu0 %v1396
    %1446 = vmatprep.subr.bf16.mxu0 %v1400
    %1447 = vmatpush1.bf16.msra.mxu0 %v1399
    %1448 = vmatprep.subr.bf16.mxu0 %v1403
    %1449 = vmatpush1.bf16.msra.mxu0 %v1402
    %1450 = vmatprep.subr.bf16.mxu0 %v1406
    %1451 = vmatpush1.bf16.msra.mxu0 %v1405
    %1452 = vmatprep.subr.bf16.mxu0 %v1409
    %1453 = vmatpush1.bf16.msra.mxu0 %v1408
    %1454 = vmatprep.subr.bf16.mxu0 %v1412
    %1455 = vmatpush1.bf16.msra.mxu0 %v1411
    %1456 = vmatprep.subr.bf16.mxu0 %v1415
    %1457 = vmatpush1.bf16.msra.mxu0 %v1414
    %1458 = vmatprep.subr.bf16.mxu0 %v1418
    %1459 = vmatpush1.bf16.msra.mxu0 %v1417
    %1460 = vmatprep.subr.bf16.mxu0 0
    %1461 = vmatpush1.bf16.msra.mxu0 0
    %1462 = vmatprep.subr.bf16.mxu0 0
    %1463 = vmatpush1.bf16.msra.mxu0 0
    %1464 = vmatprep.subr.bf16.mxu0 0
    %1465 = vmatpush1.bf16.msra.mxu0 0
    %1466 = vmatprep.subr.bf16.mxu0 0
    %1467 = vmatpush1.bf16.msra.mxu0 0
    %1468 = vmatprep.subr.bf16.mxu0 0
    %1469 = vmatpush1.bf16.msra.mxu0 0
    %1470 = vmatprep.subr.bf16.mxu0 0
    %1471 = vmatpush1.bf16.msra.mxu0 0
    %1472 = vmatprep.subr.bf16.mxu0 0
    %1473 = vmatpush1.bf16.msra.mxu0 0
    %1474 = vmatprep.subr.bf16.mxu0 0
    %1475 = vmatpush1.bf16.msra.mxu0 0
    %1476 = vmatprep.mubr.bf16.mxu0 0
    %1477 = vmatmul.mubr.bf16.gmra.mrb[0].mxu0 %v1261
    %v1478 = vpop.f32.mrb[0].mxu0
    %v1479 = vadd.f32 %v1304, %v1478
    %v1480 = vpop.f32.mrb[0].mxu0
    %v1481 = vadd.f32 %v1308, %v1480
    %v1482 = vpop.f32.mrb[0].mxu0
    %v1483 = vadd.f32 %v1304, %v1482
    %v1484 = vpop.f32.mrb[0].mxu0
    %v1485 = vadd.f32 %v1308, %v1484
    %1486 = vmatprep.mubr.bf16.mxu0 0
    %1487 = vmatmul.mubr.bf16.gmra.mrb[0].mxu0 %v1262
    %v1488 = vpop.f32.mrb[0].mxu0
    %v1489 = vadd.f32 %v1304, %v1488
    %v1490 = vpop.f32.mrb[0].mxu0
    %v1491 = vadd.f32 %v1308, %v1490
    %v1492 = vpop.f32.mrb[0].mxu0
    %v1493 = vadd.f32 %v1304, %v1492
    %v1494 = vpop.f32.mrb[0].mxu0
    %v1495 = vadd.f32 %v1308, %v1494
    %1496 = vmatprep.mubr.bf16.mxu0 0
    %1497 = vmatmul.mubr.bf16.gmra.mrb[0].mxu0 %v1263
    %v1498 = vpop.f32.mrb[0].mxu0
    %v1499 = vadd.f32 %v1304, %v1498
    %v1500 = vpop.f32.mrb[0].mxu0
    %v1501 = vadd.f32 %v1308, %v1500
    %v1502 = vpop.f32.mrb[0].mxu0
    %v1503 = vadd.f32 %v1304, %v1502
    %v1504 = vpop.f32.mrb[0].mxu0
    %v1505 = vadd.f32 %v1308, %v1504
    %1506 = vmatprep.mubr.bf16.mxu0 0
    %1507 = vmatmul.mubr.bf16.gmra.mrb[0].mxu0 %v1264
    %v1508 = vpop.f32.mrb[0].mxu0
    %v1509 = vadd.f32 %v1304, %v1508
    %v1510 = vpop.f32.mrb[0].mxu0
    %v1511 = vadd.f32 %v1308, %v1510
    %v1512 = vpop.f32.mrb[0].mxu0
    %v1513 = vadd.f32 %v1304, %v1512
    %v1514 = vpop.f32.mrb[0].mxu0
    %v1515 = vadd.f32 %v1308, %v1514
    %1516 = vdwg.mxu0
    %1517 = vmatprep.subr.bf16.mxu0 0
    %1518 = vmatpush1.bf16.msra.mxu0 %v1398
    %1519 = vmatprep.subr.bf16.mxu0 0
    %1520 = vmatpush1.bf16.msra.mxu0 %v1401
    %1521 = vmatprep.subr.bf16.mxu0 0
    %1522 = vmatpush1.bf16.msra.mxu0 %v1404
    %1523 = vmatprep.subr.bf16.mxu0 0
    %1524 = vmatpush1.bf16.msra.mxu0 %v1407
    %1525 = vmatprep.subr.bf16.mxu0 0
    %1526 = vmatpush1.bf16.msra.mxu0 %v1410
    %1527 = vmatprep.subr.bf16.mxu0 0
    %1528 = vmatpush1.bf16.msra.mxu0 %v1413
    %1529 = vmatprep.subr.bf16.mxu0 0
    %1530 = vmatpush1.bf16.msra.mxu0 %v1416
    %1531 = vmatprep.subr.bf16.mxu0 0
    %1532 = vmatpush1.bf16.msra.mxu0 %v1419
    %1533 = vmatprep.subr.bf16.mxu0 0
    %1534 = vmatpush1.bf16.msra.mxu0 0
    %1535 = vmatprep.subr.bf16.mxu0 0
    %1536 = vmatpush1.bf16.msra.mxu0 0
    %1537 = vmatprep.subr.bf16.mxu0 0
    %1538 = vmatpush1.bf16.msra.mxu0 0
    %1539 = vmatprep.subr.bf16.mxu0 0
    %1540 = vmatpush1.bf16.msra.mxu0 0
    %1541 = vmatprep.subr.bf16.mxu0 0
    %1542 = vmatpush1.bf16.msra.mxu0 0
    %1543 = vmatprep.subr.bf16.mxu0 0
    %1544 = vmatpush1.bf16.msra.mxu0 0
    %1545 = vmatprep.subr.bf16.mxu0 0
    %1546 = vmatpush1.bf16.msra.mxu0 0
    %1547 = vmatprep.subr.bf16.mxu0 0
    %1548 = vmatpush1.bf16.msra.mxu0 0
    %1549 = vmatprep.mubr.bf16.mxu0 0
    %1550 = vmatmul.mubr.bf16.gmra.mrb[0].mxu0 %v1261
    %v1551 = vpop.f32.mrb[0].mxu0
    %v1552 = vadd.f32 %v1312, %v1551
    %v1553 = vpop.f32.mrb[0].mxu0
    %v1554 = vpop.f32.mrb[0].mxu0
    %v1555 = vadd.f32 %v1312, %v1554
    %v1556 = vpop.f32.mrb[0].mxu0
    %1557 = vmatprep.mubr.bf16.mxu0 0
    %1558 = vmatmul.mubr.bf16.gmra.mrb[0].mxu0 %v1262
    %v1559 = vpop.f32.mrb[0].mxu0
    %v1560 = vadd.f32 %v1312, %v1559
    %v1561 = vpop.f32.mrb[0].mxu0
    %v1562 = vpop.f32.mrb[0].mxu0
    %v1563 = vadd.f32 %v1312, %v1562
    %v1564 = vpop.f32.mrb[0].mxu0
    %1565 = vmatprep.mubr.bf16.mxu0 0
    %1566 = vmatmul.mubr.bf16.gmra.mrb[0].mxu0 %v1263
    %v1567 = vpop.f32.mrb[0].mxu0
    %v1568 = vadd.f32 %v1312, %v1567
    %v1569 = vpop.f32.mrb[0].mxu0
    %v1570 = vpop.f32.mrb[0].mxu0
    %v1571 = vadd.f32 %v1312, %v1570
    %v1572 = vpop.f32.mrb[0].mxu0
    %1573 = vmatprep.mubr.bf16.mxu0 0
    %1574 = vmatmul.mubr.bf16.gmra.mrb[0].mxu0 %v1264
    %v1575 = vpop.f32.mrb[0].mxu0
    %v1576 = vadd.f32 %v1312, %v1575
    %v1577 = vpop.f32.mrb[0].mxu0
    %v1578 = vpop.f32.mrb[0].mxu0
    %v1579 = vadd.f32 %v1312, %v1578
    %v1580 = vpop.f32.mrb[0].mxu0
    %1581 = vdwg.mxu0
    %1582 = vst [vmem:[#allocation2 + $0x10] sm:$0xff] %v1479
    %1583 = vst [vmem:[#allocation2 + $0x78] sm:$0xff] %v1483
    %1584 = vst [vmem:[#allocation2 + $0xe0] sm:$0xff] %v1489
    %1585 = vst [vmem:[#allocation2 + $0x148] sm:$0xff] %v1493
    %1586 = vst [vmem:[#allocation2 + $0x1b0] sm:$0xff] %v1499
    %1587 = vst [vmem:[#allocation2 + $0x218] sm:$0xff] %v1503
    %1588 = vst [vmem:[#allocation2 + $0x280] sm:$0xff] %v1509
    %1589 = vst [vmem:[#allocation2 + $0x2e8] sm:$0xff] %v1513
    %1590 = vst [vmem:[#allocation2 + $0x28] sm:$0xff] %v1481
    %1591 = vst [vmem:[#allocation2 + $0x90] sm:$0xff] %v1485
    %1592 = vst [vmem:[#allocation2 + $0xf8] sm:$0xff] %v1491
    %1593 = vst [vmem:[#allocation2 + $0x160] sm:$0xff] %v1495
    %1594 = vst [vmem:[#allocation2 + $0x1c8] sm:$0xff] %v1501
    %1595 = vst [vmem:[#allocation2 + $0x230] sm:$0xff] %v1505
    %1596 = vst [vmem:[#allocation2 + $0x298] sm:$0xff] %v1511
    %1597 = vst [vmem:[#allocation2 + $0x300] sm:$0xff] %v1515
    %1598 = vst [vmem:[#allocation2 + $0x40] sm:$0xff] %v1552
    %1599 = vst [vmem:[#allocation2 + $0xa8] sm:$0xff] %v1555
    %1600 = vst [vmem:[#allocation2 + $0x110] sm:$0xff] %v1560
    %1601 = vst [vmem:[#allocation2 + $0x178] sm:$0xff] %v1563
    %1602 = vst [vmem:[#allocation2 + $0x1e0] sm:$0xff] %v1568
    %1603 = vst [vmem:[#allocation2 + $0x248] sm:$0xff] %v1571
    %1604 = vst [vmem:[#allocation2 + $0x2b0] sm:$0xff] %v1576
    %1605 = vst [vmem:[#allocation2 + $0x318] sm:$0xff] %v1579
    %v1606 = vpack.c.bf16 %v546, %v543
    %v1607 = vpack.c.bf16 %v554, %v551
    %v1608 = vpack.c.bf16 %v562, %v559
    %v1609 = vpack.c.bf16 %v570, %v567
    %v1610 = vld [vmem:[#allocation15] sm:$0xff]
    %v1611 = vld [vmem:[#allocation15 + $0x8] sm:$0xff]
    %v1612 = vld [vmem:[#allocation15 + $0x10] sm:$0xff]
    %v1613 = vld [vmem:[#allocation15 + $0x18] sm:$0xff]
    %v1614 = vld [vmem:[#allocation15 + $0x20] sm:$0xff]
    %v1615 = vld [vmem:[#allocation15 + $0x28] sm:$0xff]
    %v1616 = vld [vmem:[#allocation15 + $0x30] sm:$0xff]
    %v1617 = vld [vmem:[#allocation15 + $0x38] sm:$0xff]
    %v1618 = vld [vmem:[#allocation15 + $0x40] sm:$0xff]
    %v1619 = vld [vmem:[#allocation15 + $0x48] sm:$0xff]
    %v1620 = vld [vmem:[#allocation15 + $0x50] sm:$0xff]
    %v1621 = vld [vmem:[#allocation15 + $0x58] sm:$0xff]
    %v1622 = vld [vmem:[#allocation15 + $0x60] sm:$0xff]
    %v1623 = vld [vmem:[#allocation15 + $0x68] sm:$0xff]
    %v1624 = vld [vmem:[#allocation15 + $0x70] sm:$0xff]
    %v1625 = vld [vmem:[#allocation15 + $0x78] sm:$0xff]
    %v1626 = vld [vmem:[#allocation15 + $0x80] sm:$0xff]
    %v1627 = vld [vmem:[#allocation15 + $0x88] sm:$0xff]
    %v1628 = vld [vmem:[#allocation15 + $0x90] sm:$0xff]
    %v1629 = vld [vmem:[#allocation15 + $0x98] sm:$0xff]
    %v1630 = vld [vmem:[#allocation15 + $0xa0] sm:$0xff]
    %v1631 = vld [vmem:[#allocation15 + $0xa8] sm:$0xff]
    %v1632 = vld [vmem:[#allocation15 + $0xb0] sm:$0xff]
    %v1633 = vld [vmem:[#allocation15 + $0xb8] sm:$0xff]
    %v1634 = vld [vmem:[#allocation15 + $0xc0] sm:$0xff]
    %v1635 = vld [vmem:[#allocation15 + $0xc8] sm:$0xff]
    %v1636 = vld [vmem:[#allocation15 + $0xd0] sm:$0xff]
    %v1637 = vld [vmem:[#allocation15 + $0xd8] sm:$0xff]
    %v1638 = vld [vmem:[#allocation15 + $0xe0] sm:$0xff]
    %v1639 = vld [vmem:[#allocation15 + $0xe8] sm:$0xff]
    %v1640 = vld [vmem:[#allocation15 + $0xf0] sm:$0xff]
    %v1641 = vld [vmem:[#allocation15 + $0xf8] sm:$0xff]
    %v1642 = vld [vmem:[#allocation16] sm:$0xf]
    %v1644 = vlaneseq
    %v1645 = vshrl.u32 %v1644, 7
    %v1646 = vsub.s32 0, %v1645
    %v1647 = vrot.slane %v1642, %v1646
    %v1648 = vlaneseq
    %v1649 = vshrl.u32 %v1648, 7
    %v1650 = vsub.s32 1, %v1649
    %v1651 = vrot.slane %v1642, %v1650
    %v1652 = vlaneseq
    %v1653 = vshrl.u32 %v1652, 7
    %v1654 = vsub.s32 2, %v1653
    %v1655 = vrot.slane %v1642, %v1654
    %v1656 = vlaneseq
    %v1657 = vshrl.u32 %v1656, 7
    %v1658 = vsub.s32 3, %v1657
    %v1659 = vrot.slane %v1642, %v1658
    %v1696 = vunpack.c.l.b16 %v1610
    %v1697 = vunpack.c.h.b16 %v1610
    %v1698 = vunpack.c.l.b16 %v1611
    %v1699 = vunpack.c.h.b16 %v1611
    %v1700 = vunpack.c.l.b16 %v1612
    %v1701 = vunpack.c.h.b16 %v1612
    %v1702 = vunpack.c.l.b16 %v1613
    %v1703 = vunpack.c.h.b16 %v1613
    %v1704 = vunpack.c.l.b16 %v1614
    %v1705 = vunpack.c.h.b16 %v1614
    %v1706 = vunpack.c.l.b16 %v1615
    %v1707 = vunpack.c.h.b16 %v1615
    %v1708 = vunpack.c.l.b16 %v1616
    %v1709 = vunpack.c.h.b16 %v1616
    %v1710 = vunpack.c.l.b16 %v1617
    %v1711 = vunpack.c.h.b16 %v1617
    %v1712 = vunpack.c.l.b16 %v1618
    %v1713 = vunpack.c.h.b16 %v1618
    %v1714 = vunpack.c.l.b16 %v1619
    %v1715 = vunpack.c.h.b16 %v1619
    %v1716 = vunpack.c.l.b16 %v1620
    %v1717 = vunpack.c.h.b16 %v1620
    %v1718 = vunpack.c.l.b16 %v1621
    %v1719 = vunpack.c.h.b16 %v1621
    %v1720 = vunpack.c.l.b16 %v1622
    %v1721 = vunpack.c.h.b16 %v1622
    %v1722 = vunpack.c.l.b16 %v1623
    %v1723 = vunpack.c.h.b16 %v1623
    %v1724 = vunpack.c.l.b16 %v1624
    %v1725 = vunpack.c.h.b16 %v1624
    %v1726 = vunpack.c.l.b16 %v1625
    %v1727 = vunpack.c.h.b16 %v1625
    %v1728 = vunpack.c.l.b16 %v1626
    %v1729 = vunpack.c.h.b16 %v1626
    %v1730 = vunpack.c.l.b16 %v1627
    %v1731 = vunpack.c.h.b16 %v1627
    %v1732 = vunpack.c.l.b16 %v1628
    %v1733 = vunpack.c.h.b16 %v1628
    %v1734 = vunpack.c.l.b16 %v1629
    %v1735 = vunpack.c.h.b16 %v1629
    %v1736 = vunpack.c.l.b16 %v1630
    %v1737 = vunpack.c.h.b16 %v1630
    %v1738 = vunpack.c.l.b16 %v1631
    %v1739 = vunpack.c.h.b16 %v1631
    %v1740 = vunpack.c.l.b16 %v1632
    %v1741 = vunpack.c.h.b16 %v1632
    %v1742 = vunpack.c.l.b16 %v1633
    %v1743 = vunpack.c.h.b16 %v1633
    %v1744 = vunpack.c.l.b16 %v1634
    %v1745 = vunpack.c.h.b16 %v1634
    %v1746 = vunpack.c.l.b16 %v1635
    %v1747 = vunpack.c.h.b16 %v1635
    %v1748 = vunpack.c.l.b16 %v1636
    %v1749 = vunpack.c.h.b16 %v1636
    %v1750 = vunpack.c.l.b16 %v1637
    %v1751 = vunpack.c.h.b16 %v1637
    %v1752 = vunpack.c.l.b16 %v1638
    %v1753 = vunpack.c.h.b16 %v1638
    %v1754 = vunpack.c.l.b16 %v1639
    %v1755 = vunpack.c.h.b16 %v1639
    %v1756 = vunpack.c.l.b16 %v1640
    %v1757 = vunpack.c.h.b16 %v1640
    %v1758 = vunpack.c.l.b16 %v1641
    %v1759 = vunpack.c.h.b16 %v1641
    %v1760 = vpack.c.b16 %v1700, %v1696
    %v1761 = vpack.c.b16 %v1701, %v1697
    %v1762 = vpack.c.b16 %v1702, %v1698
    %v1763 = vpack.c.b16 %v1703, %v1699
    %v1764 = vpack.c.b16 %v1708, %v1704
    %v1765 = vpack.c.b16 %v1709, %v1705
    %v1766 = vpack.c.b16 %v1710, %v1706
    %v1767 = vpack.c.b16 %v1711, %v1707
    %v1768 = vpack.c.b16 %v1716, %v1712
    %v1769 = vpack.c.b16 %v1717, %v1713
    %v1770 = vpack.c.b16 %v1718, %v1714
    %v1771 = vpack.c.b16 %v1719, %v1715
    %v1772 = vpack.c.b16 %v1724, %v1720
    %v1773 = vpack.c.b16 %v1725, %v1721
    %v1774 = vpack.c.b16 %v1726, %v1722
    %v1775 = vpack.c.b16 %v1727, %v1723
    %v1776 = vpack.c.b16 %v1732, %v1728
    %v1777 = vpack.c.b16 %v1733, %v1729
    %v1778 = vpack.c.b16 %v1734, %v1730
    %v1779 = vpack.c.b16 %v1735, %v1731
    %v1780 = vpack.c.b16 %v1740, %v1736
    %v1781 = vpack.c.b16 %v1741, %v1737
    %v1782 = vpack.c.b16 %v1742, %v1738
    %v1783 = vpack.c.b16 %v1743, %v1739
    %v1784 = vpack.c.b16 %v1748, %v1744
    %v1785 = vpack.c.b16 %v1749, %v1745
    %v1786 = vpack.c.b16 %v1750, %v1746
    %v1787 = vpack.c.b16 %v1751, %v1747
    %v1788 = vpack.c.b16 %v1756, %v1752
    %v1789 = vpack.c.b16 %v1757, %v1753
    %v1790 = vpack.c.b16 %v1758, %v1754
    %v1791 = vpack.c.b16 %v1759, %v1755
    %1824 = vmatprep.subr.bf16.mxu0 %v1761
    %1825 = vmatpush1.bf16.msra.mxu0 %v1760
    %1826 = vmatprep.subr.bf16.mxu0 %v1765
    %1827 = vmatpush1.bf16.msra.mxu0 %v1764
    %1828 = vmatprep.subr.bf16.mxu0 %v1769
    %1829 = vmatpush1.bf16.msra.mxu0 %v1768
    %1830 = vmatprep.subr.bf16.mxu0 %v1773
    %1831 = vmatpush1.bf16.msra.mxu0 %v1772
    %1832 = vmatprep.subr.bf16.mxu0 %v1777
    %1833 = vmatpush1.bf16.msra.mxu0 %v1776
    %1834 = vmatprep.subr.bf16.mxu0 %v1781
    %1835 = vmatpush1.bf16.msra.mxu0 %v1780
    %1836 = vmatprep.subr.bf16.mxu0 %v1785
    %1837 = vmatpush1.bf16.msra.mxu0 %v1784
    %1838 = vmatprep.subr.bf16.mxu0 %v1789
    %1839 = vmatpush1.bf16.msra.mxu0 %v1788
    %1840 = vmatprep.subr.bf16.mxu0 0
    %1841 = vmatpush1.bf16.msra.mxu0 0
    %1842 = vmatprep.subr.bf16.mxu0 0
    %1843 = vmatpush1.bf16.msra.mxu0 0
    %1844 = vmatprep.subr.bf16.mxu0 0
    %1845 = vmatpush1.bf16.msra.mxu0 0
    %1846 = vmatprep.subr.bf16.mxu0 0
    %1847 = vmatpush1.bf16.msra.mxu0 0
    %1848 = vmatprep.subr.bf16.mxu0 0
    %1849 = vmatpush1.bf16.msra.mxu0 0
    %1850 = vmatprep.subr.bf16.mxu0 0
    %1851 = vmatpush1.bf16.msra.mxu0 0
    %1852 = vmatprep.subr.bf16.mxu0 0
    %1853 = vmatpush1.bf16.msra.mxu0 0
    %1854 = vmatprep.subr.bf16.mxu0 0
    %1855 = vmatpush1.bf16.msra.mxu0 0
    %1856 = vmatprep.mubr.bf16.mxu0 0
    %1857 = vmatmul.mubr.bf16.gmra.mrb[0].mxu0 %v1606
    %v1858 = vpop.f32.mrb[0].mxu0
    %v1859 = vadd.f32 %v1647, %v1858
    %v1860 = vpop.f32.mrb[0].mxu0
    %v1861 = vadd.f32 %v1651, %v1860
    %v1862 = vpop.f32.mrb[0].mxu0
    %v1863 = vadd.f32 %v1647, %v1862
    %v1864 = vpop.f32.mrb[0].mxu0
    %v1865 = vadd.f32 %v1651, %v1864
    %1866 = vmatprep.mubr.bf16.mxu0 0
    %1867 = vmatmul.mubr.bf16.gmra.mrb[0].mxu0 %v1607
    %v1868 = vpop.f32.mrb[0].mxu0
    %v1869 = vadd.f32 %v1647, %v1868
    %v1870 = vpop.f32.mrb[0].mxu0
    %v1871 = vadd.f32 %v1651, %v1870
    %v1872 = vpop.f32.mrb[0].mxu0
    %v1873 = vadd.f32 %v1647, %v1872
    %v1874 = vpop.f32.mrb[0].mxu0
    %v1875 = vadd.f32 %v1651, %v1874
    %1876 = vmatprep.mubr.bf16.mxu0 0
    %1877 = vmatmul.mubr.bf16.gmra.mrb[0].mxu0 %v1608
    %v1878 = vpop.f32.mrb[0].mxu0
    %v1879 = vadd.f32 %v1647, %v1878
    %v1880 = vpop.f32.mrb[0].mxu0
    %v1881 = vadd.f32 %v1651, %v1880
    %v1882 = vpop.f32.mrb[0].mxu0
    %v1883 = vadd.f32 %v1647, %v1882
    %v1884 = vpop.f32.mrb[0].mxu0
    %v1885 = vadd.f32 %v1651, %v1884
    %1886 = vmatprep.mubr.bf16.mxu0 0
    %1887 = vmatmul.mubr.bf16.gmra.mrb[0].mxu0 %v1609
    %v1888 = vpop.f32.mrb[0].mxu0
    %v1889 = vadd.f32 %v1647, %v1888
    %v1890 = vpop.f32.mrb[0].mxu0
    %v1891 = vadd.f32 %v1651, %v1890
    %v1892 = vpop.f32.mrb[0].mxu0
    %v1893 = vadd.f32 %v1647, %v1892
    %v1894 = vpop.f32.mrb[0].mxu0
    %v1895 = vadd.f32 %v1651, %v1894
    %1896 = vdwg.mxu0
    %1897 = vmatprep.subr.bf16.mxu0 %v1763
    %1898 = vmatpush1.bf16.msra.mxu0 %v1762
    %1899 = vmatprep.subr.bf16.mxu0 %v1767
    %1900 = vmatpush1.bf16.msra.mxu0 %v1766
    %1901 = vmatprep.subr.bf16.mxu0 %v1771
    %1902 = vmatpush1.bf16.msra.mxu0 %v1770
    %1903 = vmatprep.subr.bf16.mxu0 %v1775
    %1904 = vmatpush1.bf16.msra.mxu0 %v1774
    %1905 = vmatprep.subr.bf16.mxu0 %v1779
    %1906 = vmatpush1.bf16.msra.mxu0 %v1778
    %1907 = vmatprep.subr.bf16.mxu0 %v1783
    %1908 = vmatpush1.bf16.msra.mxu0 %v1782
    %1909 = vmatprep.subr.bf16.mxu0 %v1787
    %1910 = vmatpush1.bf16.msra.mxu0 %v1786
    %1911 = vmatprep.subr.bf16.mxu0 %v1791
    %1912 = vmatpush1.bf16.msra.mxu0 %v1790
    %1913 = vmatprep.subr.bf16.mxu0 0
    %1914 = vmatpush1.bf16.msra.mxu0 0
    %1915 = vmatprep.subr.bf16.mxu0 0
    %1916 = vmatpush1.bf16.msra.mxu0 0
    %1917 = vmatprep.subr.bf16.mxu0 0
    %1918 = vmatpush1.bf16.msra.mxu0 0
    %1919 = vmatprep.subr.bf16.mxu0 0
    %1920 = vmatpush1.bf16.msra.mxu0 0
    %1921 = vmatprep.subr.bf16.mxu0 0
    %1922 = vmatpush1.bf16.msra.mxu0 0
    %1923 = vmatprep.subr.bf16.mxu0 0
    %1924 = vmatpush1.bf16.msra.mxu0 0
    %1925 = vmatprep.subr.bf16.mxu0 0
    %1926 = vmatpush1.bf16.msra.mxu0 0
    %1927 = vmatprep.subr.bf16.mxu0 0
    %1928 = vmatpush1.bf16.msra.mxu0 0
    %1929 = vmatprep.mubr.bf16.mxu0 0
    %1930 = vmatmul.mubr.bf16.gmra.mrb[0].mxu0 %v1606
    %v1931 = vpop.f32.mrb[0].mxu0
    %v1932 = vadd.f32 %v1655, %v1931
    %v1933 = vpop.f32.mrb[0].mxu0
    %v1934 = vadd.f32 %v1659, %v1933
    %v1935 = vpop.f32.mrb[0].mxu0
    %v1936 = vadd.f32 %v1655, %v1935
    %v1937 = vpop.f32.mrb[0].mxu0
    %v1938 = vadd.f32 %v1659, %v1937
    %1939 = vmatprep.mubr.bf16.mxu0 0
    %1940 = vmatmul.mubr.bf16.gmra.mrb[0].mxu0 %v1607
    %v1941 = vpop.f32.mrb[0].mxu0
    %v1942 = vadd.f32 %v1655, %v1941
    %v1943 = vpop.f32.mrb[0].mxu0
    %v1944 = vadd.f32 %v1659, %v1943
    %v1945 = vpop.f32.mrb[0].mxu0
    %v1946 = vadd.f32 %v1655, %v1945
    %v1947 = vpop.f32.mrb[0].mxu0
    %v1948 = vadd.f32 %v1659, %v1947
    %1949 = vmatprep.mubr.bf16.mxu0 0
    %1950 = vmatmul.mubr.bf16.gmra.mrb[0].mxu0 %v1608
    %v1951 = vpop.f32.mrb[0].mxu0
    %v1952 = vadd.f32 %v1655, %v1951
    %v1953 = vpop.f32.mrb[0].mxu0
    %v1954 = vadd.f32 %v1659, %v1953
    %v1955 = vpop.f32.mrb[0].mxu0
    %v1956 = vadd.f32 %v1655, %v1955
    %v1957 = vpop.f32.mrb[0].mxu0
    %v1958 = vadd.f32 %v1659, %v1957
    %1959 = vmatprep.mubr.bf16.mxu0 0
    %1960 = vmatmul.mubr.bf16.gmra.mrb[0].mxu0 %v1609
    %v1961 = vpop.f32.mrb[0].mxu0
    %v1962 = vadd.f32 %v1655, %v1961
    %v1963 = vpop.f32.mrb[0].mxu0
    %v1964 = vadd.f32 %v1659, %v1963
    %v1965 = vpop.f32.mrb[0].mxu0
    %v1966 = vadd.f32 %v1655, %v1965
    %v1967 = vpop.f32.mrb[0].mxu0
    %v1968 = vadd.f32 %v1659, %v1967
    %1969 = vdwg.mxu0
    %v1970 = vlaneseq
    %v1971 = vand.u32 %v1970, 127
    %v1972 = vadd.s32 %v1971, 128
    %v1973 = vadd.s32 %v1971, 256
    %v1974 = vadd.s32 %v1971, 384
    %vm1975 = vcmp.lt.s32.totalorder %v1971, 0
    %v1976 = vsub.s32 0, %v1971
    %v1977 = vsel %vm1975, %v1976, %v1971
    %v1978 = vshrl.u32 %v1977, 7
    %v1979 = vand.u32 %v1977, 127
    %v1980 = vsub.s32 0, %v1979
    %v1981 = vsel %vm1975, %v1980, %v1979
    %vm1982 = vcmp.lt.s32.totalorder %v1972, 0
    %v1983 = vsub.s32 0, %v1972
    %v1984 = vsel %vm1982, %v1983, %v1972
    %v1985 = vshrl.u32 %v1984, 7
    %v1986 = vand.u32 %v1984, 127
    %v1987 = vsub.s32 0, %v1986
    %v1988 = vsel %vm1982, %v1987, %v1986
    %vm1989 = vcmp.lt.s32.totalorder %v1973, 0
    %v1990 = vsub.s32 0, %v1973
    %v1991 = vsel %vm1989, %v1990, %v1973
    %v1992 = vshrl.u32 %v1991, 7
    %v1993 = vand.u32 %v1991, 127
    %v1994 = vsub.s32 0, %v1993
    %v1995 = vsel %vm1989, %v1994, %v1993
    %vm1996 = vcmp.lt.s32.totalorder %v1974, 0
    %v1997 = vsub.s32 0, %v1974
    %v1998 = vsel %vm1996, %v1997, %v1974
    %v1999 = vshrl.u32 %v1998, 7
    %v2000 = vand.u32 %v1998, 127
    %v2001 = vsub.s32 0, %v2000
    %v2002 = vsel %vm1996, %v2001, %v2000
    %vm2003 = vcmp.ne.s32.totalorder %v1981, 0
    %vm2004 = vcmp.ne.s32.totalorder %v1988, 0
    %vm2005 = vcmp.ne.s32.totalorder %v1995, 0
    %vm2006 = vcmp.ne.s32.totalorder %v2002, 0
    %vm2007 = vcmp.lt.s32.totalorder %v1981, 0
    %vm2008 = vcmp.lt.s32.totalorder %v1988, 0
    %vm2009 = vcmp.lt.s32.totalorder %v1995, 0
    %vm2010 = vcmp.lt.s32.totalorder %v2002, 0
    %vm2011 = vmand %vm2007, %vm2003
    %vm2012 = vmand %vm2008, %vm2004
    %vm2013 = vmand %vm2009, %vm2005
    %vm2014 = vmand %vm2010, %vm2006
    %v2015 = vadd.s32 %v1981, 128
    %v2016 = vadd.s32 %v1988, 128
    %v2017 = vadd.s32 %v1995, 128
    %v2018 = vadd.s32 %v2002, 128
    %v2019 = vsel %vm2011, %v2015, %v1981
    %v2020 = vsel %vm2012, %v2016, %v1988
    %v2021 = vsel %vm2013, %v2017, %v1995
    %v2022 = vsel %vm2014, %v2018, %v2002
    %vm2023 = vcmp.lt.s32.totalorder %v2019, 64
    %vm2024 = vcmp.lt.s32.totalorder %v2020, 64
    %vm2025 = vcmp.lt.s32.totalorder %v2021, 64
    %vm2026 = vcmp.lt.s32.totalorder %v2022, 64
    %v2027 = vsel %vm2023, %v1859, %v1893
    %v2028 = vsel %vm2024, %v1861, %v1895
    %v2029 = vsel %vm2025, %v1932, %v1966
    %v2030 = vsel %vm2026, %v1934, %v1968
    %2031 = vst [vmem:[#allocation2 + $0x48] sm:$0xff] %v2027
    %2032 = vst [vmem:[#allocation2 + $0x50] sm:$0xff] %v2028
    %2033 = vst [vmem:[#allocation2 + $0x58] sm:$0xff] %v2029
    %2034 = vst [vmem:[#allocation2 + $0x60] sm:$0xff] %v2030
    %v2035 = vsel %vm2023, %v1863, %v1889
    %v2036 = vsel %vm2024, %v1865, %v1891
    %v2037 = vsel %vm2025, %v1936, %v1962
    %v2038 = vsel %vm2026, %v1938, %v1964
    %s2039 = scalar_lea.vmem [#allocation2], 104
    %2040 = vst [vmem:[%s2039 + $0x48] sm:$0xff] %v2035
    %2041 = vst [vmem:[%s2039 + $0x50] sm:$0xff] %v2036
    %2042 = vst [vmem:[%s2039 + $0x58] sm:$0xff] %v2037
    %2043 = vst [vmem:[%s2039 + $0x60] sm:$0xff] %v2038
    %v2044 = vsel %vm2023, %v1869, %v1883
    %v2045 = vsel %vm2024, %v1871, %v1885
    %v2046 = vsel %vm2025, %v1942, %v1956
    %v2047 = vsel %vm2026, %v1944, %v1958
    %s2048 = scalar_lea.vmem [#allocation2], 208
    %2049 = vst [vmem:[%s2048 + $0x48] sm:$0xff] %v2044
    %2050 = vst [vmem:[%s2048 + $0x50] sm:$0xff] %v2045
    %2051 = vst [vmem:[%s2048 + $0x58] sm:$0xff] %v2046
    %2052 = vst [vmem:[%s2048 + $0x60] sm:$0xff] %v2047
    %v2053 = vsel %vm2023, %v1873, %v1879
    %v2054 = vsel %vm2024, %v1875, %v1881
    %v2055 = vsel %vm2025, %v1946, %v1952
    %v2056 = vsel %vm2026, %v1948, %v1954
    %s2057 = scalar_lea.vmem [#allocation2], 312
    %2058 = vst [vmem:[%s2057 + $0x48] sm:$0xff] %v2053
    %2059 = vst [vmem:[%s2057 + $0x50] sm:$0xff] %v2054
    %2060 = vst [vmem:[%s2057 + $0x58] sm:$0xff] %v2055
    %2061 = vst [vmem:[%s2057 + $0x60] sm:$0xff] %v2056
    %v2062 = vsel %vm2023, %v1879, %v1873
    %v2063 = vsel %vm2024, %v1881, %v1875
    %v2064 = vsel %vm2025, %v1952, %v1946
    %v2065 = vsel %vm2026, %v1954, %v1948
    %s2066 = scalar_lea.vmem [#allocation2], 416
    %2067 = vst [vmem:[%s2066 + $0x48] sm:$0xff] %v2062
    %2068 = vst [vmem:[%s2066 + $0x50] sm:$0xff] %v2063
    %2069 = vst [vmem:[%s2066 + $0x58] sm:$0xff] %v2064
    %2070 = vst [vmem:[%s2066 + $0x60] sm:$0xff] %v2065
    %v2071 = vsel %vm2023, %v1883, %v1869
    %v2072 = vsel %vm2024, %v1885, %v1871
    %v2073 = vsel %vm2025, %v1956, %v1942
    %v2074 = vsel %vm2026, %v1958, %v1944
    %s2075 = scalar_lea.vmem [#allocation2], 520
    %2076 = vst [vmem:[%s2075 + $0x48] sm:$0xff] %v2071
    %2077 = vst [vmem:[%s2075 + $0x50] sm:$0xff] %v2072
    %2078 = vst [vmem:[%s2075 + $0x58] sm:$0xff] %v2073
    %2079 = vst [vmem:[%s2075 + $0x60] sm:$0xff] %v2074
    %v2080 = vsel %vm2023, %v1889, %v1863
    %v2081 = vsel %vm2024, %v1891, %v1865
    %v2082 = vsel %vm2025, %v1962, %v1936
    %v2083 = vsel %vm2026, %v1964, %v1938
    %s2084 = scalar_lea.vmem [#allocation2], 624
    %2085 = vst [vmem:[%s2084 + $0x48] sm:$0xff] %v2080
    %2086 = vst [vmem:[%s2084 + $0x50] sm:$0xff] %v2081
    %2087 = vst [vmem:[%s2084 + $0x58] sm:$0xff] %v2082
    %2088 = vst [vmem:[%s2084 + $0x60] sm:$0xff] %v2083
    %v2089 = vsel %vm2023, %v1893, %v1859
    %v2090 = vsel %vm2024, %v1895, %v1861
    %v2091 = vsel %vm2025, %v1966, %v1932
    %v2092 = vsel %vm2026, %v1968, %v1934
    %s2093 = scalar_lea.vmem [#allocation2], 728
    %2094 = vst [vmem:[%s2093 + $0x48] sm:$0xff] %v2089
    %2095 = vst [vmem:[%s2093 + $0x50] sm:$0xff] %v2090
    %2096 = vst [vmem:[%s2093 + $0x58] sm:$0xff] %v2091
    %2097 = vst [vmem:[%s2093 + $0x60] sm:$0xff] %v2092
    %s2098 = smul.u32 4, 64
    %s2099 = smul.u32 %s2098, 13
    %s2100 = sshll.u32 %s2099, 4
    %2101 = dma.done [#allocation6], %s2100
    %v2102 = vld [vmem:[#allocation13] sm:$0x7]
    %v2103 = vld [vmem:[#allocation3] sm:$0xff]
    %v2104 = vld [vmem:[#allocation3 + $0x8] sm:$0xff]
    %v2105 = vld [vmem:[#allocation3 + $0x10] sm:$0xff]
    %v2106 = vld [vmem:[#allocation3 + $0x18] sm:$0xff]
    %v2107 = vld [vmem:[#allocation3 + $0x20] sm:$0xff]
    %v2108 = vld [vmem:[#allocation3 + $0x28] sm:$0xff]
    %v2109 = vld [vmem:[#allocation3 + $0x30] sm:$0xff]
    %v2110 = vld [vmem:[#allocation3 + $0x38] sm:$0xff]
    %v2111 = vld [vmem:[#allocation3 + $0x40] sm:$0xff]
    %v2112 = vld [vmem:[#allocation3 + $0x48] sm:$0xff]
    %v2113 = vld [vmem:[#allocation3 + $0x50] sm:$0xff]
    %v2114 = vld [vmem:[#allocation3 + $0x58] sm:$0xff]
    %v2115 = vld [vmem:[#allocation3 + $0x60] sm:$0xff]
    %v2116 = vld [vmem:[#allocation3 + $0x68] sm:$0xff]
    %v2117 = vld [vmem:[#allocation3 + $0x70] sm:$0xff]
    %v2118 = vld [vmem:[#allocation3 + $0x78] sm:$0xff]
    %v2119 = vld [vmem:[#allocation3 + $0x80] sm:$0xff]
    %v2120 = vld [vmem:[#allocation3 + $0x88] sm:$0xff]
    %v2121 = vld [vmem:[#allocation3 + $0x90] sm:$0xff]
    %v2122 = vld [vmem:[#allocation3 + $0x98] sm:$0xff]
    %v2123 = vld [vmem:[#allocation3 + $0xa0] sm:$0xff]
    %v2124 = vld [vmem:[#allocation3 + $0xa8] sm:$0xff]
    %v2125 = vld [vmem:[#allocation3 + $0xb0] sm:$0xff]
    %v2126 = vld [vmem:[#allocation3 + $0xb8] sm:$0xff]
    %v2127 = vld [vmem:[#allocation3 + $0xc0] sm:$0xff]
    %v2128 = vld [vmem:[#allocation3 + $0xc8] sm:$0xff]
    %v2129 = vld [vmem:[#allocation3 + $0xd0] sm:$0xff]
    %v2130 = vld [vmem:[#allocation3 + $0xd8] sm:$0xff]
    %v2131 = vld [vmem:[#allocation3 + $0xe0] sm:$0xff]
    %v2132 = vld [vmem:[#allocation3 + $0xe8] sm:$0xff]
    %v2133 = vld [vmem:[#allocation3 + $0xf0] sm:$0xff]
    %v2134 = vld [vmem:[#allocation3 + $0xf8] sm:$0xff]
    %v2135 = vld [vmem:[#allocation3 + $0x100] sm:$0xff]
    %v2136 = vld [vmem:[#allocation3 + $0x108] sm:$0xff]
    %v2137 = vld [vmem:[#allocation3 + $0x110] sm:$0xff]
    %v2138 = vld [vmem:[#allocation3 + $0x118] sm:$0xff]
    %v2139 = vld [vmem:[#allocation3 + $0x120] sm:$0xff]
    %v2140 = vld [vmem:[#allocation3 + $0x128] sm:$0xff]
    %v2141 = vld [vmem:[#allocation3 + $0x130] sm:$0xff]
    %v2142 = vld [vmem:[#allocation3 + $0x138] sm:$0xff]
    %v2143 = vld [vmem:[#allocation3 + $0x140] sm:$0xff]
    %v2144 = vld [vmem:[#allocation3 + $0x148] sm:$0xff]
    %v2145 = vld [vmem:[#allocation3 + $0x150] sm:$0xff]
    %v2146 = vld [vmem:[#allocation3 + $0x158] sm:$0xff]
    %v2147 = vld [vmem:[#allocation3 + $0x160] sm:$0xff]
    %v2148 = vld [vmem:[#allocation3 + $0x168] sm:$0xff]
    %v2149 = vld [vmem:[#allocation3 + $0x170] sm:$0xff]
    %v2150 = vld [vmem:[#allocation3 + $0x178] sm:$0xff]
    %v2151 = vld [vmem:[#allocation3 + $0x180] sm:$0xff]
    %v2152 = vld [vmem:[#allocation3 + $0x188] sm:$0xff]
    %v2153 = vld [vmem:[#allocation3 + $0x190] sm:$0xff]
    %v2154 = vld [vmem:[#allocation3 + $0x198] sm:$0xff]
    %v2155 = vld [vmem:[#allocation3 + $0x1a0] sm:$0xff]
    %v2156 = vld [vmem:[#allocation3 + $0x1a8] sm:$0xff]
    %v2157 = vld [vmem:[#allocation3 + $0x1b0] sm:$0xff]
    %v2158 = vld [vmem:[#allocation3 + $0x1b8] sm:$0xff]
    %v2159 = vld [vmem:[#allocation3 + $0x1c0] sm:$0xff]
    %v2160 = vld [vmem:[#allocation3 + $0x1c8] sm:$0xff]
    %v2161 = vld [vmem:[#allocation3 + $0x1d0] sm:$0xff]
    %v2162 = vld [vmem:[#allocation3 + $0x1d8] sm:$0xff]
    %v2163 = vld [vmem:[#allocation3 + $0x1e0] sm:$0xff]
    %v2164 = vld [vmem:[#allocation3 + $0x1e8] sm:$0xff]
    %v2165 = vld [vmem:[#allocation3 + $0x1f0] sm:$0xff]
    %v2166 = vld [vmem:[#allocation3 + $0x1f8] sm:$0xff]
    %v2167 = vld [vmem:[#allocation3 + $0x200] sm:$0xff]
    %v2168 = vld [vmem:[#allocation3 + $0x208] sm:$0xff]
    %v2169 = vld [vmem:[#allocation3 + $0x210] sm:$0xff]
    %v2170 = vld [vmem:[#allocation3 + $0x218] sm:$0xff]
    %v2171 = vld [vmem:[#allocation3 + $0x220] sm:$0xff]
    %v2172 = vld [vmem:[#allocation3 + $0x228] sm:$0xff]
    %v2173 = vld [vmem:[#allocation3 + $0x230] sm:$0xff]
    %v2174 = vld [vmem:[#allocation3 + $0x238] sm:$0xff]
    %v2175 = vld [vmem:[#allocation3 + $0x240] sm:$0xff]
    %v2176 = vld [vmem:[#allocation3 + $0x248] sm:$0xff]
    %v2177 = vld [vmem:[#allocation3 + $0x250] sm:$0xff]
    %v2178 = vld [vmem:[#allocation3 + $0x258] sm:$0xff]
    %v2179 = vld [vmem:[#allocation3 + $0x260] sm:$0xff]
    %v2180 = vld [vmem:[#allocation3 + $0x268] sm:$0xff]
    %v2181 = vld [vmem:[#allocation3 + $0x270] sm:$0xff]
    %v2182 = vld [vmem:[#allocation3 + $0x278] sm:$0xff]
    %v2183 = vld [vmem:[#allocation3 + $0x280] sm:$0xff]
    %v2184 = vld [vmem:[#allocation3 + $0x288] sm:$0xff]
    %v2185 = vld [vmem:[#allocation3 + $0x290] sm:$0xff]
    %v2186 = vld [vmem:[#allocation3 + $0x298] sm:$0xff]
    %v2187 = vld [vmem:[#allocation3 + $0x2a0] sm:$0xff]
    %v2188 = vld [vmem:[#allocation3 + $0x2a8] sm:$0xff]
    %v2189 = vld [vmem:[#allocation3 + $0x2b0] sm:$0xff]
    %v2190 = vld [vmem:[#allocation3 + $0x2b8] sm:$0xff]
    %v2191 = vld [vmem:[#allocation3 + $0x2c0] sm:$0xff]
    %v2192 = vld [vmem:[#allocation3 + $0x2c8] sm:$0xff]
    %v2193 = vld [vmem:[#allocation3 + $0x2d0] sm:$0xff]
    %v2194 = vld [vmem:[#allocation3 + $0x2d8] sm:$0xff]
    %v2195 = vld [vmem:[#allocation3 + $0x2e0] sm:$0xff]
    %v2196 = vld [vmem:[#allocation3 + $0x2e8] sm:$0xff]
    %v2197 = vld [vmem:[#allocation3 + $0x2f0] sm:$0xff]
    %v2198 = vld [vmem:[#allocation3 + $0x2f8] sm:$0xff]
    %v2199 = vld [vmem:[#allocation3 + $0x300] sm:$0xff]
    %v2200 = vld [vmem:[#allocation3 + $0x308] sm:$0xff]
    %v2201 = vld [vmem:[#allocation3 + $0x310] sm:$0xff]
    %v2202 = vld [vmem:[#allocation3 + $0x318] sm:$0xff]
    %v2203 = vld [vmem:[#allocation3 + $0x320] sm:$0xff]
    %v2204 = vld [vmem:[#allocation3 + $0x328] sm:$0xff]
    %v2205 = vld [vmem:[#allocation3 + $0x330] sm:$0xff]
    %v2206 = vld [vmem:[#allocation3 + $0x338] sm:$0xff]
    %v2207 = vld [vmem:[#allocation3 + $0x340] sm:$0xff]
    %v2208 = vld [vmem:[#allocation3 + $0x348] sm:$0xff]
    %v2209 = vld [vmem:[#allocation3 + $0x350] sm:$0xff]
    %v2210 = vld [vmem:[#allocation3 + $0x358] sm:$0xff]
    %v2211 = vld [vmem:[#allocation3 + $0x360] sm:$0xff]
    %v2212 = vld [vmem:[#allocation3 + $0x368] sm:$0xff]
    %v2213 = vld [vmem:[#allocation3 + $0x370] sm:$0xff]
    %v2214 = vld [vmem:[#allocation3 + $0x378] sm:$0xff]
    %v2215 = vld [vmem:[#allocation3 + $0x380] sm:$0xff]
    %v2216 = vld [vmem:[#allocation3 + $0x388] sm:$0xff]
    %v2217 = vld [vmem:[#allocation3 + $0x390] sm:$0xff]
    %v2218 = vld [vmem:[#allocation3 + $0x398] sm:$0xff]
    %v2219 = vld [vmem:[#allocation3 + $0x3a0] sm:$0xff]
    %v2220 = vld [vmem:[#allocation3 + $0x3a8] sm:$0xff]
    %v2221 = vld [vmem:[#allocation3 + $0x3b0] sm:$0xff]
    %v2222 = vld [vmem:[#allocation3 + $0x3b8] sm:$0xff]
    %v2223 = vld [vmem:[#allocation3 + $0x3c0] sm:$0xff]
    %v2224 = vld [vmem:[#allocation3 + $0x3c8] sm:$0xff]
    %v2225 = vld [vmem:[#allocation3 + $0x3d0] sm:$0xff]
    %v2226 = vld [vmem:[#allocation3 + $0x3d8] sm:$0xff]
    %v2227 = vld [vmem:[#allocation3 + $0x3e0] sm:$0xff]
    %v2228 = vld [vmem:[#allocation3 + $0x3e8] sm:$0xff]
    %v2229 = vld [vmem:[#allocation3 + $0x3f0] sm:$0xff]
    %v2230 = vld [vmem:[#allocation3 + $0x3f8] sm:$0xff]
    %v2231 = vld [vmem:[#allocation3 + $0x400] sm:$0xff]
    %v2232 = vld [vmem:[#allocation3 + $0x408] sm:$0xff]
    %v2233 = vld [vmem:[#allocation3 + $0x410] sm:$0xff]
    %v2234 = vld [vmem:[#allocation3 + $0x418] sm:$0xff]
    %v2235 = vld [vmem:[#allocation3 + $0x420] sm:$0xff]
    %v2236 = vld [vmem:[#allocation3 + $0x428] sm:$0xff]
    %v2237 = vld [vmem:[#allocation3 + $0x430] sm:$0xff]
    %v2238 = vld [vmem:[#allocation3 + $0x438] sm:$0xff]
    %v2239 = vld [vmem:[#allocation3 + $0x440] sm:$0xff]
    %v2240 = vld [vmem:[#allocation3 + $0x448] sm:$0xff]
    %v2241 = vld [vmem:[#allocation3 + $0x450] sm:$0xff]
    %v2242 = vld [vmem:[#allocation3 + $0x458] sm:$0xff]
    %v2243 = vld [vmem:[#allocation3 + $0x460] sm:$0xff]
    %v2244 = vld [vmem:[#allocation3 + $0x468] sm:$0xff]
    %v2245 = vld [vmem:[#allocation3 + $0x470] sm:$0xff]
    %v2246 = vld [vmem:[#allocation3 + $0x478] sm:$0xff]
    %v2247 = vld [vmem:[#allocation3 + $0x480] sm:$0xff]
    %v2248 = vld [vmem:[#allocation3 + $0x488] sm:$0xff]
    %v2249 = vld [vmem:[#allocation3 + $0x490] sm:$0xff]
    %v2250 = vld [vmem:[#allocation3 + $0x498] sm:$0xff]
    %v2251 = vld [vmem:[#allocation3 + $0x4a0] sm:$0xff]
    %v2252 = vld [vmem:[#allocation3 + $0x4a8] sm:$0xff]
    %v2253 = vld [vmem:[#allocation3 + $0x4b0] sm:$0xff]
    %v2254 = vld [vmem:[#allocation3 + $0x4b8] sm:$0xff]
    %v2255 = vld [vmem:[#allocation3 + $0x4c0] sm:$0xff]
    %v2256 = vld [vmem:[#allocation3 + $0x4c8] sm:$0xff]
    %v2257 = vld [vmem:[#allocation3 + $0x4d0] sm:$0xff]
    %v2258 = vld [vmem:[#allocation3 + $0x4d8] sm:$0xff]
    %v2259 = vld [vmem:[#allocation3 + $0x4e0] sm:$0xff]
    %v2260 = vld [vmem:[#allocation3 + $0x4e8] sm:$0xff]
    %v2261 = vld [vmem:[#allocation3 + $0x4f0] sm:$0xff]
    %v2262 = vld [vmem:[#allocation3 + $0x4f8] sm:$0xff]
    %v2263 = vld [vmem:[#allocation3 + $0x500] sm:$0xff]
    %v2264 = vld [vmem:[#allocation3 + $0x508] sm:$0xff]
    %v2265 = vld [vmem:[#allocation3 + $0x510] sm:$0xff]
    %v2266 = vld [vmem:[#allocation3 + $0x518] sm:$0xff]
    %v2267 = vld [vmem:[#allocation3 + $0x520] sm:$0xff]
    %v2268 = vld [vmem:[#allocation3 + $0x528] sm:$0xff]
    %v2269 = vld [vmem:[#allocation3 + $0x530] sm:$0xff]
    %v2270 = vld [vmem:[#allocation3 + $0x538] sm:$0xff]
    %v2271 = vld [vmem:[#allocation3 + $0x540] sm:$0xff]
    %v2272 = vld [vmem:[#allocation3 + $0x548] sm:$0xff]
    %v2273 = vld [vmem:[#allocation3 + $0x550] sm:$0xff]
    %v2274 = vld [vmem:[#allocation3 + $0x558] sm:$0xff]
    %v2275 = vld [vmem:[#allocation3 + $0x560] sm:$0xff]
    %v2276 = vld [vmem:[#allocation3 + $0x568] sm:$0xff]
    %v2277 = vld [vmem:[#allocation3 + $0x570] sm:$0xff]
    %v2278 = vld [vmem:[#allocation3 + $0x578] sm:$0xff]
    %v2279 = vld [vmem:[#allocation3 + $0x580] sm:$0xff]
    %v2280 = vld [vmem:[#allocation3 + $0x588] sm:$0xff]
    %v2281 = vld [vmem:[#allocation3 + $0x590] sm:$0xff]
    %v2282 = vld [vmem:[#allocation3 + $0x598] sm:$0xff]
    %v2283 = vld [vmem:[#allocation3 + $0x5a0] sm:$0xff]
    %v2284 = vld [vmem:[#allocation3 + $0x5a8] sm:$0xff]
    %v2285 = vld [vmem:[#allocation3 + $0x5b0] sm:$0xff]
    %v2286 = vld [vmem:[#allocation3 + $0x5b8] sm:$0xff]
    %v2287 = vld [vmem:[#allocation3 + $0x5c0] sm:$0xff]
    %v2288 = vld [vmem:[#allocation3 + $0x5c8] sm:$0xff]
    %v2289 = vld [vmem:[#allocation3 + $0x5d0] sm:$0xff]
    %v2290 = vld [vmem:[#allocation3 + $0x5d8] sm:$0xff]
    %v2291 = vld [vmem:[#allocation3 + $0x5e0] sm:$0xff]
    %v2292 = vld [vmem:[#allocation3 + $0x5e8] sm:$0xff]
    %v2293 = vld [vmem:[#allocation3 + $0x5f0] sm:$0xff]
    %v2294 = vld [vmem:[#allocation3 + $0x5f8] sm:$0xff]
    %v2295 = vld [vmem:[#allocation3 + $0x600] sm:$0xff]
    %v2296 = vld [vmem:[#allocation3 + $0x608] sm:$0xff]
    %v2297 = vld [vmem:[#allocation3 + $0x610] sm:$0xff]
    %v2298 = vld [vmem:[#allocation3 + $0x618] sm:$0xff]
    %v2299 = vld [vmem:[#allocation3 + $0x620] sm:$0xff]
    %v2300 = vld [vmem:[#allocation3 + $0x628] sm:$0xff]
    %v2301 = vld [vmem:[#allocation3 + $0x630] sm:$0xff]
    %v2302 = vld [vmem:[#allocation3 + $0x638] sm:$0xff]
    %v2303 = vld [vmem:[#allocation3 + $0x640] sm:$0xff]
    %v2304 = vld [vmem:[#allocation3 + $0x648] sm:$0xff]
    %v2305 = vld [vmem:[#allocation3 + $0x650] sm:$0xff]
    %v2306 = vld [vmem:[#allocation3 + $0x658] sm:$0xff]
    %v2307 = vld [vmem:[#allocation3 + $0x660] sm:$0xff]
    %v2308 = vld [vmem:[#allocation3 + $0x668] sm:$0xff]
    %v2309 = vld [vmem:[#allocation3 + $0x670] sm:$0xff]
    %v2310 = vld [vmem:[#allocation3 + $0x678] sm:$0xff]
    %v2311 = vld [vmem:[#allocation3 + $0x680] sm:$0xff]
    %v2312 = vld [vmem:[#allocation3 + $0x688] sm:$0xff]
    %v2313 = vld [vmem:[#allocation3 + $0x690] sm:$0xff]
    %v2314 = vld [vmem:[#allocation3 + $0x698] sm:$0xff]
    %v2315 = vld [vmem:[#allocation3 + $0x6a0] sm:$0xff]
    %v2316 = vld [vmem:[#allocation3 + $0x6a8] sm:$0xff]
    %v2317 = vld [vmem:[#allocation3 + $0x6b0] sm:$0xff]
    %v2318 = vld [vmem:[#allocation3 + $0x6b8] sm:$0xff]
    %v2319 = vld [vmem:[#allocation3 + $0x6c0] sm:$0xff]
    %v2320 = vld [vmem:[#allocation3 + $0x6c8] sm:$0xff]
    %v2321 = vld [vmem:[#allocation3 + $0x6d0] sm:$0xff]
    %v2322 = vld [vmem:[#allocation3 + $0x6d8] sm:$0xff]
    %v2323 = vld [vmem:[#allocation3 + $0x6e0] sm:$0xff]
    %v2324 = vld [vmem:[#allocation3 + $0x6e8] sm:$0xff]
    %v2325 = vld [vmem:[#allocation3 + $0x6f0] sm:$0xff]
    %v2326 = vld [vmem:[#allocation3 + $0x6f8] sm:$0xff]
    %v2327 = vld [vmem:[#allocation3 + $0x700] sm:$0xff]
    %v2328 = vld [vmem:[#allocation3 + $0x708] sm:$0xff]
    %v2329 = vld [vmem:[#allocation3 + $0x710] sm:$0xff]
    %v2330 = vld [vmem:[#allocation3 + $0x718] sm:$0xff]
    %v2331 = vld [vmem:[#allocation3 + $0x720] sm:$0xff]
    %v2332 = vld [vmem:[#allocation3 + $0x728] sm:$0xff]
    %v2333 = vld [vmem:[#allocation3 + $0x730] sm:$0xff]
    %v2334 = vld [vmem:[#allocation3 + $0x738] sm:$0xff]
    %v2335 = vld [vmem:[#allocation3 + $0x740] sm:$0xff]
    %v2336 = vld [vmem:[#allocation3 + $0x748] sm:$0xff]
    %v2337 = vld [vmem:[#allocation3 + $0x750] sm:$0xff]
    %v2338 = vld [vmem:[#allocation3 + $0x758] sm:$0xff]
    %v2339 = vld [vmem:[#allocation3 + $0x760] sm:$0xff]
    %v2340 = vld [vmem:[#allocation3 + $0x768] sm:$0xff]
    %v2341 = vld [vmem:[#allocation3 + $0x770] sm:$0xff]
    %v2342 = vld [vmem:[#allocation3 + $0x778] sm:$0xff]
    %v2343 = vld [vmem:[#allocation3 + $0x780] sm:$0xff]
    %v2344 = vld [vmem:[#allocation3 + $0x788] sm:$0xff]
    %v2345 = vld [vmem:[#allocation3 + $0x790] sm:$0xff]
    %v2346 = vld [vmem:[#allocation3 + $0x798] sm:$0xff]
    %v2347 = vld [vmem:[#allocation3 + $0x7a0] sm:$0xff]
    %v2348 = vld [vmem:[#allocation3 + $0x7a8] sm:$0xff]
    %v2349 = vld [vmem:[#allocation3 + $0x7b0] sm:$0xff]
    %v2350 = vld [vmem:[#allocation3 + $0x7b8] sm:$0xff]
    %v2351 = vld [vmem:[#allocation3 + $0x7c0] sm:$0xff]
    %v2352 = vld [vmem:[#allocation3 + $0x7c8] sm:$0xff]
    %v2353 = vld [vmem:[#allocation3 + $0x7d0] sm:$0xff]
    %v2354 = vld [vmem:[#allocation3 + $0x7d8] sm:$0xff]
    %v2355 = vld [vmem:[#allocation3 + $0x7e0] sm:$0xff]
    %v2356 = vld [vmem:[#allocation3 + $0x7e8] sm:$0xff]
    %v2357 = vld [vmem:[#allocation3 + $0x7f0] sm:$0xff]
    %v2358 = vld [vmem:[#allocation3 + $0x7f8] sm:$0xff]
    %v2359 = vld [vmem:[#allocation3 + $0x800] sm:$0xff]
    %v2360 = vld [vmem:[#allocation3 + $0x808] sm:$0xff]
    %v2361 = vld [vmem:[#allocation3 + $0x810] sm:$0xff]
    %v2362 = vld [vmem:[#allocation3 + $0x818] sm:$0xff]
    %v2363 = vld [vmem:[#allocation3 + $0x820] sm:$0xff]
    %v2364 = vld [vmem:[#allocation3 + $0x828] sm:$0xff]
    %v2365 = vld [vmem:[#allocation3 + $0x830] sm:$0xff]
    %v2366 = vld [vmem:[#allocation3 + $0x838] sm:$0xff]
    %v2367 = vld [vmem:[#allocation3 + $0x840] sm:$0xff]
    %v2368 = vld [vmem:[#allocation3 + $0x848] sm:$0xff]
    %v2369 = vld [vmem:[#allocation3 + $0x850] sm:$0xff]
    %v2370 = vld [vmem:[#allocation3 + $0x858] sm:$0xff]
    %v2371 = vld [vmem:[#allocation3 + $0x860] sm:$0xff]
    %v2372 = vld [vmem:[#allocation3 + $0x868] sm:$0xff]
    %v2373 = vld [vmem:[#allocation3 + $0x870] sm:$0xff]
    %v2374 = vld [vmem:[#allocation3 + $0x878] sm:$0xff]
    %v2375 = vld [vmem:[#allocation3 + $0x880] sm:$0xff]
    %v2376 = vld [vmem:[#allocation3 + $0x888] sm:$0xff]
    %v2377 = vld [vmem:[#allocation3 + $0x890] sm:$0xff]
    %v2378 = vld [vmem:[#allocation3 + $0x898] sm:$0xff]
    %v2379 = vld [vmem:[#allocation3 + $0x8a0] sm:$0xff]
    %v2380 = vld [vmem:[#allocation3 + $0x8a8] sm:$0xff]
    %v2381 = vld [vmem:[#allocation3 + $0x8b0] sm:$0xff]
    %v2382 = vld [vmem:[#allocation3 + $0x8b8] sm:$0xff]
    %v2383 = vld [vmem:[#allocation3 + $0x8c0] sm:$0xff]
    %v2384 = vld [vmem:[#allocation3 + $0x8c8] sm:$0xff]
    %v2385 = vld [vmem:[#allocation3 + $0x8d0] sm:$0xff]
    %v2386 = vld [vmem:[#allocation3 + $0x8d8] sm:$0xff]
    %v2387 = vld [vmem:[#allocation3 + $0x8e0] sm:$0xff]
    %v2388 = vld [vmem:[#allocation3 + $0x8e8] sm:$0xff]
    %v2389 = vld [vmem:[#allocation3 + $0x8f0] sm:$0xff]
    %v2390 = vld [vmem:[#allocation3 + $0x8f8] sm:$0xff]
    %v2391 = vld [vmem:[#allocation3 + $0x900] sm:$0xff]
    %v2392 = vld [vmem:[#allocation3 + $0x908] sm:$0xff]
    %v2393 = vld [vmem:[#allocation3 + $0x910] sm:$0xff]
    %v2394 = vld [vmem:[#allocation3 + $0x918] sm:$0xff]
    %v2395 = vld [vmem:[#allocation3 + $0x920] sm:$0xff]
    %v2396 = vld [vmem:[#allocation3 + $0x928] sm:$0xff]
    %v2397 = vld [vmem:[#allocation3 + $0x930] sm:$0xff]
    %v2398 = vld [vmem:[#allocation3 + $0x938] sm:$0xff]
    %v2399 = vld [vmem:[#allocation3 + $0x940] sm:$0xff]
    %v2400 = vld [vmem:[#allocation3 + $0x948] sm:$0xff]
    %v2401 = vld [vmem:[#allocation3 + $0x950] sm:$0xff]
    %v2402 = vld [vmem:[#allocation3 + $0x958] sm:$0xff]
    %v2403 = vld [vmem:[#allocation3 + $0x960] sm:$0xff]
    %v2404 = vld [vmem:[#allocation3 + $0x968] sm:$0xff]
    %v2405 = vld [vmem:[#allocation3 + $0x970] sm:$0xff]
    %v2406 = vld [vmem:[#allocation3 + $0x978] sm:$0xff]
    %v2407 = vld [vmem:[#allocation3 + $0x980] sm:$0xff]
    %v2408 = vld [vmem:[#allocation3 + $0x988] sm:$0xff]
    %v2409 = vld [vmem:[#allocation3 + $0x990] sm:$0xff]
    %v2410 = vld [vmem:[#allocation3 + $0x998] sm:$0xff]
    %v2411 = vld [vmem:[#allocation3 + $0x9a0] sm:$0xff]
    %v2412 = vld [vmem:[#allocation3 + $0x9a8] sm:$0xff]
    %v2413 = vld [vmem:[#allocation3 + $0x9b0] sm:$0xff]
    %v2414 = vld [vmem:[#allocation3 + $0x9b8] sm:$0xff]
    %v2415 = vld [vmem:[#allocation3 + $0x9c0] sm:$0xff]
    %v2416 = vld [vmem:[#allocation3 + $0x9c8] sm:$0xff]
    %v2417 = vld [vmem:[#allocation3 + $0x9d0] sm:$0xff]
    %v2418 = vld [vmem:[#allocation3 + $0x9d8] sm:$0xff]
    %v2419 = vld [vmem:[#allocation3 + $0x9e0] sm:$0xff]
    %v2420 = vld [vmem:[#allocation3 + $0x9e8] sm:$0xff]
    %v2421 = vld [vmem:[#allocation3 + $0x9f0] sm:$0xff]
    %v2422 = vld [vmem:[#allocation3 + $0x9f8] sm:$0xff]
    %v2423 = vld [vmem:[#allocation3 + $0xa00] sm:$0xff]
    %v2424 = vld [vmem:[#allocation3 + $0xa08] sm:$0xff]
    %v2425 = vld [vmem:[#allocation3 + $0xa10] sm:$0xff]
    %v2426 = vld [vmem:[#allocation3 + $0xa18] sm:$0xff]
    %v2427 = vld [vmem:[#allocation3 + $0xa20] sm:$0xff]
    %v2428 = vld [vmem:[#allocation3 + $0xa28] sm:$0xff]
    %v2429 = vld [vmem:[#allocation3 + $0xa30] sm:$0xff]
    %v2430 = vld [vmem:[#allocation3 + $0xa38] sm:$0xff]
    %v2431 = vld [vmem:[#allocation3 + $0xa40] sm:$0xff]
    %v2432 = vld [vmem:[#allocation3 + $0xa48] sm:$0xff]
    %v2433 = vld [vmem:[#allocation3 + $0xa50] sm:$0xff]
    %v2434 = vld [vmem:[#allocation3 + $0xa58] sm:$0xff]
    %v2435 = vld [vmem:[#allocation3 + $0xa60] sm:$0xff]
    %v2436 = vld [vmem:[#allocation3 + $0xa68] sm:$0xff]
    %v2437 = vld [vmem:[#allocation3 + $0xa70] sm:$0xff]
    %v2438 = vld [vmem:[#allocation3 + $0xa78] sm:$0xff]
    %v2439 = vld [vmem:[#allocation3 + $0xa80] sm:$0xff]
    %v2440 = vld [vmem:[#allocation3 + $0xa88] sm:$0xff]
    %v2441 = vld [vmem:[#allocation3 + $0xa90] sm:$0xff]
    %v2442 = vld [vmem:[#allocation3 + $0xa98] sm:$0xff]
    %v2443 = vld [vmem:[#allocation3 + $0xaa0] sm:$0xff]
    %v2444 = vld [vmem:[#allocation3 + $0xaa8] sm:$0xff]
    %v2445 = vld [vmem:[#allocation3 + $0xab0] sm:$0xff]
    %v2446 = vld [vmem:[#allocation3 + $0xab8] sm:$0xff]
    %v2447 = vld [vmem:[#allocation3 + $0xac0] sm:$0xff]
    %v2448 = vld [vmem:[#allocation3 + $0xac8] sm:$0xff]
    %v2449 = vld [vmem:[#allocation3 + $0xad0] sm:$0xff]
    %v2450 = vld [vmem:[#allocation3 + $0xad8] sm:$0xff]
    %v2451 = vld [vmem:[#allocation3 + $0xae0] sm:$0xff]
    %v2452 = vld [vmem:[#allocation3 + $0xae8] sm:$0xff]
    %v2453 = vld [vmem:[#allocation3 + $0xaf0] sm:$0xff]
    %v2454 = vld [vmem:[#allocation3 + $0xaf8] sm:$0xff]
    %v2455 = vld [vmem:[#allocation3 + $0xb00] sm:$0xff]
    %v2456 = vld [vmem:[#allocation3 + $0xb08] sm:$0xff]
    %v2457 = vld [vmem:[#allocation3 + $0xb10] sm:$0xff]
    %v2458 = vld [vmem:[#allocation3 + $0xb18] sm:$0xff]
    %v2459 = vld [vmem:[#allocation3 + $0xb20] sm:$0xff]
    %v2460 = vld [vmem:[#allocation3 + $0xb28] sm:$0xff]
    %v2461 = vld [vmem:[#allocation3 + $0xb30] sm:$0xff]
    %v2462 = vld [vmem:[#allocation3 + $0xb38] sm:$0xff]
    %v2463 = vld [vmem:[#allocation3 + $0xb40] sm:$0xff]
    %v2464 = vld [vmem:[#allocation3 + $0xb48] sm:$0xff]
    %v2465 = vld [vmem:[#allocation3 + $0xb50] sm:$0xff]
    %v2466 = vld [vmem:[#allocation3 + $0xb58] sm:$0xff]
    %v2467 = vld [vmem:[#allocation3 + $0xb60] sm:$0xff]
    %v2468 = vld [vmem:[#allocation3 + $0xb68] sm:$0xff]
    %v2469 = vld [vmem:[#allocation3 + $0xb70] sm:$0xff]
    %v2470 = vld [vmem:[#allocation3 + $0xb78] sm:$0xff]
    %v2471 = vld [vmem:[#allocation3 + $0xb80] sm:$0xff]
    %v2472 = vld [vmem:[#allocation3 + $0xb88] sm:$0xff]
    %v2473 = vld [vmem:[#allocation3 + $0xb90] sm:$0xff]
    %v2474 = vld [vmem:[#allocation3 + $0xb98] sm:$0xff]
    %v2475 = vld [vmem:[#allocation3 + $0xba0] sm:$0xff]
    %v2476 = vld [vmem:[#allocation3 + $0xba8] sm:$0xff]
    %v2477 = vld [vmem:[#allocation3 + $0xbb0] sm:$0xff]
    %v2478 = vld [vmem:[#allocation3 + $0xbb8] sm:$0xff]
    %v2479 = vld [vmem:[#allocation3 + $0xbc0] sm:$0xff]
    %v2480 = vld [vmem:[#allocation3 + $0xbc8] sm:$0xff]
    %v2481 = vld [vmem:[#allocation3 + $0xbd0] sm:$0xff]
    %v2482 = vld [vmem:[#allocation3 + $0xbd8] sm:$0xff]
    %v2483 = vld [vmem:[#allocation3 + $0xbe0] sm:$0xff]
    %v2484 = vld [vmem:[#allocation3 + $0xbe8] sm:$0xff]
    %v2485 = vld [vmem:[#allocation3 + $0xbf0] sm:$0xff]
    %v2486 = vld [vmem:[#allocation3 + $0xbf8] sm:$0xff]
    %v2487 = vld [vmem:[#allocation3 + $0xc00] sm:$0xff]
    %v2488 = vld [vmem:[#allocation3 + $0xc08] sm:$0xff]
    %v2489 = vld [vmem:[#allocation3 + $0xc10] sm:$0xff]
    %v2490 = vld [vmem:[#allocation3 + $0xc18] sm:$0xff]
    %v2491 = vld [vmem:[#allocation3 + $0xc20] sm:$0xff]
    %v2492 = vld [vmem:[#allocation3 + $0xc28] sm:$0xff]
    %v2493 = vld [vmem:[#allocation3 + $0xc30] sm:$0xff]
    %v2494 = vld [vmem:[#allocation3 + $0xc38] sm:$0xff]
    %v2495 = vld [vmem:[#allocation3 + $0xc40] sm:$0xff]
    %v2496 = vld [vmem:[#allocation3 + $0xc48] sm:$0xff]
    %v2497 = vld [vmem:[#allocation3 + $0xc50] sm:$0xff]
    %v2498 = vld [vmem:[#allocation3 + $0xc58] sm:$0xff]
    %v2499 = vld [vmem:[#allocation3 + $0xc60] sm:$0xff]
    %v2500 = vld [vmem:[#allocation3 + $0xc68] sm:$0xff]
    %v2501 = vld [vmem:[#allocation3 + $0xc70] sm:$0xff]
    %v2502 = vld [vmem:[#allocation3 + $0xc78] sm:$0xff]
    %v2503 = vld [vmem:[#allocation3 + $0xc80] sm:$0xff]
    %v2504 = vld [vmem:[#allocation3 + $0xc88] sm:$0xff]
    %v2505 = vld [vmem:[#allocation3 + $0xc90] sm:$0xff]
    %v2506 = vld [vmem:[#allocation3 + $0xc98] sm:$0xff]
    %v2507 = vld [vmem:[#allocation3 + $0xca0] sm:$0xff]
    %v2508 = vld [vmem:[#allocation3 + $0xca8] sm:$0xff]
    %v2509 = vld [vmem:[#allocation3 + $0xcb0] sm:$0xff]
    %v2510 = vld [vmem:[#allocation3 + $0xcb8] sm:$0xff]
    %v2511 = vld [vmem:[#allocation3 + $0xcc0] sm:$0xff]
    %v2512 = vld [vmem:[#allocation3 + $0xcc8] sm:$0xff]
    %v2513 = vld [vmem:[#allocation3 + $0xcd0] sm:$0xff]
    %v2514 = vld [vmem:[#allocation3 + $0xcd8] sm:$0xff]
    %v2515 = vld [vmem:[#allocation3 + $0xce0] sm:$0xff]
    %v2516 = vld [vmem:[#allocation3 + $0xce8] sm:$0xff]
    %v2517 = vld [vmem:[#allocation3 + $0xcf0] sm:$0xff]
    %v2518 = vld [vmem:[#allocation3 + $0xcf8] sm:$0xff]
    %2519 = vmatprep.subr.bf16.mxu0 %v2104
    %2520 = vmatpush1.bf16.msra.mxu0 %v2103
    %2521 = vmatprep.subr.bf16.mxu0 %v2117
    %2522 = vmatpush1.bf16.msra.mxu0 %v2116
    %2523 = vmatprep.subr.bf16.mxu0 %v2130
    %2524 = vmatpush1.bf16.msra.mxu0 %v2129
    %2525 = vmatprep.subr.bf16.mxu0 %v2143
    %2526 = vmatpush1.bf16.msra.mxu0 %v2142
    %2527 = vmatprep.subr.bf16.mxu0 %v2156
    %2528 = vmatpush1.bf16.msra.mxu0 %v2155
    %2529 = vmatprep.subr.bf16.mxu0 %v2169
    %2530 = vmatpush1.bf16.msra.mxu0 %v2168
    %2531 = vmatprep.subr.bf16.mxu0 %v2182
    %2532 = vmatpush1.bf16.msra.mxu0 %v2181
    %2533 = vmatprep.subr.bf16.mxu0 %v2195
    %2534 = vmatpush1.bf16.msra.mxu0 %v2194
    %2535 = vmatprep.subr.bf16.mxu0 %v2208
    %2536 = vmatpush1.bf16.msra.mxu0 %v2207
    %2537 = vmatprep.subr.bf16.mxu0 %v2221
    %2538 = vmatpush1.bf16.msra.mxu0 %v2220
    %2539 = vmatprep.subr.bf16.mxu0 %v2234
    %2540 = vmatpush1.bf16.msra.mxu0 %v2233
    %2541 = vmatprep.subr.bf16.mxu0 %v2247
    %2542 = vmatpush1.bf16.msra.mxu0 %v2246
    %2543 = vmatprep.subr.bf16.mxu0 %v2260
    %2544 = vmatpush1.bf16.msra.mxu0 %v2259
    %2545 = vmatprep.subr.bf16.mxu0 %v2273
    %2546 = vmatpush1.bf16.msra.mxu0 %v2272
    %2547 = vmatprep.subr.bf16.mxu0 %v2286
    %2548 = vmatpush1.bf16.msra.mxu0 %v2285
    %2549 = vmatprep.subr.bf16.mxu0 %v2299
    %2550 = vmatpush1.bf16.msra.mxu0 %v2298
    %2551 = vmatprep.mubr.bf16.mxu0 0
    %2552 = vmatmul.mubr.bf16.gmra.mrb[0].mxu0 0
    %v2553 = vpop.f32.mrb[0].mxu0
    %v2554 = vadd.f32 0.0, %v2553
    %v2555 = vpop.f32.mrb[0].mxu0
    %v2556 = vadd.f32 0.0, %v2555
    %v2557 = vpop.f32.mrb[0].mxu0
    %v2558 = vpop.f32.mrb[0].mxu0
    %2559 = vdwg.mxu0
    %2560 = vmatprep.subr.bf16.mxu0 %v2312
    %2561 = vmatpush1.bf16.msra.mxu0 %v2311
    %2562 = vmatprep.subr.bf16.mxu0 %v2325
    %2563 = vmatpush1.bf16.msra.mxu0 %v2324
    %2564 = vmatprep.subr.bf16.mxu0 %v2338
    %2565 = vmatpush1.bf16.msra.mxu0 %v2337
    %2566 = vmatprep.subr.bf16.mxu0 %v2351
    %2567 = vmatpush1.bf16.msra.mxu0 %v2350
    %2568 = vmatprep.subr.bf16.mxu0 %v2364
    %2569 = vmatpush1.bf16.msra.mxu0 %v2363
    %2570 = vmatprep.subr.bf16.mxu0 %v2377
    %2571 = vmatpush1.bf16.msra.mxu0 %v2376
    %2572 = vmatprep.subr.bf16.mxu0 %v2390
    %2573 = vmatpush1.bf16.msra.mxu0 %v2389
    %2574 = vmatprep.subr.bf16.mxu0 %v2403
    %2575 = vmatpush1.bf16.msra.mxu0 %v2402
    %2576 = vmatprep.subr.bf16.mxu0 %v2416
    %2577 = vmatpush1.bf16.msra.mxu0 %v2415
    %2578 = vmatprep.subr.bf16.mxu0 %v2429
    %2579 = vmatpush1.bf16.msra.mxu0 %v2428
    %2580 = vmatprep.subr.bf16.mxu0 %v2442
    %2581 = vmatpush1.bf16.msra.mxu0 %v2441
    %2582 = vmatprep.subr.bf16.mxu0 %v2455
    %2583 = vmatpush1.bf16.msra.mxu0 %v2454
    %2584 = vmatprep.subr.bf16.mxu0 %v2468
    %2585 = vmatpush1.bf16.msra.mxu0 %v2467
    %2586 = vmatprep.subr.bf16.mxu0 %v2481
    %2587 = vmatpush1.bf16.msra.mxu0 %v2480
    %2588 = vmatprep.subr.bf16.mxu0 %v2494
    %2589 = vmatpush1.bf16.msra.mxu0 %v2493
    %2590 = vmatprep.subr.bf16.mxu0 %v2507
    %2591 = vmatpush1.bf16.msra.mxu0 %v2506
    %2592 = vmatprep.mubr.bf16.mxu0 0
    %2593 = vmatmul.mubr.bf16.gmra.mrb[0].mxu0 0
    %v2594 = vpop.f32.mrb[0].mxu0
    %v2595 = vadd.f32 %v2554, %v2594
    %v2596 = vpop.f32.mrb[0].mxu0
    %v2597 = vadd.f32 %v2556, %v2596
    %v2598 = vpop.f32.mrb[0].mxu0
    %v2599 = vpop.f32.mrb[0].mxu0
    %2600 = vdwg.mxu0
    %2601 = vmatprep.subr.bf16.mxu0 %v2106
    %2602 = vmatpush1.bf16.msra.mxu0 %v2105
    %2603 = vmatprep.subr.bf16.mxu0 %v2119
    %2604 = vmatpush1.bf16.msra.mxu0 %v2118
    %2605 = vmatprep.subr.bf16.mxu0 %v2132
    %2606 = vmatpush1.bf16.msra.mxu0 %v2131
    %2607 = vmatprep.subr.bf16.mxu0 %v2145
    %2608 = vmatpush1.bf16.msra.mxu0 %v2144
    %2609 = vmatprep.subr.bf16.mxu0 %v2158
    %2610 = vmatpush1.bf16.msra.mxu0 %v2157
    %2611 = vmatprep.subr.bf16.mxu0 %v2171
    %2612 = vmatpush1.bf16.msra.mxu0 %v2170
    %2613 = vmatprep.subr.bf16.mxu0 %v2184
    %2614 = vmatpush1.bf16.msra.mxu0 %v2183
    %2615 = vmatprep.subr.bf16.mxu0 %v2197
    %2616 = vmatpush1.bf16.msra.mxu0 %v2196
    %2617 = vmatprep.subr.bf16.mxu0 %v2210
    %2618 = vmatpush1.bf16.msra.mxu0 %v2209
    %2619 = vmatprep.subr.bf16.mxu0 %v2223
    %2620 = vmatpush1.bf16.msra.mxu0 %v2222
    %2621 = vmatprep.subr.bf16.mxu0 %v2236
    %2622 = vmatpush1.bf16.msra.mxu0 %v2235
    %2623 = vmatprep.subr.bf16.mxu0 %v2249
    %2624 = vmatpush1.bf16.msra.mxu0 %v2248
    %2625 = vmatprep.subr.bf16.mxu0 %v2262
    %2626 = vmatpush1.bf16.msra.mxu0 %v2261
    %2627 = vmatprep.subr.bf16.mxu0 %v2275
    %2628 = vmatpush1.bf16.msra.mxu0 %v2274
    %2629 = vmatprep.subr.bf16.mxu0 %v2288
    %2630 = vmatpush1.bf16.msra.mxu0 %v2287
    %2631 = vmatprep.subr.bf16.mxu0 %v2301
    %2632 = vmatpush1.bf16.msra.mxu0 %v2300
    %2633 = vmatprep.mubr.bf16.mxu0 0
    %2634 = vmatmul.mubr.bf16.gmra.mrb[0].mxu0 0
    %v2635 = vpop.f32.mrb[0].mxu0
    %v2636 = vadd.f32 0.0, %v2635
    %v2637 = vpop.f32.mrb[0].mxu0
    %v2638 = vadd.f32 0.0, %v2637
    %v2639 = vpop.f32.mrb[0].mxu0
    %v2640 = vpop.f32.mrb[0].mxu0
    %2641 = vdwg.mxu0
    %2642 = vmatprep.subr.bf16.mxu0 %v2314
    %2643 = vmatpush1.bf16.msra.mxu0 %v2313
    %2644 = vmatprep.subr.bf16.mxu0 %v2327
    %2645 = vmatpush1.bf16.msra.mxu0 %v2326
    %2646 = vmatprep.subr.bf16.mxu0 %v2340
    %2647 = vmatpush1.bf16.msra.mxu0 %v2339
    %2648 = vmatprep.subr.bf16.mxu0 %v2353
    %2649 = vmatpush1.bf16.msra.mxu0 %v2352
    %2650 = vmatprep.subr.bf16.mxu0 %v2366
    %2651 = vmatpush1.bf16.msra.mxu0 %v2365
    %2652 = vmatprep.subr.bf16.mxu0 %v2379
    %2653 = vmatpush1.bf16.msra.mxu0 %v2378
    %2654 = vmatprep.subr.bf16.mxu0 %v2392
    %2655 = vmatpush1.bf16.msra.mxu0 %v2391
    %2656 = vmatprep.subr.bf16.mxu0 %v2405
    %2657 = vmatpush1.bf16.msra.mxu0 %v2404
    %2658 = vmatprep.subr.bf16.mxu0 %v2418
    %2659 = vmatpush1.bf16.msra.mxu0 %v2417
    %2660 = vmatprep.subr.bf16.mxu0 %v2431
    %2661 = vmatpush1.bf16.msra.mxu0 %v2430
    %2662 = vmatprep.subr.bf16.mxu0 %v2444
    %2663 = vmatpush1.bf16.msra.mxu0 %v2443
    %2664 = vmatprep.subr.bf16.mxu0 %v2457
    %2665 = vmatpush1.bf16.msra.mxu0 %v2456
    %2666 = vmatprep.subr.bf16.mxu0 %v2470
    %2667 = vmatpush1.bf16.msra.mxu0 %v2469
    %2668 = vmatprep.subr.bf16.mxu0 %v2483
    %2669 = vmatpush1.bf16.msra.mxu0 %v2482
    %2670 = vmatprep.subr.bf16.mxu0 %v2496
    %2671 = vmatpush1.bf16.msra.mxu0 %v2495
    %2672 = vmatprep.subr.bf16.mxu0 %v2509
    %2673 = vmatpush1.bf16.msra.mxu0 %v2508
    %2674 = vmatprep.mubr.bf16.mxu0 0
    %2675 = vmatmul.mubr.bf16.gmra.mrb[0].mxu0 0
    %v2676 = vpop.f32.mrb[0].mxu0
    %v2677 = vadd.f32 %v2636, %v2676
    %v2678 = vpop.f32.mrb[0].mxu0
    %v2679 = vadd.f32 %v2638, %v2678
    %v2680 = vpop.f32.mrb[0].mxu0
    %v2681 = vpop.f32.mrb[0].mxu0
    %2682 = vdwg.mxu0
    %2683 = vmatprep.subr.bf16.mxu0 %v2108
    %2684 = vmatpush1.bf16.msra.mxu0 %v2107
    %2685 = vmatprep.subr.bf16.mxu0 %v2121
    %2686 = vmatpush1.bf16.msra.mxu0 %v2120
    %2687 = vmatprep.subr.bf16.mxu0 %v2134
    %2688 = vmatpush1.bf16.msra.mxu0 %v2133
    %2689 = vmatprep.subr.bf16.mxu0 %v2147
    %2690 = vmatpush1.bf16.msra.mxu0 %v2146
    %2691 = vmatprep.subr.bf16.mxu0 %v2160
    %2692 = vmatpush1.bf16.msra.mxu0 %v2159
    %2693 = vmatprep.subr.bf16.mxu0 %v2173
    %2694 = vmatpush1.bf16.msra.mxu0 %v2172
    %2695 = vmatprep.subr.bf16.mxu0 %v2186
    %2696 = vmatpush1.bf16.msra.mxu0 %v2185
    %2697 = vmatprep.subr.bf16.mxu0 %v2199
    %2698 = vmatpush1.bf16.msra.mxu0 %v2198
    %2699 = vmatprep.subr.bf16.mxu0 %v2212
    %2700 = vmatpush1.bf16.msra.mxu0 %v2211
    %2701 = vmatprep.subr.bf16.mxu0 %v2225
    %2702 = vmatpush1.bf16.msra.mxu0 %v2224
    %2703 = vmatprep.subr.bf16.mxu0 %v2238
    %2704 = vmatpush1.bf16.msra.mxu0 %v2237
    %2705 = vmatprep.subr.bf16.mxu0 %v2251
    %2706 = vmatpush1.bf16.msra.mxu0 %v2250
    %2707 = vmatprep.subr.bf16.mxu0 %v2264
    %2708 = vmatpush1.bf16.msra.mxu0 %v2263
    %2709 = vmatprep.subr.bf16.mxu0 %v2277
    %2710 = vmatpush1.bf16.msra.mxu0 %v2276
    %2711 = vmatprep.subr.bf16.mxu0 %v2290
    %2712 = vmatpush1.bf16.msra.mxu0 %v2289
    %2713 = vmatprep.subr.bf16.mxu0 %v2303
    %2714 = vmatpush1.bf16.msra.mxu0 %v2302
    %2715 = vmatprep.mubr.bf16.mxu0 0
    %2716 = vmatmul.mubr.bf16.gmra.mrb[0].mxu0 0
    %v2717 = vpop.f32.mrb[0].mxu0
    %v2718 = vadd.f32 0.0, %v2717
    %v2719 = vpop.f32.mrb[0].mxu0
    %v2720 = vadd.f32 0.0, %v2719
    %v2721 = vpop.f32.mrb[0].mxu0
    %v2722 = vpop.f32.mrb[0].mxu0
    %2723 = vdwg.mxu0
    %2724 = vmatprep.subr.bf16.mxu0 %v2316
    %2725 = vmatpush1.bf16.msra.mxu0 %v2315
    %2726 = vmatprep.subr.bf16.mxu0 %v2329
    %2727 = vmatpush1.bf16.msra.mxu0 %v2328
    %2728 = vmatprep.subr.bf16.mxu0 %v2342
    %2729 = vmatpush1.bf16.msra.mxu0 %v2341
    %2730 = vmatprep.subr.bf16.mxu0 %v2355
    %2731 = vmatpush1.bf16.msra.mxu0 %v2354
    %2732 = vmatprep.subr.bf16.mxu0 %v2368
    %2733 = vmatpush1.bf16.msra.mxu0 %v2367
    %2734 = vmatprep.subr.bf16.mxu0 %v2381
    %2735 = vmatpush1.bf16.msra.mxu0 %v2380
    %2736 = vmatprep.subr.bf16.mxu0 %v2394
    %2737 = vmatpush1.bf16.msra.mxu0 %v2393
    %2738 = vmatprep.subr.bf16.mxu0 %v2407
    %2739 = vmatpush1.bf16.msra.mxu0 %v2406
    %2740 = vmatprep.subr.bf16.mxu0 %v2420
    %2741 = vmatpush1.bf16.msra.mxu0 %v2419
    %2742 = vmatprep.subr.bf16.mxu0 %v2433
    %2743 = vmatpush1.bf16.msra.mxu0 %v2432
    %2744 = vmatprep.subr.bf16.mxu0 %v2446
    %2745 = vmatpush1.bf16.msra.mxu0 %v2445
    %2746 = vmatprep.subr.bf16.mxu0 %v2459
    %2747 = vmatpush1.bf16.msra.mxu0 %v2458
    %2748 = vmatprep.subr.bf16.mxu0 %v2472
    %2749 = vmatpush1.bf16.msra.mxu0 %v2471
    %2750 = vmatprep.subr.bf16.mxu0 %v2485
    %2751 = vmatpush1.bf16.msra.mxu0 %v2484
    %2752 = vmatprep.subr.bf16.mxu0 %v2498
    %2753 = vmatpush1.bf16.msra.mxu0 %v2497
    %2754 = vmatprep.subr.bf16.mxu0 %v2511
    %2755 = vmatpush1.bf16.msra.mxu0 %v2510
    %2756 = vmatprep.mubr.bf16.mxu0 0
    %2757 = vmatmul.mubr.bf16.gmra.mrb[0].mxu0 0
    %v2758 = vpop.f32.mrb[0].mxu0
    %v2759 = vadd.f32 %v2718, %v2758
    %v2760 = vpop.f32.mrb[0].mxu0
    %v2761 = vadd.f32 %v2720, %v2760
    %v2762 = vpop.f32.mrb[0].mxu0
    %v2763 = vpop.f32.mrb[0].mxu0
    %2764 = vdwg.mxu0
    %2765 = vmatprep.subr.bf16.mxu0 %v2110
    %2766 = vmatpush1.bf16.msra.mxu0 %v2109
    %2767 = vmatprep.subr.bf16.mxu0 %v2123
    %2768 = vmatpush1.bf16.msra.mxu0 %v2122
    %2769 = vmatprep.subr.bf16.mxu0 %v2136
    %2770 = vmatpush1.bf16.msra.mxu0 %v2135
    %2771 = vmatprep.subr.bf16.mxu0 %v2149
    %2772 = vmatpush1.bf16.msra.mxu0 %v2148
    %2773 = vmatprep.subr.bf16.mxu0 %v2162
    %2774 = vmatpush1.bf16.msra.mxu0 %v2161
    %2775 = vmatprep.subr.bf16.mxu0 %v2175
    %2776 = vmatpush1.bf16.msra.mxu0 %v2174
    %2777 = vmatprep.subr.bf16.mxu0 %v2188
    %2778 = vmatpush1.bf16.msra.mxu0 %v2187
    %2779 = vmatprep.subr.bf16.mxu0 %v2201
    %2780 = vmatpush1.bf16.msra.mxu0 %v2200
    %2781 = vmatprep.subr.bf16.mxu0 %v2214
    %2782 = vmatpush1.bf16.msra.mxu0 %v2213
    %2783 = vmatprep.subr.bf16.mxu0 %v2227
    %2784 = vmatpush1.bf16.msra.mxu0 %v2226
    %2785 = vmatprep.subr.bf16.mxu0 %v2240
    %2786 = vmatpush1.bf16.msra.mxu0 %v2239
    %2787 = vmatprep.subr.bf16.mxu0 %v2253
    %2788 = vmatpush1.bf16.msra.mxu0 %v2252
    %2789 = vmatprep.subr.bf16.mxu0 %v2266
    %2790 = vmatpush1.bf16.msra.mxu0 %v2265
    %2791 = vmatprep.subr.bf16.mxu0 %v2279
    %2792 = vmatpush1.bf16.msra.mxu0 %v2278
    %2793 = vmatprep.subr.bf16.mxu0 %v2292
    %2794 = vmatpush1.bf16.msra.mxu0 %v2291
    %2795 = vmatprep.subr.bf16.mxu0 %v2305
    %2796 = vmatpush1.bf16.msra.mxu0 %v2304
    %2797 = vmatprep.mubr.bf16.mxu0 0
    %2798 = vmatmul.mubr.bf16.gmra.mrb[0].mxu0 0
    %v2799 = vpop.f32.mrb[0].mxu0
    %v2800 = vadd.f32 0.0, %v2799
    %v2801 = vpop.f32.mrb[0].mxu0
    %v2802 = vadd.f32 0.0, %v2801
    %v2803 = vpop.f32.mrb[0].mxu0
    %v2804 = vpop.f32.mrb[0].mxu0
    %2805 = vdwg.mxu0
    %2806 = vmatprep.subr.bf16.mxu0 %v2318
    %2807 = vmatpush1.bf16.msra.mxu0 %v2317
    %2808 = vmatprep.subr.bf16.mxu0 %v2331
    %2809 = vmatpush1.bf16.msra.mxu0 %v2330
    %2810 = vmatprep.subr.bf16.mxu0 %v2344
    %2811 = vmatpush1.bf16.msra.mxu0 %v2343
    %2812 = vmatprep.subr.bf16.mxu0 %v2357
    %2813 = vmatpush1.bf16.msra.mxu0 %v2356
    %2814 = vmatprep.subr.bf16.mxu0 %v2370
    %2815 = vmatpush1.bf16.msra.mxu0 %v2369
    %2816 = vmatprep.subr.bf16.mxu0 %v2383
    %2817 = vmatpush1.bf16.msra.mxu0 %v2382
    %2818 = vmatprep.subr.bf16.mxu0 %v2396
    %2819 = vmatpush1.bf16.msra.mxu0 %v2395
    %2820 = vmatprep.subr.bf16.mxu0 %v2409
    %2821 = vmatpush1.bf16.msra.mxu0 %v2408
    %2822 = vmatprep.subr.bf16.mxu0 %v2422
    %2823 = vmatpush1.bf16.msra.mxu0 %v2421
    %2824 = vmatprep.subr.bf16.mxu0 %v2435
    %2825 = vmatpush1.bf16.msra.mxu0 %v2434
    %2826 = vmatprep.subr.bf16.mxu0 %v2448
    %2827 = vmatpush1.bf16.msra.mxu0 %v2447
    %2828 = vmatprep.subr.bf16.mxu0 %v2461
    %2829 = vmatpush1.bf16.msra.mxu0 %v2460
    %2830 = vmatprep.subr.bf16.mxu0 %v2474
    %2831 = vmatpush1.bf16.msra.mxu0 %v2473
    %2832 = vmatprep.subr.bf16.mxu0 %v2487
    %2833 = vmatpush1.bf16.msra.mxu0 %v2486
    %2834 = vmatprep.subr.bf16.mxu0 %v2500
    %2835 = vmatpush1.bf16.msra.mxu0 %v2499
    %2836 = vmatprep.subr.bf16.mxu0 %v2513
    %2837 = vmatpush1.bf16.msra.mxu0 %v2512
    %2838 = vmatprep.mubr.bf16.mxu0 0
    %2839 = vmatmul.mubr.bf16.gmra.mrb[0].mxu0 0
    %v2840 = vpop.f32.mrb[0].mxu0
    %v2841 = vadd.f32 %v2800, %v2840
    %v2842 = vpop.f32.mrb[0].mxu0
    %v2843 = vadd.f32 %v2802, %v2842
    %v2844 = vpop.f32.mrb[0].mxu0
    %v2845 = vpop.f32.mrb[0].mxu0
    %2846 = vdwg.mxu0
    %2847 = vmatprep.subr.bf16.mxu0 %v2112
    %2848 = vmatpush1.bf16.msra.mxu0 %v2111
    %2849 = vmatprep.subr.bf16.mxu0 %v2125
    %2850 = vmatpush1.bf16.msra.mxu0 %v2124
    %2851 = vmatprep.subr.bf16.mxu0 %v2138
    %2852 = vmatpush1.bf16.msra.mxu0 %v2137
    %2853 = vmatprep.subr.bf16.mxu0 %v2151
    %2854 = vmatpush1.bf16.msra.mxu0 %v2150
    %2855 = vmatprep.subr.bf16.mxu0 %v2164
    %2856 = vmatpush1.bf16.msra.mxu0 %v2163
    %2857 = vmatprep.subr.bf16.mxu0 %v2177
    %2858 = vmatpush1.bf16.msra.mxu0 %v2176
    %2859 = vmatprep.subr.bf16.mxu0 %v2190
    %2860 = vmatpush1.bf16.msra.mxu0 %v2189
    %2861 = vmatprep.subr.bf16.mxu0 %v2203
    %2862 = vmatpush1.bf16.msra.mxu0 %v2202
    %2863 = vmatprep.subr.bf16.mxu0 %v2216
    %2864 = vmatpush1.bf16.msra.mxu0 %v2215
    %2865 = vmatprep.subr.bf16.mxu0 %v2229
    %2866 = vmatpush1.bf16.msra.mxu0 %v2228
    %2867 = vmatprep.subr.bf16.mxu0 %v2242
    %2868 = vmatpush1.bf16.msra.mxu0 %v2241
    %2869 = vmatprep.subr.bf16.mxu0 %v2255
    %2870 = vmatpush1.bf16.msra.mxu0 %v2254
    %2871 = vmatprep.subr.bf16.mxu0 %v2268
    %2872 = vmatpush1.bf16.msra.mxu0 %v2267
    %2873 = vmatprep.subr.bf16.mxu0 %v2281
    %2874 = vmatpush1.bf16.msra.mxu0 %v2280
    %2875 = vmatprep.subr.bf16.mxu0 %v2294
    %2876 = vmatpush1.bf16.msra.mxu0 %v2293
    %2877 = vmatprep.subr.bf16.mxu0 %v2307
    %2878 = vmatpush1.bf16.msra.mxu0 %v2306
    %2879 = vmatprep.mubr.bf16.mxu0 0
    %2880 = vmatmul.mubr.bf16.gmra.mrb[0].mxu0 0
    %v2881 = vpop.f32.mrb[0].mxu0
    %v2882 = vadd.f32 0.0, %v2881
    %v2883 = vpop.f32.mrb[0].mxu0
    %v2884 = vadd.f32 0.0, %v2883
    %v2885 = vpop.f32.mrb[0].mxu0
    %v2886 = vpop.f32.mrb[0].mxu0
    %2887 = vdwg.mxu0
    %2888 = vmatprep.subr.bf16.mxu0 %v2320
    %2889 = vmatpush1.bf16.msra.mxu0 %v2319
    %2890 = vmatprep.subr.bf16.mxu0 %v2333
    %2891 = vmatpush1.bf16.msra.mxu0 %v2332
    %2892 = vmatprep.subr.bf16.mxu0 %v2346
    %2893 = vmatpush1.bf16.msra.mxu0 %v2345
    %2894 = vmatprep.subr.bf16.mxu0 %v2359
    %2895 = vmatpush1.bf16.msra.mxu0 %v2358
    %2896 = vmatprep.subr.bf16.mxu0 %v2372
    %2897 = vmatpush1.bf16.msra.mxu0 %v2371
    %2898 = vmatprep.subr.bf16.mxu0 %v2385
    %2899 = vmatpush1.bf16.msra.mxu0 %v2384
    %2900 = vmatprep.subr.bf16.mxu0 %v2398
    %2901 = vmatpush1.bf16.msra.mxu0 %v2397
    %2902 = vmatprep.subr.bf16.mxu0 %v2411
    %2903 = vmatpush1.bf16.msra.mxu0 %v2410
    %2904 = vmatprep.subr.bf16.mxu0 %v2424
    %2905 = vmatpush1.bf16.msra.mxu0 %v2423
    %2906 = vmatprep.subr.bf16.mxu0 %v2437
    %2907 = vmatpush1.bf16.msra.mxu0 %v2436
    %2908 = vmatprep.subr.bf16.mxu0 %v2450
    %2909 = vmatpush1.bf16.msra.mxu0 %v2449
    %2910 = vmatprep.subr.bf16.mxu0 %v2463
    %2911 = vmatpush1.bf16.msra.mxu0 %v2462
    %2912 = vmatprep.subr.bf16.mxu0 %v2476
    %2913 = vmatpush1.bf16.msra.mxu0 %v2475
    %2914 = vmatprep.subr.bf16.mxu0 %v2489
    %2915 = vmatpush1.bf16.msra.mxu0 %v2488
    %2916 = vmatprep.subr.bf16.mxu0 %v2502
    %2917 = vmatpush1.bf16.msra.mxu0 %v2501
    %2918 = vmatprep.subr.bf16.mxu0 %v2515
    %2919 = vmatpush1.bf16.msra.mxu0 %v2514
    %2920 = vmatprep.mubr.bf16.mxu0 0
    %2921 = vmatmul.mubr.bf16.gmra.mrb[0].mxu0 0
    %v2922 = vpop.f32.mrb[0].mxu0
    %v2923 = vadd.f32 %v2882, %v2922
    %v2924 = vpop.f32.mrb[0].mxu0
    %v2925 = vadd.f32 %v2884, %v2924
    %v2926 = vpop.f32.mrb[0].mxu0
    %v2927 = vpop.f32.mrb[0].mxu0
    %2928 = vdwg.mxu0
    %2929 = vmatprep.subr.bf16.mxu0 %v2114
    %2930 = vmatpush1.bf16.msra.mxu0 %v2113
    %2931 = vmatprep.subr.bf16.mxu0 %v2127
    %2932 = vmatpush1.bf16.msra.mxu0 %v2126
    %2933 = vmatprep.subr.bf16.mxu0 %v2140
    %2934 = vmatpush1.bf16.msra.mxu0 %v2139
    %2935 = vmatprep.subr.bf16.mxu0 %v2153
    %2936 = vmatpush1.bf16.msra.mxu0 %v2152
    %2937 = vmatprep.subr.bf16.mxu0 %v2166
    %2938 = vmatpush1.bf16.msra.mxu0 %v2165
    %2939 = vmatprep.subr.bf16.mxu0 %v2179
    %2940 = vmatpush1.bf16.msra.mxu0 %v2178
    %2941 = vmatprep.subr.bf16.mxu0 %v2192
    %2942 = vmatpush1.bf16.msra.mxu0 %v2191
    %2943 = vmatprep.subr.bf16.mxu0 %v2205
    %2944 = vmatpush1.bf16.msra.mxu0 %v2204
    %2945 = vmatprep.subr.bf16.mxu0 %v2218
    %2946 = vmatpush1.bf16.msra.mxu0 %v2217
    %2947 = vmatprep.subr.bf16.mxu0 %v2231
    %2948 = vmatpush1.bf16.msra.mxu0 %v2230
    %2949 = vmatprep.subr.bf16.mxu0 %v2244
    %2950 = vmatpush1.bf16.msra.mxu0 %v2243
    %2951 = vmatprep.subr.bf16.mxu0 %v2257
    %2952 = vmatpush1.bf16.msra.mxu0 %v2256
    %2953 = vmatprep.subr.bf16.mxu0 %v2270
    %2954 = vmatpush1.bf16.msra.mxu0 %v2269
    %2955 = vmatprep.subr.bf16.mxu0 %v2283
    %2956 = vmatpush1.bf16.msra.mxu0 %v2282
    %2957 = vmatprep.subr.bf16.mxu0 %v2296
    %2958 = vmatpush1.bf16.msra.mxu0 %v2295
    %2959 = vmatprep.subr.bf16.mxu0 %v2309
    %2960 = vmatpush1.bf16.msra.mxu0 %v2308
    %2961 = vmatprep.mubr.bf16.mxu0 0
    %2962 = vmatmul.mubr.bf16.gmra.mrb[0].mxu0 0
    %v2963 = vpop.f32.mrb[0].mxu0
    %v2964 = vadd.f32 0.0, %v2963
    %v2965 = vpop.f32.mrb[0].mxu0
    %v2966 = vadd.f32 0.0, %v2965
    %v2967 = vpop.f32.mrb[0].mxu0
    %v2968 = vpop.f32.mrb[0].mxu0
    %2969 = vdwg.mxu0
    %2970 = vmatprep.subr.bf16.mxu0 %v2322
    %2971 = vmatpush1.bf16.msra.mxu0 %v2321
    %2972 = vmatprep.subr.bf16.mxu0 %v2335
    %2973 = vmatpush1.bf16.msra.mxu0 %v2334
    %2974 = vmatprep.subr.bf16.mxu0 %v2348
    %2975 = vmatpush1.bf16.msra.mxu0 %v2347
    %2976 = vmatprep.subr.bf16.mxu0 %v2361
    %2977 = vmatpush1.bf16.msra.mxu0 %v2360
    %2978 = vmatprep.subr.bf16.mxu0 %v2374
    %2979 = vmatpush1.bf16.msra.mxu0 %v2373
    %2980 = vmatprep.subr.bf16.mxu0 %v2387
    %2981 = vmatpush1.bf16.msra.mxu0 %v2386
    %2982 = vmatprep.subr.bf16.mxu0 %v2400
    %2983 = vmatpush1.bf16.msra.mxu0 %v2399
    %2984 = vmatprep.subr.bf16.mxu0 %v2413
    %2985 = vmatpush1.bf16.msra.mxu0 %v2412
    %2986 = vmatprep.subr.bf16.mxu0 %v2426
    %2987 = vmatpush1.bf16.msra.mxu0 %v2425
    %2988 = vmatprep.subr.bf16.mxu0 %v2439
    %2989 = vmatpush1.bf16.msra.mxu0 %v2438
    %2990 = vmatprep.subr.bf16.mxu0 %v2452
    %2991 = vmatpush1.bf16.msra.mxu0 %v2451
    %2992 = vmatprep.subr.bf16.mxu0 %v2465
    %2993 = vmatpush1.bf16.msra.mxu0 %v2464
    %2994 = vmatprep.subr.bf16.mxu0 %v2478
    %2995 = vmatpush1.bf16.msra.mxu0 %v2477
    %2996 = vmatprep.subr.bf16.mxu0 %v2491
    %2997 = vmatpush1.bf16.msra.mxu0 %v2490
    %2998 = vmatprep.subr.bf16.mxu0 %v2504
    %2999 = vmatpush1.bf16.msra.mxu0 %v2503
    %3000 = vmatprep.subr.bf16.mxu0 %v2517
    %3001 = vmatpush1.bf16.msra.mxu0 %v2516
    %3002 = vmatprep.mubr.bf16.mxu0 0
    %3003 = vmatmul.mubr.bf16.gmra.mrb[0].mxu0 0
    %v3004 = vpop.f32.mrb[0].mxu0
    %v3005 = vadd.f32 %v2964, %v3004
    %v3006 = vpop.f32.mrb[0].mxu0
    %v3007 = vadd.f32 %v2966, %v3006
    %v3008 = vpop.f32.mrb[0].mxu0
    %v3009 = vpop.f32.mrb[0].mxu0
    %3010 = vdwg.mxu0
    %3011 = vmatprep.subr.bf16.mxu0 0
    %3012 = vmatpush1.bf16.msra.mxu0 %v2115
    %3013 = vmatprep.subr.bf16.mxu0 0
    %3014 = vmatpush1.bf16.msra.mxu0 %v2128
    %3015 = vmatprep.subr.bf16.mxu0 0
    %3016 = vmatpush1.bf16.msra.mxu0 %v2141
    %3017 = vmatprep.subr.bf16.mxu0 0
    %3018 = vmatpush1.bf16.msra.mxu0 %v2154
    %3019 = vmatprep.subr.bf16.mxu0 0
    %3020 = vmatpush1.bf16.msra.mxu0 %v2167
    %3021 = vmatprep.subr.bf16.mxu0 0
    %3022 = vmatpush1.bf16.msra.mxu0 %v2180
    %3023 = vmatprep.subr.bf16.mxu0 0
    %3024 = vmatpush1.bf16.msra.mxu0 %v2193
    %3025 = vmatprep.subr.bf16.mxu0 0
    %3026 = vmatpush1.bf16.msra.mxu0 %v2206
    %3027 = vmatprep.subr.bf16.mxu0 0
    %3028 = vmatpush1.bf16.msra.mxu0 %v2219
    %3029 = vmatprep.subr.bf16.mxu0 0
    %3030 = vmatpush1.bf16.msra.mxu0 %v2232
    %3031 = vmatprep.subr.bf16.mxu0 0
    %3032 = vmatpush1.bf16.msra.mxu0 %v2245
    %3033 = vmatprep.subr.bf16.mxu0 0
    %3034 = vmatpush1.bf16.msra.mxu0 %v2258
    %3035 = vmatprep.subr.bf16.mxu0 0
    %3036 = vmatpush1.bf16.msra.mxu0 %v2271
    %3037 = vmatprep.subr.bf16.mxu0 0
    %3038 = vmatpush1.bf16.msra.mxu0 %v2284
    %3039 = vmatprep.subr.bf16.mxu0 0
    %3040 = vmatpush1.bf16.msra.mxu0 %v2297
    %3041 = vmatprep.subr.bf16.mxu0 0
    %3042 = vmatpush1.bf16.msra.mxu0 %v2310
    %3043 = vmatprep.mubr.bf16.mxu0 0
    %3044 = vmatmul.mubr.bf16.gmra.mrb[0].mxu0 0
    %v3045 = vpop.f32.mrb[0].mxu0
    %v3046 = vadd.f32 0.0, %v3045
    %v3047 = vpop.f32.mrb[0].mxu0
    %v3048 = vpop.f32.mrb[0].mxu0
    %v3049 = vpop.f32.mrb[0].mxu0
    %3050 = vdwg.mxu0
    %3051 = vmatprep.subr.bf16.mxu0 0
    %3052 = vmatpush1.bf16.msra.mxu0 %v2323
    %3053 = vmatprep.subr.bf16.mxu0 0
    %3054 = vmatpush1.bf16.msra.mxu0 %v2336
    %3055 = vmatprep.subr.bf16.mxu0 0
    %3056 = vmatpush1.bf16.msra.mxu0 %v2349
    %3057 = vmatprep.subr.bf16.mxu0 0
    %3058 = vmatpush1.bf16.msra.mxu0 %v2362
    %3059 = vmatprep.subr.bf16.mxu0 0
    %3060 = vmatpush1.bf16.msra.mxu0 %v2375
    %3061 = vmatprep.subr.bf16.mxu0 0
    %3062 = vmatpush1.bf16.msra.mxu0 %v2388
    %3063 = vmatprep.subr.bf16.mxu0 0
    %3064 = vmatpush1.bf16.msra.mxu0 %v2401
    %3065 = vmatprep.subr.bf16.mxu0 0
    %3066 = vmatpush1.bf16.msra.mxu0 %v2414
    %3067 = vmatprep.subr.bf16.mxu0 0
    %3068 = vmatpush1.bf16.msra.mxu0 %v2427
    %3069 = vmatprep.subr.bf16.mxu0 0
    %3070 = vmatpush1.bf16.msra.mxu0 %v2440
    %3071 = vmatprep.subr.bf16.mxu0 0
    %3072 = vmatpush1.bf16.msra.mxu0 %v2453
    %3073 = vmatprep.subr.bf16.mxu0 0
    %3074 = vmatpush1.bf16.msra.mxu0 %v2466
    %3075 = vmatprep.subr.bf16.mxu0 0
    %3076 = vmatpush1.bf16.msra.mxu0 %v2479
    %3077 = vmatprep.subr.bf16.mxu0 0
    %3078 = vmatpush1.bf16.msra.mxu0 %v2492
    %3079 = vmatprep.subr.bf16.mxu0 0
    %3080 = vmatpush1.bf16.msra.mxu0 %v2505
    %3081 = vmatprep.subr.bf16.mxu0 0
    %3082 = vmatpush1.bf16.msra.mxu0 %v2518
    %3083 = vmatprep.mubr.bf16.mxu0 0
    %3084 = vmatmul.mubr.bf16.gmra.mrb[0].mxu0 0
    %v3085 = vpop.f32.mrb[0].mxu0
    %v3086 = vadd.f32 %v3046, %v3085
    %v3087 = vpop.f32.mrb[0].mxu0
    %v3088 = vpop.f32.mrb[0].mxu0
    %v3089 = vpop.f32.mrb[0].mxu0
    %3090 = vdwg.mxu0
    %v3091 = vld [vmem:[#allocation2] sm:$0xff]
    %v3092 = vld [vmem:[#allocation2 + $0x8] sm:$0xff]
    %v3093 = vld [vmem:[#allocation2 + $0x10] sm:$0xff]
    %v3094 = vld [vmem:[#allocation2 + $0x18] sm:$0xff]
    %v3095 = vld [vmem:[#allocation2 + $0x20] sm:$0xff]
    %v3096 = vld [vmem:[#allocation2 + $0x28] sm:$0xff]
    %v3097 = vld [vmem:[#allocation2 + $0x30] sm:$0xff]
    %v3098 = vld [vmem:[#allocation2 + $0x38] sm:$0xff]
    %v3099 = vld [vmem:[#allocation2 + $0x40] sm:$0xff]
    %v3100 = vld [vmem:[#allocation2 + $0x48] sm:$0xff]
    %v3101 = vld [vmem:[#allocation2 + $0x50] sm:$0xff]
    %v3102 = vld [vmem:[#allocation2 + $0x58] sm:$0xff]
    %v3103 = vld [vmem:[#allocation2 + $0x60] sm:$0xff]
    %v3104 = vadd.f32 %v3091, %v2595
    %v3105 = vadd.f32 %v3092, %v2597
    %v3106 = vadd.f32 %v3093, %v2677
    %v3107 = vmul.f32 %v3104, 0.5
    %v3108 = vmul.f32 %v3105, 0.5
    %v3109 = vmul.f32 %v3106, 0.5
    %v3110 = vtanh.pop %v3107
    %v3111 = vtanh.pop %v3108
    %v3112 = vtanh.pop %v3109
    %v3113 = vmul.f32 %v3110, 0.5
    %v3114 = vmul.f32 %v3111, 0.5
    %v3115 = vmul.f32 %v3112, 0.5
    %v3116 = vadd.f32 %v3113, 0.5
    %v3117 = vadd.f32 %v3114, 0.5
    %v3118 = vadd.f32 %v3115, 0.5
    %v3119 = vadd.f32 %v3094, %v2679
    %v3120 = vadd.f32 %v3095, %v2759
    %v3121 = vadd.f32 %v3096, %v2761
    %v3122 = vmul.f32 %v3119, 0.5
    %v3123 = vmul.f32 %v3120, 0.5
    %v3124 = vmul.f32 %v3121, 0.5
    %v3125 = vtanh.pop %v3122
    %v3126 = vtanh.pop %v3123
    %v3127 = vtanh.pop %v3124
    %v3128 = vmul.f32 %v3125, 0.5
    %v3129 = vmul.f32 %v3126, 0.5
    %v3130 = vmul.f32 %v3127, 0.5
    %v3131 = vadd.f32 %v3128, 0.5
    %v3132 = vadd.f32 %v3129, 0.5
    %v3133 = vadd.f32 %v3130, 0.5
    %v3135 = vlaneseq
    %v3136 = vshrl.u32 %v3135, 7
    %v3137 = vsub.s32 0, %v3136
    %v3138 = vrot.slane %v2102, %v3137
    %v3139 = vlaneseq
    %v3140 = vshrl.u32 %v3139, 7
    %v3141 = vsub.s32 1, %v3140
    %v3142 = vrot.slane %v2102, %v3141
    %v3143 = vlaneseq
    %v3144 = vshrl.u32 %v3143, 7
    %v3145 = vsub.s32 2, %v3144
    %v3146 = vrot.slane %v2102, %v3145
    %v3150 = vadd.f32 %v2841, %v3138
    %v3151 = vadd.f32 %v2843, %v3142
    %v3152 = vadd.f32 %v2923, %v3146
    %v3153 = vmul.f32 %v3116, %v3150
    %v3154 = vmul.f32 %v3117, %v3151
    %v3155 = vmul.f32 %v3118, %v3152
    %v3156 = vadd.f32 %v3097, %v3153
    %v3157 = vadd.f32 %v3098, %v3154
    %v3158 = vadd.f32 %v3099, %v3155
    %v3159 = vtanh.pop %v3156
    %v3160 = vtanh.pop %v3157
    %v3161 = vtanh.pop %v3158
    %v3162 = vsub.f32 0.0, %v3159
    %v3163 = vsub.f32 0.0, %v3160
    %v3164 = vsub.f32 0.0, %v3161
    %v3165 = vmul.f32 %v3131, %v3162
    %v3166 = vmul.f32 %v3132, %v3163
    %v3167 = vmul.f32 %v3133, %v3164
    %v3168 = vadd.f32 %v3159, %v3165
    %v3169 = vadd.f32 %v3160, %v3166
    %v3170 = vadd.f32 %v3161, %v3167
    %v3171 = vadd.f32 %v3100, %v2925
    %v3172 = vadd.f32 %v3101, %v3005
    %v3173 = vadd.f32 %v3102, %v3007
    %v3174 = vadd.f32 %v3103, %v3086
    %v3175 = vmul.f32 %v3171, 0.5
    %v3176 = vtanh.pop %v3175
    %v3177 = vmul.f32 %v3176, 0.5
    %v3178 = vadd.f32 %v3177, 0.5
    %v3179 = vmul.f32 %v3172, 0.5
    %v3180 = vtanh.pop %v3179
    %v3181 = vmul.f32 %v3180, 0.5
    %v3182 = vadd.f32 %v3181, 0.5
    %v3183 = vtanh.pop %v3173
    %v3184 = vmul.f32 %v3174, 0.5
    %v3185 = vtanh.pop %v3184
    %v3186 = vmul.f32 %v3185, 0.5
    %v3187 = vadd.f32 %v3186, 0.5
    %v3188 = vmul.f32 %v3182, 0.0
    %v3189 = vmul.f32 %v3178, %v3183
    %v3190 = vadd.f32 %v3188, %v3189
    %v3191 = vtanh.pop %v3190
    %v3192 = vmul.f32 %v3187, %v3191
    %v3193 = vpack.c.bf16 %v3168, %v3168
    %v3194 = vpack.c.bf16 %v3169, %v3169
    %v3195 = vpack.c.bf16 %v3170, %v3170
    %v3196 = vpack.c.bf16 %v3192, %v3192
    %3197 = vmatprep.subr.bf16.mxu0 %v2104
    %3198 = vmatpush1.bf16.msra.mxu0 %v2103
    %3199 = vmatprep.subr.bf16.mxu0 %v2117
    %3200 = vmatpush1.bf16.msra.mxu0 %v2116
    %3201 = vmatprep.subr.bf16.mxu0 %v2130
    %3202 = vmatpush1.bf16.msra.mxu0 %v2129
    %3203 = vmatprep.subr.bf16.mxu0 %v2143
    %3204 = vmatpush1.bf16.msra.mxu0 %v2142
    %3205 = vmatprep.subr.bf16.mxu0 %v2156
    %3206 = vmatpush1.bf16.msra.mxu0 %v2155
    %3207 = vmatprep.subr.bf16.mxu0 %v2169
    %3208 = vmatpush1.bf16.msra.mxu0 %v2168
    %3209 = vmatprep.subr.bf16.mxu0 %v2182
    %3210 = vmatpush1.bf16.msra.mxu0 %v2181
    %3211 = vmatprep.subr.bf16.mxu0 %v2195
    %3212 = vmatpush1.bf16.msra.mxu0 %v2194
    %3213 = vmatprep.subr.bf16.mxu0 %v2208
    %3214 = vmatpush1.bf16.msra.mxu0 %v2207
    %3215 = vmatprep.subr.bf16.mxu0 %v2221
    %3216 = vmatpush1.bf16.msra.mxu0 %v2220
    %3217 = vmatprep.subr.bf16.mxu0 %v2234
    %3218 = vmatpush1.bf16.msra.mxu0 %v2233
    %3219 = vmatprep.subr.bf16.mxu0 %v2247
    %3220 = vmatpush1.bf16.msra.mxu0 %v2246
    %3221 = vmatprep.subr.bf16.mxu0 %v2260
    %3222 = vmatpush1.bf16.msra.mxu0 %v2259
    %3223 = vmatprep.subr.bf16.mxu0 %v2273
    %3224 = vmatpush1.bf16.msra.mxu0 %v2272
    %3225 = vmatprep.subr.bf16.mxu0 %v2286
    %3226 = vmatpush1.bf16.msra.mxu0 %v2285
    %3227 = vmatprep.subr.bf16.mxu0 %v2299
    %3228 = vmatpush1.bf16.msra.mxu0 %v2298
    %3229 = vmatprep.mubr.bf16.mxu0 %v3194
    %3230 = vmatmul.mubr.bf16.gmra.mrb[0].mxu0 %v3193
    %v3231 = vpop.f32.mrb[0].mxu0
    %v3232 = vadd.f32 0.0, %v3231
    %v3233 = vpop.f32.mrb[0].mxu0
    %v3234 = vadd.f32 0.0, %v3233
    %v3235 = vpop.f32.mrb[0].mxu0
    %v3236 = vpop.f32.mrb[0].mxu0
    %3237 = vdwg.mxu0
    %3238 = vmatprep.subr.bf16.mxu0 %v2312
    %3239 = vmatpush1.bf16.msra.mxu0 %v2311
    %3240 = vmatprep.subr.bf16.mxu0 %v2325
    %3241 = vmatpush1.bf16.msra.mxu0 %v2324
    %3242 = vmatprep.subr.bf16.mxu0 %v2338
    %3243 = vmatpush1.bf16.msra.mxu0 %v2337
    %3244 = vmatprep.subr.bf16.mxu0 %v2351
    %3245 = vmatpush1.bf16.msra.mxu0 %v2350
    %3246 = vmatprep.subr.bf16.mxu0 %v2364
    %3247 = vmatpush1.bf16.msra.mxu0 %v2363
    %3248 = vmatprep.subr.bf16.mxu0 %v2377
    %3249 = vmatpush1.bf16.msra.mxu0 %v2376
    %3250 = vmatprep.subr.bf16.mxu0 %v2390
    %3251 = vmatpush1.bf16.msra.mxu0 %v2389
    %3252 = vmatprep.subr.bf16.mxu0 %v2403
    %3253 = vmatpush1.bf16.msra.mxu0 %v2402
    %3254 = vmatprep.subr.bf16.mxu0 %v2416
    %3255 = vmatpush1.bf16.msra.mxu0 %v2415
    %3256 = vmatprep.subr.bf16.mxu0 %v2429
    %3257 = vmatpush1.bf16.msra.mxu0 %v2428
    %3258 = vmatprep.subr.bf16.mxu0 %v2442
    %3259 = vmatpush1.bf16.msra.mxu0 %v2441
    %3260 = vmatprep.subr.bf16.mxu0 %v2455
    %3261 = vmatpush1.bf16.msra.mxu0 %v2454
    %3262 = vmatprep.subr.bf16.mxu0 %v2468
    %3263 = vmatpush1.bf16.msra.mxu0 %v2467
    %3264 = vmatprep.subr.bf16.mxu0 %v2481
    %3265 = vmatpush1.bf16.msra.mxu0 %v2480
    %3266 = vmatprep.subr.bf16.mxu0 %v2494
    %3267 = vmatpush1.bf16.msra.mxu0 %v2493
    %3268 = vmatprep.subr.bf16.mxu0 %v2507
    %3269 = vmatpush1.bf16.msra.mxu0 %v2506
    %3270 = vmatprep.mubr.bf16.mxu0 %v3196
    %3271 = vmatmul.mubr.bf16.gmra.mrb[0].mxu0 %v3195
    %v3272 = vpop.f32.mrb[0].mxu0
    %v3273 = vadd.f32 %v3232, %v3272
    %v3274 = vpop.f32.mrb[0].mxu0
    %v3275 = vadd.f32 %v3234, %v3274
    %v3276 = vpop.f32.mrb[0].mxu0
    %v3277 = vpop.f32.mrb[0].mxu0
    %3278 = vdwg.mxu0
    %3279 = vmatprep.subr.bf16.mxu0 %v2106
    %3280 = vmatpush1.bf16.msra.mxu0 %v2105
    %3281 = vmatprep.subr.bf16.mxu0 %v2119
    %3282 = vmatpush1.bf16.msra.mxu0 %v2118
    %3283 = vmatprep.subr.bf16.mxu0 %v2132
    %3284 = vmatpush1.bf16.msra.mxu0 %v2131
    %3285 = vmatprep.subr.bf16.mxu0 %v2145
    %3286 = vmatpush1.bf16.msra.mxu0 %v2144
    %3287 = vmatprep.subr.bf16.mxu0 %v2158
    %3288 = vmatpush1.bf16.msra.mxu0 %v2157
    %3289 = vmatprep.subr.bf16.mxu0 %v2171
    %3290 = vmatpush1.bf16.msra.mxu0 %v2170
    %3291 = vmatprep.subr.bf16.mxu0 %v2184
    %3292 = vmatpush1.bf16.msra.mxu0 %v2183
    %3293 = vmatprep.subr.bf16.mxu0 %v2197
    %3294 = vmatpush1.bf16.msra.mxu0 %v2196
    %3295 = vmatprep.subr.bf16.mxu0 %v2210
    %3296 = vmatpush1.bf16.msra.mxu0 %v2209
    %3297 = vmatprep.subr.bf16.mxu0 %v2223
    %3298 = vmatpush1.bf16.msra.mxu0 %v2222
    %3299 = vmatprep.subr.bf16.mxu0 %v2236
    %3300 = vmatpush1.bf16.msra.mxu0 %v2235
    %3301 = vmatprep.subr.bf16.mxu0 %v2249
    %3302 = vmatpush1.bf16.msra.mxu0 %v2248
    %3303 = vmatprep.subr.bf16.mxu0 %v2262
    %3304 = vmatpush1.bf16.msra.mxu0 %v2261
    %3305 = vmatprep.subr.bf16.mxu0 %v2275
    %3306 = vmatpush1.bf16.msra.mxu0 %v2274
    %3307 = vmatprep.subr.bf16.mxu0 %v2288
    %3308 = vmatpush1.bf16.msra.mxu0 %v2287
    %3309 = vmatprep.subr.bf16.mxu0 %v2301
    %3310 = vmatpush1.bf16.msra.mxu0 %v2300
    %3311 = vmatprep.mubr.bf16.mxu0 %v3194
    %3312 = vmatmul.mubr.bf16.gmra.mrb[0].mxu0 %v3193
    %v3313 = vpop.f32.mrb[0].mxu0
    %v3314 = vadd.f32 0.0, %v3313
    %v3315 = vpop.f32.mrb[0].mxu0
    %v3316 = vadd.f32 0.0, %v3315
    %v3317 = vpop.f32.mrb[0].mxu0
    %v3318 = vpop.f32.mrb[0].mxu0
    %3319 = vdwg.mxu0
    %3320 = vmatprep.subr.bf16.mxu0 %v2314
    %3321 = vmatpush1.bf16.msra.mxu0 %v2313
    %3322 = vmatprep.subr.bf16.mxu0 %v2327
    %3323 = vmatpush1.bf16.msra.mxu0 %v2326
    %3324 = vmatprep.subr.bf16.mxu0 %v2340
    %3325 = vmatpush1.bf16.msra.mxu0 %v2339
    %3326 = vmatprep.subr.bf16.mxu0 %v2353
    %3327 = vmatpush1.bf16.msra.mxu0 %v2352
    %3328 = vmatprep.subr.bf16.mxu0 %v2366
    %3329 = vmatpush1.bf16.msra.mxu0 %v2365
    %3330 = vmatprep.subr.bf16.mxu0 %v2379
    %3331 = vmatpush1.bf16.msra.mxu0 %v2378
    %3332 = vmatprep.subr.bf16.mxu0 %v2392
    %3333 = vmatpush1.bf16.msra.mxu0 %v2391
    %3334 = vmatprep.subr.bf16.mxu0 %v2405
    %3335 = vmatpush1.bf16.msra.mxu0 %v2404
    %3336 = vmatprep.subr.bf16.mxu0 %v2418
    %3337 = vmatpush1.bf16.msra.mxu0 %v2417
    %3338 = vmatprep.subr.bf16.mxu0 %v2431
    %3339 = vmatpush1.bf16.msra.mxu0 %v2430
    %3340 = vmatprep.subr.bf16.mxu0 %v2444
    %3341 = vmatpush1.bf16.msra.mxu0 %v2443
    %3342 = vmatprep.subr.bf16.mxu0 %v2457
    %3343 = vmatpush1.bf16.msra.mxu0 %v2456
    %3344 = vmatprep.subr.bf16.mxu0 %v2470
    %3345 = vmatpush1.bf16.msra.mxu0 %v2469
    %3346 = vmatprep.subr.bf16.mxu0 %v2483
    %3347 = vmatpush1.bf16.msra.mxu0 %v2482
    %3348 = vmatprep.subr.bf16.mxu0 %v2496
    %3349 = vmatpush1.bf16.msra.mxu0 %v2495
    %3350 = vmatprep.subr.bf16.mxu0 %v2509
    %3351 = vmatpush1.bf16.msra.mxu0 %v2508
    %3352 = vmatprep.mubr.bf16.mxu0 %v3196
    %3353 = vmatmul.mubr.bf16.gmra.mrb[0].mxu0 %v3195
    %v3354 = vpop.f32.mrb[0].mxu0
    %v3355 = vadd.f32 %v3314, %v3354
    %v3356 = vpop.f32.mrb[0].mxu0
    %v3357 = vadd.f32 %v3316, %v3356
    %v3358 = vpop.f32.mrb[0].mxu0
    %v3359 = vpop.f32.mrb[0].mxu0
    %3360 = vdwg.mxu0
    %3361 = vmatprep.subr.bf16.mxu0 %v2108
    %3362 = vmatpush1.bf16.msra.mxu0 %v2107
    %3363 = vmatprep.subr.bf16.mxu0 %v2121
    %3364 = vmatpush1.bf16.msra.mxu0 %v2120
    %3365 = vmatprep.subr.bf16.mxu0 %v2134
    %3366 = vmatpush1.bf16.msra.mxu0 %v2133
    %3367 = vmatprep.subr.bf16.mxu0 %v2147
    %3368 = vmatpush1.bf16.msra.mxu0 %v2146
    %3369 = vmatprep.subr.bf16.mxu0 %v2160
    %3370 = vmatpush1.bf16.msra.mxu0 %v2159
    %3371 = vmatprep.subr.bf16.mxu0 %v2173
    %3372 = vmatpush1.bf16.msra.mxu0 %v2172
    %3373 = vmatprep.subr.bf16.mxu0 %v2186
    %3374 = vmatpush1.bf16.msra.mxu0 %v2185
    %3375 = vmatprep.subr.bf16.mxu0 %v2199
    %3376 = vmatpush1.bf16.msra.mxu0 %v2198
    %3377 = vmatprep.subr.bf16.mxu0 %v2212
    %3378 = vmatpush1.bf16.msra.mxu0 %v2211
    %3379 = vmatprep.subr.bf16.mxu0 %v2225
    %3380 = vmatpush1.bf16.msra.mxu0 %v2224
    %3381 = vmatprep.subr.bf16.mxu0 %v2238
    %3382 = vmatpush1.bf16.msra.mxu0 %v2237
    %3383 = vmatprep.subr.bf16.mxu0 %v2251
    %3384 = vmatpush1.bf16.msra.mxu0 %v2250
    %3385 = vmatprep.subr.bf16.mxu0 %v2264
    %3386 = vmatpush1.bf16.msra.mxu0 %v2263
    %3387 = vmatprep.subr.bf16.mxu0 %v2277
    %3388 = vmatpush1.bf16.msra.mxu0 %v2276
    %3389 = vmatprep.subr.bf16.mxu0 %v2290
    %3390 = vmatpush1.bf16.msra.mxu0 %v2289
    %3391 = vmatprep.subr.bf16.mxu0 %v2303
    %3392 = vmatpush1.bf16.msra.mxu0 %v2302
    %3393 = vmatprep.mubr.bf16.mxu0 %v3194
    %3394 = vmatmul.mubr.bf16.gmra.mrb[0].mxu0 %v3193
    %v3395 = vpop.f32.mrb[0].mxu0
    %v3396 = vadd.f32 0.0, %v3395
    %v3397 = vpop.f32.mrb[0].mxu0
    %v3398 = vadd.f32 0.0, %v3397
    %v3399 = vpop.f32.mrb[0].mxu0
    %v3400 = vpop.f32.mrb[0].mxu0
    %3401 = vdwg.mxu0
    %3402 = vmatprep.subr.bf16.mxu0 %v2316
    %3403 = vmatpush1.bf16.msra.mxu0 %v2315
    %3404 = vmatprep.subr.bf16.mxu0 %v2329
    %3405 = vmatpush1.bf16.msra.mxu0 %v2328
    %3406 = vmatprep.subr.bf16.mxu0 %v2342
    %3407 = vmatpush1.bf16.msra.mxu0 %v2341
    %3408 = vmatprep.subr.bf16.mxu0 %v2355
    %3409 = vmatpush1.bf16.msra.mxu0 %v2354
    %3410 = vmatprep.subr.bf16.mxu0 %v2368
    %3411 = vmatpush1.bf16.msra.mxu0 %v2367
    %3412 = vmatprep.subr.bf16.mxu0 %v2381
    %3413 = vmatpush1.bf16.msra.mxu0 %v2380
    %3414 = vmatprep.subr.bf16.mxu0 %v2394
    %3415 = vmatpush1.bf16.msra.mxu0 %v2393
    %3416 = vmatprep.subr.bf16.mxu0 %v2407
    %3417 = vmatpush1.bf16.msra.mxu0 %v2406
    %3418 = vmatprep.subr.bf16.mxu0 %v2420
    %3419 = vmatpush1.bf16.msra.mxu0 %v2419
    %3420 = vmatprep.subr.bf16.mxu0 %v2433
    %3421 = vmatpush1.bf16.msra.mxu0 %v2432
    %3422 = vmatprep.subr.bf16.mxu0 %v2446
    %3423 = vmatpush1.bf16.msra.mxu0 %v2445
    %3424 = vmatprep.subr.bf16.mxu0 %v2459
    %3425 = vmatpush1.bf16.msra.mxu0 %v2458
    %3426 = vmatprep.subr.bf16.mxu0 %v2472
    %3427 = vmatpush1.bf16.msra.mxu0 %v2471
    %3428 = vmatprep.subr.bf16.mxu0 %v2485
    %3429 = vmatpush1.bf16.msra.mxu0 %v2484
    %3430 = vmatprep.subr.bf16.mxu0 %v2498
    %3431 = vmatpush1.bf16.msra.mxu0 %v2497
    %3432 = vmatprep.subr.bf16.mxu0 %v2511
    %3433 = vmatpush1.bf16.msra.mxu0 %v2510
    %3434 = vmatprep.mubr.bf16.mxu0 %v3196
    %3435 = vmatmul.mubr.bf16.gmra.mrb[0].mxu0 %v3195
    %v3436 = vpop.f32.mrb[0].mxu0
    %v3437 = vadd.f32 %v3396, %v3436
    %v3438 = vpop.f32.mrb[0].mxu0
    %v3439 = vadd.f32 %v3398, %v3438
    %v3440 = vpop.f32.mrb[0].mxu0
    %v3441 = vpop.f32.mrb[0].mxu0
    %3442 = vdwg.mxu0
    %3443 = vmatprep.subr.bf16.mxu0 %v2110
    %3444 = vmatpush1.bf16.msra.mxu0 %v2109
    %3445 = vmatprep.subr.bf16.mxu0 %v2123
    %3446 = vmatpush1.bf16.msra.mxu0 %v2122
    %3447 = vmatprep.subr.bf16.mxu0 %v2136
    %3448 = vmatpush1.bf16.msra.mxu0 %v2135
    %3449 = vmatprep.subr.bf16.mxu0 %v2149
    %3450 = vmatpush1.bf16.msra.mxu0 %v2148
    %3451 = vmatprep.subr.bf16.mxu0 %v2162
    %3452 = vmatpush1.bf16.msra.mxu0 %v2161
    %3453 = vmatprep.subr.bf16.mxu0 %v2175
    %3454 = vmatpush1.bf16.msra.mxu0 %v2174
    %3455 = vmatprep.subr.bf16.mxu0 %v2188
    %3456 = vmatpush1.bf16.msra.mxu0 %v2187
    %3457 = vmatprep.subr.bf16.mxu0 %v2201
    %3458 = vmatpush1.bf16.msra.mxu0 %v2200
    %3459 = vmatprep.subr.bf16.mxu0 %v2214
    %3460 = vmatpush1.bf16.msra.mxu0 %v2213
    %3461 = vmatprep.subr.bf16.mxu0 %v2227
    %3462 = vmatpush1.bf16.msra.mxu0 %v2226
    %3463 = vmatprep.subr.bf16.mxu0 %v2240
    %3464 = vmatpush1.bf16.msra.mxu0 %v2239
    %3465 = vmatprep.subr.bf16.mxu0 %v2253
    %3466 = vmatpush1.bf16.msra.mxu0 %v2252
    %3467 = vmatprep.subr.bf16.mxu0 %v2266
    %3468 = vmatpush1.bf16.msra.mxu0 %v2265
    %3469 = vmatprep.subr.bf16.mxu0 %v2279
    %3470 = vmatpush1.bf16.msra.mxu0 %v2278
    %3471 = vmatprep.subr.bf16.mxu0 %v2292
    %3472 = vmatpush1.bf16.msra.mxu0 %v2291
    %3473 = vmatprep.subr.bf16.mxu0 %v2305
    %3474 = vmatpush1.bf16.msra.mxu0 %v2304
    %3475 = vmatprep.mubr.bf16.mxu0 %v3194
    %3476 = vmatmul.mubr.bf16.gmra.mrb[0].mxu0 %v3193
    %v3477 = vpop.f32.mrb[0].mxu0
    %v3478 = vadd.f32 0.0, %v3477
    %v3479 = vpop.f32.mrb[0].mxu0
    %v3480 = vadd.f32 0.0, %v3479
    %v3481 = vpop.f32.mrb[0].mxu0
    %v3482 = vpop.f32.mrb[0].mxu0
    %3483 = vdwg.mxu0
    %3484 = vmatprep.subr.bf16.mxu0 %v2318
    %3485 = vmatpush1.bf16.msra.mxu0 %v2317
    %3486 = vmatprep.subr.bf16.mxu0 %v2331
    %3487 = vmatpush1.bf16.msra.mxu0 %v2330
    %3488 = vmatprep.subr.bf16.mxu0 %v2344
    %3489 = vmatpush1.bf16.msra.mxu0 %v2343
    %3490 = vmatprep.subr.bf16.mxu0 %v2357
    %3491 = vmatpush1.bf16.msra.mxu0 %v2356
    %3492 = vmatprep.subr.bf16.mxu0 %v2370
    %3493 = vmatpush1.bf16.msra.mxu0 %v2369
    %3494 = vmatprep.subr.bf16.mxu0 %v2383
    %3495 = vmatpush1.bf16.msra.mxu0 %v2382
    %3496 = vmatprep.subr.bf16.mxu0 %v2396
    %3497 = vmatpush1.bf16.msra.mxu0 %v2395
    %3498 = vmatprep.subr.bf16.mxu0 %v2409
    %3499 = vmatpush1.bf16.msra.mxu0 %v2408
    %3500 = vmatprep.subr.bf16.mxu0 %v2422
    %3501 = vmatpush1.bf16.msra.mxu0 %v2421
    %3502 = vmatprep.subr.bf16.mxu0 %v2435
    %3503 = vmatpush1.bf16.msra.mxu0 %v2434
    %3504 = vmatprep.subr.bf16.mxu0 %v2448
    %3505 = vmatpush1.bf16.msra.mxu0 %v2447
    %3506 = vmatprep.subr.bf16.mxu0 %v2461
    %3507 = vmatpush1.bf16.msra.mxu0 %v2460
    %3508 = vmatprep.subr.bf16.mxu0 %v2474
    %3509 = vmatpush1.bf16.msra.mxu0 %v2473
    %3510 = vmatprep.subr.bf16.mxu0 %v2487
    %3511 = vmatpush1.bf16.msra.mxu0 %v2486
    %3512 = vmatprep.subr.bf16.mxu0 %v2500
    %3513 = vmatpush1.bf16.msra.mxu0 %v2499
    %3514 = vmatprep.subr.bf16.mxu0 %v2513
    %3515 = vmatpush1.bf16.msra.mxu0 %v2512
    %3516 = vmatprep.mubr.bf16.mxu0 %v3196
    %3517 = vmatmul.mubr.bf16.gmra.mrb[0].mxu0 %v3195
    %v3518 = vpop.f32.mrb[0].mxu0
    %v3519 = vadd.f32 %v3478, %v3518
    %v3520 = vpop.f32.mrb[0].mxu0
    %v3521 = vadd.f32 %v3480, %v3520
    %v3522 = vpop.f32.mrb[0].mxu0
    %v3523 = vpop.f32.mrb[0].mxu0
    %3524 = vdwg.mxu0
    %3525 = vmatprep.subr.bf16.mxu0 %v2112
    %3526 = vmatpush1.bf16.msra.mxu0 %v2111
    %3527 = vmatprep.subr.bf16.mxu0 %v2125
    %3528 = vmatpush1.bf16.msra.mxu0 %v2124
    %3529 = vmatprep.subr.bf16.mxu0 %v2138
    %3530 = vmatpush1.bf16.msra.mxu0 %v2137
    %3531 = vmatprep.subr.bf16.mxu0 %v2151
    %3532 = vmatpush1.bf16.msra.mxu0 %v2150
    %3533 = vmatprep.subr.bf16.mxu0 %v2164
    %3534 = vmatpush1.bf16.msra.mxu0 %v2163
    %3535 = vmatprep.subr.bf16.mxu0 %v2177
    %3536 = vmatpush1.bf16.msra.mxu0 %v2176
    %3537 = vmatprep.subr.bf16.mxu0 %v2190
    %3538 = vmatpush1.bf16.msra.mxu0 %v2189
    %3539 = vmatprep.subr.bf16.mxu0 %v2203
    %3540 = vmatpush1.bf16.msra.mxu0 %v2202
    %3541 = vmatprep.subr.bf16.mxu0 %v2216
    %3542 = vmatpush1.bf16.msra.mxu0 %v2215
    %3543 = vmatprep.subr.bf16.mxu0 %v2229
    %3544 = vmatpush1.bf16.msra.mxu0 %v2228
    %3545 = vmatprep.subr.bf16.mxu0 %v2242
    %3546 = vmatpush1.bf16.msra.mxu0 %v2241
    %3547 = vmatprep.subr.bf16.mxu0 %v2255
    %3548 = vmatpush1.bf16.msra.mxu0 %v2254
    %3549 = vmatprep.subr.bf16.mxu0 %v2268
    %3550 = vmatpush1.bf16.msra.mxu0 %v2267
    %3551 = vmatprep.subr.bf16.mxu0 %v2281
    %3552 = vmatpush1.bf16.msra.mxu0 %v2280
    %3553 = vmatprep.subr.bf16.mxu0 %v2294
    %3554 = vmatpush1.bf16.msra.mxu0 %v2293
    %3555 = vmatprep.subr.bf16.mxu0 %v2307
    %3556 = vmatpush1.bf16.msra.mxu0 %v2306
    %3557 = vmatprep.mubr.bf16.mxu0 %v3194
    %3558 = vmatmul.mubr.bf16.gmra.mrb[0].mxu0 %v3193
    %v3559 = vpop.f32.mrb[0].mxu0
    %v3560 = vadd.f32 0.0, %v3559
    %v3561 = vpop.f32.mrb[0].mxu0
    %v3562 = vadd.f32 0.0, %v3561
    %v3563 = vpop.f32.mrb[0].mxu0
    %v3564 = vpop.f32.mrb[0].mxu0
    %3565 = vdwg.mxu0
    %3566 = vmatprep.subr.bf16.mxu0 %v2320
    %3567 = vmatpush1.bf16.msra.mxu0 %v2319
    %3568 = vmatprep.subr.bf16.mxu0 %v2333
    %3569 = vmatpush1.bf16.msra.mxu0 %v2332
    %3570 = vmatprep.subr.bf16.mxu0 %v2346
    %3571 = vmatpush1.bf16.msra.mxu0 %v2345
    %3572 = vmatprep.subr.bf16.mxu0 %v2359
    %3573 = vmatpush1.bf16.msra.mxu0 %v2358
    %3574 = vmatprep.subr.bf16.mxu0 %v2372
    %3575 = vmatpush1.bf16.msra.mxu0 %v2371
    %3576 = vmatprep.subr.bf16.mxu0 %v2385
    %3577 = vmatpush1.bf16.msra.mxu0 %v2384
    %3578 = vmatprep.subr.bf16.mxu0 %v2398
    %3579 = vmatpush1.bf16.msra.mxu0 %v2397
    %3580 = vmatprep.subr.bf16.mxu0 %v2411
    %3581 = vmatpush1.bf16.msra.mxu0 %v2410
    %3582 = vmatprep.subr.bf16.mxu0 %v2424
    %3583 = vmatpush1.bf16.msra.mxu0 %v2423
    %3584 = vmatprep.subr.bf16.mxu0 %v2437
    %3585 = vmatpush1.bf16.msra.mxu0 %v2436
    %3586 = vmatprep.subr.bf16.mxu0 %v2450
    %3587 = vmatpush1.bf16.msra.mxu0 %v2449
    %3588 = vmatprep.subr.bf16.mxu0 %v2463
    %3589 = vmatpush1.bf16.msra.mxu0 %v2462
    %3590 = vmatprep.subr.bf16.mxu0 %v2476
    %3591 = vmatpush1.bf16.msra.mxu0 %v2475
    %3592 = vmatprep.subr.bf16.mxu0 %v2489
    %3593 = vmatpush1.bf16.msra.mxu0 %v2488
    %3594 = vmatprep.subr.bf16.mxu0 %v2502
    %3595 = vmatpush1.bf16.msra.mxu0 %v2501
    %3596 = vmatprep.subr.bf16.mxu0 %v2515
    %3597 = vmatpush1.bf16.msra.mxu0 %v2514
    %3598 = vmatprep.mubr.bf16.mxu0 %v3196
    %3599 = vmatmul.mubr.bf16.gmra.mrb[0].mxu0 %v3195
    %v3600 = vpop.f32.mrb[0].mxu0
    %v3601 = vadd.f32 %v3560, %v3600
    %v3602 = vpop.f32.mrb[0].mxu0
    %v3603 = vadd.f32 %v3562, %v3602
    %v3604 = vpop.f32.mrb[0].mxu0
    %v3605 = vpop.f32.mrb[0].mxu0
    %3606 = vdwg.mxu0
    %3607 = vmatprep.subr.bf16.mxu0 %v2114
    %3608 = vmatpush1.bf16.msra.mxu0 %v2113
    %3609 = vmatprep.subr.bf16.mxu0 %v2127
    %3610 = vmatpush1.bf16.msra.mxu0 %v2126
    %3611 = vmatprep.subr.bf16.mxu0 %v2140
    %3612 = vmatpush1.bf16.msra.mxu0 %v2139
    %3613 = vmatprep.subr.bf16.mxu0 %v2153
    %3614 = vmatpush1.bf16.msra.mxu0 %v2152
    %3615 = vmatprep.subr.bf16.mxu0 %v2166
    %3616 = vmatpush1.bf16.msra.mxu0 %v2165
    %3617 = vmatprep.subr.bf16.mxu0 %v2179
    %3618 = vmatpush1.bf16.msra.mxu0 %v2178
    %3619 = vmatprep.subr.bf16.mxu0 %v2192
    %3620 = vmatpush1.bf16.msra.mxu0 %v2191
    %3621 = vmatprep.subr.bf16.mxu0 %v2205
    %3622 = vmatpush1.bf16.msra.mxu0 %v2204
    %3623 = vmatprep.subr.bf16.mxu0 %v2218
    %3624 = vmatpush1.bf16.msra.mxu0 %v2217
    %3625 = vmatprep.subr.bf16.mxu0 %v2231
    %3626 = vmatpush1.bf16.msra.mxu0 %v2230
    %3627 = vmatprep.subr.bf16.mxu0 %v2244
    %3628 = vmatpush1.bf16.msra.mxu0 %v2243
    %3629 = vmatprep.subr.bf16.mxu0 %v2257
    %3630 = vmatpush1.bf16.msra.mxu0 %v2256
    %3631 = vmatprep.subr.bf16.mxu0 %v2270
    %3632 = vmatpush1.bf16.msra.mxu0 %v2269
    %3633 = vmatprep.subr.bf16.mxu0 %v2283
    %3634 = vmatpush1.bf16.msra.mxu0 %v2282
    %3635 = vmatprep.subr.bf16.mxu0 %v2296
    %3636 = vmatpush1.bf16.msra.mxu0 %v2295
    %3637 = vmatprep.subr.bf16.mxu0 %v2309
    %3638 = vmatpush1.bf16.msra.mxu0 %v2308
    %3639 = vmatprep.mubr.bf16.mxu0 %v3194
    %3640 = vmatmul.mubr.bf16.gmra.mrb[0].mxu0 %v3193
    %v3641 = vpop.f32.mrb[0].mxu0
    %v3642 = vadd.f32 0.0, %v3641
    %v3643 = vpop.f32.mrb[0].mxu0
    %v3644 = vadd.f32 0.0, %v3643
    %v3645 = vpop.f32.mrb[0].mxu0
    %v3646 = vpop.f32.mrb[0].mxu0
    %3647 = vdwg.mxu0
    %3648 = vmatprep.subr.bf16.mxu0 %v2322
    %3649 = vmatpush1.bf16.msra.mxu0 %v2321
    %3650 = vmatprep.subr.bf16.mxu0 %v2335
    %3651 = vmatpush1.bf16.msra.mxu0 %v2334
    %3652 = vmatprep.subr.bf16.mxu0 %v2348
    %3653 = vmatpush1.bf16.msra.mxu0 %v2347
    %3654 = vmatprep.subr.bf16.mxu0 %v2361
    %3655 = vmatpush1.bf16.msra.mxu0 %v2360
    %3656 = vmatprep.subr.bf16.mxu0 %v2374
    %3657 = vmatpush1.bf16.msra.mxu0 %v2373
    %3658 = vmatprep.subr.bf16.mxu0 %v2387
    %3659 = vmatpush1.bf16.msra.mxu0 %v2386
    %3660 = vmatprep.subr.bf16.mxu0 %v2400
    %3661 = vmatpush1.bf16.msra.mxu0 %v2399
    %3662 = vmatprep.subr.bf16.mxu0 %v2413
    %3663 = vmatpush1.bf16.msra.mxu0 %v2412
    %3664 = vmatprep.subr.bf16.mxu0 %v2426
    %3665 = vmatpush1.bf16.msra.mxu0 %v2425
    %3666 = vmatprep.subr.bf16.mxu0 %v2439
    %3667 = vmatpush1.bf16.msra.mxu0 %v2438
    %3668 = vmatprep.subr.bf16.mxu0 %v2452
    %3669 = vmatpush1.bf16.msra.mxu0 %v2451
    %3670 = vmatprep.subr.bf16.mxu0 %v2465
    %3671 = vmatpush1.bf16.msra.mxu0 %v2464
    %3672 = vmatprep.subr.bf16.mxu0 %v2478
    %3673 = vmatpush1.bf16.msra.mxu0 %v2477
    %3674 = vmatprep.subr.bf16.mxu0 %v2491
    %3675 = vmatpush1.bf16.msra.mxu0 %v2490
    %3676 = vmatprep.subr.bf16.mxu0 %v2504
    %3677 = vmatpush1.bf16.msra.mxu0 %v2503
    %3678 = vmatprep.subr.bf16.mxu0 %v2517
    %3679 = vmatpush1.bf16.msra.mxu0 %v2516
    %3680 = vmatprep.mubr.bf16.mxu0 %v3196
    %3681 = vmatmul.mubr.bf16.gmra.mrb[0].mxu0 %v3195
    %v3682 = vpop.f32.mrb[0].mxu0
    %v3683 = vadd.f32 %v3642, %v3682
    %v3684 = vpop.f32.mrb[0].mxu0
    %v3685 = vadd.f32 %v3644, %v3684
    %v3686 = vpop.f32.mrb[0].mxu0
    %v3687 = vpop.f32.mrb[0].mxu0
    %3688 = vdwg.mxu0
    %3689 = vmatprep.subr.bf16.mxu0 0
    %3690 = vmatpush1.bf16.msra.mxu0 %v2115
    %3691 = vmatprep.subr.bf16.mxu0 0
    %3692 = vmatpush1.bf16.msra.mxu0 %v2128
    %3693 = vmatprep.subr.bf16.mxu0 0
    %3694 = vmatpush1.bf16.msra.mxu0 %v2141
    %3695 = vmatprep.subr.bf16.mxu0 0
    %3696 = vmatpush1.bf16.msra.mxu0 %v2154
    %3697 = vmatprep.subr.bf16.mxu0 0
    %3698 = vmatpush1.bf16.msra.mxu0 %v2167
    %3699 = vmatprep.subr.bf16.mxu0 0
    %3700 = vmatpush1.bf16.msra.mxu0 %v2180
    %3701 = vmatprep.subr.bf16.mxu0 0
    %3702 = vmatpush1.bf16.msra.mxu0 %v2193
    %3703 = vmatprep.subr.bf16.mxu0 0
    %3704 = vmatpush1.bf16.msra.mxu0 %v2206
    %3705 = vmatprep.subr.bf16.mxu0 0
    %3706 = vmatpush1.bf16.msra.mxu0 %v2219
    %3707 = vmatprep.subr.bf16.mxu0 0
    %3708 = vmatpush1.bf16.msra.mxu0 %v2232
    %3709 = vmatprep.subr.bf16.mxu0 0
    %3710 = vmatpush1.bf16.msra.mxu0 %v2245
    %3711 = vmatprep.subr.bf16.mxu0 0
    %3712 = vmatpush1.bf16.msra.mxu0 %v2258
    %3713 = vmatprep.subr.bf16.mxu0 0
    %3714 = vmatpush1.bf16.msra.mxu0 %v2271
    %3715 = vmatprep.subr.bf16.mxu0 0
    %3716 = vmatpush1.bf16.msra.mxu0 %v2284
    %3717 = vmatprep.subr.bf16.mxu0 0
    %3718 = vmatpush1.bf16.msra.mxu0 %v2297
    %3719 = vmatprep.subr.bf16.mxu0 0
    %3720 = vmatpush1.bf16.msra.mxu0 %v2310
    %3721 = vmatprep.mubr.bf16.mxu0 %v3194
    %3722 = vmatmul.mubr.bf16.gmra.mrb[0].mxu0 %v3193
    %v3723 = vpop.f32.mrb[0].mxu0
    %v3724 = vadd.f32 0.0, %v3723
    %v3725 = vpop.f32.mrb[0].mxu0
    %v3726 = vpop.f32.mrb[0].mxu0
    %v3727 = vpop.f32.mrb[0].mxu0
    %3728 = vdwg.mxu0
    %3729 = vmatprep.subr.bf16.mxu0 0
    %3730 = vmatpush1.bf16.msra.mxu0 %v2323
    %3731 = vmatprep.subr.bf16.mxu0 0
    %3732 = vmatpush1.bf16.msra.mxu0 %v2336
    %3733 = vmatprep.subr.bf16.mxu0 0
    %3734 = vmatpush1.bf16.msra.mxu0 %v2349
    %3735 = vmatprep.subr.bf16.mxu0 0
    %3736 = vmatpush1.bf16.msra.mxu0 %v2362
    %3737 = vmatprep.subr.bf16.mxu0 0
    %3738 = vmatpush1.bf16.msra.mxu0 %v2375
    %3739 = vmatprep.subr.bf16.mxu0 0
    %3740 = vmatpush1.bf16.msra.mxu0 %v2388
    %3741 = vmatprep.subr.bf16.mxu0 0
    %3742 = vmatpush1.bf16.msra.mxu0 %v2401
    %3743 = vmatprep.subr.bf16.mxu0 0
    %3744 = vmatpush1.bf16.msra.mxu0 %v2414
    %3745 = vmatprep.subr.bf16.mxu0 0
    %3746 = vmatpush1.bf16.msra.mxu0 %v2427
    %3747 = vmatprep.subr.bf16.mxu0 0
    %3748 = vmatpush1.bf16.msra.mxu0 %v2440
    %3749 = vmatprep.subr.bf16.mxu0 0
    %3750 = vmatpush1.bf16.msra.mxu0 %v2453
    %3751 = vmatprep.subr.bf16.mxu0 0
    %3752 = vmatpush1.bf16.msra.mxu0 %v2466
    %3753 = vmatprep.subr.bf16.mxu0 0
    %3754 = vmatpush1.bf16.msra.mxu0 %v2479
    %3755 = vmatprep.subr.bf16.mxu0 0
    %3756 = vmatpush1.bf16.msra.mxu0 %v2492
    %3757 = vmatprep.subr.bf16.mxu0 0
    %3758 = vmatpush1.bf16.msra.mxu0 %v2505
    %3759 = vmatprep.subr.bf16.mxu0 0
    %3760 = vmatpush1.bf16.msra.mxu0 %v2518
    %3761 = vmatprep.mubr.bf16.mxu0 %v3196
    %3762 = vmatmul.mubr.bf16.gmra.mrb[0].mxu0 %v3195
    %v3763 = vpop.f32.mrb[0].mxu0
    %v3764 = vadd.f32 %v3724, %v3763
    %v3765 = vpop.f32.mrb[0].mxu0
    %v3766 = vpop.f32.mrb[0].mxu0
    %v3767 = vpop.f32.mrb[0].mxu0
    %3768 = vdwg.mxu0
    %v3769 = vld [vmem:[%s2039] sm:$0xff]
    %v3770 = vld [vmem:[%s2039 + $0x8] sm:$0xff]
    %v3771 = vld [vmem:[%s2039 + $0x10] sm:$0xff]
    %v3772 = vld [vmem:[%s2039 + $0x18] sm:$0xff]
    %v3773 = vld [vmem:[%s2039 + $0x20] sm:$0xff]
    %v3774 = vld [vmem:[%s2039 + $0x28] sm:$0xff]
    %v3775 = vld [vmem:[%s2039 + $0x30] sm:$0xff]
    %v3776 = vld [vmem:[%s2039 + $0x38] sm:$0xff]
    %v3777 = vld [vmem:[%s2039 + $0x40] sm:$0xff]
    %v3778 = vld [vmem:[%s2039 + $0x48] sm:$0xff]
    %v3779 = vld [vmem:[%s2039 + $0x50] sm:$0xff]
    %v3780 = vld [vmem:[%s2039 + $0x58] sm:$0xff]
    %v3781 = vld [vmem:[%s2039 + $0x60] sm:$0xff]
    %v3782 = vadd.f32 %v3769, %v3273
    %v3783 = vadd.f32 %v3770, %v3275
    %v3784 = vadd.f32 %v3771, %v3355
    %v3785 = vmul.f32 %v3782, 0.5
    %v3786 = vmul.f32 %v3783, 0.5
    %v3787 = vmul.f32 %v3784, 0.5
    %v3788 = vtanh.pop %v3785
    %v3789 = vtanh.pop %v3786
    %v3790 = vtanh.pop %v3787
    %v3791 = vmul.f32 %v3788, 0.5
    %v3792 = vmul.f32 %v3789, 0.5
    %v3793 = vmul.f32 %v3790, 0.5
    %v3794 = vadd.f32 %v3791, 0.5
    %v3795 = vadd.f32 %v3792, 0.5
    %v3796 = vadd.f32 %v3793, 0.5
    %v3797 = vadd.f32 %v3772, %v3357
    %v3798 = vadd.f32 %v3773, %v3437
    %v3799 = vadd.f32 %v3774, %v3439
    %v3800 = vmul.f32 %v3797, 0.5
    %v3801 = vmul.f32 %v3798, 0.5
    %v3802 = vmul.f32 %v3799, 0.5
    %v3803 = vtanh.pop %v3800
    %v3804 = vtanh.pop %v3801
    %v3805 = vtanh.pop %v3802
    %v3806 = vmul.f32 %v3803, 0.5
    %v3807 = vmul.f32 %v3804, 0.5
    %v3808 = vmul.f32 %v3805, 0.5
    %v3809 = vadd.f32 %v3806, 0.5
    %v3810 = vadd.f32 %v3807, 0.5
    %v3811 = vadd.f32 %v3808, 0.5
    %v3812 = vadd.f32 %v3519, %v3138
    %v3813 = vadd.f32 %v3521, %v3142
    %v3814 = vadd.f32 %v3601, %v3146
    %v3815 = vmul.f32 %v3794, %v3812
    %v3816 = vmul.f32 %v3795, %v3813
    %v3817 = vmul.f32 %v3796, %v3814
    %v3818 = vadd.f32 %v3775, %v3815
    %v3819 = vadd.f32 %v3776, %v3816
    %v3820 = vadd.f32 %v3777, %v3817
    %v3821 = vtanh.pop %v3818
    %v3822 = vtanh.pop %v3819
    %v3823 = vtanh.pop %v3820
    %v3824 = vsub.f32 %v3168, %v3821
    %v3825 = vsub.f32 %v3169, %v3822
    %v3826 = vsub.f32 %v3170, %v3823
    %v3827 = vmul.f32 %v3809, %v3824
    %v3828 = vmul.f32 %v3810, %v3825
    %v3829 = vmul.f32 %v3811, %v3826
    %v3830 = vadd.f32 %v3821, %v3827
    %v3831 = vadd.f32 %v3822, %v3828
    %v3832 = vadd.f32 %v3823, %v3829
    %v3833 = vadd.f32 %v3778, %v3603
    %v3834 = vadd.f32 %v3779, %v3683
    %v3835 = vadd.f32 %v3780, %v3685
    %v3836 = vadd.f32 %v3781, %v3764
    %v3837 = vmul.f32 %v3833, 0.5
    %v3838 = vtanh.pop %v3837
    %v3839 = vmul.f32 %v3838, 0.5
    %v3840 = vadd.f32 %v3839, 0.5
    %v3841 = vmul.f32 %v3834, 0.5
    %v3842 = vtanh.pop %v3841
    %v3843 = vmul.f32 %v3842, 0.5
    %v3844 = vadd.f32 %v3843, 0.5
    %v3845 = vtanh.pop %v3835
    %v3846 = vmul.f32 %v3836, 0.5
    %v3847 = vtanh.pop %v3846
    %v3848 = vmul.f32 %v3847, 0.5
    %v3849 = vadd.f32 %v3848, 0.5
    %v3850 = vmul.f32 %v3844, %v3190
    %v3851 = vmul.f32 %v3840, %v3845
    %v3852 = vadd.f32 %v3850, %v3851
    %v3853 = vtanh.pop %v3852
    %v3854 = vmul.f32 %v3849, %v3853
    %v3855 = vmax.f32 %v3168, %v3830
    %v3856 = vmax.f32 %v3169, %v3831
    %v3857 = vmax.f32 %v3170, %v3832
    %v3858 = vmax.f32 %v3192, %v3854
    %v3859 = vpack.c.bf16 %v3830, %v3830
    %v3860 = vpack.c.bf16 %v3831, %v3831
    %v3861 = vpack.c.bf16 %v3832, %v3832
    %v3862 = vpack.c.bf16 %v3854, %v3854
    %3863 = vmatprep.subr.bf16.mxu0 %v2104
    %3864 = vmatpush1.bf16.msra.mxu0 %v2103
    %3865 = vmatprep.subr.bf16.mxu0 %v2117
    %3866 = vmatpush1.bf16.msra.mxu0 %v2116
    %3867 = vmatprep.subr.bf16.mxu0 %v2130
    %3868 = vmatpush1.bf16.msra.mxu0 %v2129
    %3869 = vmatprep.subr.bf16.mxu0 %v2143
    %3870 = vmatpush1.bf16.msra.mxu0 %v2142
    %3871 = vmatprep.subr.bf16.mxu0 %v2156
    %3872 = vmatpush1.bf16.msra.mxu0 %v2155
    %3873 = vmatprep.subr.bf16.mxu0 %v2169
    %3874 = vmatpush1.bf16.msra.mxu0 %v2168
    %3875 = vmatprep.subr.bf16.mxu0 %v2182
    %3876 = vmatpush1.bf16.msra.mxu0 %v2181
    %3877 = vmatprep.subr.bf16.mxu0 %v2195
    %3878 = vmatpush1.bf16.msra.mxu0 %v2194
    %3879 = vmatprep.subr.bf16.mxu0 %v2208
    %3880 = vmatpush1.bf16.msra.mxu0 %v2207
    %3881 = vmatprep.subr.bf16.mxu0 %v2221
    %3882 = vmatpush1.bf16.msra.mxu0 %v2220
    %3883 = vmatprep.subr.bf16.mxu0 %v2234
    %3884 = vmatpush1.bf16.msra.mxu0 %v2233
    %3885 = vmatprep.subr.bf16.mxu0 %v2247
    %3886 = vmatpush1.bf16.msra.mxu0 %v2246
    %3887 = vmatprep.subr.bf16.mxu0 %v2260
    %3888 = vmatpush1.bf16.msra.mxu0 %v2259
    %3889 = vmatprep.subr.bf16.mxu0 %v2273
    %3890 = vmatpush1.bf16.msra.mxu0 %v2272
    %3891 = vmatprep.subr.bf16.mxu0 %v2286
    %3892 = vmatpush1.bf16.msra.mxu0 %v2285
    %3893 = vmatprep.subr.bf16.mxu0 %v2299
    %3894 = vmatpush1.bf16.msra.mxu0 %v2298
    %3895 = vmatprep.mubr.bf16.mxu0 %v3860
    %3896 = vmatmul.mubr.bf16.gmra.mrb[0].mxu0 %v3859
    %v3897 = vpop.f32.mrb[0].mxu0
    %v3898 = vadd.f32 0.0, %v3897
    %v3899 = vpop.f32.mrb[0].mxu0
    %v3900 = vadd.f32 0.0, %v3899
    %v3901 = vpop.f32.mrb[0].mxu0
    %v3902 = vpop.f32.mrb[0].mxu0
    %3903 = vdwg.mxu0
    %3904 = vmatprep.subr.bf16.mxu0 %v2312
    %3905 = vmatpush1.bf16.msra.mxu0 %v2311
    %3906 = vmatprep.subr.bf16.mxu0 %v2325
    %3907 = vmatpush1.bf16.msra.mxu0 %v2324
    %3908 = vmatprep.subr.bf16.mxu0 %v2338
    %3909 = vmatpush1.bf16.msra.mxu0 %v2337
    %3910 = vmatprep.subr.bf16.mxu0 %v2351
    %3911 = vmatpush1.bf16.msra.mxu0 %v2350
    %3912 = vmatprep.subr.bf16.mxu0 %v2364
    %3913 = vmatpush1.bf16.msra.mxu0 %v2363
    %3914 = vmatprep.subr.bf16.mxu0 %v2377
    %3915 = vmatpush1.bf16.msra.mxu0 %v2376
    %3916 = vmatprep.subr.bf16.mxu0 %v2390
    %3917 = vmatpush1.bf16.msra.mxu0 %v2389
    %3918 = vmatprep.subr.bf16.mxu0 %v2403
    %3919 = vmatpush1.bf16.msra.mxu0 %v2402
    %3920 = vmatprep.subr.bf16.mxu0 %v2416
    %3921 = vmatpush1.bf16.msra.mxu0 %v2415
    %3922 = vmatprep.subr.bf16.mxu0 %v2429
    %3923 = vmatpush1.bf16.msra.mxu0 %v2428
    %3924 = vmatprep.subr.bf16.mxu0 %v2442
    %3925 = vmatpush1.bf16.msra.mxu0 %v2441
    %3926 = vmatprep.subr.bf16.mxu0 %v2455
    %3927 = vmatpush1.bf16.msra.mxu0 %v2454
    %3928 = vmatprep.subr.bf16.mxu0 %v2468
    %3929 = vmatpush1.bf16.msra.mxu0 %v2467
    %3930 = vmatprep.subr.bf16.mxu0 %v2481
    %3931 = vmatpush1.bf16.msra.mxu0 %v2480
    %3932 = vmatprep.subr.bf16.mxu0 %v2494
    %3933 = vmatpush1.bf16.msra.mxu0 %v2493
    %3934 = vmatprep.subr.bf16.mxu0 %v2507
    %3935 = vmatpush1.bf16.msra.mxu0 %v2506
    %3936 = vmatprep.mubr.bf16.mxu0 %v3862
    %3937 = vmatmul.mubr.bf16.gmra.mrb[0].mxu0 %v3861
    %v3938 = vpop.f32.mrb[0].mxu0
    %v3939 = vadd.f32 %v3898, %v3938
    %v3940 = vpop.f32.mrb[0].mxu0
    %v3941 = vadd.f32 %v3900, %v3940
    %v3942 = vpop.f32.mrb[0].mxu0
    %v3943 = vpop.f32.mrb[0].mxu0
    %3944 = vdwg.mxu0
    %3945 = vmatprep.subr.bf16.mxu0 %v2106
    %3946 = vmatpush1.bf16.msra.mxu0 %v2105
    %3947 = vmatprep.subr.bf16.mxu0 %v2119
    %3948 = vmatpush1.bf16.msra.mxu0 %v2118
    %3949 = vmatprep.subr.bf16.mxu0 %v2132
    %3950 = vmatpush1.bf16.msra.mxu0 %v2131
    %3951 = vmatprep.subr.bf16.mxu0 %v2145
    %3952 = vmatpush1.bf16.msra.mxu0 %v2144
    %3953 = vmatprep.subr.bf16.mxu0 %v2158
    %3954 = vmatpush1.bf16.msra.mxu0 %v2157
    %3955 = vmatprep.subr.bf16.mxu0 %v2171
    %3956 = vmatpush1.bf16.msra.mxu0 %v2170
    %3957 = vmatprep.subr.bf16.mxu0 %v2184
    %3958 = vmatpush1.bf16.msra.mxu0 %v2183
    %3959 = vmatprep.subr.bf16.mxu0 %v2197
    %3960 = vmatpush1.bf16.msra.mxu0 %v2196
    %3961 = vmatprep.subr.bf16.mxu0 %v2210
    %3962 = vmatpush1.bf16.msra.mxu0 %v2209
    %3963 = vmatprep.subr.bf16.mxu0 %v2223
    %3964 = vmatpush1.bf16.msra.mxu0 %v2222
    %3965 = vmatprep.subr.bf16.mxu0 %v2236
    %3966 = vmatpush1.bf16.msra.mxu0 %v2235
    %3967 = vmatprep.subr.bf16.mxu0 %v2249
    %3968 = vmatpush1.bf16.msra.mxu0 %v2248
    %3969 = vmatprep.subr.bf16.mxu0 %v2262
    %3970 = vmatpush1.bf16.msra.mxu0 %v2261
    %3971 = vmatprep.subr.bf16.mxu0 %v2275
    %3972 = vmatpush1.bf16.msra.mxu0 %v2274
    %3973 = vmatprep.subr.bf16.mxu0 %v2288
    %3974 = vmatpush1.bf16.msra.mxu0 %v2287
    %3975 = vmatprep.subr.bf16.mxu0 %v2301
    %3976 = vmatpush1.bf16.msra.mxu0 %v2300
    %3977 = vmatprep.mubr.bf16.mxu0 %v3860
    %3978 = vmatmul.mubr.bf16.gmra.mrb[0].mxu0 %v3859
    %v3979 = vpop.f32.mrb[0].mxu0
    %v3980 = vadd.f32 0.0, %v3979
    %v3981 = vpop.f32.mrb[0].mxu0
    %v3982 = vadd.f32 0.0, %v3981
    %v3983 = vpop.f32.mrb[0].mxu0
    %v3984 = vpop.f32.mrb[0].mxu0
    %3985 = vdwg.mxu0
    %3986 = vmatprep.subr.bf16.mxu0 %v2314
    %3987 = vmatpush1.bf16.msra.mxu0 %v2313
    %3988 = vmatprep.subr.bf16.mxu0 %v2327
    %3989 = vmatpush1.bf16.msra.mxu0 %v2326
    %3990 = vmatprep.subr.bf16.mxu0 %v2340
    %3991 = vmatpush1.bf16.msra.mxu0 %v2339
    %3992 = vmatprep.subr.bf16.mxu0 %v2353
    %3993 = vmatpush1.bf16.msra.mxu0 %v2352
    %3994 = vmatprep.subr.bf16.mxu0 %v2366
    %3995 = vmatpush1.bf16.msra.mxu0 %v2365
    %3996 = vmatprep.subr.bf16.mxu0 %v2379
    %3997 = vmatpush1.bf16.msra.mxu0 %v2378
    %3998 = vmatprep.subr.bf16.mxu0 %v2392
    %3999 = vmatpush1.bf16.msra.mxu0 %v2391
    %4000 = vmatprep.subr.bf16.mxu0 %v2405
    %4001 = vmatpush1.bf16.msra.mxu0 %v2404
    %4002 = vmatprep.subr.bf16.mxu0 %v2418
    %4003 = vmatpush1.bf16.msra.mxu0 %v2417
    %4004 = vmatprep.subr.bf16.mxu0 %v2431
    %4005 = vmatpush1.bf16.msra.mxu0 %v2430
    %4006 = vmatprep.subr.bf16.mxu0 %v2444
    %4007 = vmatpush1.bf16.msra.mxu0 %v2443
    %4008 = vmatprep.subr.bf16.mxu0 %v2457
    %4009 = vmatpush1.bf16.msra.mxu0 %v2456
    %4010 = vmatprep.subr.bf16.mxu0 %v2470
    %4011 = vmatpush1.bf16.msra.mxu0 %v2469
    %4012 = vmatprep.subr.bf16.mxu0 %v2483
    %4013 = vmatpush1.bf16.msra.mxu0 %v2482
    %4014 = vmatprep.subr.bf16.mxu0 %v2496
    %4015 = vmatpush1.bf16.msra.mxu0 %v2495
    %4016 = vmatprep.subr.bf16.mxu0 %v2509
    %4017 = vmatpush1.bf16.msra.mxu0 %v2508
    %4018 = vmatprep.mubr.bf16.mxu0 %v3862
    %4019 = vmatmul.mubr.bf16.gmra.mrb[0].mxu0 %v3861
    %v4020 = vpop.f32.mrb[0].mxu0
    %v4021 = vadd.f32 %v3980, %v4020
    %v4022 = vpop.f32.mrb[0].mxu0
    %v4023 = vadd.f32 %v3982, %v4022
    %v4024 = vpop.f32.mrb[0].mxu0
    %v4025 = vpop.f32.mrb[0].mxu0
    %4026 = vdwg.mxu0
    %4027 = vmatprep.subr.bf16.mxu0 %v2108
    %4028 = vmatpush1.bf16.msra.mxu0 %v2107
    %4029 = vmatprep.subr.bf16.mxu0 %v2121
    %4030 = vmatpush1.bf16.msra.mxu0 %v2120
    %4031 = vmatprep.subr.bf16.mxu0 %v2134
    %4032 = vmatpush1.bf16.msra.mxu0 %v2133
    %4033 = vmatprep.subr.bf16.mxu0 %v2147
    %4034 = vmatpush1.bf16.msra.mxu0 %v2146
    %4035 = vmatprep.subr.bf16.mxu0 %v2160
    %4036 = vmatpush1.bf16.msra.mxu0 %v2159
    %4037 = vmatprep.subr.bf16.mxu0 %v2173
    %4038 = vmatpush1.bf16.msra.mxu0 %v2172
    %4039 = vmatprep.subr.bf16.mxu0 %v2186
    %4040 = vmatpush1.bf16.msra.mxu0 %v2185
    %4041 = vmatprep.subr.bf16.mxu0 %v2199
    %4042 = vmatpush1.bf16.msra.mxu0 %v2198
    %4043 = vmatprep.subr.bf16.mxu0 %v2212
    %4044 = vmatpush1.bf16.msra.mxu0 %v2211
    %4045 = vmatprep.subr.bf16.mxu0 %v2225
    %4046 = vmatpush1.bf16.msra.mxu0 %v2224
    %4047 = vmatprep.subr.bf16.mxu0 %v2238
    %4048 = vmatpush1.bf16.msra.mxu0 %v2237
    %4049 = vmatprep.subr.bf16.mxu0 %v2251
    %4050 = vmatpush1.bf16.msra.mxu0 %v2250
    %4051 = vmatprep.subr.bf16.mxu0 %v2264
    %4052 = vmatpush1.bf16.msra.mxu0 %v2263
    %4053 = vmatprep.subr.bf16.mxu0 %v2277
    %4054 = vmatpush1.bf16.msra.mxu0 %v2276
    %4055 = vmatprep.subr.bf16.mxu0 %v2290
    %4056 = vmatpush1.bf16.msra.mxu0 %v2289
    %4057 = vmatprep.subr.bf16.mxu0 %v2303
    %4058 = vmatpush1.bf16.msra.mxu0 %v2302
    %4059 = vmatprep.mubr.bf16.mxu0 %v3860
    %4060 = vmatmul.mubr.bf16.gmra.mrb[0].mxu0 %v3859
    %v4061 = vpop.f32.mrb[0].mxu0
    %v4062 = vadd.f32 0.0, %v4061
    %v4063 = vpop.f32.mrb[0].mxu0
    %v4064 = vadd.f32 0.0, %v4063
    %v4065 = vpop.f32.mrb[0].mxu0
    %v4066 = vpop.f32.mrb[0].mxu0
    %4067 = vdwg.mxu0
    %4068 = vmatprep.subr.bf16.mxu0 %v2316
    %4069 = vmatpush1.bf16.msra.mxu0 %v2315
    %4070 = vmatprep.subr.bf16.mxu0 %v2329
    %4071 = vmatpush1.bf16.msra.mxu0 %v2328
    %4072 = vmatprep.subr.bf16.mxu0 %v2342
    %4073 = vmatpush1.bf16.msra.mxu0 %v2341
    %4074 = vmatprep.subr.bf16.mxu0 %v2355
    %4075 = vmatpush1.bf16.msra.mxu0 %v2354
    %4076 = vmatprep.subr.bf16.mxu0 %v2368
    %4077 = vmatpush1.bf16.msra.mxu0 %v2367
    %4078 = vmatprep.subr.bf16.mxu0 %v2381
    %4079 = vmatpush1.bf16.msra.mxu0 %v2380
    %4080 = vmatprep.subr.bf16.mxu0 %v2394
    %4081 = vmatpush1.bf16.msra.mxu0 %v2393
    %4082 = vmatprep.subr.bf16.mxu0 %v2407
    %4083 = vmatpush1.bf16.msra.mxu0 %v2406
    %4084 = vmatprep.subr.bf16.mxu0 %v2420
    %4085 = vmatpush1.bf16.msra.mxu0 %v2419
    %4086 = vmatprep.subr.bf16.mxu0 %v2433
    %4087 = vmatpush1.bf16.msra.mxu0 %v2432
    %4088 = vmatprep.subr.bf16.mxu0 %v2446
    %4089 = vmatpush1.bf16.msra.mxu0 %v2445
    %4090 = vmatprep.subr.bf16.mxu0 %v2459
    %4091 = vmatpush1.bf16.msra.mxu0 %v2458
    %4092 = vmatprep.subr.bf16.mxu0 %v2472
    %4093 = vmatpush1.bf16.msra.mxu0 %v2471
    %4094 = vmatprep.subr.bf16.mxu0 %v2485
    %4095 = vmatpush1.bf16.msra.mxu0 %v2484
    %4096 = vmatprep.subr.bf16.mxu0 %v2498
    %4097 = vmatpush1.bf16.msra.mxu0 %v2497
    %4098 = vmatprep.subr.bf16.mxu0 %v2511
    %4099 = vmatpush1.bf16.msra.mxu0 %v2510
    %4100 = vmatprep.mubr.bf16.mxu0 %v3862
    %4101 = vmatmul.mubr.bf16.gmra.mrb[0].mxu0 %v3861
    %v4102 = vpop.f32.mrb[0].mxu0
    %v4103 = vadd.f32 %v4062, %v4102
    %v4104 = vpop.f32.mrb[0].mxu0
    %v4105 = vadd.f32 %v4064, %v4104
    %v4106 = vpop.f32.mrb[0].mxu0
    %v4107 = vpop.f32.mrb[0].mxu0
    %4108 = vdwg.mxu0
    %4109 = vmatprep.subr.bf16.mxu0 %v2110
    %4110 = vmatpush1.bf16.msra.mxu0 %v2109
    %4111 = vmatprep.subr.bf16.mxu0 %v2123
    %4112 = vmatpush1.bf16.msra.mxu0 %v2122
    %4113 = vmatprep.subr.bf16.mxu0 %v2136
    %4114 = vmatpush1.bf16.msra.mxu0 %v2135
    %4115 = vmatprep.subr.bf16.mxu0 %v2149
    %4116 = vmatpush1.bf16.msra.mxu0 %v2148
    %4117 = vmatprep.subr.bf16.mxu0 %v2162
    %4118 = vmatpush1.bf16.msra.mxu0 %v2161
    %4119 = vmatprep.subr.bf16.mxu0 %v2175
    %4120 = vmatpush1.bf16.msra.mxu0 %v2174
    %4121 = vmatprep.subr.bf16.mxu0 %v2188
    %4122 = vmatpush1.bf16.msra.mxu0 %v2187
    %4123 = vmatprep.subr.bf16.mxu0 %v2201
    %4124 = vmatpush1.bf16.msra.mxu0 %v2200
    %4125 = vmatprep.subr.bf16.mxu0 %v2214
    %4126 = vmatpush1.bf16.msra.mxu0 %v2213
    %4127 = vmatprep.subr.bf16.mxu0 %v2227
    %4128 = vmatpush1.bf16.msra.mxu0 %v2226
    %4129 = vmatprep.subr.bf16.mxu0 %v2240
    %4130 = vmatpush1.bf16.msra.mxu0 %v2239
    %4131 = vmatprep.subr.bf16.mxu0 %v2253
    %4132 = vmatpush1.bf16.msra.mxu0 %v2252
    %4133 = vmatprep.subr.bf16.mxu0 %v2266
    %4134 = vmatpush1.bf16.msra.mxu0 %v2265
    %4135 = vmatprep.subr.bf16.mxu0 %v2279
    %4136 = vmatpush1.bf16.msra.mxu0 %v2278
    %4137 = vmatprep.subr.bf16.mxu0 %v2292
    %4138 = vmatpush1.bf16.msra.mxu0 %v2291
    %4139 = vmatprep.subr.bf16.mxu0 %v2305
    %4140 = vmatpush1.bf16.msra.mxu0 %v2304
    %4141 = vmatprep.mubr.bf16.mxu0 %v3860
    %4142 = vmatmul.mubr.bf16.gmra.mrb[0].mxu0 %v3859
    %v4143 = vpop.f32.mrb[0].mxu0
    %v4144 = vadd.f32 0.0, %v4143
    %v4145 = vpop.f32.mrb[0].mxu0
    %v4146 = vadd.f32 0.0, %v4145
    %v4147 = vpop.f32.mrb[0].mxu0
    %v4148 = vpop.f32.mrb[0].mxu0
    %4149 = vdwg.mxu0
    %4150 = vmatprep.subr.bf16.mxu0 %v2318
    %4151 = vmatpush1.bf16.msra.mxu0 %v2317
    %4152 = vmatprep.subr.bf16.mxu0 %v2331
    %4153 = vmatpush1.bf16.msra.mxu0 %v2330
    %4154 = vmatprep.subr.bf16.mxu0 %v2344
    %4155 = vmatpush1.bf16.msra.mxu0 %v2343
    %4156 = vmatprep.subr.bf16.mxu0 %v2357
    %4157 = vmatpush1.bf16.msra.mxu0 %v2356
    %4158 = vmatprep.subr.bf16.mxu0 %v2370
    %4159 = vmatpush1.bf16.msra.mxu0 %v2369
    %4160 = vmatprep.subr.bf16.mxu0 %v2383
    %4161 = vmatpush1.bf16.msra.mxu0 %v2382
    %4162 = vmatprep.subr.bf16.mxu0 %v2396
    %4163 = vmatpush1.bf16.msra.mxu0 %v2395
    %4164 = vmatprep.subr.bf16.mxu0 %v2409
    %4165 = vmatpush1.bf16.msra.mxu0 %v2408
    %4166 = vmatprep.subr.bf16.mxu0 %v2422
    %4167 = vmatpush1.bf16.msra.mxu0 %v2421
    %4168 = vmatprep.subr.bf16.mxu0 %v2435
    %4169 = vmatpush1.bf16.msra.mxu0 %v2434
    %4170 = vmatprep.subr.bf16.mxu0 %v2448
    %4171 = vmatpush1.bf16.msra.mxu0 %v2447
    %4172 = vmatprep.subr.bf16.mxu0 %v2461
    %4173 = vmatpush1.bf16.msra.mxu0 %v2460
    %4174 = vmatprep.subr.bf16.mxu0 %v2474
    %4175 = vmatpush1.bf16.msra.mxu0 %v2473
    %4176 = vmatprep.subr.bf16.mxu0 %v2487
    %4177 = vmatpush1.bf16.msra.mxu0 %v2486
    %4178 = vmatprep.subr.bf16.mxu0 %v2500
    %4179 = vmatpush1.bf16.msra.mxu0 %v2499
    %4180 = vmatprep.subr.bf16.mxu0 %v2513
    %4181 = vmatpush1.bf16.msra.mxu0 %v2512
    %4182 = vmatprep.mubr.bf16.mxu0 %v3862
    %4183 = vmatmul.mubr.bf16.gmra.mrb[0].mxu0 %v3861
    %v4184 = vpop.f32.mrb[0].mxu0
    %v4185 = vadd.f32 %v4144, %v4184
    %v4186 = vpop.f32.mrb[0].mxu0
    %v4187 = vadd.f32 %v4146, %v4186
    %v4188 = vpop.f32.mrb[0].mxu0
    %v4189 = vpop.f32.mrb[0].mxu0
    %4190 = vdwg.mxu0
    %4191 = vmatprep.subr.bf16.mxu0 %v2112
    %4192 = vmatpush1.bf16.msra.mxu0 %v2111
    %4193 = vmatprep.subr.bf16.mxu0 %v2125
    %4194 = vmatpush1.bf16.msra.mxu0 %v2124
    %4195 = vmatprep.subr.bf16.mxu0 %v2138
    %4196 = vmatpush1.bf16.msra.mxu0 %v2137
    %4197 = vmatprep.subr.bf16.mxu0 %v2151
    %4198 = vmatpush1.bf16.msra.mxu0 %v2150
    %4199 = vmatprep.subr.bf16.mxu0 %v2164
    %4200 = vmatpush1.bf16.msra.mxu0 %v2163
    %4201 = vmatprep.subr.bf16.mxu0 %v2177
    %4202 = vmatpush1.bf16.msra.mxu0 %v2176
    %4203 = vmatprep.subr.bf16.mxu0 %v2190
    %4204 = vmatpush1.bf16.msra.mxu0 %v2189
    %4205 = vmatprep.subr.bf16.mxu0 %v2203
    %4206 = vmatpush1.bf16.msra.mxu0 %v2202
    %4207 = vmatprep.subr.bf16.mxu0 %v2216
    %4208 = vmatpush1.bf16.msra.mxu0 %v2215
    %4209 = vmatprep.subr.bf16.mxu0 %v2229
    %4210 = vmatpush1.bf16.msra.mxu0 %v2228
    %4211 = vmatprep.subr.bf16.mxu0 %v2242
    %4212 = vmatpush1.bf16.msra.mxu0 %v2241
    %4213 = vmatprep.subr.bf16.mxu0 %v2255
    %4214 = vmatpush1.bf16.msra.mxu0 %v2254
    %4215 = vmatprep.subr.bf16.mxu0 %v2268
    %4216 = vmatpush1.bf16.msra.mxu0 %v2267
    %4217 = vmatprep.subr.bf16.mxu0 %v2281
    %4218 = vmatpush1.bf16.msra.mxu0 %v2280
    %4219 = vmatprep.subr.bf16.mxu0 %v2294
    %4220 = vmatpush1.bf16.msra.mxu0 %v2293
    %4221 = vmatprep.subr.bf16.mxu0 %v2307
    %4222 = vmatpush1.bf16.msra.mxu0 %v2306
    %4223 = vmatprep.mubr.bf16.mxu0 %v3860
    %4224 = vmatmul.mubr.bf16.gmra.mrb[0].mxu0 %v3859
    %v4225 = vpop.f32.mrb[0].mxu0
    %v4226 = vadd.f32 0.0, %v4225
    %v4227 = vpop.f32.mrb[0].mxu0
    %v4228 = vadd.f32 0.0, %v4227
    %v4229 = vpop.f32.mrb[0].mxu0
    %v4230 = vpop.f32.mrb[0].mxu0
    %4231 = vdwg.mxu0
    %4232 = vmatprep.subr.bf16.mxu0 %v2320
    %4233 = vmatpush1.bf16.msra.mxu0 %v2319
    %4234 = vmatprep.subr.bf16.mxu0 %v2333
    %4235 = vmatpush1.bf16.msra.mxu0 %v2332
    %4236 = vmatprep.subr.bf16.mxu0 %v2346
    %4237 = vmatpush1.bf16.msra.mxu0 %v2345
    %4238 = vmatprep.subr.bf16.mxu0 %v2359
    %4239 = vmatpush1.bf16.msra.mxu0 %v2358
    %4240 = vmatprep.subr.bf16.mxu0 %v2372
    %4241 = vmatpush1.bf16.msra.mxu0 %v2371
    %4242 = vmatprep.subr.bf16.mxu0 %v2385
    %4243 = vmatpush1.bf16.msra.mxu0 %v2384
    %4244 = vmatprep.subr.bf16.mxu0 %v2398
    %4245 = vmatpush1.bf16.msra.mxu0 %v2397
    %4246 = vmatprep.subr.bf16.mxu0 %v2411
    %4247 = vmatpush1.bf16.msra.mxu0 %v2410
    %4248 = vmatprep.subr.bf16.mxu0 %v2424
    %4249 = vmatpush1.bf16.msra.mxu0 %v2423
    %4250 = vmatprep.subr.bf16.mxu0 %v2437
    %4251 = vmatpush1.bf16.msra.mxu0 %v2436
    %4252 = vmatprep.subr.bf16.mxu0 %v2450
    %4253 = vmatpush1.bf16.msra.mxu0 %v2449
    %4254 = vmatprep.subr.bf16.mxu0 %v2463
    %4255 = vmatpush1.bf16.msra.mxu0 %v2462
    %4256 = vmatprep.subr.bf16.mxu0 %v2476
    %4257 = vmatpush1.bf16.msra.mxu0 %v2475
    %4258 = vmatprep.subr.bf16.mxu0 %v2489
    %4259 = vmatpush1.bf16.msra.mxu0 %v2488
    %4260 = vmatprep.subr.bf16.mxu0 %v2502
    %4261 = vmatpush1.bf16.msra.mxu0 %v2501
    %4262 = vmatprep.subr.bf16.mxu0 %v2515
    %4263 = vmatpush1.bf16.msra.mxu0 %v2514
    %4264 = vmatprep.mubr.bf16.mxu0 %v3862
    %4265 = vmatmul.mubr.bf16.gmra.mrb[0].mxu0 %v3861
    %v4266 = vpop.f32.mrb[0].mxu0
    %v4267 = vadd.f32 %v4226, %v4266
    %v4268 = vpop.f32.mrb[0].mxu0
    %v4269 = vadd.f32 %v4228, %v4268
    %v4270 = vpop.f32.mrb[0].mxu0
    %v4271 = vpop.f32.mrb[0].mxu0
    %4272 = vdwg.mxu0
    %4273 = vmatprep.subr.bf16.mxu0 %v2114
    %4274 = vmatpush1.bf16.msra.mxu0 %v2113
    %4275 = vmatprep.subr.bf16.mxu0 %v2127
    %4276 = vmatpush1.bf16.msra.mxu0 %v2126
    %4277 = vmatprep.subr.bf16.mxu0 %v2140
    %4278 = vmatpush1.bf16.msra.mxu0 %v2139
    %4279 = vmatprep.subr.bf16.mxu0 %v2153
    %4280 = vmatpush1.bf16.msra.mxu0 %v2152
    %4281 = vmatprep.subr.bf16.mxu0 %v2166
    %4282 = vmatpush1.bf16.msra.mxu0 %v2165
    %4283 = vmatprep.subr.bf16.mxu0 %v2179
    %4284 = vmatpush1.bf16.msra.mxu0 %v2178
    %4285 = vmatprep.subr.bf16.mxu0 %v2192
    %4286 = vmatpush1.bf16.msra.mxu0 %v2191
    %4287 = vmatprep.subr.bf16.mxu0 %v2205
    %4288 = vmatpush1.bf16.msra.mxu0 %v2204
    %4289 = vmatprep.subr.bf16.mxu0 %v2218
    %4290 = vmatpush1.bf16.msra.mxu0 %v2217
    %4291 = vmatprep.subr.bf16.mxu0 %v2231
    %4292 = vmatpush1.bf16.msra.mxu0 %v2230
    %4293 = vmatprep.subr.bf16.mxu0 %v2244
    %4294 = vmatpush1.bf16.msra.mxu0 %v2243
    %4295 = vmatprep.subr.bf16.mxu0 %v2257
    %4296 = vmatpush1.bf16.msra.mxu0 %v2256
    %4297 = vmatprep.subr.bf16.mxu0 %v2270
    %4298 = vmatpush1.bf16.msra.mxu0 %v2269
    %4299 = vmatprep.subr.bf16.mxu0 %v2283
    %4300 = vmatpush1.bf16.msra.mxu0 %v2282
    %4301 = vmatprep.subr.bf16.mxu0 %v2296
    %4302 = vmatpush1.bf16.msra.mxu0 %v2295
    %4303 = vmatprep.subr.bf16.mxu0 %v2309
    %4304 = vmatpush1.bf16.msra.mxu0 %v2308
    %4305 = vmatprep.mubr.bf16.mxu0 %v3860
    %4306 = vmatmul.mubr.bf16.gmra.mrb[0].mxu0 %v3859
    %v4307 = vpop.f32.mrb[0].mxu0
    %v4308 = vadd.f32 0.0, %v4307
    %v4309 = vpop.f32.mrb[0].mxu0
    %v4310 = vadd.f32 0.0, %v4309
    %v4311 = vpop.f32.mrb[0].mxu0
    %v4312 = vpop.f32.mrb[0].mxu0
    %4313 = vdwg.mxu0
    %4314 = vmatprep.subr.bf16.mxu0 %v2322
    %4315 = vmatpush1.bf16.msra.mxu0 %v2321
    %4316 = vmatprep.subr.bf16.mxu0 %v2335
    %4317 = vmatpush1.bf16.msra.mxu0 %v2334
    %4318 = vmatprep.subr.bf16.mxu0 %v2348
    %4319 = vmatpush1.bf16.msra.mxu0 %v2347
    %4320 = vmatprep.subr.bf16.mxu0 %v2361
    %4321 = vmatpush1.bf16.msra.mxu0 %v2360
    %4322 = vmatprep.subr.bf16.mxu0 %v2374
    %4323 = vmatpush1.bf16.msra.mxu0 %v2373
    %4324 = vmatprep.subr.bf16.mxu0 %v2387
    %4325 = vmatpush1.bf16.msra.mxu0 %v2386
    %4326 = vmatprep.subr.bf16.mxu0 %v2400
    %4327 = vmatpush1.bf16.msra.mxu0 %v2399
    %4328 = vmatprep.subr.bf16.mxu0 %v2413
    %4329 = vmatpush1.bf16.msra.mxu0 %v2412
    %4330 = vmatprep.subr.bf16.mxu0 %v2426
    %4331 = vmatpush1.bf16.msra.mxu0 %v2425
    %4332 = vmatprep.subr.bf16.mxu0 %v2439
    %4333 = vmatpush1.bf16.msra.mxu0 %v2438
    %4334 = vmatprep.subr.bf16.mxu0 %v2452
    %4335 = vmatpush1.bf16.msra.mxu0 %v2451
    %4336 = vmatprep.subr.bf16.mxu0 %v2465
    %4337 = vmatpush1.bf16.msra.mxu0 %v2464
    %4338 = vmatprep.subr.bf16.mxu0 %v2478
    %4339 = vmatpush1.bf16.msra.mxu0 %v2477
    %4340 = vmatprep.subr.bf16.mxu0 %v2491
    %4341 = vmatpush1.bf16.msra.mxu0 %v2490
    %4342 = vmatprep.subr.bf16.mxu0 %v2504
    %4343 = vmatpush1.bf16.msra.mxu0 %v2503
    %4344 = vmatprep.subr.bf16.mxu0 %v2517
    %4345 = vmatpush1.bf16.msra.mxu0 %v2516
    %4346 = vmatprep.mubr.bf16.mxu0 %v3862
    %4347 = vmatmul.mubr.bf16.gmra.mrb[0].mxu0 %v3861
    %v4348 = vpop.f32.mrb[0].mxu0
    %v4349 = vadd.f32 %v4308, %v4348
    %v4350 = vpop.f32.mrb[0].mxu0
    %v4351 = vadd.f32 %v4310, %v4350
    %v4352 = vpop.f32.mrb[0].mxu0
    %v4353 = vpop.f32.mrb[0].mxu0
    %4354 = vdwg.mxu0
    %4355 = vmatprep.subr.bf16.mxu0 0
    %4356 = vmatpush1.bf16.msra.mxu0 %v2115
    %4357 = vmatprep.subr.bf16.mxu0 0
    %4358 = vmatpush1.bf16.msra.mxu0 %v2128
    %4359 = vmatprep.subr.bf16.mxu0 0
    %4360 = vmatpush1.bf16.msra.mxu0 %v2141
    %4361 = vmatprep.subr.bf16.mxu0 0
    %4362 = vmatpush1.bf16.msra.mxu0 %v2154
    %4363 = vmatprep.subr.bf16.mxu0 0
    %4364 = vmatpush1.bf16.msra.mxu0 %v2167
    %4365 = vmatprep.subr.bf16.mxu0 0
    %4366 = vmatpush1.bf16.msra.mxu0 %v2180
    %4367 = vmatprep.subr.bf16.mxu0 0
    %4368 = vmatpush1.bf16.msra.mxu0 %v2193
    %4369 = vmatprep.subr.bf16.mxu0 0
    %4370 = vmatpush1.bf16.msra.mxu0 %v2206
    %4371 = vmatprep.subr.bf16.mxu0 0
    %4372 = vmatpush1.bf16.msra.mxu0 %v2219
    %4373 = vmatprep.subr.bf16.mxu0 0
    %4374 = vmatpush1.bf16.msra.mxu0 %v2232
    %4375 = vmatprep.subr.bf16.mxu0 0
    %4376 = vmatpush1.bf16.msra.mxu0 %v2245
    %4377 = vmatprep.subr.bf16.mxu0 0
    %4378 = vmatpush1.bf16.msra.mxu0 %v2258
    %4379 = vmatprep.subr.bf16.mxu0 0
    %4380 = vmatpush1.bf16.msra.mxu0 %v2271
    %4381 = vmatprep.subr.bf16.mxu0 0
    %4382 = vmatpush1.bf16.msra.mxu0 %v2284
    %4383 = vmatprep.subr.bf16.mxu0 0
    %4384 = vmatpush1.bf16.msra.mxu0 %v2297
    %4385 = vmatprep.subr.bf16.mxu0 0
    %4386 = vmatpush1.bf16.msra.mxu0 %v2310
    %4387 = vmatprep.mubr.bf16.mxu0 %v3860
    %4388 = vmatmul.mubr.bf16.gmra.mrb[0].mxu0 %v3859
    %v4389 = vpop.f32.mrb[0].mxu0
    %v4390 = vadd.f32 0.0, %v4389
    %v4391 = vpop.f32.mrb[0].mxu0
    %v4392 = vpop.f32.mrb[0].mxu0
    %v4393 = vpop.f32.mrb[0].mxu0
    %4394 = vdwg.mxu0
    %4395 = vmatprep.subr.bf16.mxu0 0
    %4396 = vmatpush1.bf16.msra.mxu0 %v2323
    %4397 = vmatprep.subr.bf16.mxu0 0
    %4398 = vmatpush1.bf16.msra.mxu0 %v2336
    %4399 = vmatprep.subr.bf16.mxu0 0
    %4400 = vmatpush1.bf16.msra.mxu0 %v2349
    %4401 = vmatprep.subr.bf16.mxu0 0
    %4402 = vmatpush1.bf16.msra.mxu0 %v2362
    %4403 = vmatprep.subr.bf16.mxu0 0
    %4404 = vmatpush1.bf16.msra.mxu0 %v2375
    %4405 = vmatprep.subr.bf16.mxu0 0
    %4406 = vmatpush1.bf16.msra.mxu0 %v2388
    %4407 = vmatprep.subr.bf16.mxu0 0
    %4408 = vmatpush1.bf16.msra.mxu0 %v2401
    %4409 = vmatprep.subr.bf16.mxu0 0
    %4410 = vmatpush1.bf16.msra.mxu0 %v2414
    %4411 = vmatprep.subr.bf16.mxu0 0
    %4412 = vmatpush1.bf16.msra.mxu0 %v2427
    %4413 = vmatprep.subr.bf16.mxu0 0
    %4414 = vmatpush1.bf16.msra.mxu0 %v2440
    %4415 = vmatprep.subr.bf16.mxu0 0
    %4416 = vmatpush1.bf16.msra.mxu0 %v2453
    %4417 = vmatprep.subr.bf16.mxu0 0
    %4418 = vmatpush1.bf16.msra.mxu0 %v2466
    %4419 = vmatprep.subr.bf16.mxu0 0
    %4420 = vmatpush1.bf16.msra.mxu0 %v2479
    %4421 = vmatprep.subr.bf16.mxu0 0
    %4422 = vmatpush1.bf16.msra.mxu0 %v2492
    %4423 = vmatprep.subr.bf16.mxu0 0
    %4424 = vmatpush1.bf16.msra.mxu0 %v2505
    %4425 = vmatprep.subr.bf16.mxu0 0
    %4426 = vmatpush1.bf16.msra.mxu0 %v2518
    %4427 = vmatprep.mubr.bf16.mxu0 %v3862
    %4428 = vmatmul.mubr.bf16.gmra.mrb[0].mxu0 %v3861
    %v4429 = vpop.f32.mrb[0].mxu0
    %v4430 = vadd.f32 %v4390, %v4429
    %v4431 = vpop.f32.mrb[0].mxu0
    %v4432 = vpop.f32.mrb[0].mxu0
    %v4433 = vpop.f32.mrb[0].mxu0
    %4434 = vdwg.mxu0
    %v4435 = vld [vmem:[%s2048] sm:$0xff]
    %v4436 = vld [vmem:[%s2048 + $0x8] sm:$0xff]
    %v4437 = vld [vmem:[%s2048 + $0x10] sm:$0xff]
    %v4438 = vld [vmem:[%s2048 + $0x18] sm:$0xff]
    %v4439 = vld [vmem:[%s2048 + $0x20] sm:$0xff]
    %v4440 = vld [vmem:[%s2048 + $0x28] sm:$0xff]
    %v4441 = vld [vmem:[%s2048 + $0x30] sm:$0xff]
    %v4442 = vld [vmem:[%s2048 + $0x38] sm:$0xff]
    %v4443 = vld [vmem:[%s2048 + $0x40] sm:$0xff]
    %v4444 = vld [vmem:[%s2048 + $0x48] sm:$0xff]
    %v4445 = vld [vmem:[%s2048 + $0x50] sm:$0xff]
    %v4446 = vld [vmem:[%s2048 + $0x58] sm:$0xff]
    %v4447 = vld [vmem:[%s2048 + $0x60] sm:$0xff]
    %v4448 = vadd.f32 %v4435, %v3939
    %v4449 = vadd.f32 %v4436, %v3941
    %v4450 = vadd.f32 %v4437, %v4021
    %v4451 = vmul.f32 %v4448, 0.5
    %v4452 = vmul.f32 %v4449, 0.5
    %v4453 = vmul.f32 %v4450, 0.5
    %v4454 = vtanh.pop %v4451
    %v4455 = vtanh.pop %v4452
    %v4456 = vtanh.pop %v4453
    %v4457 = vmul.f32 %v4454, 0.5
    %v4458 = vmul.f32 %v4455, 0.5
    %v4459 = vmul.f32 %v4456, 0.5
    %v4460 = vadd.f32 %v4457, 0.5
    %v4461 = vadd.f32 %v4458, 0.5
    %v4462 = vadd.f32 %v4459, 0.5
    %v4463 = vadd.f32 %v4438, %v4023
    %v4464 = vadd.f32 %v4439, %v4103
    %v4465 = vadd.f32 %v4440, %v4105
    %v4466 = vmul.f32 %v4463, 0.5
    %v4467 = vmul.f32 %v4464, 0.5
    %v4468 = vmul.f32 %v4465, 0.5
    %v4469 = vtanh.pop %v4466
    %v4470 = vtanh.pop %v4467
    %v4471 = vtanh.pop %v4468
    %v4472 = vmul.f32 %v4469, 0.5
    %v4473 = vmul.f32 %v4470, 0.5
    %v4474 = vmul.f32 %v4471, 0.5
    %v4475 = vadd.f32 %v4472, 0.5
    %v4476 = vadd.f32 %v4473, 0.5
    %v4477 = vadd.f32 %v4474, 0.5
    %v4478 = vadd.f32 %v4185, %v3138
    %v4479 = vadd.f32 %v4187, %v3142
    %v4480 = vadd.f32 %v4267, %v3146
    %v4481 = vmul.f32 %v4460, %v4478
    %v4482 = vmul.f32 %v4461, %v4479
    %v4483 = vmul.f32 %v4462, %v4480
    %v4484 = vadd.f32 %v4441, %v4481
    %v4485 = vadd.f32 %v4442, %v4482
    %v4486 = vadd.f32 %v4443, %v4483
    %v4487 = vtanh.pop %v4484
    %v4488 = vtanh.pop %v4485
    %v4489 = vtanh.pop %v4486
    %v4490 = vsub.f32 %v3830, %v4487
    %v4491 = vsub.f32 %v3831, %v4488
    %v4492 = vsub.f32 %v3832, %v4489
    %v4493 = vmul.f32 %v4475, %v4490
    %v4494 = vmul.f32 %v4476, %v4491
    %v4495 = vmul.f32 %v4477, %v4492
    %v4496 = vadd.f32 %v4487, %v4493
    %v4497 = vadd.f32 %v4488, %v4494
    %v4498 = vadd.f32 %v4489, %v4495
    %v4499 = vadd.f32 %v4444, %v4269
    %v4500 = vadd.f32 %v4445, %v4349
    %v4501 = vadd.f32 %v4446, %v4351
    %v4502 = vadd.f32 %v4447, %v4430
    %v4503 = vmul.f32 %v4499, 0.5
    %v4504 = vtanh.pop %v4503
    %v4505 = vmul.f32 %v4504, 0.5
    %v4506 = vadd.f32 %v4505, 0.5
    %v4507 = vmul.f32 %v4500, 0.5
    %v4508 = vtanh.pop %v4507
    %v4509 = vmul.f32 %v4508, 0.5
    %v4510 = vadd.f32 %v4509, 0.5
    %v4511 = vtanh.pop %v4501
    %v4512 = vmul.f32 %v4502, 0.5
    %v4513 = vtanh.pop %v4512
    %v4514 = vmul.f32 %v4513, 0.5
    %v4515 = vadd.f32 %v4514, 0.5
    %v4516 = vmul.f32 %v4510, %v3852
    %v4517 = vmul.f32 %v4506, %v4511
    %v4518 = vadd.f32 %v4516, %v4517
    %v4519 = vtanh.pop %v4518
    %v4520 = vmul.f32 %v4515, %v4519
    %v4521 = vmax.f32 %v3855, %v4496
    %v4522 = vmax.f32 %v3856, %v4497
    %v4523 = vmax.f32 %v3857, %v4498
    %v4524 = vmax.f32 %v3858, %v4520
    %v4525 = vpack.c.bf16 %v4496, %v4496
    %v4526 = vpack.c.bf16 %v4497, %v4497
    %v4527 = vpack.c.bf16 %v4498, %v4498
    %v4528 = vpack.c.bf16 %v4520, %v4520
    %4529 = vmatprep.subr.bf16.mxu0 %v2104
    %4530 = vmatpush1.bf16.msra.mxu0 %v2103
    %4531 = vmatprep.subr.bf16.mxu0 %v2117
    %4532 = vmatpush1.bf16.msra.mxu0 %v2116
    %4533 = vmatprep.subr.bf16.mxu0 %v2130
    %4534 = vmatpush1.bf16.msra.mxu0 %v2129
    %4535 = vmatprep.subr.bf16.mxu0 %v2143
    %4536 = vmatpush1.bf16.msra.mxu0 %v2142
    %4537 = vmatprep.subr.bf16.mxu0 %v2156
    %4538 = vmatpush1.bf16.msra.mxu0 %v2155
    %4539 = vmatprep.subr.bf16.mxu0 %v2169
    %4540 = vmatpush1.bf16.msra.mxu0 %v2168
    %4541 = vmatprep.subr.bf16.mxu0 %v2182
    %4542 = vmatpush1.bf16.msra.mxu0 %v2181
    %4543 = vmatprep.subr.bf16.mxu0 %v2195
    %4544 = vmatpush1.bf16.msra.mxu0 %v2194
    %4545 = vmatprep.subr.bf16.mxu0 %v2208
    %4546 = vmatpush1.bf16.msra.mxu0 %v2207
    %4547 = vmatprep.subr.bf16.mxu0 %v2221
    %4548 = vmatpush1.bf16.msra.mxu0 %v2220
    %4549 = vmatprep.subr.bf16.mxu0 %v2234
    %4550 = vmatpush1.bf16.msra.mxu0 %v2233
    %4551 = vmatprep.subr.bf16.mxu0 %v2247
    %4552 = vmatpush1.bf16.msra.mxu0 %v2246
    %4553 = vmatprep.subr.bf16.mxu0 %v2260
    %4554 = vmatpush1.bf16.msra.mxu0 %v2259
    %4555 = vmatprep.subr.bf16.mxu0 %v2273
    %4556 = vmatpush1.bf16.msra.mxu0 %v2272
    %4557 = vmatprep.subr.bf16.mxu0 %v2286
    %4558 = vmatpush1.bf16.msra.mxu0 %v2285
    %4559 = vmatprep.subr.bf16.mxu0 %v2299
    %4560 = vmatpush1.bf16.msra.mxu0 %v2298
    %4561 = vmatprep.mubr.bf16.mxu0 %v4526
    %4562 = vmatmul.mubr.bf16.gmra.mrb[0].mxu0 %v4525
    %v4563 = vpop.f32.mrb[0].mxu0
    %v4564 = vadd.f32 0.0, %v4563
    %v4565 = vpop.f32.mrb[0].mxu0
    %v4566 = vadd.f32 0.0, %v4565
    %v4567 = vpop.f32.mrb[0].mxu0
    %v4568 = vpop.f32.mrb[0].mxu0
    %4569 = vdwg.mxu0
    %4570 = vmatprep.subr.bf16.mxu0 %v2312
    %4571 = vmatpush1.bf16.msra.mxu0 %v2311
    %4572 = vmatprep.subr.bf16.mxu0 %v2325
    %4573 = vmatpush1.bf16.msra.mxu0 %v2324
    %4574 = vmatprep.subr.bf16.mxu0 %v2338
    %4575 = vmatpush1.bf16.msra.mxu0 %v2337
    %4576 = vmatprep.subr.bf16.mxu0 %v2351
    %4577 = vmatpush1.bf16.msra.mxu0 %v2350
    %4578 = vmatprep.subr.bf16.mxu0 %v2364
    %4579 = vmatpush1.bf16.msra.mxu0 %v2363
    %4580 = vmatprep.subr.bf16.mxu0 %v2377
    %4581 = vmatpush1.bf16.msra.mxu0 %v2376
    %4582 = vmatprep.subr.bf16.mxu0 %v2390
    %4583 = vmatpush1.bf16.msra.mxu0 %v2389
    %4584 = vmatprep.subr.bf16.mxu0 %v2403
    %4585 = vmatpush1.bf16.msra.mxu0 %v2402
    %4586 = vmatprep.subr.bf16.mxu0 %v2416
    %4587 = vmatpush1.bf16.msra.mxu0 %v2415
    %4588 = vmatprep.subr.bf16.mxu0 %v2429
    %4589 = vmatpush1.bf16.msra.mxu0 %v2428
    %4590 = vmatprep.subr.bf16.mxu0 %v2442
    %4591 = vmatpush1.bf16.msra.mxu0 %v2441
    %4592 = vmatprep.subr.bf16.mxu0 %v2455
    %4593 = vmatpush1.bf16.msra.mxu0 %v2454
    %4594 = vmatprep.subr.bf16.mxu0 %v2468
    %4595 = vmatpush1.bf16.msra.mxu0 %v2467
    %4596 = vmatprep.subr.bf16.mxu0 %v2481
    %4597 = vmatpush1.bf16.msra.mxu0 %v2480
    %4598 = vmatprep.subr.bf16.mxu0 %v2494
    %4599 = vmatpush1.bf16.msra.mxu0 %v2493
    %4600 = vmatprep.subr.bf16.mxu0 %v2507
    %4601 = vmatpush1.bf16.msra.mxu0 %v2506
    %4602 = vmatprep.mubr.bf16.mxu0 %v4528
    %4603 = vmatmul.mubr.bf16.gmra.mrb[0].mxu0 %v4527
    %v4604 = vpop.f32.mrb[0].mxu0
    %v4605 = vadd.f32 %v4564, %v4604
    %v4606 = vpop.f32.mrb[0].mxu0
    %v4607 = vadd.f32 %v4566, %v4606
    %v4608 = vpop.f32.mrb[0].mxu0
    %v4609 = vpop.f32.mrb[0].mxu0
    %4610 = vdwg.mxu0
    %4611 = vmatprep.subr.bf16.mxu0 %v2106
    %4612 = vmatpush1.bf16.msra.mxu0 %v2105
    %4613 = vmatprep.subr.bf16.mxu0 %v2119
    %4614 = vmatpush1.bf16.msra.mxu0 %v2118
    %4615 = vmatprep.subr.bf16.mxu0 %v2132
    %4616 = vmatpush1.bf16.msra.mxu0 %v2131
    %4617 = vmatprep.subr.bf16.mxu0 %v2145
    %4618 = vmatpush1.bf16.msra.mxu0 %v2144
    %4619 = vmatprep.subr.bf16.mxu0 %v2158
    %4620 = vmatpush1.bf16.msra.mxu0 %v2157
    %4621 = vmatprep.subr.bf16.mxu0 %v2171
    %4622 = vmatpush1.bf16.msra.mxu0 %v2170
    %4623 = vmatprep.subr.bf16.mxu0 %v2184
    %4624 = vmatpush1.bf16.msra.mxu0 %v2183
    %4625 = vmatprep.subr.bf16.mxu0 %v2197
    %4626 = vmatpush1.bf16.msra.mxu0 %v2196
    %4627 = vmatprep.subr.bf16.mxu0 %v2210
    %4628 = vmatpush1.bf16.msra.mxu0 %v2209
    %4629 = vmatprep.subr.bf16.mxu0 %v2223
    %4630 = vmatpush1.bf16.msra.mxu0 %v2222
    %4631 = vmatprep.subr.bf16.mxu0 %v2236
    %4632 = vmatpush1.bf16.msra.mxu0 %v2235
    %4633 = vmatprep.subr.bf16.mxu0 %v2249
    %4634 = vmatpush1.bf16.msra.mxu0 %v2248
    %4635 = vmatprep.subr.bf16.mxu0 %v2262
    %4636 = vmatpush1.bf16.msra.mxu0 %v2261
    %4637 = vmatprep.subr.bf16.mxu0 %v2275
    %4638 = vmatpush1.bf16.msra.mxu0 %v2274
    %4639 = vmatprep.subr.bf16.mxu0 %v2288
    %4640 = vmatpush1.bf16.msra.mxu0 %v2287
    %4641 = vmatprep.subr.bf16.mxu0 %v2301
    %4642 = vmatpush1.bf16.msra.mxu0 %v2300
    %4643 = vmatprep.mubr.bf16.mxu0 %v4526
    %4644 = vmatmul.mubr.bf16.gmra.mrb[0].mxu0 %v4525
    %v4645 = vpop.f32.mrb[0].mxu0
    %v4646 = vadd.f32 0.0, %v4645
    %v4647 = vpop.f32.mrb[0].mxu0
    %v4648 = vadd.f32 0.0, %v4647
    %v4649 = vpop.f32.mrb[0].mxu0
    %v4650 = vpop.f32.mrb[0].mxu0
    %4651 = vdwg.mxu0
    %4652 = vmatprep.subr.bf16.mxu0 %v2314
    %4653 = vmatpush1.bf16.msra.mxu0 %v2313
    %4654 = vmatprep.subr.bf16.mxu0 %v2327
    %4655 = vmatpush1.bf16.msra.mxu0 %v2326
    %4656 = vmatprep.subr.bf16.mxu0 %v2340
    %4657 = vmatpush1.bf16.msra.mxu0 %v2339
    %4658 = vmatprep.subr.bf16.mxu0 %v2353
    %4659 = vmatpush1.bf16.msra.mxu0 %v2352
    %4660 = vmatprep.subr.bf16.mxu0 %v2366
    %4661 = vmatpush1.bf16.msra.mxu0 %v2365
    %4662 = vmatprep.subr.bf16.mxu0 %v2379
    %4663 = vmatpush1.bf16.msra.mxu0 %v2378
    %4664 = vmatprep.subr.bf16.mxu0 %v2392
    %4665 = vmatpush1.bf16.msra.mxu0 %v2391
    %4666 = vmatprep.subr.bf16.mxu0 %v2405
    %4667 = vmatpush1.bf16.msra.mxu0 %v2404
    %4668 = vmatprep.subr.bf16.mxu0 %v2418
    %4669 = vmatpush1.bf16.msra.mxu0 %v2417
    %4670 = vmatprep.subr.bf16.mxu0 %v2431
    %4671 = vmatpush1.bf16.msra.mxu0 %v2430
    %4672 = vmatprep.subr.bf16.mxu0 %v2444
    %4673 = vmatpush1.bf16.msra.mxu0 %v2443
    %4674 = vmatprep.subr.bf16.mxu0 %v2457
    %4675 = vmatpush1.bf16.msra.mxu0 %v2456
    %4676 = vmatprep.subr.bf16.mxu0 %v2470
    %4677 = vmatpush1.bf16.msra.mxu0 %v2469
    %4678 = vmatprep.subr.bf16.mxu0 %v2483
    %4679 = vmatpush1.bf16.msra.mxu0 %v2482
    %4680 = vmatprep.subr.bf16.mxu0 %v2496
    %4681 = vmatpush1.bf16.msra.mxu0 %v2495
    %4682 = vmatprep.subr.bf16.mxu0 %v2509
    %4683 = vmatpush1.bf16.msra.mxu0 %v2508
    %4684 = vmatprep.mubr.bf16.mxu0 %v4528
    %4685 = vmatmul.mubr.bf16.gmra.mrb[0].mxu0 %v4527
    %v4686 = vpop.f32.mrb[0].mxu0
    %v4687 = vadd.f32 %v4646, %v4686
    %v4688 = vpop.f32.mrb[0].mxu0
    %v4689 = vadd.f32 %v4648, %v4688
    %v4690 = vpop.f32.mrb[0].mxu0
    %v4691 = vpop.f32.mrb[0].mxu0
    %4692 = vdwg.mxu0
    %4693 = vmatprep.subr.bf16.mxu0 %v2108
    %4694 = vmatpush1.bf16.msra.mxu0 %v2107
    %4695 = vmatprep.subr.bf16.mxu0 %v2121
    %4696 = vmatpush1.bf16.msra.mxu0 %v2120
    %4697 = vmatprep.subr.bf16.mxu0 %v2134
    %4698 = vmatpush1.bf16.msra.mxu0 %v2133
    %4699 = vmatprep.subr.bf16.mxu0 %v2147
    %4700 = vmatpush1.bf16.msra.mxu0 %v2146
    %4701 = vmatprep.subr.bf16.mxu0 %v2160
    %4702 = vmatpush1.bf16.msra.mxu0 %v2159
    %4703 = vmatprep.subr.bf16.mxu0 %v2173
    %4704 = vmatpush1.bf16.msra.mxu0 %v2172
    %4705 = vmatprep.subr.bf16.mxu0 %v2186
    %4706 = vmatpush1.bf16.msra.mxu0 %v2185
    %4707 = vmatprep.subr.bf16.mxu0 %v2199
    %4708 = vmatpush1.bf16.msra.mxu0 %v2198
    %4709 = vmatprep.subr.bf16.mxu0 %v2212
    %4710 = vmatpush1.bf16.msra.mxu0 %v2211
    %4711 = vmatprep.subr.bf16.mxu0 %v2225
    %4712 = vmatpush1.bf16.msra.mxu0 %v2224
    %4713 = vmatprep.subr.bf16.mxu0 %v2238
    %4714 = vmatpush1.bf16.msra.mxu0 %v2237
    %4715 = vmatprep.subr.bf16.mxu0 %v2251
    %4716 = vmatpush1.bf16.msra.mxu0 %v2250
    %4717 = vmatprep.subr.bf16.mxu0 %v2264
    %4718 = vmatpush1.bf16.msra.mxu0 %v2263
    %4719 = vmatprep.subr.bf16.mxu0 %v2277
    %4720 = vmatpush1.bf16.msra.mxu0 %v2276
    %4721 = vmatprep.subr.bf16.mxu0 %v2290
    %4722 = vmatpush1.bf16.msra.mxu0 %v2289
    %4723 = vmatprep.subr.bf16.mxu0 %v2303
    %4724 = vmatpush1.bf16.msra.mxu0 %v2302
    %4725 = vmatprep.mubr.bf16.mxu0 %v4526
    %4726 = vmatmul.mubr.bf16.gmra.mrb[0].mxu0 %v4525
    %v4727 = vpop.f32.mrb[0].mxu0
    %v4728 = vadd.f32 0.0, %v4727
    %v4729 = vpop.f32.mrb[0].mxu0
    %v4730 = vadd.f32 0.0, %v4729
    %v4731 = vpop.f32.mrb[0].mxu0
    %v4732 = vpop.f32.mrb[0].mxu0
    %4733 = vdwg.mxu0
    %4734 = vmatprep.subr.bf16.mxu0 %v2316
    %4735 = vmatpush1.bf16.msra.mxu0 %v2315
    %4736 = vmatprep.subr.bf16.mxu0 %v2329
    %4737 = vmatpush1.bf16.msra.mxu0 %v2328
    %4738 = vmatprep.subr.bf16.mxu0 %v2342
    %4739 = vmatpush1.bf16.msra.mxu0 %v2341
    %4740 = vmatprep.subr.bf16.mxu0 %v2355
    %4741 = vmatpush1.bf16.msra.mxu0 %v2354
    %4742 = vmatprep.subr.bf16.mxu0 %v2368
    %4743 = vmatpush1.bf16.msra.mxu0 %v2367
    %4744 = vmatprep.subr.bf16.mxu0 %v2381
    %4745 = vmatpush1.bf16.msra.mxu0 %v2380
    %4746 = vmatprep.subr.bf16.mxu0 %v2394
    %4747 = vmatpush1.bf16.msra.mxu0 %v2393
    %4748 = vmatprep.subr.bf16.mxu0 %v2407
    %4749 = vmatpush1.bf16.msra.mxu0 %v2406
    %4750 = vmatprep.subr.bf16.mxu0 %v2420
    %4751 = vmatpush1.bf16.msra.mxu0 %v2419
    %4752 = vmatprep.subr.bf16.mxu0 %v2433
    %4753 = vmatpush1.bf16.msra.mxu0 %v2432
    %4754 = vmatprep.subr.bf16.mxu0 %v2446
    %4755 = vmatpush1.bf16.msra.mxu0 %v2445
    %4756 = vmatprep.subr.bf16.mxu0 %v2459
    %4757 = vmatpush1.bf16.msra.mxu0 %v2458
    %4758 = vmatprep.subr.bf16.mxu0 %v2472
    %4759 = vmatpush1.bf16.msra.mxu0 %v2471
    %4760 = vmatprep.subr.bf16.mxu0 %v2485
    %4761 = vmatpush1.bf16.msra.mxu0 %v2484
    %4762 = vmatprep.subr.bf16.mxu0 %v2498
    %4763 = vmatpush1.bf16.msra.mxu0 %v2497
    %4764 = vmatprep.subr.bf16.mxu0 %v2511
    %4765 = vmatpush1.bf16.msra.mxu0 %v2510
    %4766 = vmatprep.mubr.bf16.mxu0 %v4528
    %4767 = vmatmul.mubr.bf16.gmra.mrb[0].mxu0 %v4527
    %v4768 = vpop.f32.mrb[0].mxu0
    %v4769 = vadd.f32 %v4728, %v4768
    %v4770 = vpop.f32.mrb[0].mxu0
    %v4771 = vadd.f32 %v4730, %v4770
    %v4772 = vpop.f32.mrb[0].mxu0
    %v4773 = vpop.f32.mrb[0].mxu0
    %4774 = vdwg.mxu0
    %4775 = vmatprep.subr.bf16.mxu0 %v2110
    %4776 = vmatpush1.bf16.msra.mxu0 %v2109
    %4777 = vmatprep.subr.bf16.mxu0 %v2123
    %4778 = vmatpush1.bf16.msra.mxu0 %v2122
    %4779 = vmatprep.subr.bf16.mxu0 %v2136
    %4780 = vmatpush1.bf16.msra.mxu0 %v2135
    %4781 = vmatprep.subr.bf16.mxu0 %v2149
    %4782 = vmatpush1.bf16.msra.mxu0 %v2148
    %4783 = vmatprep.subr.bf16.mxu0 %v2162
    %4784 = vmatpush1.bf16.msra.mxu0 %v2161
    %4785 = vmatprep.subr.bf16.mxu0 %v2175
    %4786 = vmatpush1.bf16.msra.mxu0 %v2174
    %4787 = vmatprep.subr.bf16.mxu0 %v2188
    %4788 = vmatpush1.bf16.msra.mxu0 %v2187
    %4789 = vmatprep.subr.bf16.mxu0 %v2201
    %4790 = vmatpush1.bf16.msra.mxu0 %v2200
    %4791 = vmatprep.subr.bf16.mxu0 %v2214
    %4792 = vmatpush1.bf16.msra.mxu0 %v2213
    %4793 = vmatprep.subr.bf16.mxu0 %v2227
    %4794 = vmatpush1.bf16.msra.mxu0 %v2226
    %4795 = vmatprep.subr.bf16.mxu0 %v2240
    %4796 = vmatpush1.bf16.msra.mxu0 %v2239
    %4797 = vmatprep.subr.bf16.mxu0 %v2253
    %4798 = vmatpush1.bf16.msra.mxu0 %v2252
    %4799 = vmatprep.subr.bf16.mxu0 %v2266
    %4800 = vmatpush1.bf16.msra.mxu0 %v2265
    %4801 = vmatprep.subr.bf16.mxu0 %v2279
    %4802 = vmatpush1.bf16.msra.mxu0 %v2278
    %4803 = vmatprep.subr.bf16.mxu0 %v2292
    %4804 = vmatpush1.bf16.msra.mxu0 %v2291
    %4805 = vmatprep.subr.bf16.mxu0 %v2305
    %4806 = vmatpush1.bf16.msra.mxu0 %v2304
    %4807 = vmatprep.mubr.bf16.mxu0 %v4526
    %4808 = vmatmul.mubr.bf16.gmra.mrb[0].mxu0 %v4525
    %v4809 = vpop.f32.mrb[0].mxu0
    %v4810 = vadd.f32 0.0, %v4809
    %v4811 = vpop.f32.mrb[0].mxu0
    %v4812 = vadd.f32 0.0, %v4811
    %v4813 = vpop.f32.mrb[0].mxu0
    %v4814 = vpop.f32.mrb[0].mxu0
    %4815 = vdwg.mxu0
    %4816 = vmatprep.subr.bf16.mxu0 %v2318
    %4817 = vmatpush1.bf16.msra.mxu0 %v2317
    %4818 = vmatprep.subr.bf16.mxu0 %v2331
    %4819 = vmatpush1.bf16.msra.mxu0 %v2330
    %4820 = vmatprep.subr.bf16.mxu0 %v2344
    %4821 = vmatpush1.bf16.msra.mxu0 %v2343
    %4822 = vmatprep.subr.bf16.mxu0 %v2357
    %4823 = vmatpush1.bf16.msra.mxu0 %v2356
    %4824 = vmatprep.subr.bf16.mxu0 %v2370
    %4825 = vmatpush1.bf16.msra.mxu0 %v2369
    %4826 = vmatprep.subr.bf16.mxu0 %v2383
    %4827 = vmatpush1.bf16.msra.mxu0 %v2382
    %4828 = vmatprep.subr.bf16.mxu0 %v2396
    %4829 = vmatpush1.bf16.msra.mxu0 %v2395
    %4830 = vmatprep.subr.bf16.mxu0 %v2409
    %4831 = vmatpush1.bf16.msra.mxu0 %v2408
    %4832 = vmatprep.subr.bf16.mxu0 %v2422
    %4833 = vmatpush1.bf16.msra.mxu0 %v2421
    %4834 = vmatprep.subr.bf16.mxu0 %v2435
    %4835 = vmatpush1.bf16.msra.mxu0 %v2434
    %4836 = vmatprep.subr.bf16.mxu0 %v2448
    %4837 = vmatpush1.bf16.msra.mxu0 %v2447
    %4838 = vmatprep.subr.bf16.mxu0 %v2461
    %4839 = vmatpush1.bf16.msra.mxu0 %v2460
    %4840 = vmatprep.subr.bf16.mxu0 %v2474
    %4841 = vmatpush1.bf16.msra.mxu0 %v2473
    %4842 = vmatprep.subr.bf16.mxu0 %v2487
    %4843 = vmatpush1.bf16.msra.mxu0 %v2486
    %4844 = vmatprep.subr.bf16.mxu0 %v2500
    %4845 = vmatpush1.bf16.msra.mxu0 %v2499
    %4846 = vmatprep.subr.bf16.mxu0 %v2513
    %4847 = vmatpush1.bf16.msra.mxu0 %v2512
    %4848 = vmatprep.mubr.bf16.mxu0 %v4528
    %4849 = vmatmul.mubr.bf16.gmra.mrb[0].mxu0 %v4527
    %v4850 = vpop.f32.mrb[0].mxu0
    %v4851 = vadd.f32 %v4810, %v4850
    %v4852 = vpop.f32.mrb[0].mxu0
    %v4853 = vadd.f32 %v4812, %v4852
    %v4854 = vpop.f32.mrb[0].mxu0
    %v4855 = vpop.f32.mrb[0].mxu0
    %4856 = vdwg.mxu0
    %4857 = vmatprep.subr.bf16.mxu0 %v2112
    %4858 = vmatpush1.bf16.msra.mxu0 %v2111
    %4859 = vmatprep.subr.bf16.mxu0 %v2125
    %4860 = vmatpush1.bf16.msra.mxu0 %v2124
    %4861 = vmatprep.subr.bf16.mxu0 %v2138
    %4862 = vmatpush1.bf16.msra.mxu0 %v2137
    %4863 = vmatprep.subr.bf16.mxu0 %v2151
    %4864 = vmatpush1.bf16.msra.mxu0 %v2150
    %4865 = vmatprep.subr.bf16.mxu0 %v2164
    %4866 = vmatpush1.bf16.msra.mxu0 %v2163
    %4867 = vmatprep.subr.bf16.mxu0 %v2177
    %4868 = vmatpush1.bf16.msra.mxu0 %v2176
    %4869 = vmatprep.subr.bf16.mxu0 %v2190
    %4870 = vmatpush1.bf16.msra.mxu0 %v2189
    %4871 = vmatprep.subr.bf16.mxu0 %v2203
    %4872 = vmatpush1.bf16.msra.mxu0 %v2202
    %4873 = vmatprep.subr.bf16.mxu0 %v2216
    %4874 = vmatpush1.bf16.msra.mxu0 %v2215
    %4875 = vmatprep.subr.bf16.mxu0 %v2229
    %4876 = vmatpush1.bf16.msra.mxu0 %v2228
    %4877 = vmatprep.subr.bf16.mxu0 %v2242
    %4878 = vmatpush1.bf16.msra.mxu0 %v2241
    %4879 = vmatprep.subr.bf16.mxu0 %v2255
    %4880 = vmatpush1.bf16.msra.mxu0 %v2254
    %4881 = vmatprep.subr.bf16.mxu0 %v2268
    %4882 = vmatpush1.bf16.msra.mxu0 %v2267
    %4883 = vmatprep.subr.bf16.mxu0 %v2281
    %4884 = vmatpush1.bf16.msra.mxu0 %v2280
    %4885 = vmatprep.subr.bf16.mxu0 %v2294
    %4886 = vmatpush1.bf16.msra.mxu0 %v2293
    %4887 = vmatprep.subr.bf16.mxu0 %v2307
    %4888 = vmatpush1.bf16.msra.mxu0 %v2306
    %4889 = vmatprep.mubr.bf16.mxu0 %v4526
    %4890 = vmatmul.mubr.bf16.gmra.mrb[0].mxu0 %v4525
    %v4891 = vpop.f32.mrb[0].mxu0
    %v4892 = vadd.f32 0.0, %v4891
    %v4893 = vpop.f32.mrb[0].mxu0
    %v4894 = vadd.f32 0.0, %v4893
    %v4895 = vpop.f32.mrb[0].mxu0
    %v4896 = vpop.f32.mrb[0].mxu0
    %4897 = vdwg.mxu0
    %4898 = vmatprep.subr.bf16.mxu0 %v2320
    %4899 = vmatpush1.bf16.msra.mxu0 %v2319
    %4900 = vmatprep.subr.bf16.mxu0 %v2333
    %4901 = vmatpush1.bf16.msra.mxu0 %v2332
    %4902 = vmatprep.subr.bf16.mxu0 %v2346
    %4903 = vmatpush1.bf16.msra.mxu0 %v2345
    %4904 = vmatprep.subr.bf16.mxu0 %v2359
    %4905 = vmatpush1.bf16.msra.mxu0 %v2358
    %4906 = vmatprep.subr.bf16.mxu0 %v2372
    %4907 = vmatpush1.bf16.msra.mxu0 %v2371
    %4908 = vmatprep.subr.bf16.mxu0 %v2385
    %4909 = vmatpush1.bf16.msra.mxu0 %v2384
    %4910 = vmatprep.subr.bf16.mxu0 %v2398
    %4911 = vmatpush1.bf16.msra.mxu0 %v2397
    %4912 = vmatprep.subr.bf16.mxu0 %v2411
    %4913 = vmatpush1.bf16.msra.mxu0 %v2410
    %4914 = vmatprep.subr.bf16.mxu0 %v2424
    %4915 = vmatpush1.bf16.msra.mxu0 %v2423
    %4916 = vmatprep.subr.bf16.mxu0 %v2437
    %4917 = vmatpush1.bf16.msra.mxu0 %v2436
    %4918 = vmatprep.subr.bf16.mxu0 %v2450
    %4919 = vmatpush1.bf16.msra.mxu0 %v2449
    %4920 = vmatprep.subr.bf16.mxu0 %v2463
    %4921 = vmatpush1.bf16.msra.mxu0 %v2462
    %4922 = vmatprep.subr.bf16.mxu0 %v2476
    %4923 = vmatpush1.bf16.msra.mxu0 %v2475
    %4924 = vmatprep.subr.bf16.mxu0 %v2489
    %4925 = vmatpush1.bf16.msra.mxu0 %v2488
    %4926 = vmatprep.subr.bf16.mxu0 %v2502
    %4927 = vmatpush1.bf16.msra.mxu0 %v2501
    %4928 = vmatprep.subr.bf16.mxu0 %v2515
    %4929 = vmatpush1.bf16.msra.mxu0 %v2514
    %4930 = vmatprep.mubr.bf16.mxu0 %v4528
    %4931 = vmatmul.mubr.bf16.gmra.mrb[0].mxu0 %v4527
    %v4932 = vpop.f32.mrb[0].mxu0
    %v4933 = vadd.f32 %v4892, %v4932
    %v4934 = vpop.f32.mrb[0].mxu0
    %v4935 = vadd.f32 %v4894, %v4934
    %v4936 = vpop.f32.mrb[0].mxu0
    %v4937 = vpop.f32.mrb[0].mxu0
    %4938 = vdwg.mxu0
    %4939 = vmatprep.subr.bf16.mxu0 %v2114
    %4940 = vmatpush1.bf16.msra.mxu0 %v2113
    %4941 = vmatprep.subr.bf16.mxu0 %v2127
    %4942 = vmatpush1.bf16.msra.mxu0 %v2126
    %4943 = vmatprep.subr.bf16.mxu0 %v2140
    %4944 = vmatpush1.bf16.msra.mxu0 %v2139
    %4945 = vmatprep.subr.bf16.mxu0 %v2153
    %4946 = vmatpush1.bf16.msra.mxu0 %v2152
    %4947 = vmatprep.subr.bf16.mxu0 %v2166
    %4948 = vmatpush1.bf16.msra.mxu0 %v2165
    %4949 = vmatprep.subr.bf16.mxu0 %v2179
    %4950 = vmatpush1.bf16.msra.mxu0 %v2178
    %4951 = vmatprep.subr.bf16.mxu0 %v2192
    %4952 = vmatpush1.bf16.msra.mxu0 %v2191
    %4953 = vmatprep.subr.bf16.mxu0 %v2205
    %4954 = vmatpush1.bf16.msra.mxu0 %v2204
    %4955 = vmatprep.subr.bf16.mxu0 %v2218
    %4956 = vmatpush1.bf16.msra.mxu0 %v2217
    %4957 = vmatprep.subr.bf16.mxu0 %v2231
    %4958 = vmatpush1.bf16.msra.mxu0 %v2230
    %4959 = vmatprep.subr.bf16.mxu0 %v2244
    %4960 = vmatpush1.bf16.msra.mxu0 %v2243
    %4961 = vmatprep.subr.bf16.mxu0 %v2257
    %4962 = vmatpush1.bf16.msra.mxu0 %v2256
    %4963 = vmatprep.subr.bf16.mxu0 %v2270
    %4964 = vmatpush1.bf16.msra.mxu0 %v2269
    %4965 = vmatprep.subr.bf16.mxu0 %v2283
    %4966 = vmatpush1.bf16.msra.mxu0 %v2282
    %4967 = vmatprep.subr.bf16.mxu0 %v2296
    %4968 = vmatpush1.bf16.msra.mxu0 %v2295
    %4969 = vmatprep.subr.bf16.mxu0 %v2309
    %4970 = vmatpush1.bf16.msra.mxu0 %v2308
    %4971 = vmatprep.mubr.bf16.mxu0 %v4526
    %4972 = vmatmul.mubr.bf16.gmra.mrb[0].mxu0 %v4525
    %v4973 = vpop.f32.mrb[0].mxu0
    %v4974 = vadd.f32 0.0, %v4973
    %v4975 = vpop.f32.mrb[0].mxu0
    %v4976 = vadd.f32 0.0, %v4975
    %v4977 = vpop.f32.mrb[0].mxu0
    %v4978 = vpop.f32.mrb[0].mxu0
    %4979 = vdwg.mxu0
    %4980 = vmatprep.subr.bf16.mxu0 %v2322
    %4981 = vmatpush1.bf16.msra.mxu0 %v2321
    %4982 = vmatprep.subr.bf16.mxu0 %v2335
    %4983 = vmatpush1.bf16.msra.mxu0 %v2334
    %4984 = vmatprep.subr.bf16.mxu0 %v2348
    %4985 = vmatpush1.bf16.msra.mxu0 %v2347
    %4986 = vmatprep.subr.bf16.mxu0 %v2361
    %4987 = vmatpush1.bf16.msra.mxu0 %v2360
    %4988 = vmatprep.subr.bf16.mxu0 %v2374
    %4989 = vmatpush1.bf16.msra.mxu0 %v2373
    %4990 = vmatprep.subr.bf16.mxu0 %v2387
    %4991 = vmatpush1.bf16.msra.mxu0 %v2386
    %4992 = vmatprep.subr.bf16.mxu0 %v2400
    %4993 = vmatpush1.bf16.msra.mxu0 %v2399
    %4994 = vmatprep.subr.bf16.mxu0 %v2413
    %4995 = vmatpush1.bf16.msra.mxu0 %v2412
    %4996 = vmatprep.subr.bf16.mxu0 %v2426
    %4997 = vmatpush1.bf16.msra.mxu0 %v2425
    %4998 = vmatprep.subr.bf16.mxu0 %v2439
    %4999 = vmatpush1.bf16.msra.mxu0 %v2438
    %5000 = vmatprep.subr.bf16.mxu0 %v2452
    %5001 = vmatpush1.bf16.msra.mxu0 %v2451
    %5002 = vmatprep.subr.bf16.mxu0 %v2465
    %5003 = vmatpush1.bf16.msra.mxu0 %v2464
    %5004 = vmatprep.subr.bf16.mxu0 %v2478
    %5005 = vmatpush1.bf16.msra.mxu0 %v2477
    %5006 = vmatprep.subr.bf16.mxu0 %v2491
    %5007 = vmatpush1.bf16.msra.mxu0 %v2490
    %5008 = vmatprep.subr.bf16.mxu0 %v2504
    %5009 = vmatpush1.bf16.msra.mxu0 %v2503
    %5010 = vmatprep.subr.bf16.mxu0 %v2517
    %5011 = vmatpush1.bf16.msra.mxu0 %v2516
    %5012 = vmatprep.mubr.bf16.mxu0 %v4528
    %5013 = vmatmul.mubr.bf16.gmra.mrb[0].mxu0 %v4527
    %v5014 = vpop.f32.mrb[0].mxu0
    %v5015 = vadd.f32 %v4974, %v5014
    %v5016 = vpop.f32.mrb[0].mxu0
    %v5017 = vadd.f32 %v4976, %v5016
    %v5018 = vpop.f32.mrb[0].mxu0
    %v5019 = vpop.f32.mrb[0].mxu0
    %5020 = vdwg.mxu0
    %5021 = vmatprep.subr.bf16.mxu0 0
    %5022 = vmatpush1.bf16.msra.mxu0 %v2115
    %5023 = vmatprep.subr.bf16.mxu0 0
    %5024 = vmatpush1.bf16.msra.mxu0 %v2128
    %5025 = vmatprep.subr.bf16.mxu0 0
    %5026 = vmatpush1.bf16.msra.mxu0 %v2141
    %5027 = vmatprep.subr.bf16.mxu0 0
    %5028 = vmatpush1.bf16.msra.mxu0 %v2154
    %5029 = vmatprep.subr.bf16.mxu0 0
    %5030 = vmatpush1.bf16.msra.mxu0 %v2167
    %5031 = vmatprep.subr.bf16.mxu0 0
    %5032 = vmatpush1.bf16.msra.mxu0 %v2180
    %5033 = vmatprep.subr.bf16.mxu0 0
    %5034 = vmatpush1.bf16.msra.mxu0 %v2193
    %5035 = vmatprep.subr.bf16.mxu0 0
    %5036 = vmatpush1.bf16.msra.mxu0 %v2206
    %5037 = vmatprep.subr.bf16.mxu0 0
    %5038 = vmatpush1.bf16.msra.mxu0 %v2219
    %5039 = vmatprep.subr.bf16.mxu0 0
    %5040 = vmatpush1.bf16.msra.mxu0 %v2232
    %5041 = vmatprep.subr.bf16.mxu0 0
    %5042 = vmatpush1.bf16.msra.mxu0 %v2245
    %5043 = vmatprep.subr.bf16.mxu0 0
    %5044 = vmatpush1.bf16.msra.mxu0 %v2258
    %5045 = vmatprep.subr.bf16.mxu0 0
    %5046 = vmatpush1.bf16.msra.mxu0 %v2271
    %5047 = vmatprep.subr.bf16.mxu0 0
    %5048 = vmatpush1.bf16.msra.mxu0 %v2284
    %5049 = vmatprep.subr.bf16.mxu0 0
    %5050 = vmatpush1.bf16.msra.mxu0 %v2297
    %5051 = vmatprep.subr.bf16.mxu0 0
    %5052 = vmatpush1.bf16.msra.mxu0 %v2310
    %5053 = vmatprep.mubr.bf16.mxu0 %v4526
    %5054 = vmatmul.mubr.bf16.gmra.mrb[0].mxu0 %v4525
    %v5055 = vpop.f32.mrb[0].mxu0
    %v5056 = vadd.f32 0.0, %v5055
    %v5057 = vpop.f32.mrb[0].mxu0
    %v5058 = vpop.f32.mrb[0].mxu0
    %v5059 = vpop.f32.mrb[0].mxu0
    %5060 = vdwg.mxu0
    %5061 = vmatprep.subr.bf16.mxu0 0
    %5062 = vmatpush1.bf16.msra.mxu0 %v2323
    %5063 = vmatprep.subr.bf16.mxu0 0
    %5064 = vmatpush1.bf16.msra.mxu0 %v2336
    %5065 = vmatprep.subr.bf16.mxu0 0
    %5066 = vmatpush1.bf16.msra.mxu0 %v2349
    %5067 = vmatprep.subr.bf16.mxu0 0
    %5068 = vmatpush1.bf16.msra.mxu0 %v2362
    %5069 = vmatprep.subr.bf16.mxu0 0
    %5070 = vmatpush1.bf16.msra.mxu0 %v2375
    %5071 = vmatprep.subr.bf16.mxu0 0
    %5072 = vmatpush1.bf16.msra.mxu0 %v2388
    %5073 = vmatprep.subr.bf16.mxu0 0
    %5074 = vmatpush1.bf16.msra.mxu0 %v2401
    %5075 = vmatprep.subr.bf16.mxu0 0
    %5076 = vmatpush1.bf16.msra.mxu0 %v2414
    %5077 = vmatprep.subr.bf16.mxu0 0
    %5078 = vmatpush1.bf16.msra.mxu0 %v2427
    %5079 = vmatprep.subr.bf16.mxu0 0
    %5080 = vmatpush1.bf16.msra.mxu0 %v2440
    %5081 = vmatprep.subr.bf16.mxu0 0
    %5082 = vmatpush1.bf16.msra.mxu0 %v2453
    %5083 = vmatprep.subr.bf16.mxu0 0
    %5084 = vmatpush1.bf16.msra.mxu0 %v2466
    %5085 = vmatprep.subr.bf16.mxu0 0
    %5086 = vmatpush1.bf16.msra.mxu0 %v2479
    %5087 = vmatprep.subr.bf16.mxu0 0
    %5088 = vmatpush1.bf16.msra.mxu0 %v2492
    %5089 = vmatprep.subr.bf16.mxu0 0
    %5090 = vmatpush1.bf16.msra.mxu0 %v2505
    %5091 = vmatprep.subr.bf16.mxu0 0
    %5092 = vmatpush1.bf16.msra.mxu0 %v2518
    %5093 = vmatprep.mubr.bf16.mxu0 %v4528
    %5094 = vmatmul.mubr.bf16.gmra.mrb[0].mxu0 %v4527
    %v5095 = vpop.f32.mrb[0].mxu0
    %v5096 = vadd.f32 %v5056, %v5095
    %v5097 = vpop.f32.mrb[0].mxu0
    %v5098 = vpop.f32.mrb[0].mxu0
    %v5099 = vpop.f32.mrb[0].mxu0
    %5100 = vdwg.mxu0
    %v5101 = vld [vmem:[%s2057] sm:$0xff]
    %v5102 = vld [vmem:[%s2057 + $0x8] sm:$0xff]
    %v5103 = vld [vmem:[%s2057 + $0x10] sm:$0xff]
    %v5104 = vld [vmem:[%s2057 + $0x18] sm:$0xff]
    %v5105 = vld [vmem:[%s2057 + $0x20] sm:$0xff]
    %v5106 = vld [vmem:[%s2057 + $0x28] sm:$0xff]
    %v5107 = vld [vmem:[%s2057 + $0x30] sm:$0xff]
    %v5108 = vld [vmem:[%s2057 + $0x38] sm:$0xff]
    %v5109 = vld [vmem:[%s2057 + $0x40] sm:$0xff]
    %v5110 = vld [vmem:[%s2057 + $0x48] sm:$0xff]
    %v5111 = vld [vmem:[%s2057 + $0x50] sm:$0xff]
    %v5112 = vld [vmem:[%s2057 + $0x58] sm:$0xff]
    %v5113 = vld [vmem:[%s2057 + $0x60] sm:$0xff]
    %v5114 = vadd.f32 %v5101, %v4605
    %v5115 = vadd.f32 %v5102, %v4607
    %v5116 = vadd.f32 %v5103, %v4687
    %v5117 = vmul.f32 %v5114, 0.5
    %v5118 = vmul.f32 %v5115, 0.5
    %v5119 = vmul.f32 %v5116, 0.5
    %v5120 = vtanh.pop %v5117
    %v5121 = vtanh.pop %v5118
    %v5122 = vtanh.pop %v5119
    %v5123 = vmul.f32 %v5120, 0.5
    %v5124 = vmul.f32 %v5121, 0.5
    %v5125 = vmul.f32 %v5122, 0.5
    %v5126 = vadd.f32 %v5123, 0.5
    %v5127 = vadd.f32 %v5124, 0.5
    %v5128 = vadd.f32 %v5125, 0.5
    %v5129 = vadd.f32 %v5104, %v4689
    %v5130 = vadd.f32 %v5105, %v4769
    %v5131 = vadd.f32 %v5106, %v4771
    %v5132 = vmul.f32 %v5129, 0.5
    %v5133 = vmul.f32 %v5130, 0.5
    %v5134 = vmul.f32 %v5131, 0.5
    %v5135 = vtanh.pop %v5132
    %v5136 = vtanh.pop %v5133
    %v5137 = vtanh.pop %v5134
    %v5138 = vmul.f32 %v5135, 0.5
    %v5139 = vmul.f32 %v5136, 0.5
    %v5140 = vmul.f32 %v5137, 0.5
    %v5141 = vadd.f32 %v5138, 0.5
    %v5142 = vadd.f32 %v5139, 0.5
    %v5143 = vadd.f32 %v5140, 0.5
    %v5144 = vadd.f32 %v4851, %v3138
    %v5145 = vadd.f32 %v4853, %v3142
    %v5146 = vadd.f32 %v4933, %v3146
    %v5147 = vmul.f32 %v5126, %v5144
    %v5148 = vmul.f32 %v5127, %v5145
    %v5149 = vmul.f32 %v5128, %v5146
    %v5150 = vadd.f32 %v5107, %v5147
    %v5151 = vadd.f32 %v5108, %v5148
    %v5152 = vadd.f32 %v5109, %v5149
    %v5153 = vtanh.pop %v5150
    %v5154 = vtanh.pop %v5151
    %v5155 = vtanh.pop %v5152
    %v5156 = vsub.f32 %v4496, %v5153
    %v5157 = vsub.f32 %v4497, %v5154
    %v5158 = vsub.f32 %v4498, %v5155
    %v5159 = vmul.f32 %v5141, %v5156
    %v5160 = vmul.f32 %v5142, %v5157
    %v5161 = vmul.f32 %v5143, %v5158
    %v5162 = vadd.f32 %v5153, %v5159
    %v5163 = vadd.f32 %v5154, %v5160
    %v5164 = vadd.f32 %v5155, %v5161
    %v5165 = vadd.f32 %v5110, %v4935
    %v5166 = vadd.f32 %v5111, %v5015
    %v5167 = vadd.f32 %v5112, %v5017
    %v5168 = vadd.f32 %v5113, %v5096
    %v5169 = vmul.f32 %v5165, 0.5
    %v5170 = vtanh.pop %v5169
    %v5171 = vmul.f32 %v5170, 0.5
    %v5172 = vadd.f32 %v5171, 0.5
    %v5173 = vmul.f32 %v5166, 0.5
    %v5174 = vtanh.pop %v5173
    %v5175 = vmul.f32 %v5174, 0.5
    %v5176 = vadd.f32 %v5175, 0.5
    %v5177 = vtanh.pop %v5167
    %v5178 = vmul.f32 %v5168, 0.5
    %v5179 = vtanh.pop %v5178
    %v5180 = vmul.f32 %v5179, 0.5
    %v5181 = vadd.f32 %v5180, 0.5
    %v5182 = vmul.f32 %v5176, %v4518
    %v5183 = vmul.f32 %v5172, %v5177
    %v5184 = vadd.f32 %v5182, %v5183
    %v5185 = vtanh.pop %v5184
    %v5186 = vmul.f32 %v5181, %v5185
    %v5187 = vmax.f32 %v4521, %v5162
    %v5188 = vmax.f32 %v4522, %v5163
    %v5189 = vmax.f32 %v4523, %v5164
    %v5190 = vmax.f32 %v4524, %v5186
    %v5191 = vpack.c.bf16 %v5162, %v5162
    %v5192 = vpack.c.bf16 %v5163, %v5163
    %v5193 = vpack.c.bf16 %v5164, %v5164
    %v5194 = vpack.c.bf16 %v5186, %v5186
    %5195 = vmatprep.subr.bf16.mxu0 %v2104
    %5196 = vmatpush1.bf16.msra.mxu0 %v2103
    %5197 = vmatprep.subr.bf16.mxu0 %v2117
    %5198 = vmatpush1.bf16.msra.mxu0 %v2116
    %5199 = vmatprep.subr.bf16.mxu0 %v2130
    %5200 = vmatpush1.bf16.msra.mxu0 %v2129
    %5201 = vmatprep.subr.bf16.mxu0 %v2143
    %5202 = vmatpush1.bf16.msra.mxu0 %v2142
    %5203 = vmatprep.subr.bf16.mxu0 %v2156
    %5204 = vmatpush1.bf16.msra.mxu0 %v2155
    %5205 = vmatprep.subr.bf16.mxu0 %v2169
    %5206 = vmatpush1.bf16.msra.mxu0 %v2168
    %5207 = vmatprep.subr.bf16.mxu0 %v2182
    %5208 = vmatpush1.bf16.msra.mxu0 %v2181
    %5209 = vmatprep.subr.bf16.mxu0 %v2195
    %5210 = vmatpush1.bf16.msra.mxu0 %v2194
    %5211 = vmatprep.subr.bf16.mxu0 %v2208
    %5212 = vmatpush1.bf16.msra.mxu0 %v2207
    %5213 = vmatprep.subr.bf16.mxu0 %v2221
    %5214 = vmatpush1.bf16.msra.mxu0 %v2220
    %5215 = vmatprep.subr.bf16.mxu0 %v2234
    %5216 = vmatpush1.bf16.msra.mxu0 %v2233
    %5217 = vmatprep.subr.bf16.mxu0 %v2247
    %5218 = vmatpush1.bf16.msra.mxu0 %v2246
    %5219 = vmatprep.subr.bf16.mxu0 %v2260
    %5220 = vmatpush1.bf16.msra.mxu0 %v2259
    %5221 = vmatprep.subr.bf16.mxu0 %v2273
    %5222 = vmatpush1.bf16.msra.mxu0 %v2272
    %5223 = vmatprep.subr.bf16.mxu0 %v2286
    %5224 = vmatpush1.bf16.msra.mxu0 %v2285
    %5225 = vmatprep.subr.bf16.mxu0 %v2299
    %5226 = vmatpush1.bf16.msra.mxu0 %v2298
    %5227 = vmatprep.mubr.bf16.mxu0 %v5192
    %5228 = vmatmul.mubr.bf16.gmra.mrb[0].mxu0 %v5191
    %v5229 = vpop.f32.mrb[0].mxu0
    %v5230 = vadd.f32 0.0, %v5229
    %v5231 = vpop.f32.mrb[0].mxu0
    %v5232 = vadd.f32 0.0, %v5231
    %v5233 = vpop.f32.mrb[0].mxu0
    %v5234 = vpop.f32.mrb[0].mxu0
    %5235 = vdwg.mxu0
    %5236 = vmatprep.subr.bf16.mxu0 %v2312
    %5237 = vmatpush1.bf16.msra.mxu0 %v2311
    %5238 = vmatprep.subr.bf16.mxu0 %v2325
    %5239 = vmatpush1.bf16.msra.mxu0 %v2324
    %5240 = vmatprep.subr.bf16.mxu0 %v2338
    %5241 = vmatpush1.bf16.msra.mxu0 %v2337
    %5242 = vmatprep.subr.bf16.mxu0 %v2351
    %5243 = vmatpush1.bf16.msra.mxu0 %v2350
    %5244 = vmatprep.subr.bf16.mxu0 %v2364
    %5245 = vmatpush1.bf16.msra.mxu0 %v2363
    %5246 = vmatprep.subr.bf16.mxu0 %v2377
    %5247 = vmatpush1.bf16.msra.mxu0 %v2376
    %5248 = vmatprep.subr.bf16.mxu0 %v2390
    %5249 = vmatpush1.bf16.msra.mxu0 %v2389
    %5250 = vmatprep.subr.bf16.mxu0 %v2403
    %5251 = vmatpush1.bf16.msra.mxu0 %v2402
    %5252 = vmatprep.subr.bf16.mxu0 %v2416
    %5253 = vmatpush1.bf16.msra.mxu0 %v2415
    %5254 = vmatprep.subr.bf16.mxu0 %v2429
    %5255 = vmatpush1.bf16.msra.mxu0 %v2428
    %5256 = vmatprep.subr.bf16.mxu0 %v2442
    %5257 = vmatpush1.bf16.msra.mxu0 %v2441
    %5258 = vmatprep.subr.bf16.mxu0 %v2455
    %5259 = vmatpush1.bf16.msra.mxu0 %v2454
    %5260 = vmatprep.subr.bf16.mxu0 %v2468
    %5261 = vmatpush1.bf16.msra.mxu0 %v2467
    %5262 = vmatprep.subr.bf16.mxu0 %v2481
    %5263 = vmatpush1.bf16.msra.mxu0 %v2480
    %5264 = vmatprep.subr.bf16.mxu0 %v2494
    %5265 = vmatpush1.bf16.msra.mxu0 %v2493
    %5266 = vmatprep.subr.bf16.mxu0 %v2507
    %5267 = vmatpush1.bf16.msra.mxu0 %v2506
    %5268 = vmatprep.mubr.bf16.mxu0 %v5194
    %5269 = vmatmul.mubr.bf16.gmra.mrb[0].mxu0 %v5193
    %v5270 = vpop.f32.mrb[0].mxu0
    %v5271 = vadd.f32 %v5230, %v5270
    %v5272 = vpop.f32.mrb[0].mxu0
    %v5273 = vadd.f32 %v5232, %v5272
    %v5274 = vpop.f32.mrb[0].mxu0
    %v5275 = vpop.f32.mrb[0].mxu0
    %5276 = vdwg.mxu0
    %5277 = vmatprep.subr.bf16.mxu0 %v2106
    %5278 = vmatpush1.bf16.msra.mxu0 %v2105
    %5279 = vmatprep.subr.bf16.mxu0 %v2119
    %5280 = vmatpush1.bf16.msra.mxu0 %v2118
    %5281 = vmatprep.subr.bf16.mxu0 %v2132
    %5282 = vmatpush1.bf16.msra.mxu0 %v2131
    %5283 = vmatprep.subr.bf16.mxu0 %v2145
    %5284 = vmatpush1.bf16.msra.mxu0 %v2144
    %5285 = vmatprep.subr.bf16.mxu0 %v2158
    %5286 = vmatpush1.bf16.msra.mxu0 %v2157
    %5287 = vmatprep.subr.bf16.mxu0 %v2171
    %5288 = vmatpush1.bf16.msra.mxu0 %v2170
    %5289 = vmatprep.subr.bf16.mxu0 %v2184
    %5290 = vmatpush1.bf16.msra.mxu0 %v2183
    %5291 = vmatprep.subr.bf16.mxu0 %v2197
    %5292 = vmatpush1.bf16.msra.mxu0 %v2196
    %5293 = vmatprep.subr.bf16.mxu0 %v2210
    %5294 = vmatpush1.bf16.msra.mxu0 %v2209
    %5295 = vmatprep.subr.bf16.mxu0 %v2223
    %5296 = vmatpush1.bf16.msra.mxu0 %v2222
    %5297 = vmatprep.subr.bf16.mxu0 %v2236
    %5298 = vmatpush1.bf16.msra.mxu0 %v2235
    %5299 = vmatprep.subr.bf16.mxu0 %v2249
    %5300 = vmatpush1.bf16.msra.mxu0 %v2248
    %5301 = vmatprep.subr.bf16.mxu0 %v2262
    %5302 = vmatpush1.bf16.msra.mxu0 %v2261
    %5303 = vmatprep.subr.bf16.mxu0 %v2275
    %5304 = vmatpush1.bf16.msra.mxu0 %v2274
    %5305 = vmatprep.subr.bf16.mxu0 %v2288
    %5306 = vmatpush1.bf16.msra.mxu0 %v2287
    %5307 = vmatprep.subr.bf16.mxu0 %v2301
    %5308 = vmatpush1.bf16.msra.mxu0 %v2300
    %5309 = vmatprep.mubr.bf16.mxu0 %v5192
    %5310 = vmatmul.mubr.bf16.gmra.mrb[0].mxu0 %v5191
    %v5311 = vpop.f32.mrb[0].mxu0
    %v5312 = vadd.f32 0.0, %v5311
    %v5313 = vpop.f32.mrb[0].mxu0
    %v5314 = vadd.f32 0.0, %v5313
    %v5315 = vpop.f32.mrb[0].mxu0
    %v5316 = vpop.f32.mrb[0].mxu0
    %5317 = vdwg.mxu0
    %5318 = vmatprep.subr.bf16.mxu0 %v2314
    %5319 = vmatpush1.bf16.msra.mxu0 %v2313
    %5320 = vmatprep.subr.bf16.mxu0 %v2327
    %5321 = vmatpush1.bf16.msra.mxu0 %v2326
    %5322 = vmatprep.subr.bf16.mxu0 %v2340
    %5323 = vmatpush1.bf16.msra.mxu0 %v2339
    %5324 = vmatprep.subr.bf16.mxu0 %v2353
    %5325 = vmatpush1.bf16.msra.mxu0 %v2352
    %5326 = vmatprep.subr.bf16.mxu0 %v2366
    %5327 = vmatpush1.bf16.msra.mxu0 %v2365
    %5328 = vmatprep.subr.bf16.mxu0 %v2379
    %5329 = vmatpush1.bf16.msra.mxu0 %v2378
    %5330 = vmatprep.subr.bf16.mxu0 %v2392
    %5331 = vmatpush1.bf16.msra.mxu0 %v2391
    %5332 = vmatprep.subr.bf16.mxu0 %v2405
    %5333 = vmatpush1.bf16.msra.mxu0 %v2404
    %5334 = vmatprep.subr.bf16.mxu0 %v2418
    %5335 = vmatpush1.bf16.msra.mxu0 %v2417
    %5336 = vmatprep.subr.bf16.mxu0 %v2431
    %5337 = vmatpush1.bf16.msra.mxu0 %v2430
    %5338 = vmatprep.subr.bf16.mxu0 %v2444
    %5339 = vmatpush1.bf16.msra.mxu0 %v2443
    %5340 = vmatprep.subr.bf16.mxu0 %v2457
    %5341 = vmatpush1.bf16.msra.mxu0 %v2456
    %5342 = vmatprep.subr.bf16.mxu0 %v2470
    %5343 = vmatpush1.bf16.msra.mxu0 %v2469
    %5344 = vmatprep.subr.bf16.mxu0 %v2483
    %5345 = vmatpush1.bf16.msra.mxu0 %v2482
    %5346 = vmatprep.subr.bf16.mxu0 %v2496
    %5347 = vmatpush1.bf16.msra.mxu0 %v2495
    %5348 = vmatprep.subr.bf16.mxu0 %v2509
    %5349 = vmatpush1.bf16.msra.mxu0 %v2508
    %5350 = vmatprep.mubr.bf16.mxu0 %v5194
    %5351 = vmatmul.mubr.bf16.gmra.mrb[0].mxu0 %v5193
    %v5352 = vpop.f32.mrb[0].mxu0
    %v5353 = vadd.f32 %v5312, %v5352
    %v5354 = vpop.f32.mrb[0].mxu0
    %v5355 = vadd.f32 %v5314, %v5354
    %v5356 = vpop.f32.mrb[0].mxu0
    %v5357 = vpop.f32.mrb[0].mxu0
    %5358 = vdwg.mxu0
    %5359 = vmatprep.subr.bf16.mxu0 %v2108
    %5360 = vmatpush1.bf16.msra.mxu0 %v2107
    %5361 = vmatprep.subr.bf16.mxu0 %v2121
    %5362 = vmatpush1.bf16.msra.mxu0 %v2120
    %5363 = vmatprep.subr.bf16.mxu0 %v2134
    %5364 = vmatpush1.bf16.msra.mxu0 %v2133
    %5365 = vmatprep.subr.bf16.mxu0 %v2147
    %5366 = vmatpush1.bf16.msra.mxu0 %v2146
    %5367 = vmatprep.subr.bf16.mxu0 %v2160
    %5368 = vmatpush1.bf16.msra.mxu0 %v2159
    %5369 = vmatprep.subr.bf16.mxu0 %v2173
    %5370 = vmatpush1.bf16.msra.mxu0 %v2172
    %5371 = vmatprep.subr.bf16.mxu0 %v2186
    %5372 = vmatpush1.bf16.msra.mxu0 %v2185
    %5373 = vmatprep.subr.bf16.mxu0 %v2199
    %5374 = vmatpush1.bf16.msra.mxu0 %v2198
    %5375 = vmatprep.subr.bf16.mxu0 %v2212
    %5376 = vmatpush1.bf16.msra.mxu0 %v2211
    %5377 = vmatprep.subr.bf16.mxu0 %v2225
    %5378 = vmatpush1.bf16.msra.mxu0 %v2224
    %5379 = vmatprep.subr.bf16.mxu0 %v2238
    %5380 = vmatpush1.bf16.msra.mxu0 %v2237
    %5381 = vmatprep.subr.bf16.mxu0 %v2251
    %5382 = vmatpush1.bf16.msra.mxu0 %v2250
    %5383 = vmatprep.subr.bf16.mxu0 %v2264
    %5384 = vmatpush1.bf16.msra.mxu0 %v2263
    %5385 = vmatprep.subr.bf16.mxu0 %v2277
    %5386 = vmatpush1.bf16.msra.mxu0 %v2276
    %5387 = vmatprep.subr.bf16.mxu0 %v2290
    %5388 = vmatpush1.bf16.msra.mxu0 %v2289
    %5389 = vmatprep.subr.bf16.mxu0 %v2303
    %5390 = vmatpush1.bf16.msra.mxu0 %v2302
    %5391 = vmatprep.mubr.bf16.mxu0 %v5192
    %5392 = vmatmul.mubr.bf16.gmra.mrb[0].mxu0 %v5191
    %v5393 = vpop.f32.mrb[0].mxu0
    %v5394 = vadd.f32 0.0, %v5393
    %v5395 = vpop.f32.mrb[0].mxu0
    %v5396 = vadd.f32 0.0, %v5395
    %v5397 = vpop.f32.mrb[0].mxu0
    %v5398 = vpop.f32.mrb[0].mxu0
    %5399 = vdwg.mxu0
    %5400 = vmatprep.subr.bf16.mxu0 %v2316
    %5401 = vmatpush1.bf16.msra.mxu0 %v2315
    %5402 = vmatprep.subr.bf16.mxu0 %v2329
    %5403 = vmatpush1.bf16.msra.mxu0 %v2328
    %5404 = vmatprep.subr.bf16.mxu0 %v2342
    %5405 = vmatpush1.bf16.msra.mxu0 %v2341
    %5406 = vmatprep.subr.bf16.mxu0 %v2355
    %5407 = vmatpush1.bf16.msra.mxu0 %v2354
    %5408 = vmatprep.subr.bf16.mxu0 %v2368
    %5409 = vmatpush1.bf16.msra.mxu0 %v2367
    %5410 = vmatprep.subr.bf16.mxu0 %v2381
    %5411 = vmatpush1.bf16.msra.mxu0 %v2380
    %5412 = vmatprep.subr.bf16.mxu0 %v2394
    %5413 = vmatpush1.bf16.msra.mxu0 %v2393
    %5414 = vmatprep.subr.bf16.mxu0 %v2407
    %5415 = vmatpush1.bf16.msra.mxu0 %v2406
    %5416 = vmatprep.subr.bf16.mxu0 %v2420
    %5417 = vmatpush1.bf16.msra.mxu0 %v2419
    %5418 = vmatprep.subr.bf16.mxu0 %v2433
    %5419 = vmatpush1.bf16.msra.mxu0 %v2432
    %5420 = vmatprep.subr.bf16.mxu0 %v2446
    %5421 = vmatpush1.bf16.msra.mxu0 %v2445
    %5422 = vmatprep.subr.bf16.mxu0 %v2459
    %5423 = vmatpush1.bf16.msra.mxu0 %v2458
    %5424 = vmatprep.subr.bf16.mxu0 %v2472
    %5425 = vmatpush1.bf16.msra.mxu0 %v2471
    %5426 = vmatprep.subr.bf16.mxu0 %v2485
    %5427 = vmatpush1.bf16.msra.mxu0 %v2484
    %5428 = vmatprep.subr.bf16.mxu0 %v2498
    %5429 = vmatpush1.bf16.msra.mxu0 %v2497
    %5430 = vmatprep.subr.bf16.mxu0 %v2511
    %5431 = vmatpush1.bf16.msra.mxu0 %v2510
    %5432 = vmatprep.mubr.bf16.mxu0 %v5194
    %5433 = vmatmul.mubr.bf16.gmra.mrb[0].mxu0 %v5193
    %v5434 = vpop.f32.mrb[0].mxu0
    %v5435 = vadd.f32 %v5394, %v5434
    %v5436 = vpop.f32.mrb[0].mxu0
    %v5437 = vadd.f32 %v5396, %v5436
    %v5438 = vpop.f32.mrb[0].mxu0
    %v5439 = vpop.f32.mrb[0].mxu0
    %5440 = vdwg.mxu0
    %5441 = vmatprep.subr.bf16.mxu0 %v2110
    %5442 = vmatpush1.bf16.msra.mxu0 %v2109
    %5443 = vmatprep.subr.bf16.mxu0 %v2123
    %5444 = vmatpush1.bf16.msra.mxu0 %v2122
    %5445 = vmatprep.subr.bf16.mxu0 %v2136
    %5446 = vmatpush1.bf16.msra.mxu0 %v2135
    %5447 = vmatprep.subr.bf16.mxu0 %v2149
    %5448 = vmatpush1.bf16.msra.mxu0 %v2148
    %5449 = vmatprep.subr.bf16.mxu0 %v2162
    %5450 = vmatpush1.bf16.msra.mxu0 %v2161
    %5451 = vmatprep.subr.bf16.mxu0 %v2175
    %5452 = vmatpush1.bf16.msra.mxu0 %v2174
    %5453 = vmatprep.subr.bf16.mxu0 %v2188
    %5454 = vmatpush1.bf16.msra.mxu0 %v2187
    %5455 = vmatprep.subr.bf16.mxu0 %v2201
    %5456 = vmatpush1.bf16.msra.mxu0 %v2200
    %5457 = vmatprep.subr.bf16.mxu0 %v2214
    %5458 = vmatpush1.bf16.msra.mxu0 %v2213
    %5459 = vmatprep.subr.bf16.mxu0 %v2227
    %5460 = vmatpush1.bf16.msra.mxu0 %v2226
    %5461 = vmatprep.subr.bf16.mxu0 %v2240
    %5462 = vmatpush1.bf16.msra.mxu0 %v2239
    %5463 = vmatprep.subr.bf16.mxu0 %v2253
    %5464 = vmatpush1.bf16.msra.mxu0 %v2252
    %5465 = vmatprep.subr.bf16.mxu0 %v2266
    %5466 = vmatpush1.bf16.msra.mxu0 %v2265
    %5467 = vmatprep.subr.bf16.mxu0 %v2279
    %5468 = vmatpush1.bf16.msra.mxu0 %v2278
    %5469 = vmatprep.subr.bf16.mxu0 %v2292
    %5470 = vmatpush1.bf16.msra.mxu0 %v2291
    %5471 = vmatprep.subr.bf16.mxu0 %v2305
    %5472 = vmatpush1.bf16.msra.mxu0 %v2304
    %5473 = vmatprep.mubr.bf16.mxu0 %v5192
    %5474 = vmatmul.mubr.bf16.gmra.mrb[0].mxu0 %v5191
    %v5475 = vpop.f32.mrb[0].mxu0
    %v5476 = vadd.f32 0.0, %v5475
    %v5477 = vpop.f32.mrb[0].mxu0
    %v5478 = vadd.f32 0.0, %v5477
    %v5479 = vpop.f32.mrb[0].mxu0
    %v5480 = vpop.f32.mrb[0].mxu0
    %5481 = vdwg.mxu0
    %5482 = vmatprep.subr.bf16.mxu0 %v2318
    %5483 = vmatpush1.bf16.msra.mxu0 %v2317
    %5484 = vmatprep.subr.bf16.mxu0 %v2331
    %5485 = vmatpush1.bf16.msra.mxu0 %v2330
    %5486 = vmatprep.subr.bf16.mxu0 %v2344
    %5487 = vmatpush1.bf16.msra.mxu0 %v2343
    %5488 = vmatprep.subr.bf16.mxu0 %v2357
    %5489 = vmatpush1.bf16.msra.mxu0 %v2356
    %5490 = vmatprep.subr.bf16.mxu0 %v2370
    %5491 = vmatpush1.bf16.msra.mxu0 %v2369
    %5492 = vmatprep.subr.bf16.mxu0 %v2383
    %5493 = vmatpush1.bf16.msra.mxu0 %v2382
    %5494 = vmatprep.subr.bf16.mxu0 %v2396
    %5495 = vmatpush1.bf16.msra.mxu0 %v2395
    %5496 = vmatprep.subr.bf16.mxu0 %v2409
    %5497 = vmatpush1.bf16.msra.mxu0 %v2408
    %5498 = vmatprep.subr.bf16.mxu0 %v2422
    %5499 = vmatpush1.bf16.msra.mxu0 %v2421
    %5500 = vmatprep.subr.bf16.mxu0 %v2435
    %5501 = vmatpush1.bf16.msra.mxu0 %v2434
    %5502 = vmatprep.subr.bf16.mxu0 %v2448
    %5503 = vmatpush1.bf16.msra.mxu0 %v2447
    %5504 = vmatprep.subr.bf16.mxu0 %v2461
    %5505 = vmatpush1.bf16.msra.mxu0 %v2460
    %5506 = vmatprep.subr.bf16.mxu0 %v2474
    %5507 = vmatpush1.bf16.msra.mxu0 %v2473
    %5508 = vmatprep.subr.bf16.mxu0 %v2487
    %5509 = vmatpush1.bf16.msra.mxu0 %v2486
    %5510 = vmatprep.subr.bf16.mxu0 %v2500
    %5511 = vmatpush1.bf16.msra.mxu0 %v2499
    %5512 = vmatprep.subr.bf16.mxu0 %v2513
    %5513 = vmatpush1.bf16.msra.mxu0 %v2512
    %5514 = vmatprep.mubr.bf16.mxu0 %v5194
    %5515 = vmatmul.mubr.bf16.gmra.mrb[0].mxu0 %v5193
    %v5516 = vpop.f32.mrb[0].mxu0
    %v5517 = vadd.f32 %v5476, %v5516
    %v5518 = vpop.f32.mrb[0].mxu0
    %v5519 = vadd.f32 %v5478, %v5518
    %v5520 = vpop.f32.mrb[0].mxu0
    %v5521 = vpop.f32.mrb[0].mxu0
    %5522 = vdwg.mxu0
    %5523 = vmatprep.subr.bf16.mxu0 %v2112
    %5524 = vmatpush1.bf16.msra.mxu0 %v2111
    %5525 = vmatprep.subr.bf16.mxu0 %v2125
    %5526 = vmatpush1.bf16.msra.mxu0 %v2124
    %5527 = vmatprep.subr.bf16.mxu0 %v2138
    %5528 = vmatpush1.bf16.msra.mxu0 %v2137
    %5529 = vmatprep.subr.bf16.mxu0 %v2151
    %5530 = vmatpush1.bf16.msra.mxu0 %v2150
    %5531 = vmatprep.subr.bf16.mxu0 %v2164
    %5532 = vmatpush1.bf16.msra.mxu0 %v2163
    %5533 = vmatprep.subr.bf16.mxu0 %v2177
    %5534 = vmatpush1.bf16.msra.mxu0 %v2176
    %5535 = vmatprep.subr.bf16.mxu0 %v2190
    %5536 = vmatpush1.bf16.msra.mxu0 %v2189
    %5537 = vmatprep.subr.bf16.mxu0 %v2203
    %5538 = vmatpush1.bf16.msra.mxu0 %v2202
    %5539 = vmatprep.subr.bf16.mxu0 %v2216
    %5540 = vmatpush1.bf16.msra.mxu0 %v2215
    %5541 = vmatprep.subr.bf16.mxu0 %v2229
    %5542 = vmatpush1.bf16.msra.mxu0 %v2228
    %5543 = vmatprep.subr.bf16.mxu0 %v2242
    %5544 = vmatpush1.bf16.msra.mxu0 %v2241
    %5545 = vmatprep.subr.bf16.mxu0 %v2255
    %5546 = vmatpush1.bf16.msra.mxu0 %v2254
    %5547 = vmatprep.subr.bf16.mxu0 %v2268
    %5548 = vmatpush1.bf16.msra.mxu0 %v2267
    %5549 = vmatprep.subr.bf16.mxu0 %v2281
    %5550 = vmatpush1.bf16.msra.mxu0 %v2280
    %5551 = vmatprep.subr.bf16.mxu0 %v2294
    %5552 = vmatpush1.bf16.msra.mxu0 %v2293
    %5553 = vmatprep.subr.bf16.mxu0 %v2307
    %5554 = vmatpush1.bf16.msra.mxu0 %v2306
    %5555 = vmatprep.mubr.bf16.mxu0 %v5192
    %5556 = vmatmul.mubr.bf16.gmra.mrb[0].mxu0 %v5191
    %v5557 = vpop.f32.mrb[0].mxu0
    %v5558 = vadd.f32 0.0, %v5557
    %v5559 = vpop.f32.mrb[0].mxu0
    %v5560 = vadd.f32 0.0, %v5559
    %v5561 = vpop.f32.mrb[0].mxu0
    %v5562 = vpop.f32.mrb[0].mxu0
    %5563 = vdwg.mxu0
    %5564 = vmatprep.subr.bf16.mxu0 %v2320
    %5565 = vmatpush1.bf16.msra.mxu0 %v2319
    %5566 = vmatprep.subr.bf16.mxu0 %v2333
    %5567 = vmatpush1.bf16.msra.mxu0 %v2332
    %5568 = vmatprep.subr.bf16.mxu0 %v2346
    %5569 = vmatpush1.bf16.msra.mxu0 %v2345
    %5570 = vmatprep.subr.bf16.mxu0 %v2359
    %5571 = vmatpush1.bf16.msra.mxu0 %v2358
    %5572 = vmatprep.subr.bf16.mxu0 %v2372
    %5573 = vmatpush1.bf16.msra.mxu0 %v2371
    %5574 = vmatprep.subr.bf16.mxu0 %v2385
    %5575 = vmatpush1.bf16.msra.mxu0 %v2384
    %5576 = vmatprep.subr.bf16.mxu0 %v2398
    %5577 = vmatpush1.bf16.msra.mxu0 %v2397
    %5578 = vmatprep.subr.bf16.mxu0 %v2411
    %5579 = vmatpush1.bf16.msra.mxu0 %v2410
    %5580 = vmatprep.subr.bf16.mxu0 %v2424
    %5581 = vmatpush1.bf16.msra.mxu0 %v2423
    %5582 = vmatprep.subr.bf16.mxu0 %v2437
    %5583 = vmatpush1.bf16.msra.mxu0 %v2436
    %5584 = vmatprep.subr.bf16.mxu0 %v2450
    %5585 = vmatpush1.bf16.msra.mxu0 %v2449
    %5586 = vmatprep.subr.bf16.mxu0 %v2463
    %5587 = vmatpush1.bf16.msra.mxu0 %v2462
    %5588 = vmatprep.subr.bf16.mxu0 %v2476
    %5589 = vmatpush1.bf16.msra.mxu0 %v2475
    %5590 = vmatprep.subr.bf16.mxu0 %v2489
    %5591 = vmatpush1.bf16.msra.mxu0 %v2488
    %5592 = vmatprep.subr.bf16.mxu0 %v2502
    %5593 = vmatpush1.bf16.msra.mxu0 %v2501
    %5594 = vmatprep.subr.bf16.mxu0 %v2515
    %5595 = vmatpush1.bf16.msra.mxu0 %v2514
    %5596 = vmatprep.mubr.bf16.mxu0 %v5194
    %5597 = vmatmul.mubr.bf16.gmra.mrb[0].mxu0 %v5193
    %v5598 = vpop.f32.mrb[0].mxu0
    %v5599 = vadd.f32 %v5558, %v5598
    %v5600 = vpop.f32.mrb[0].mxu0
    %v5601 = vadd.f32 %v5560, %v5600
    %v5602 = vpop.f32.mrb[0].mxu0
    %v5603 = vpop.f32.mrb[0].mxu0
    %5604 = vdwg.mxu0
    %5605 = vmatprep.subr.bf16.mxu0 %v2114
    %5606 = vmatpush1.bf16.msra.mxu0 %v2113
    %5607 = vmatprep.subr.bf16.mxu0 %v2127
    %5608 = vmatpush1.bf16.msra.mxu0 %v2126
    %5609 = vmatprep.subr.bf16.mxu0 %v2140
    %5610 = vmatpush1.bf16.msra.mxu0 %v2139
    %5611 = vmatprep.subr.bf16.mxu0 %v2153
    %5612 = vmatpush1.bf16.msra.mxu0 %v2152
    %5613 = vmatprep.subr.bf16.mxu0 %v2166
    %5614 = vmatpush1.bf16.msra.mxu0 %v2165
    %5615 = vmatprep.subr.bf16.mxu0 %v2179
    %5616 = vmatpush1.bf16.msra.mxu0 %v2178
    %5617 = vmatprep.subr.bf16.mxu0 %v2192
    %5618 = vmatpush1.bf16.msra.mxu0 %v2191
    %5619 = vmatprep.subr.bf16.mxu0 %v2205
    %5620 = vmatpush1.bf16.msra.mxu0 %v2204
    %5621 = vmatprep.subr.bf16.mxu0 %v2218
    %5622 = vmatpush1.bf16.msra.mxu0 %v2217
    %5623 = vmatprep.subr.bf16.mxu0 %v2231
    %5624 = vmatpush1.bf16.msra.mxu0 %v2230
    %5625 = vmatprep.subr.bf16.mxu0 %v2244
    %5626 = vmatpush1.bf16.msra.mxu0 %v2243
    %5627 = vmatprep.subr.bf16.mxu0 %v2257
    %5628 = vmatpush1.bf16.msra.mxu0 %v2256
    %5629 = vmatprep.subr.bf16.mxu0 %v2270
    %5630 = vmatpush1.bf16.msra.mxu0 %v2269
    %5631 = vmatprep.subr.bf16.mxu0 %v2283
    %5632 = vmatpush1.bf16.msra.mxu0 %v2282
    %5633 = vmatprep.subr.bf16.mxu0 %v2296
    %5634 = vmatpush1.bf16.msra.mxu0 %v2295
    %5635 = vmatprep.subr.bf16.mxu0 %v2309
    %5636 = vmatpush1.bf16.msra.mxu0 %v2308
    %5637 = vmatprep.mubr.bf16.mxu0 %v5192
    %5638 = vmatmul.mubr.bf16.gmra.mrb[0].mxu0 %v5191
    %v5639 = vpop.f32.mrb[0].mxu0
    %v5640 = vadd.f32 0.0, %v5639
    %v5641 = vpop.f32.mrb[0].mxu0
    %v5642 = vadd.f32 0.0, %v5641
    %v5643 = vpop.f32.mrb[0].mxu0
    %v5644 = vpop.f32.mrb[0].mxu0
    %5645 = vdwg.mxu0
    %5646 = vmatprep.subr.bf16.mxu0 %v2322
    %5647 = vmatpush1.bf16.msra.mxu0 %v2321
    %5648 = vmatprep.subr.bf16.mxu0 %v2335
    %5649 = vmatpush1.bf16.msra.mxu0 %v2334
    %5650 = vmatprep.subr.bf16.mxu0 %v2348
    %5651 = vmatpush1.bf16.msra.mxu0 %v2347
    %5652 = vmatprep.subr.bf16.mxu0 %v2361
    %5653 = vmatpush1.bf16.msra.mxu0 %v2360
    %5654 = vmatprep.subr.bf16.mxu0 %v2374
    %5655 = vmatpush1.bf16.msra.mxu0 %v2373
    %5656 = vmatprep.subr.bf16.mxu0 %v2387
    %5657 = vmatpush1.bf16.msra.mxu0 %v2386
    %5658 = vmatprep.subr.bf16.mxu0 %v2400
    %5659 = vmatpush1.bf16.msra.mxu0 %v2399
    %5660 = vmatprep.subr.bf16.mxu0 %v2413
    %5661 = vmatpush1.bf16.msra.mxu0 %v2412
    %5662 = vmatprep.subr.bf16.mxu0 %v2426
    %5663 = vmatpush1.bf16.msra.mxu0 %v2425
    %5664 = vmatprep.subr.bf16.mxu0 %v2439
    %5665 = vmatpush1.bf16.msra.mxu0 %v2438
    %5666 = vmatprep.subr.bf16.mxu0 %v2452
    %5667 = vmatpush1.bf16.msra.mxu0 %v2451
    %5668 = vmatprep.subr.bf16.mxu0 %v2465
    %5669 = vmatpush1.bf16.msra.mxu0 %v2464
    %5670 = vmatprep.subr.bf16.mxu0 %v2478
    %5671 = vmatpush1.bf16.msra.mxu0 %v2477
    %5672 = vmatprep.subr.bf16.mxu0 %v2491
    %5673 = vmatpush1.bf16.msra.mxu0 %v2490
    %5674 = vmatprep.subr.bf16.mxu0 %v2504
    %5675 = vmatpush1.bf16.msra.mxu0 %v2503
    %5676 = vmatprep.subr.bf16.mxu0 %v2517
    %5677 = vmatpush1.bf16.msra.mxu0 %v2516
    %5678 = vmatprep.mubr.bf16.mxu0 %v5194
    %5679 = vmatmul.mubr.bf16.gmra.mrb[0].mxu0 %v5193
    %v5680 = vpop.f32.mrb[0].mxu0
    %v5681 = vadd.f32 %v5640, %v5680
    %v5682 = vpop.f32.mrb[0].mxu0
    %v5683 = vadd.f32 %v5642, %v5682
    %v5684 = vpop.f32.mrb[0].mxu0
    %v5685 = vpop.f32.mrb[0].mxu0
    %5686 = vdwg.mxu0
    %5687 = vmatprep.subr.bf16.mxu0 0
    %5688 = vmatpush1.bf16.msra.mxu0 %v2115
    %5689 = vmatprep.subr.bf16.mxu0 0
    %5690 = vmatpush1.bf16.msra.mxu0 %v2128
    %5691 = vmatprep.subr.bf16.mxu0 0
    %5692 = vmatpush1.bf16.msra.mxu0 %v2141
    %5693 = vmatprep.subr.bf16.mxu0 0
    %5694 = vmatpush1.bf16.msra.mxu0 %v2154
    %5695 = vmatprep.subr.bf16.mxu0 0
    %5696 = vmatpush1.bf16.msra.mxu0 %v2167
    %5697 = vmatprep.subr.bf16.mxu0 0
    %5698 = vmatpush1.bf16.msra.mxu0 %v2180
    %5699 = vmatprep.subr.bf16.mxu0 0
    %5700 = vmatpush1.bf16.msra.mxu0 %v2193
    %5701 = vmatprep.subr.bf16.mxu0 0
    %5702 = vmatpush1.bf16.msra.mxu0 %v2206
    %5703 = vmatprep.subr.bf16.mxu0 0
    %5704 = vmatpush1.bf16.msra.mxu0 %v2219
    %5705 = vmatprep.subr.bf16.mxu0 0
    %5706 = vmatpush1.bf16.msra.mxu0 %v2232
    %5707 = vmatprep.subr.bf16.mxu0 0
    %5708 = vmatpush1.bf16.msra.mxu0 %v2245
    %5709 = vmatprep.subr.bf16.mxu0 0
    %5710 = vmatpush1.bf16.msra.mxu0 %v2258
    %5711 = vmatprep.subr.bf16.mxu0 0
    %5712 = vmatpush1.bf16.msra.mxu0 %v2271
    %5713 = vmatprep.subr.bf16.mxu0 0
    %5714 = vmatpush1.bf16.msra.mxu0 %v2284
    %5715 = vmatprep.subr.bf16.mxu0 0
    %5716 = vmatpush1.bf16.msra.mxu0 %v2297
    %5717 = vmatprep.subr.bf16.mxu0 0
    %5718 = vmatpush1.bf16.msra.mxu0 %v2310
    %5719 = vmatprep.mubr.bf16.mxu0 %v5192
    %5720 = vmatmul.mubr.bf16.gmra.mrb[0].mxu0 %v5191
    %v5721 = vpop.f32.mrb[0].mxu0
    %v5722 = vadd.f32 0.0, %v5721
    %v5723 = vpop.f32.mrb[0].mxu0
    %v5724 = vpop.f32.mrb[0].mxu0
    %v5725 = vpop.f32.mrb[0].mxu0
    %5726 = vdwg.mxu0
    %5727 = vmatprep.subr.bf16.mxu0 0
    %5728 = vmatpush1.bf16.msra.mxu0 %v2323
    %5729 = vmatprep.subr.bf16.mxu0 0
    %5730 = vmatpush1.bf16.msra.mxu0 %v2336
    %5731 = vmatprep.subr.bf16.mxu0 0
    %5732 = vmatpush1.bf16.msra.mxu0 %v2349
    %5733 = vmatprep.subr.bf16.mxu0 0
    %5734 = vmatpush1.bf16.msra.mxu0 %v2362
    %5735 = vmatprep.subr.bf16.mxu0 0
    %5736 = vmatpush1.bf16.msra.mxu0 %v2375
    %5737 = vmatprep.subr.bf16.mxu0 0
    %5738 = vmatpush1.bf16.msra.mxu0 %v2388
    %5739 = vmatprep.subr.bf16.mxu0 0
    %5740 = vmatpush1.bf16.msra.mxu0 %v2401
    %5741 = vmatprep.subr.bf16.mxu0 0
    %5742 = vmatpush1.bf16.msra.mxu0 %v2414
    %5743 = vmatprep.subr.bf16.mxu0 0
    %5744 = vmatpush1.bf16.msra.mxu0 %v2427
    %5745 = vmatprep.subr.bf16.mxu0 0
    %5746 = vmatpush1.bf16.msra.mxu0 %v2440
    %5747 = vmatprep.subr.bf16.mxu0 0
    %5748 = vmatpush1.bf16.msra.mxu0 %v2453
    %5749 = vmatprep.subr.bf16.mxu0 0
    %5750 = vmatpush1.bf16.msra.mxu0 %v2466
    %5751 = vmatprep.subr.bf16.mxu0 0
    %5752 = vmatpush1.bf16.msra.mxu0 %v2479
    %5753 = vmatprep.subr.bf16.mxu0 0
    %5754 = vmatpush1.bf16.msra.mxu0 %v2492
    %5755 = vmatprep.subr.bf16.mxu0 0
    %5756 = vmatpush1.bf16.msra.mxu0 %v2505
    %5757 = vmatprep.subr.bf16.mxu0 0
    %5758 = vmatpush1.bf16.msra.mxu0 %v2518
    %5759 = vmatprep.mubr.bf16.mxu0 %v5194
    %5760 = vmatmul.mubr.bf16.gmra.mrb[0].mxu0 %v5193
    %v5761 = vpop.f32.mrb[0].mxu0
    %v5762 = vadd.f32 %v5722, %v5761
    %v5763 = vpop.f32.mrb[0].mxu0
    %v5764 = vpop.f32.mrb[0].mxu0
    %v5765 = vpop.f32.mrb[0].mxu0
    %5766 = vdwg.mxu0
    %v5767 = vld [vmem:[%s2066] sm:$0xff]
    %v5768 = vld [vmem:[%s2066 + $0x8] sm:$0xff]
    %v5769 = vld [vmem:[%s2066 + $0x10] sm:$0xff]
    %v5770 = vld [vmem:[%s2066 + $0x18] sm:$0xff]
    %v5771 = vld [vmem:[%s2066 + $0x20] sm:$0xff]
    %v5772 = vld [vmem:[%s2066 + $0x28] sm:$0xff]
    %v5773 = vld [vmem:[%s2066 + $0x30] sm:$0xff]
    %v5774 = vld [vmem:[%s2066 + $0x38] sm:$0xff]
    %v5775 = vld [vmem:[%s2066 + $0x40] sm:$0xff]
    %v5776 = vld [vmem:[%s2066 + $0x48] sm:$0xff]
    %v5777 = vld [vmem:[%s2066 + $0x50] sm:$0xff]
    %v5778 = vld [vmem:[%s2066 + $0x58] sm:$0xff]
    %v5779 = vld [vmem:[%s2066 + $0x60] sm:$0xff]
    %v5780 = vadd.f32 %v5767, %v5271
    %v5781 = vadd.f32 %v5768, %v5273
    %v5782 = vadd.f32 %v5769, %v5353
    %v5783 = vmul.f32 %v5780, 0.5
    %v5784 = vmul.f32 %v5781, 0.5
    %v5785 = vmul.f32 %v5782, 0.5
    %v5786 = vtanh.pop %v5783
    %v5787 = vtanh.pop %v5784
    %v5788 = vtanh.pop %v5785
    %v5789 = vmul.f32 %v5786, 0.5
    %v5790 = vmul.f32 %v5787, 0.5
    %v5791 = vmul.f32 %v5788, 0.5
    %v5792 = vadd.f32 %v5789, 0.5
    %v5793 = vadd.f32 %v5790, 0.5
    %v5794 = vadd.f32 %v5791, 0.5
    %v5795 = vadd.f32 %v5770, %v5355
    %v5796 = vadd.f32 %v5771, %v5435
    %v5797 = vadd.f32 %v5772, %v5437
    %v5798 = vmul.f32 %v5795, 0.5
    %v5799 = vmul.f32 %v5796, 0.5
    %v5800 = vmul.f32 %v5797, 0.5
    %v5801 = vtanh.pop %v5798
    %v5802 = vtanh.pop %v5799
    %v5803 = vtanh.pop %v5800
    %v5804 = vmul.f32 %v5801, 0.5
    %v5805 = vmul.f32 %v5802, 0.5
    %v5806 = vmul.f32 %v5803, 0.5
    %v5807 = vadd.f32 %v5804, 0.5
    %v5808 = vadd.f32 %v5805, 0.5
    %v5809 = vadd.f32 %v5806, 0.5
    %v5810 = vadd.f32 %v5517, %v3138
    %v5811 = vadd.f32 %v5519, %v3142
    %v5812 = vadd.f32 %v5599, %v3146
    %v5813 = vmul.f32 %v5792, %v5810
    %v5814 = vmul.f32 %v5793, %v5811
    %v5815 = vmul.f32 %v5794, %v5812
    %v5816 = vadd.f32 %v5773, %v5813
    %v5817 = vadd.f32 %v5774, %v5814
    %v5818 = vadd.f32 %v5775, %v5815
    %v5819 = vtanh.pop %v5816
    %v5820 = vtanh.pop %v5817
    %v5821 = vtanh.pop %v5818
    %v5822 = vsub.f32 %v5162, %v5819
    %v5823 = vsub.f32 %v5163, %v5820
    %v5824 = vsub.f32 %v5164, %v5821
    %v5825 = vmul.f32 %v5807, %v5822
    %v5826 = vmul.f32 %v5808, %v5823
    %v5827 = vmul.f32 %v5809, %v5824
    %v5828 = vadd.f32 %v5819, %v5825
    %v5829 = vadd.f32 %v5820, %v5826
    %v5830 = vadd.f32 %v5821, %v5827
    %v5831 = vadd.f32 %v5776, %v5601
    %v5832 = vadd.f32 %v5777, %v5681
    %v5833 = vadd.f32 %v5778, %v5683
    %v5834 = vadd.f32 %v5779, %v5762
    %v5835 = vmul.f32 %v5831, 0.5
    %v5836 = vtanh.pop %v5835
    %v5837 = vmul.f32 %v5836, 0.5
    %v5838 = vadd.f32 %v5837, 0.5
    %v5839 = vmul.f32 %v5832, 0.5
    %v5840 = vtanh.pop %v5839
    %v5841 = vmul.f32 %v5840, 0.5
    %v5842 = vadd.f32 %v5841, 0.5
    %v5843 = vtanh.pop %v5833
    %v5844 = vmul.f32 %v5834, 0.5
    %v5845 = vtanh.pop %v5844
    %v5846 = vmul.f32 %v5845, 0.5
    %v5847 = vadd.f32 %v5846, 0.5
    %v5848 = vmul.f32 %v5842, %v5184
    %v5849 = vmul.f32 %v5838, %v5843
    %v5850 = vadd.f32 %v5848, %v5849
    %v5851 = vtanh.pop %v5850
    %v5852 = vmul.f32 %v5847, %v5851
    %v5853 = vmax.f32 %v5187, %v5828
    %v5854 = vmax.f32 %v5188, %v5829
    %v5855 = vmax.f32 %v5189, %v5830
    %v5856 = vmax.f32 %v5190, %v5852
    %v5857 = vpack.c.bf16 %v5828, %v5828
    %v5858 = vpack.c.bf16 %v5829, %v5829
    %v5859 = vpack.c.bf16 %v5830, %v5830
    %v5860 = vpack.c.bf16 %v5852, %v5852
    %5861 = vmatprep.subr.bf16.mxu0 %v2104
    %5862 = vmatpush1.bf16.msra.mxu0 %v2103
    %5863 = vmatprep.subr.bf16.mxu0 %v2117
    %5864 = vmatpush1.bf16.msra.mxu0 %v2116
    %5865 = vmatprep.subr.bf16.mxu0 %v2130
    %5866 = vmatpush1.bf16.msra.mxu0 %v2129
    %5867 = vmatprep.subr.bf16.mxu0 %v2143
    %5868 = vmatpush1.bf16.msra.mxu0 %v2142
    %5869 = vmatprep.subr.bf16.mxu0 %v2156
    %5870 = vmatpush1.bf16.msra.mxu0 %v2155
    %5871 = vmatprep.subr.bf16.mxu0 %v2169
    %5872 = vmatpush1.bf16.msra.mxu0 %v2168
    %5873 = vmatprep.subr.bf16.mxu0 %v2182
    %5874 = vmatpush1.bf16.msra.mxu0 %v2181
    %5875 = vmatprep.subr.bf16.mxu0 %v2195
    %5876 = vmatpush1.bf16.msra.mxu0 %v2194
    %5877 = vmatprep.subr.bf16.mxu0 %v2208
    %5878 = vmatpush1.bf16.msra.mxu0 %v2207
    %5879 = vmatprep.subr.bf16.mxu0 %v2221
    %5880 = vmatpush1.bf16.msra.mxu0 %v2220
    %5881 = vmatprep.subr.bf16.mxu0 %v2234
    %5882 = vmatpush1.bf16.msra.mxu0 %v2233
    %5883 = vmatprep.subr.bf16.mxu0 %v2247
    %5884 = vmatpush1.bf16.msra.mxu0 %v2246
    %5885 = vmatprep.subr.bf16.mxu0 %v2260
    %5886 = vmatpush1.bf16.msra.mxu0 %v2259
    %5887 = vmatprep.subr.bf16.mxu0 %v2273
    %5888 = vmatpush1.bf16.msra.mxu0 %v2272
    %5889 = vmatprep.subr.bf16.mxu0 %v2286
    %5890 = vmatpush1.bf16.msra.mxu0 %v2285
    %5891 = vmatprep.subr.bf16.mxu0 %v2299
    %5892 = vmatpush1.bf16.msra.mxu0 %v2298
    %5893 = vmatprep.mubr.bf16.mxu0 %v5858
    %5894 = vmatmul.mubr.bf16.gmra.mrb[0].mxu0 %v5857
    %v5895 = vpop.f32.mrb[0].mxu0
    %v5896 = vadd.f32 0.0, %v5895
    %v5897 = vpop.f32.mrb[0].mxu0
    %v5898 = vadd.f32 0.0, %v5897
    %v5899 = vpop.f32.mrb[0].mxu0
    %v5900 = vpop.f32.mrb[0].mxu0
    %5901 = vdwg.mxu0
    %5902 = vmatprep.subr.bf16.mxu0 %v2312
    %5903 = vmatpush1.bf16.msra.mxu0 %v2311
    %5904 = vmatprep.subr.bf16.mxu0 %v2325
    %5905 = vmatpush1.bf16.msra.mxu0 %v2324
    %5906 = vmatprep.subr.bf16.mxu0 %v2338
    %5907 = vmatpush1.bf16.msra.mxu0 %v2337
    %5908 = vmatprep.subr.bf16.mxu0 %v2351
    %5909 = vmatpush1.bf16.msra.mxu0 %v2350
    %5910 = vmatprep.subr.bf16.mxu0 %v2364
    %5911 = vmatpush1.bf16.msra.mxu0 %v2363
    %5912 = vmatprep.subr.bf16.mxu0 %v2377
    %5913 = vmatpush1.bf16.msra.mxu0 %v2376
    %5914 = vmatprep.subr.bf16.mxu0 %v2390
    %5915 = vmatpush1.bf16.msra.mxu0 %v2389
    %5916 = vmatprep.subr.bf16.mxu0 %v2403
    %5917 = vmatpush1.bf16.msra.mxu0 %v2402
    %5918 = vmatprep.subr.bf16.mxu0 %v2416
    %5919 = vmatpush1.bf16.msra.mxu0 %v2415
    %5920 = vmatprep.subr.bf16.mxu0 %v2429
    %5921 = vmatpush1.bf16.msra.mxu0 %v2428
    %5922 = vmatprep.subr.bf16.mxu0 %v2442
    %5923 = vmatpush1.bf16.msra.mxu0 %v2441
    %5924 = vmatprep.subr.bf16.mxu0 %v2455
    %5925 = vmatpush1.bf16.msra.mxu0 %v2454
    %5926 = vmatprep.subr.bf16.mxu0 %v2468
    %5927 = vmatpush1.bf16.msra.mxu0 %v2467
    %5928 = vmatprep.subr.bf16.mxu0 %v2481
    %5929 = vmatpush1.bf16.msra.mxu0 %v2480
    %5930 = vmatprep.subr.bf16.mxu0 %v2494
    %5931 = vmatpush1.bf16.msra.mxu0 %v2493
    %5932 = vmatprep.subr.bf16.mxu0 %v2507
    %5933 = vmatpush1.bf16.msra.mxu0 %v2506
    %5934 = vmatprep.mubr.bf16.mxu0 %v5860
    %5935 = vmatmul.mubr.bf16.gmra.mrb[0].mxu0 %v5859
    %v5936 = vpop.f32.mrb[0].mxu0
    %v5937 = vadd.f32 %v5896, %v5936
    %v5938 = vpop.f32.mrb[0].mxu0
    %v5939 = vadd.f32 %v5898, %v5938
    %v5940 = vpop.f32.mrb[0].mxu0
    %v5941 = vpop.f32.mrb[0].mxu0
    %5942 = vdwg.mxu0
    %5943 = vmatprep.subr.bf16.mxu0 %v2106
    %5944 = vmatpush1.bf16.msra.mxu0 %v2105
    %5945 = vmatprep.subr.bf16.mxu0 %v2119
    %5946 = vmatpush1.bf16.msra.mxu0 %v2118
    %5947 = vmatprep.subr.bf16.mxu0 %v2132
    %5948 = vmatpush1.bf16.msra.mxu0 %v2131
    %5949 = vmatprep.subr.bf16.mxu0 %v2145
    %5950 = vmatpush1.bf16.msra.mxu0 %v2144
    %5951 = vmatprep.subr.bf16.mxu0 %v2158
    %5952 = vmatpush1.bf16.msra.mxu0 %v2157
    %5953 = vmatprep.subr.bf16.mxu0 %v2171
    %5954 = vmatpush1.bf16.msra.mxu0 %v2170
    %5955 = vmatprep.subr.bf16.mxu0 %v2184
    %5956 = vmatpush1.bf16.msra.mxu0 %v2183
    %5957 = vmatprep.subr.bf16.mxu0 %v2197
    %5958 = vmatpush1.bf16.msra.mxu0 %v2196
    %5959 = vmatprep.subr.bf16.mxu0 %v2210
    %5960 = vmatpush1.bf16.msra.mxu0 %v2209
    %5961 = vmatprep.subr.bf16.mxu0 %v2223
    %5962 = vmatpush1.bf16.msra.mxu0 %v2222
    %5963 = vmatprep.subr.bf16.mxu0 %v2236
    %5964 = vmatpush1.bf16.msra.mxu0 %v2235
    %5965 = vmatprep.subr.bf16.mxu0 %v2249
    %5966 = vmatpush1.bf16.msra.mxu0 %v2248
    %5967 = vmatprep.subr.bf16.mxu0 %v2262
    %5968 = vmatpush1.bf16.msra.mxu0 %v2261
    %5969 = vmatprep.subr.bf16.mxu0 %v2275
    %5970 = vmatpush1.bf16.msra.mxu0 %v2274
    %5971 = vmatprep.subr.bf16.mxu0 %v2288
    %5972 = vmatpush1.bf16.msra.mxu0 %v2287
    %5973 = vmatprep.subr.bf16.mxu0 %v2301
    %5974 = vmatpush1.bf16.msra.mxu0 %v2300
    %5975 = vmatprep.mubr.bf16.mxu0 %v5858
    %5976 = vmatmul.mubr.bf16.gmra.mrb[0].mxu0 %v5857
    %v5977 = vpop.f32.mrb[0].mxu0
    %v5978 = vadd.f32 0.0, %v5977
    %v5979 = vpop.f32.mrb[0].mxu0
    %v5980 = vadd.f32 0.0, %v5979
    %v5981 = vpop.f32.mrb[0].mxu0
    %v5982 = vpop.f32.mrb[0].mxu0
    %5983 = vdwg.mxu0
    %5984 = vmatprep.subr.bf16.mxu0 %v2314
    %5985 = vmatpush1.bf16.msra.mxu0 %v2313
    %5986 = vmatprep.subr.bf16.mxu0 %v2327
    %5987 = vmatpush1.bf16.msra.mxu0 %v2326
    %5988 = vmatprep.subr.bf16.mxu0 %v2340
    %5989 = vmatpush1.bf16.msra.mxu0 %v2339
    %5990 = vmatprep.subr.bf16.mxu0 %v2353
    %5991 = vmatpush1.bf16.msra.mxu0 %v2352
    %5992 = vmatprep.subr.bf16.mxu0 %v2366
    %5993 = vmatpush1.bf16.msra.mxu0 %v2365
    %5994 = vmatprep.subr.bf16.mxu0 %v2379
    %5995 = vmatpush1.bf16.msra.mxu0 %v2378
    %5996 = vmatprep.subr.bf16.mxu0 %v2392
    %5997 = vmatpush1.bf16.msra.mxu0 %v2391
    %5998 = vmatprep.subr.bf16.mxu0 %v2405
    %5999 = vmatpush1.bf16.msra.mxu0 %v2404
    %6000 = vmatprep.subr.bf16.mxu0 %v2418
    %6001 = vmatpush1.bf16.msra.mxu0 %v2417
    %6002 = vmatprep.subr.bf16.mxu0 %v2431
    %6003 = vmatpush1.bf16.msra.mxu0 %v2430
    %6004 = vmatprep.subr.bf16.mxu0 %v2444
    %6005 = vmatpush1.bf16.msra.mxu0 %v2443
    %6006 = vmatprep.subr.bf16.mxu0 %v2457
    %6007 = vmatpush1.bf16.msra.mxu0 %v2456
    %6008 = vmatprep.subr.bf16.mxu0 %v2470
    %6009 = vmatpush1.bf16.msra.mxu0 %v2469
    %6010 = vmatprep.subr.bf16.mxu0 %v2483
    %6011 = vmatpush1.bf16.msra.mxu0 %v2482
    %6012 = vmatprep.subr.bf16.mxu0 %v2496
    %6013 = vmatpush1.bf16.msra.mxu0 %v2495
    %6014 = vmatprep.subr.bf16.mxu0 %v2509
    %6015 = vmatpush1.bf16.msra.mxu0 %v2508
    %6016 = vmatprep.mubr.bf16.mxu0 %v5860
    %6017 = vmatmul.mubr.bf16.gmra.mrb[0].mxu0 %v5859
    %v6018 = vpop.f32.mrb[0].mxu0
    %v6019 = vadd.f32 %v5978, %v6018
    %v6020 = vpop.f32.mrb[0].mxu0
    %v6021 = vadd.f32 %v5980, %v6020
    %v6022 = vpop.f32.mrb[0].mxu0
    %v6023 = vpop.f32.mrb[0].mxu0
    %6024 = vdwg.mxu0
    %6025 = vmatprep.subr.bf16.mxu0 %v2108
    %6026 = vmatpush1.bf16.msra.mxu0 %v2107
    %6027 = vmatprep.subr.bf16.mxu0 %v2121
    %6028 = vmatpush1.bf16.msra.mxu0 %v2120
    %6029 = vmatprep.subr.bf16.mxu0 %v2134
    %6030 = vmatpush1.bf16.msra.mxu0 %v2133
    %6031 = vmatprep.subr.bf16.mxu0 %v2147
    %6032 = vmatpush1.bf16.msra.mxu0 %v2146
    %6033 = vmatprep.subr.bf16.mxu0 %v2160
    %6034 = vmatpush1.bf16.msra.mxu0 %v2159
    %6035 = vmatprep.subr.bf16.mxu0 %v2173
    %6036 = vmatpush1.bf16.msra.mxu0 %v2172
    %6037 = vmatprep.subr.bf16.mxu0 %v2186
    %6038 = vmatpush1.bf16.msra.mxu0 %v2185
    %6039 = vmatprep.subr.bf16.mxu0 %v2199
    %6040 = vmatpush1.bf16.msra.mxu0 %v2198
    %6041 = vmatprep.subr.bf16.mxu0 %v2212
    %6042 = vmatpush1.bf16.msra.mxu0 %v2211
    %6043 = vmatprep.subr.bf16.mxu0 %v2225
    %6044 = vmatpush1.bf16.msra.mxu0 %v2224
    %6045 = vmatprep.subr.bf16.mxu0 %v2238
    %6046 = vmatpush1.bf16.msra.mxu0 %v2237
    %6047 = vmatprep.subr.bf16.mxu0 %v2251
    %6048 = vmatpush1.bf16.msra.mxu0 %v2250
    %6049 = vmatprep.subr.bf16.mxu0 %v2264
    %6050 = vmatpush1.bf16.msra.mxu0 %v2263
    %6051 = vmatprep.subr.bf16.mxu0 %v2277
    %6052 = vmatpush1.bf16.msra.mxu0 %v2276
    %6053 = vmatprep.subr.bf16.mxu0 %v2290
    %6054 = vmatpush1.bf16.msra.mxu0 %v2289
    %6055 = vmatprep.subr.bf16.mxu0 %v2303
    %6056 = vmatpush1.bf16.msra.mxu0 %v2302
    %6057 = vmatprep.mubr.bf16.mxu0 %v5858
    %6058 = vmatmul.mubr.bf16.gmra.mrb[0].mxu0 %v5857
    %v6059 = vpop.f32.mrb[0].mxu0
    %v6060 = vadd.f32 0.0, %v6059
    %v6061 = vpop.f32.mrb[0].mxu0
    %v6062 = vadd.f32 0.0, %v6061
    %v6063 = vpop.f32.mrb[0].mxu0
    %v6064 = vpop.f32.mrb[0].mxu0
    %6065 = vdwg.mxu0
    %6066 = vmatprep.subr.bf16.mxu0 %v2316
    %6067 = vmatpush1.bf16.msra.mxu0 %v2315
    %6068 = vmatprep.subr.bf16.mxu0 %v2329
    %6069 = vmatpush1.bf16.msra.mxu0 %v2328
    %6070 = vmatprep.subr.bf16.mxu0 %v2342
    %6071 = vmatpush1.bf16.msra.mxu0 %v2341
    %6072 = vmatprep.subr.bf16.mxu0 %v2355
    %6073 = vmatpush1.bf16.msra.mxu0 %v2354
    %6074 = vmatprep.subr.bf16.mxu0 %v2368
    %6075 = vmatpush1.bf16.msra.mxu0 %v2367
    %6076 = vmatprep.subr.bf16.mxu0 %v2381
    %6077 = vmatpush1.bf16.msra.mxu0 %v2380
    %6078 = vmatprep.subr.bf16.mxu0 %v2394
    %6079 = vmatpush1.bf16.msra.mxu0 %v2393
    %6080 = vmatprep.subr.bf16.mxu0 %v2407
    %6081 = vmatpush1.bf16.msra.mxu0 %v2406
    %6082 = vmatprep.subr.bf16.mxu0 %v2420
    %6083 = vmatpush1.bf16.msra.mxu0 %v2419
    %6084 = vmatprep.subr.bf16.mxu0 %v2433
    %6085 = vmatpush1.bf16.msra.mxu0 %v2432
    %6086 = vmatprep.subr.bf16.mxu0 %v2446
    %6087 = vmatpush1.bf16.msra.mxu0 %v2445
    %6088 = vmatprep.subr.bf16.mxu0 %v2459
    %6089 = vmatpush1.bf16.msra.mxu0 %v2458
    %6090 = vmatprep.subr.bf16.mxu0 %v2472
    %6091 = vmatpush1.bf16.msra.mxu0 %v2471
    %6092 = vmatprep.subr.bf16.mxu0 %v2485
    %6093 = vmatpush1.bf16.msra.mxu0 %v2484
    %6094 = vmatprep.subr.bf16.mxu0 %v2498
    %6095 = vmatpush1.bf16.msra.mxu0 %v2497
    %6096 = vmatprep.subr.bf16.mxu0 %v2511
    %6097 = vmatpush1.bf16.msra.mxu0 %v2510
    %6098 = vmatprep.mubr.bf16.mxu0 %v5860
    %6099 = vmatmul.mubr.bf16.gmra.mrb[0].mxu0 %v5859
    %v6100 = vpop.f32.mrb[0].mxu0
    %v6101 = vadd.f32 %v6060, %v6100
    %v6102 = vpop.f32.mrb[0].mxu0
    %v6103 = vadd.f32 %v6062, %v6102
    %v6104 = vpop.f32.mrb[0].mxu0
    %v6105 = vpop.f32.mrb[0].mxu0
    %6106 = vdwg.mxu0
    %6107 = vmatprep.subr.bf16.mxu0 %v2110
    %6108 = vmatpush1.bf16.msra.mxu0 %v2109
    %6109 = vmatprep.subr.bf16.mxu0 %v2123
    %6110 = vmatpush1.bf16.msra.mxu0 %v2122
    %6111 = vmatprep.subr.bf16.mxu0 %v2136
    %6112 = vmatpush1.bf16.msra.mxu0 %v2135
    %6113 = vmatprep.subr.bf16.mxu0 %v2149
    %6114 = vmatpush1.bf16.msra.mxu0 %v2148
    %6115 = vmatprep.subr.bf16.mxu0 %v2162
    %6116 = vmatpush1.bf16.msra.mxu0 %v2161
    %6117 = vmatprep.subr.bf16.mxu0 %v2175
    %6118 = vmatpush1.bf16.msra.mxu0 %v2174
    %6119 = vmatprep.subr.bf16.mxu0 %v2188
    %6120 = vmatpush1.bf16.msra.mxu0 %v2187
    %6121 = vmatprep.subr.bf16.mxu0 %v2201
    %6122 = vmatpush1.bf16.msra.mxu0 %v2200
    %6123 = vmatprep.subr.bf16.mxu0 %v2214
    %6124 = vmatpush1.bf16.msra.mxu0 %v2213
    %6125 = vmatprep.subr.bf16.mxu0 %v2227
    %6126 = vmatpush1.bf16.msra.mxu0 %v2226
    %6127 = vmatprep.subr.bf16.mxu0 %v2240
    %6128 = vmatpush1.bf16.msra.mxu0 %v2239
    %6129 = vmatprep.subr.bf16.mxu0 %v2253
    %6130 = vmatpush1.bf16.msra.mxu0 %v2252
    %6131 = vmatprep.subr.bf16.mxu0 %v2266
    %6132 = vmatpush1.bf16.msra.mxu0 %v2265
    %6133 = vmatprep.subr.bf16.mxu0 %v2279
    %6134 = vmatpush1.bf16.msra.mxu0 %v2278
    %6135 = vmatprep.subr.bf16.mxu0 %v2292
    %6136 = vmatpush1.bf16.msra.mxu0 %v2291
    %6137 = vmatprep.subr.bf16.mxu0 %v2305
    %6138 = vmatpush1.bf16.msra.mxu0 %v2304
    %6139 = vmatprep.mubr.bf16.mxu0 %v5858
    %6140 = vmatmul.mubr.bf16.gmra.mrb[0].mxu0 %v5857
    %v6141 = vpop.f32.mrb[0].mxu0
    %v6142 = vadd.f32 0.0, %v6141
    %v6143 = vpop.f32.mrb[0].mxu0
    %v6144 = vadd.f32 0.0, %v6143
    %v6145 = vpop.f32.mrb[0].mxu0
    %v6146 = vpop.f32.mrb[0].mxu0
    %6147 = vdwg.mxu0
    %6148 = vmatprep.subr.bf16.mxu0 %v2318
    %6149 = vmatpush1.bf16.msra.mxu0 %v2317
    %6150 = vmatprep.subr.bf16.mxu0 %v2331
    %6151 = vmatpush1.bf16.msra.mxu0 %v2330
    %6152 = vmatprep.subr.bf16.mxu0 %v2344
    %6153 = vmatpush1.bf16.msra.mxu0 %v2343
    %6154 = vmatprep.subr.bf16.mxu0 %v2357
    %6155 = vmatpush1.bf16.msra.mxu0 %v2356
    %6156 = vmatprep.subr.bf16.mxu0 %v2370
    %6157 = vmatpush1.bf16.msra.mxu0 %v2369
    %6158 = vmatprep.subr.bf16.mxu0 %v2383
    %6159 = vmatpush1.bf16.msra.mxu0 %v2382
    %6160 = vmatprep.subr.bf16.mxu0 %v2396
    %6161 = vmatpush1.bf16.msra.mxu0 %v2395
    %6162 = vmatprep.subr.bf16.mxu0 %v2409
    %6163 = vmatpush1.bf16.msra.mxu0 %v2408
    %6164 = vmatprep.subr.bf16.mxu0 %v2422
    %6165 = vmatpush1.bf16.msra.mxu0 %v2421
    %6166 = vmatprep.subr.bf16.mxu0 %v2435
    %6167 = vmatpush1.bf16.msra.mxu0 %v2434
    %6168 = vmatprep.subr.bf16.mxu0 %v2448
    %6169 = vmatpush1.bf16.msra.mxu0 %v2447
    %6170 = vmatprep.subr.bf16.mxu0 %v2461
    %6171 = vmatpush1.bf16.msra.mxu0 %v2460
    %6172 = vmatprep.subr.bf16.mxu0 %v2474
    %6173 = vmatpush1.bf16.msra.mxu0 %v2473
    %6174 = vmatprep.subr.bf16.mxu0 %v2487
    %6175 = vmatpush1.bf16.msra.mxu0 %v2486
    %6176 = vmatprep.subr.bf16.mxu0 %v2500
    %6177 = vmatpush1.bf16.msra.mxu0 %v2499
    %6178 = vmatprep.subr.bf16.mxu0 %v2513
    %6179 = vmatpush1.bf16.msra.mxu0 %v2512
    %6180 = vmatprep.mubr.bf16.mxu0 %v5860
    %6181 = vmatmul.mubr.bf16.gmra.mrb[0].mxu0 %v5859
    %v6182 = vpop.f32.mrb[0].mxu0
    %v6183 = vadd.f32 %v6142, %v6182
    %v6184 = vpop.f32.mrb[0].mxu0
    %v6185 = vadd.f32 %v6144, %v6184
    %v6186 = vpop.f32.mrb[0].mxu0
    %v6187 = vpop.f32.mrb[0].mxu0
    %6188 = vdwg.mxu0
    %6189 = vmatprep.subr.bf16.mxu0 %v2112
    %6190 = vmatpush1.bf16.msra.mxu0 %v2111
    %6191 = vmatprep.subr.bf16.mxu0 %v2125
    %6192 = vmatpush1.bf16.msra.mxu0 %v2124
    %6193 = vmatprep.subr.bf16.mxu0 %v2138
    %6194 = vmatpush1.bf16.msra.mxu0 %v2137
    %6195 = vmatprep.subr.bf16.mxu0 %v2151
    %6196 = vmatpush1.bf16.msra.mxu0 %v2150
    %6197 = vmatprep.subr.bf16.mxu0 %v2164
    %6198 = vmatpush1.bf16.msra.mxu0 %v2163
    %6199 = vmatprep.subr.bf16.mxu0 %v2177
    %6200 = vmatpush1.bf16.msra.mxu0 %v2176
    %6201 = vmatprep.subr.bf16.mxu0 %v2190
    %6202 = vmatpush1.bf16.msra.mxu0 %v2189
    %6203 = vmatprep.subr.bf16.mxu0 %v2203
    %6204 = vmatpush1.bf16.msra.mxu0 %v2202
    %6205 = vmatprep.subr.bf16.mxu0 %v2216
    %6206 = vmatpush1.bf16.msra.mxu0 %v2215
    %6207 = vmatprep.subr.bf16.mxu0 %v2229
    %6208 = vmatpush1.bf16.msra.mxu0 %v2228
    %6209 = vmatprep.subr.bf16.mxu0 %v2242
    %6210 = vmatpush1.bf16.msra.mxu0 %v2241
    %6211 = vmatprep.subr.bf16.mxu0 %v2255
    %6212 = vmatpush1.bf16.msra.mxu0 %v2254
    %6213 = vmatprep.subr.bf16.mxu0 %v2268
    %6214 = vmatpush1.bf16.msra.mxu0 %v2267
    %6215 = vmatprep.subr.bf16.mxu0 %v2281
    %6216 = vmatpush1.bf16.msra.mxu0 %v2280
    %6217 = vmatprep.subr.bf16.mxu0 %v2294
    %6218 = vmatpush1.bf16.msra.mxu0 %v2293
    %6219 = vmatprep.subr.bf16.mxu0 %v2307
    %6220 = vmatpush1.bf16.msra.mxu0 %v2306
    %6221 = vmatprep.mubr.bf16.mxu0 %v5858
    %6222 = vmatmul.mubr.bf16.gmra.mrb[0].mxu0 %v5857
    %v6223 = vpop.f32.mrb[0].mxu0
    %v6224 = vadd.f32 0.0, %v6223
    %v6225 = vpop.f32.mrb[0].mxu0
    %v6226 = vadd.f32 0.0, %v6225
    %v6227 = vpop.f32.mrb[0].mxu0
    %v6228 = vpop.f32.mrb[0].mxu0
    %6229 = vdwg.mxu0
    %6230 = vmatprep.subr.bf16.mxu0 %v2320
    %6231 = vmatpush1.bf16.msra.mxu0 %v2319
    %6232 = vmatprep.subr.bf16.mxu0 %v2333
    %6233 = vmatpush1.bf16.msra.mxu0 %v2332
    %6234 = vmatprep.subr.bf16.mxu0 %v2346
    %6235 = vmatpush1.bf16.msra.mxu0 %v2345
    %6236 = vmatprep.subr.bf16.mxu0 %v2359
    %6237 = vmatpush1.bf16.msra.mxu0 %v2358
    %6238 = vmatprep.subr.bf16.mxu0 %v2372
    %6239 = vmatpush1.bf16.msra.mxu0 %v2371
    %6240 = vmatprep.subr.bf16.mxu0 %v2385
    %6241 = vmatpush1.bf16.msra.mxu0 %v2384
    %6242 = vmatprep.subr.bf16.mxu0 %v2398
    %6243 = vmatpush1.bf16.msra.mxu0 %v2397
    %6244 = vmatprep.subr.bf16.mxu0 %v2411
    %6245 = vmatpush1.bf16.msra.mxu0 %v2410
    %6246 = vmatprep.subr.bf16.mxu0 %v2424
    %6247 = vmatpush1.bf16.msra.mxu0 %v2423
    %6248 = vmatprep.subr.bf16.mxu0 %v2437
    %6249 = vmatpush1.bf16.msra.mxu0 %v2436
    %6250 = vmatprep.subr.bf16.mxu0 %v2450
    %6251 = vmatpush1.bf16.msra.mxu0 %v2449
    %6252 = vmatprep.subr.bf16.mxu0 %v2463
    %6253 = vmatpush1.bf16.msra.mxu0 %v2462
    %6254 = vmatprep.subr.bf16.mxu0 %v2476
    %6255 = vmatpush1.bf16.msra.mxu0 %v2475
    %6256 = vmatprep.subr.bf16.mxu0 %v2489
    %6257 = vmatpush1.bf16.msra.mxu0 %v2488
    %6258 = vmatprep.subr.bf16.mxu0 %v2502
    %6259 = vmatpush1.bf16.msra.mxu0 %v2501
    %6260 = vmatprep.subr.bf16.mxu0 %v2515
    %6261 = vmatpush1.bf16.msra.mxu0 %v2514
    %6262 = vmatprep.mubr.bf16.mxu0 %v5860
    %6263 = vmatmul.mubr.bf16.gmra.mrb[0].mxu0 %v5859
    %v6264 = vpop.f32.mrb[0].mxu0
    %v6265 = vadd.f32 %v6224, %v6264
    %v6266 = vpop.f32.mrb[0].mxu0
    %v6267 = vadd.f32 %v6226, %v6266
    %v6268 = vpop.f32.mrb[0].mxu0
    %v6269 = vpop.f32.mrb[0].mxu0
    %6270 = vdwg.mxu0
    %6271 = vmatprep.subr.bf16.mxu0 %v2114
    %6272 = vmatpush1.bf16.msra.mxu0 %v2113
    %6273 = vmatprep.subr.bf16.mxu0 %v2127
    %6274 = vmatpush1.bf16.msra.mxu0 %v2126
    %6275 = vmatprep.subr.bf16.mxu0 %v2140
    %6276 = vmatpush1.bf16.msra.mxu0 %v2139
    %6277 = vmatprep.subr.bf16.mxu0 %v2153
    %6278 = vmatpush1.bf16.msra.mxu0 %v2152
    %6279 = vmatprep.subr.bf16.mxu0 %v2166
    %6280 = vmatpush1.bf16.msra.mxu0 %v2165
    %6281 = vmatprep.subr.bf16.mxu0 %v2179
    %6282 = vmatpush1.bf16.msra.mxu0 %v2178
    %6283 = vmatprep.subr.bf16.mxu0 %v2192
    %6284 = vmatpush1.bf16.msra.mxu0 %v2191
    %6285 = vmatprep.subr.bf16.mxu0 %v2205
    %6286 = vmatpush1.bf16.msra.mxu0 %v2204
    %6287 = vmatprep.subr.bf16.mxu0 %v2218
    %6288 = vmatpush1.bf16.msra.mxu0 %v2217
    %6289 = vmatprep.subr.bf16.mxu0 %v2231
    %6290 = vmatpush1.bf16.msra.mxu0 %v2230
    %6291 = vmatprep.subr.bf16.mxu0 %v2244
    %6292 = vmatpush1.bf16.msra.mxu0 %v2243
    %6293 = vmatprep.subr.bf16.mxu0 %v2257
    %6294 = vmatpush1.bf16.msra.mxu0 %v2256
    %6295 = vmatprep.subr.bf16.mxu0 %v2270
    %6296 = vmatpush1.bf16.msra.mxu0 %v2269
    %6297 = vmatprep.subr.bf16.mxu0 %v2283
    %6298 = vmatpush1.bf16.msra.mxu0 %v2282
    %6299 = vmatprep.subr.bf16.mxu0 %v2296
    %6300 = vmatpush1.bf16.msra.mxu0 %v2295
    %6301 = vmatprep.subr.bf16.mxu0 %v2309
    %6302 = vmatpush1.bf16.msra.mxu0 %v2308
    %6303 = vmatprep.mubr.bf16.mxu0 %v5858
    %6304 = vmatmul.mubr.bf16.gmra.mrb[0].mxu0 %v5857
    %v6305 = vpop.f32.mrb[0].mxu0
    %v6306 = vadd.f32 0.0, %v6305
    %v6307 = vpop.f32.mrb[0].mxu0
    %v6308 = vadd.f32 0.0, %v6307
    %v6309 = vpop.f32.mrb[0].mxu0
    %v6310 = vpop.f32.mrb[0].mxu0
    %6311 = vdwg.mxu0
    %6312 = vmatprep.subr.bf16.mxu0 %v2322
    %6313 = vmatpush1.bf16.msra.mxu0 %v2321
    %6314 = vmatprep.subr.bf16.mxu0 %v2335
    %6315 = vmatpush1.bf16.msra.mxu0 %v2334
    %6316 = vmatprep.subr.bf16.mxu0 %v2348
    %6317 = vmatpush1.bf16.msra.mxu0 %v2347
    %6318 = vmatprep.subr.bf16.mxu0 %v2361
    %6319 = vmatpush1.bf16.msra.mxu0 %v2360
    %6320 = vmatprep.subr.bf16.mxu0 %v2374
    %6321 = vmatpush1.bf16.msra.mxu0 %v2373
    %6322 = vmatprep.subr.bf16.mxu0 %v2387
    %6323 = vmatpush1.bf16.msra.mxu0 %v2386
    %6324 = vmatprep.subr.bf16.mxu0 %v2400
    %6325 = vmatpush1.bf16.msra.mxu0 %v2399
    %6326 = vmatprep.subr.bf16.mxu0 %v2413
    %6327 = vmatpush1.bf16.msra.mxu0 %v2412
    %6328 = vmatprep.subr.bf16.mxu0 %v2426
    %6329 = vmatpush1.bf16.msra.mxu0 %v2425
    %6330 = vmatprep.subr.bf16.mxu0 %v2439
    %6331 = vmatpush1.bf16.msra.mxu0 %v2438
    %6332 = vmatprep.subr.bf16.mxu0 %v2452
    %6333 = vmatpush1.bf16.msra.mxu0 %v2451
    %6334 = vmatprep.subr.bf16.mxu0 %v2465
    %6335 = vmatpush1.bf16.msra.mxu0 %v2464
    %6336 = vmatprep.subr.bf16.mxu0 %v2478
    %6337 = vmatpush1.bf16.msra.mxu0 %v2477
    %6338 = vmatprep.subr.bf16.mxu0 %v2491
    %6339 = vmatpush1.bf16.msra.mxu0 %v2490
    %6340 = vmatprep.subr.bf16.mxu0 %v2504
    %6341 = vmatpush1.bf16.msra.mxu0 %v2503
    %6342 = vmatprep.subr.bf16.mxu0 %v2517
    %6343 = vmatpush1.bf16.msra.mxu0 %v2516
    %6344 = vmatprep.mubr.bf16.mxu0 %v5860
    %6345 = vmatmul.mubr.bf16.gmra.mrb[0].mxu0 %v5859
    %v6346 = vpop.f32.mrb[0].mxu0
    %v6347 = vadd.f32 %v6306, %v6346
    %v6348 = vpop.f32.mrb[0].mxu0
    %v6349 = vadd.f32 %v6308, %v6348
    %v6350 = vpop.f32.mrb[0].mxu0
    %v6351 = vpop.f32.mrb[0].mxu0
    %6352 = vdwg.mxu0
    %6353 = vmatprep.subr.bf16.mxu0 0
    %6354 = vmatpush1.bf16.msra.mxu0 %v2115
    %6355 = vmatprep.subr.bf16.mxu0 0
    %6356 = vmatpush1.bf16.msra.mxu0 %v2128
    %6357 = vmatprep.subr.bf16.mxu0 0
    %6358 = vmatpush1.bf16.msra.mxu0 %v2141
    %6359 = vmatprep.subr.bf16.mxu0 0
    %6360 = vmatpush1.bf16.msra.mxu0 %v2154
    %6361 = vmatprep.subr.bf16.mxu0 0
    %6362 = vmatpush1.bf16.msra.mxu0 %v2167
    %6363 = vmatprep.subr.bf16.mxu0 0
    %6364 = vmatpush1.bf16.msra.mxu0 %v2180
    %6365 = vmatprep.subr.bf16.mxu0 0
    %6366 = vmatpush1.bf16.msra.mxu0 %v2193
    %6367 = vmatprep.subr.bf16.mxu0 0
    %6368 = vmatpush1.bf16.msra.mxu0 %v2206
    %6369 = vmatprep.subr.bf16.mxu0 0
    %6370 = vmatpush1.bf16.msra.mxu0 %v2219
    %6371 = vmatprep.subr.bf16.mxu0 0
    %6372 = vmatpush1.bf16.msra.mxu0 %v2232
    %6373 = vmatprep.subr.bf16.mxu0 0
    %6374 = vmatpush1.bf16.msra.mxu0 %v2245
    %6375 = vmatprep.subr.bf16.mxu0 0
    %6376 = vmatpush1.bf16.msra.mxu0 %v2258
    %6377 = vmatprep.subr.bf16.mxu0 0
    %6378 = vmatpush1.bf16.msra.mxu0 %v2271
    %6379 = vmatprep.subr.bf16.mxu0 0
    %6380 = vmatpush1.bf16.msra.mxu0 %v2284
    %6381 = vmatprep.subr.bf16.mxu0 0
    %6382 = vmatpush1.bf16.msra.mxu0 %v2297
    %6383 = vmatprep.subr.bf16.mxu0 0
    %6384 = vmatpush1.bf16.msra.mxu0 %v2310
    %6385 = vmatprep.mubr.bf16.mxu0 %v5858
    %6386 = vmatmul.mubr.bf16.gmra.mrb[0].mxu0 %v5857
    %v6387 = vpop.f32.mrb[0].mxu0
    %v6388 = vadd.f32 0.0, %v6387
    %v6389 = vpop.f32.mrb[0].mxu0
    %v6390 = vpop.f32.mrb[0].mxu0
    %v6391 = vpop.f32.mrb[0].mxu0
    %6392 = vdwg.mxu0
    %6393 = vmatprep.subr.bf16.mxu0 0
    %6394 = vmatpush1.bf16.msra.mxu0 %v2323
    %6395 = vmatprep.subr.bf16.mxu0 0
    %6396 = vmatpush1.bf16.msra.mxu0 %v2336
    %6397 = vmatprep.subr.bf16.mxu0 0
    %6398 = vmatpush1.bf16.msra.mxu0 %v2349
    %6399 = vmatprep.subr.bf16.mxu0 0
    %6400 = vmatpush1.bf16.msra.mxu0 %v2362
    %6401 = vmatprep.subr.bf16.mxu0 0
    %6402 = vmatpush1.bf16.msra.mxu0 %v2375
    %6403 = vmatprep.subr.bf16.mxu0 0
    %6404 = vmatpush1.bf16.msra.mxu0 %v2388
    %6405 = vmatprep.subr.bf16.mxu0 0
    %6406 = vmatpush1.bf16.msra.mxu0 %v2401
    %6407 = vmatprep.subr.bf16.mxu0 0
    %6408 = vmatpush1.bf16.msra.mxu0 %v2414
    %6409 = vmatprep.subr.bf16.mxu0 0
    %6410 = vmatpush1.bf16.msra.mxu0 %v2427
    %6411 = vmatprep.subr.bf16.mxu0 0
    %6412 = vmatpush1.bf16.msra.mxu0 %v2440
    %6413 = vmatprep.subr.bf16.mxu0 0
    %6414 = vmatpush1.bf16.msra.mxu0 %v2453
    %6415 = vmatprep.subr.bf16.mxu0 0
    %6416 = vmatpush1.bf16.msra.mxu0 %v2466
    %6417 = vmatprep.subr.bf16.mxu0 0
    %6418 = vmatpush1.bf16.msra.mxu0 %v2479
    %6419 = vmatprep.subr.bf16.mxu0 0
    %6420 = vmatpush1.bf16.msra.mxu0 %v2492
    %6421 = vmatprep.subr.bf16.mxu0 0
    %6422 = vmatpush1.bf16.msra.mxu0 %v2505
    %6423 = vmatprep.subr.bf16.mxu0 0
    %6424 = vmatpush1.bf16.msra.mxu0 %v2518
    %6425 = vmatprep.mubr.bf16.mxu0 %v5860
    %6426 = vmatmul.mubr.bf16.gmra.mrb[0].mxu0 %v5859
    %v6427 = vpop.f32.mrb[0].mxu0
    %v6428 = vadd.f32 %v6388, %v6427
    %v6429 = vpop.f32.mrb[0].mxu0
    %v6430 = vpop.f32.mrb[0].mxu0
    %v6431 = vpop.f32.mrb[0].mxu0
    %6432 = vdwg.mxu0
    %v6433 = vld [vmem:[%s2075] sm:$0xff]
    %v6434 = vld [vmem:[%s2075 + $0x8] sm:$0xff]
    %v6435 = vld [vmem:[%s2075 + $0x10] sm:$0xff]
    %v6436 = vld [vmem:[%s2075 + $0x18] sm:$0xff]
    %v6437 = vld [vmem:[%s2075 + $0x20] sm:$0xff]
    %v6438 = vld [vmem:[%s2075 + $0x28] sm:$0xff]
    %v6439 = vld [vmem:[%s2075 + $0x30] sm:$0xff]
    %v6440 = vld [vmem:[%s2075 + $0x38] sm:$0xff]
    %v6441 = vld [vmem:[%s2075 + $0x40] sm:$0xff]
    %v6442 = vld [vmem:[%s2075 + $0x48] sm:$0xff]
    %v6443 = vld [vmem:[%s2075 + $0x50] sm:$0xff]
    %v6444 = vld [vmem:[%s2075 + $0x58] sm:$0xff]
    %v6445 = vld [vmem:[%s2075 + $0x60] sm:$0xff]
    %v6446 = vadd.f32 %v6433, %v5937
    %v6447 = vadd.f32 %v6434, %v5939
    %v6448 = vadd.f32 %v6435, %v6019
    %v6449 = vmul.f32 %v6446, 0.5
    %v6450 = vmul.f32 %v6447, 0.5
    %v6451 = vmul.f32 %v6448, 0.5
    %v6452 = vtanh.pop %v6449
    %v6453 = vtanh.pop %v6450
    %v6454 = vtanh.pop %v6451
    %v6455 = vmul.f32 %v6452, 0.5
    %v6456 = vmul.f32 %v6453, 0.5
    %v6457 = vmul.f32 %v6454, 0.5
    %v6458 = vadd.f32 %v6455, 0.5
    %v6459 = vadd.f32 %v6456, 0.5
    %v6460 = vadd.f32 %v6457, 0.5
    %v6461 = vadd.f32 %v6436, %v6021
    %v6462 = vadd.f32 %v6437, %v6101
    %v6463 = vadd.f32 %v6438, %v6103
    %v6464 = vmul.f32 %v6461, 0.5
    %v6465 = vmul.f32 %v6462, 0.5
    %v6466 = vmul.f32 %v6463, 0.5
    %v6467 = vtanh.pop %v6464
    %v6468 = vtanh.pop %v6465
    %v6469 = vtanh.pop %v6466
    %v6470 = vmul.f32 %v6467, 0.5
    %v6471 = vmul.f32 %v6468, 0.5
    %v6472 = vmul.f32 %v6469, 0.5
    %v6473 = vadd.f32 %v6470, 0.5
    %v6474 = vadd.f32 %v6471, 0.5
    %v6475 = vadd.f32 %v6472, 0.5
    %v6476 = vadd.f32 %v6183, %v3138
    %v6477 = vadd.f32 %v6185, %v3142
    %v6478 = vadd.f32 %v6265, %v3146
    %v6479 = vmul.f32 %v6458, %v6476
    %v6480 = vmul.f32 %v6459, %v6477
    %v6481 = vmul.f32 %v6460, %v6478
    %v6482 = vadd.f32 %v6439, %v6479
    %v6483 = vadd.f32 %v6440, %v6480
    %v6484 = vadd.f32 %v6441, %v6481
    %v6485 = vtanh.pop %v6482
    %v6486 = vtanh.pop %v6483
    %v6487 = vtanh.pop %v6484
    %v6488 = vsub.f32 %v5828, %v6485
    %v6489 = vsub.f32 %v5829, %v6486
    %v6490 = vsub.f32 %v5830, %v6487
    %v6491 = vmul.f32 %v6473, %v6488
    %v6492 = vmul.f32 %v6474, %v6489
    %v6493 = vmul.f32 %v6475, %v6490
    %v6494 = vadd.f32 %v6485, %v6491
    %v6495 = vadd.f32 %v6486, %v6492
    %v6496 = vadd.f32 %v6487, %v6493
    %v6497 = vadd.f32 %v6442, %v6267
    %v6498 = vadd.f32 %v6443, %v6347
    %v6499 = vadd.f32 %v6444, %v6349
    %v6500 = vadd.f32 %v6445, %v6428
    %v6501 = vmul.f32 %v6497, 0.5
    %v6502 = vtanh.pop %v6501
    %v6503 = vmul.f32 %v6502, 0.5
    %v6504 = vadd.f32 %v6503, 0.5
    %v6505 = vmul.f32 %v6498, 0.5
    %v6506 = vtanh.pop %v6505
    %v6507 = vmul.f32 %v6506, 0.5
    %v6508 = vadd.f32 %v6507, 0.5
    %v6509 = vtanh.pop %v6499
    %v6510 = vmul.f32 %v6500, 0.5
    %v6511 = vtanh.pop %v6510
    %v6512 = vmul.f32 %v6511, 0.5
    %v6513 = vadd.f32 %v6512, 0.5
    %v6514 = vmul.f32 %v6508, %v5850
    %v6515 = vmul.f32 %v6504, %v6509
    %v6516 = vadd.f32 %v6514, %v6515
    %v6517 = vtanh.pop %v6516
    %v6518 = vmul.f32 %v6513, %v6517
    %v6519 = vmax.f32 %v5853, %v6494
    %v6520 = vmax.f32 %v5854, %v6495
    %v6521 = vmax.f32 %v5855, %v6496
    %v6522 = vmax.f32 %v5856, %v6518
    %v6523 = vpack.c.bf16 %v6494, %v6494
    %v6524 = vpack.c.bf16 %v6495, %v6495
    %v6525 = vpack.c.bf16 %v6496, %v6496
    %v6526 = vpack.c.bf16 %v6518, %v6518
    %6527 = vmatprep.subr.bf16.mxu0 %v2104
    %6528 = vmatpush1.bf16.msra.mxu0 %v2103
    %6529 = vmatprep.subr.bf16.mxu0 %v2117
    %6530 = vmatpush1.bf16.msra.mxu0 %v2116
    %6531 = vmatprep.subr.bf16.mxu0 %v2130
    %6532 = vmatpush1.bf16.msra.mxu0 %v2129
    %6533 = vmatprep.subr.bf16.mxu0 %v2143
    %6534 = vmatpush1.bf16.msra.mxu0 %v2142
    %6535 = vmatprep.subr.bf16.mxu0 %v2156
    %6536 = vmatpush1.bf16.msra.mxu0 %v2155
    %6537 = vmatprep.subr.bf16.mxu0 %v2169
    %6538 = vmatpush1.bf16.msra.mxu0 %v2168
    %6539 = vmatprep.subr.bf16.mxu0 %v2182
    %6540 = vmatpush1.bf16.msra.mxu0 %v2181
    %6541 = vmatprep.subr.bf16.mxu0 %v2195
    %6542 = vmatpush1.bf16.msra.mxu0 %v2194
    %6543 = vmatprep.subr.bf16.mxu0 %v2208
    %6544 = vmatpush1.bf16.msra.mxu0 %v2207
    %6545 = vmatprep.subr.bf16.mxu0 %v2221
    %6546 = vmatpush1.bf16.msra.mxu0 %v2220
    %6547 = vmatprep.subr.bf16.mxu0 %v2234
    %6548 = vmatpush1.bf16.msra.mxu0 %v2233
    %6549 = vmatprep.subr.bf16.mxu0 %v2247
    %6550 = vmatpush1.bf16.msra.mxu0 %v2246
    %6551 = vmatprep.subr.bf16.mxu0 %v2260
    %6552 = vmatpush1.bf16.msra.mxu0 %v2259
    %6553 = vmatprep.subr.bf16.mxu0 %v2273
    %6554 = vmatpush1.bf16.msra.mxu0 %v2272
    %6555 = vmatprep.subr.bf16.mxu0 %v2286
    %6556 = vmatpush1.bf16.msra.mxu0 %v2285
    %6557 = vmatprep.subr.bf16.mxu0 %v2299
    %6558 = vmatpush1.bf16.msra.mxu0 %v2298
    %6559 = vmatprep.mubr.bf16.mxu0 %v6524
    %6560 = vmatmul.mubr.bf16.gmra.mrb[0].mxu0 %v6523
    %v6561 = vpop.f32.mrb[0].mxu0
    %v6562 = vadd.f32 0.0, %v6561
    %v6563 = vpop.f32.mrb[0].mxu0
    %v6564 = vadd.f32 0.0, %v6563
    %v6565 = vpop.f32.mrb[0].mxu0
    %v6566 = vpop.f32.mrb[0].mxu0
    %6567 = vdwg.mxu0
    %6568 = vmatprep.subr.bf16.mxu0 %v2312
    %6569 = vmatpush1.bf16.msra.mxu0 %v2311
    %6570 = vmatprep.subr.bf16.mxu0 %v2325
    %6571 = vmatpush1.bf16.msra.mxu0 %v2324
    %6572 = vmatprep.subr.bf16.mxu0 %v2338
    %6573 = vmatpush1.bf16.msra.mxu0 %v2337
    %6574 = vmatprep.subr.bf16.mxu0 %v2351
    %6575 = vmatpush1.bf16.msra.mxu0 %v2350
    %6576 = vmatprep.subr.bf16.mxu0 %v2364
    %6577 = vmatpush1.bf16.msra.mxu0 %v2363
    %6578 = vmatprep.subr.bf16.mxu0 %v2377
    %6579 = vmatpush1.bf16.msra.mxu0 %v2376
    %6580 = vmatprep.subr.bf16.mxu0 %v2390
    %6581 = vmatpush1.bf16.msra.mxu0 %v2389
    %6582 = vmatprep.subr.bf16.mxu0 %v2403
    %6583 = vmatpush1.bf16.msra.mxu0 %v2402
    %6584 = vmatprep.subr.bf16.mxu0 %v2416
    %6585 = vmatpush1.bf16.msra.mxu0 %v2415
    %6586 = vmatprep.subr.bf16.mxu0 %v2429
    %6587 = vmatpush1.bf16.msra.mxu0 %v2428
    %6588 = vmatprep.subr.bf16.mxu0 %v2442
    %6589 = vmatpush1.bf16.msra.mxu0 %v2441
    %6590 = vmatprep.subr.bf16.mxu0 %v2455
    %6591 = vmatpush1.bf16.msra.mxu0 %v2454
    %6592 = vmatprep.subr.bf16.mxu0 %v2468
    %6593 = vmatpush1.bf16.msra.mxu0 %v2467
    %6594 = vmatprep.subr.bf16.mxu0 %v2481
    %6595 = vmatpush1.bf16.msra.mxu0 %v2480
    %6596 = vmatprep.subr.bf16.mxu0 %v2494
    %6597 = vmatpush1.bf16.msra.mxu0 %v2493
    %6598 = vmatprep.subr.bf16.mxu0 %v2507
    %6599 = vmatpush1.bf16.msra.mxu0 %v2506
    %6600 = vmatprep.mubr.bf16.mxu0 %v6526
    %6601 = vmatmul.mubr.bf16.gmra.mrb[0].mxu0 %v6525
    %v6602 = vpop.f32.mrb[0].mxu0
    %v6603 = vadd.f32 %v6562, %v6602
    %v6604 = vpop.f32.mrb[0].mxu0
    %v6605 = vadd.f32 %v6564, %v6604
    %v6606 = vpop.f32.mrb[0].mxu0
    %v6607 = vpop.f32.mrb[0].mxu0
    %6608 = vdwg.mxu0
    %6609 = vmatprep.subr.bf16.mxu0 %v2106
    %6610 = vmatpush1.bf16.msra.mxu0 %v2105
    %6611 = vmatprep.subr.bf16.mxu0 %v2119
    %6612 = vmatpush1.bf16.msra.mxu0 %v2118
    %6613 = vmatprep.subr.bf16.mxu0 %v2132
    %6614 = vmatpush1.bf16.msra.mxu0 %v2131
    %6615 = vmatprep.subr.bf16.mxu0 %v2145
    %6616 = vmatpush1.bf16.msra.mxu0 %v2144
    %6617 = vmatprep.subr.bf16.mxu0 %v2158
    %6618 = vmatpush1.bf16.msra.mxu0 %v2157
    %6619 = vmatprep.subr.bf16.mxu0 %v2171
    %6620 = vmatpush1.bf16.msra.mxu0 %v2170
    %6621 = vmatprep.subr.bf16.mxu0 %v2184
    %6622 = vmatpush1.bf16.msra.mxu0 %v2183
    %6623 = vmatprep.subr.bf16.mxu0 %v2197
    %6624 = vmatpush1.bf16.msra.mxu0 %v2196
    %6625 = vmatprep.subr.bf16.mxu0 %v2210
    %6626 = vmatpush1.bf16.msra.mxu0 %v2209
    %6627 = vmatprep.subr.bf16.mxu0 %v2223
    %6628 = vmatpush1.bf16.msra.mxu0 %v2222
    %6629 = vmatprep.subr.bf16.mxu0 %v2236
    %6630 = vmatpush1.bf16.msra.mxu0 %v2235
    %6631 = vmatprep.subr.bf16.mxu0 %v2249
    %6632 = vmatpush1.bf16.msra.mxu0 %v2248
    %6633 = vmatprep.subr.bf16.mxu0 %v2262
    %6634 = vmatpush1.bf16.msra.mxu0 %v2261
    %6635 = vmatprep.subr.bf16.mxu0 %v2275
    %6636 = vmatpush1.bf16.msra.mxu0 %v2274
    %6637 = vmatprep.subr.bf16.mxu0 %v2288
    %6638 = vmatpush1.bf16.msra.mxu0 %v2287
    %6639 = vmatprep.subr.bf16.mxu0 %v2301
    %6640 = vmatpush1.bf16.msra.mxu0 %v2300
    %6641 = vmatprep.mubr.bf16.mxu0 %v6524
    %6642 = vmatmul.mubr.bf16.gmra.mrb[0].mxu0 %v6523
    %v6643 = vpop.f32.mrb[0].mxu0
    %v6644 = vadd.f32 0.0, %v6643
    %v6645 = vpop.f32.mrb[0].mxu0
    %v6646 = vadd.f32 0.0, %v6645
    %v6647 = vpop.f32.mrb[0].mxu0
    %v6648 = vpop.f32.mrb[0].mxu0
    %6649 = vdwg.mxu0
    %6650 = vmatprep.subr.bf16.mxu0 %v2314
    %6651 = vmatpush1.bf16.msra.mxu0 %v2313
    %6652 = vmatprep.subr.bf16.mxu0 %v2327
    %6653 = vmatpush1.bf16.msra.mxu0 %v2326
    %6654 = vmatprep.subr.bf16.mxu0 %v2340
    %6655 = vmatpush1.bf16.msra.mxu0 %v2339
    %6656 = vmatprep.subr.bf16.mxu0 %v2353
    %6657 = vmatpush1.bf16.msra.mxu0 %v2352
    %6658 = vmatprep.subr.bf16.mxu0 %v2366
    %6659 = vmatpush1.bf16.msra.mxu0 %v2365
    %6660 = vmatprep.subr.bf16.mxu0 %v2379
    %6661 = vmatpush1.bf16.msra.mxu0 %v2378
    %6662 = vmatprep.subr.bf16.mxu0 %v2392
    %6663 = vmatpush1.bf16.msra.mxu0 %v2391
    %6664 = vmatprep.subr.bf16.mxu0 %v2405
    %6665 = vmatpush1.bf16.msra.mxu0 %v2404
    %6666 = vmatprep.subr.bf16.mxu0 %v2418
    %6667 = vmatpush1.bf16.msra.mxu0 %v2417
    %6668 = vmatprep.subr.bf16.mxu0 %v2431
    %6669 = vmatpush1.bf16.msra.mxu0 %v2430
    %6670 = vmatprep.subr.bf16.mxu0 %v2444
    %6671 = vmatpush1.bf16.msra.mxu0 %v2443
    %6672 = vmatprep.subr.bf16.mxu0 %v2457
    %6673 = vmatpush1.bf16.msra.mxu0 %v2456
    %6674 = vmatprep.subr.bf16.mxu0 %v2470
    %6675 = vmatpush1.bf16.msra.mxu0 %v2469
    %6676 = vmatprep.subr.bf16.mxu0 %v2483
    %6677 = vmatpush1.bf16.msra.mxu0 %v2482
    %6678 = vmatprep.subr.bf16.mxu0 %v2496
    %6679 = vmatpush1.bf16.msra.mxu0 %v2495
    %6680 = vmatprep.subr.bf16.mxu0 %v2509
    %6681 = vmatpush1.bf16.msra.mxu0 %v2508
    %6682 = vmatprep.mubr.bf16.mxu0 %v6526
    %6683 = vmatmul.mubr.bf16.gmra.mrb[0].mxu0 %v6525
    %v6684 = vpop.f32.mrb[0].mxu0
    %v6685 = vadd.f32 %v6644, %v6684
    %v6686 = vpop.f32.mrb[0].mxu0
    %v6687 = vadd.f32 %v6646, %v6686
    %v6688 = vpop.f32.mrb[0].mxu0
    %v6689 = vpop.f32.mrb[0].mxu0
    %6690 = vdwg.mxu0
    %6691 = vmatprep.subr.bf16.mxu0 %v2108
    %6692 = vmatpush1.bf16.msra.mxu0 %v2107
    %6693 = vmatprep.subr.bf16.mxu0 %v2121
    %6694 = vmatpush1.bf16.msra.mxu0 %v2120
    %6695 = vmatprep.subr.bf16.mxu0 %v2134
    %6696 = vmatpush1.bf16.msra.mxu0 %v2133
    %6697 = vmatprep.subr.bf16.mxu0 %v2147
    %6698 = vmatpush1.bf16.msra.mxu0 %v2146
    %6699 = vmatprep.subr.bf16.mxu0 %v2160
    %6700 = vmatpush1.bf16.msra.mxu0 %v2159
    %6701 = vmatprep.subr.bf16.mxu0 %v2173
    %6702 = vmatpush1.bf16.msra.mxu0 %v2172
    %6703 = vmatprep.subr.bf16.mxu0 %v2186
    %6704 = vmatpush1.bf16.msra.mxu0 %v2185
    %6705 = vmatprep.subr.bf16.mxu0 %v2199
    %6706 = vmatpush1.bf16.msra.mxu0 %v2198
    %6707 = vmatprep.subr.bf16.mxu0 %v2212
    %6708 = vmatpush1.bf16.msra.mxu0 %v2211
    %6709 = vmatprep.subr.bf16.mxu0 %v2225
    %6710 = vmatpush1.bf16.msra.mxu0 %v2224
    %6711 = vmatprep.subr.bf16.mxu0 %v2238
    %6712 = vmatpush1.bf16.msra.mxu0 %v2237
    %6713 = vmatprep.subr.bf16.mxu0 %v2251
    %6714 = vmatpush1.bf16.msra.mxu0 %v2250
    %6715 = vmatprep.subr.bf16.mxu0 %v2264
    %6716 = vmatpush1.bf16.msra.mxu0 %v2263
    %6717 = vmatprep.subr.bf16.mxu0 %v2277
    %6718 = vmatpush1.bf16.msra.mxu0 %v2276
    %6719 = vmatprep.subr.bf16.mxu0 %v2290
    %6720 = vmatpush1.bf16.msra.mxu0 %v2289
    %6721 = vmatprep.subr.bf16.mxu0 %v2303
    %6722 = vmatpush1.bf16.msra.mxu0 %v2302
    %6723 = vmatprep.mubr.bf16.mxu0 %v6524
    %6724 = vmatmul.mubr.bf16.gmra.mrb[0].mxu0 %v6523
    %v6725 = vpop.f32.mrb[0].mxu0
    %v6726 = vadd.f32 0.0, %v6725
    %v6727 = vpop.f32.mrb[0].mxu0
    %v6728 = vadd.f32 0.0, %v6727
    %v6729 = vpop.f32.mrb[0].mxu0
    %v6730 = vpop.f32.mrb[0].mxu0
    %6731 = vdwg.mxu0
    %6732 = vmatprep.subr.bf16.mxu0 %v2316
    %6733 = vmatpush1.bf16.msra.mxu0 %v2315
    %6734 = vmatprep.subr.bf16.mxu0 %v2329
    %6735 = vmatpush1.bf16.msra.mxu0 %v2328
    %6736 = vmatprep.subr.bf16.mxu0 %v2342
    %6737 = vmatpush1.bf16.msra.mxu0 %v2341
    %6738 = vmatprep.subr.bf16.mxu0 %v2355
    %6739 = vmatpush1.bf16.msra.mxu0 %v2354
    %6740 = vmatprep.subr.bf16.mxu0 %v2368
    %6741 = vmatpush1.bf16.msra.mxu0 %v2367
    %6742 = vmatprep.subr.bf16.mxu0 %v2381
    %6743 = vmatpush1.bf16.msra.mxu0 %v2380
    %6744 = vmatprep.subr.bf16.mxu0 %v2394
    %6745 = vmatpush1.bf16.msra.mxu0 %v2393
    %6746 = vmatprep.subr.bf16.mxu0 %v2407
    %6747 = vmatpush1.bf16.msra.mxu0 %v2406
    %6748 = vmatprep.subr.bf16.mxu0 %v2420
    %6749 = vmatpush1.bf16.msra.mxu0 %v2419
    %6750 = vmatprep.subr.bf16.mxu0 %v2433
    %6751 = vmatpush1.bf16.msra.mxu0 %v2432
    %6752 = vmatprep.subr.bf16.mxu0 %v2446
    %6753 = vmatpush1.bf16.msra.mxu0 %v2445
    %6754 = vmatprep.subr.bf16.mxu0 %v2459
    %6755 = vmatpush1.bf16.msra.mxu0 %v2458
    %6756 = vmatprep.subr.bf16.mxu0 %v2472
    %6757 = vmatpush1.bf16.msra.mxu0 %v2471
    %6758 = vmatprep.subr.bf16.mxu0 %v2485
    %6759 = vmatpush1.bf16.msra.mxu0 %v2484
    %6760 = vmatprep.subr.bf16.mxu0 %v2498
    %6761 = vmatpush1.bf16.msra.mxu0 %v2497
    %6762 = vmatprep.subr.bf16.mxu0 %v2511
    %6763 = vmatpush1.bf16.msra.mxu0 %v2510
    %6764 = vmatprep.mubr.bf16.mxu0 %v6526
    %6765 = vmatmul.mubr.bf16.gmra.mrb[0].mxu0 %v6525
    %v6766 = vpop.f32.mrb[0].mxu0
    %v6767 = vadd.f32 %v6726, %v6766
    %v6768 = vpop.f32.mrb[0].mxu0
    %v6769 = vadd.f32 %v6728, %v6768
    %v6770 = vpop.f32.mrb[0].mxu0
    %v6771 = vpop.f32.mrb[0].mxu0
    %6772 = vdwg.mxu0
    %6773 = vmatprep.subr.bf16.mxu0 %v2110
    %6774 = vmatpush1.bf16.msra.mxu0 %v2109
    %6775 = vmatprep.subr.bf16.mxu0 %v2123
    %6776 = vmatpush1.bf16.msra.mxu0 %v2122
    %6777 = vmatprep.subr.bf16.mxu0 %v2136
    %6778 = vmatpush1.bf16.msra.mxu0 %v2135
    %6779 = vmatprep.subr.bf16.mxu0 %v2149
    %6780 = vmatpush1.bf16.msra.mxu0 %v2148
    %6781 = vmatprep.subr.bf16.mxu0 %v2162
    %6782 = vmatpush1.bf16.msra.mxu0 %v2161
    %6783 = vmatprep.subr.bf16.mxu0 %v2175
    %6784 = vmatpush1.bf16.msra.mxu0 %v2174
    %6785 = vmatprep.subr.bf16.mxu0 %v2188
    %6786 = vmatpush1.bf16.msra.mxu0 %v2187
    %6787 = vmatprep.subr.bf16.mxu0 %v2201
    %6788 = vmatpush1.bf16.msra.mxu0 %v2200
    %6789 = vmatprep.subr.bf16.mxu0 %v2214
    %6790 = vmatpush1.bf16.msra.mxu0 %v2213
    %6791 = vmatprep.subr.bf16.mxu0 %v2227
    %6792 = vmatpush1.bf16.msra.mxu0 %v2226
    %6793 = vmatprep.subr.bf16.mxu0 %v2240
    %6794 = vmatpush1.bf16.msra.mxu0 %v2239
    %6795 = vmatprep.subr.bf16.mxu0 %v2253
    %6796 = vmatpush1.bf16.msra.mxu0 %v2252
    %6797 = vmatprep.subr.bf16.mxu0 %v2266
    %6798 = vmatpush1.bf16.msra.mxu0 %v2265
    %6799 = vmatprep.subr.bf16.mxu0 %v2279
    %6800 = vmatpush1.bf16.msra.mxu0 %v2278
    %6801 = vmatprep.subr.bf16.mxu0 %v2292
    %6802 = vmatpush1.bf16.msra.mxu0 %v2291
    %6803 = vmatprep.subr.bf16.mxu0 %v2305
    %6804 = vmatpush1.bf16.msra.mxu0 %v2304
    %6805 = vmatprep.mubr.bf16.mxu0 %v6524
    %6806 = vmatmul.mubr.bf16.gmra.mrb[0].mxu0 %v6523
    %v6807 = vpop.f32.mrb[0].mxu0
    %v6808 = vadd.f32 0.0, %v6807
    %v6809 = vpop.f32.mrb[0].mxu0
    %v6810 = vadd.f32 0.0, %v6809
    %v6811 = vpop.f32.mrb[0].mxu0
    %v6812 = vpop.f32.mrb[0].mxu0
    %6813 = vdwg.mxu0
    %6814 = vmatprep.subr.bf16.mxu0 %v2318
    %6815 = vmatpush1.bf16.msra.mxu0 %v2317
    %6816 = vmatprep.subr.bf16.mxu0 %v2331
    %6817 = vmatpush1.bf16.msra.mxu0 %v2330
    %6818 = vmatprep.subr.bf16.mxu0 %v2344
    %6819 = vmatpush1.bf16.msra.mxu0 %v2343
    %6820 = vmatprep.subr.bf16.mxu0 %v2357
    %6821 = vmatpush1.bf16.msra.mxu0 %v2356
    %6822 = vmatprep.subr.bf16.mxu0 %v2370
    %6823 = vmatpush1.bf16.msra.mxu0 %v2369
    %6824 = vmatprep.subr.bf16.mxu0 %v2383
    %6825 = vmatpush1.bf16.msra.mxu0 %v2382
    %6826 = vmatprep.subr.bf16.mxu0 %v2396
    %6827 = vmatpush1.bf16.msra.mxu0 %v2395
    %6828 = vmatprep.subr.bf16.mxu0 %v2409
    %6829 = vmatpush1.bf16.msra.mxu0 %v2408
    %6830 = vmatprep.subr.bf16.mxu0 %v2422
    %6831 = vmatpush1.bf16.msra.mxu0 %v2421
    %6832 = vmatprep.subr.bf16.mxu0 %v2435
    %6833 = vmatpush1.bf16.msra.mxu0 %v2434
    %6834 = vmatprep.subr.bf16.mxu0 %v2448
    %6835 = vmatpush1.bf16.msra.mxu0 %v2447
    %6836 = vmatprep.subr.bf16.mxu0 %v2461
    %6837 = vmatpush1.bf16.msra.mxu0 %v2460
    %6838 = vmatprep.subr.bf16.mxu0 %v2474
    %6839 = vmatpush1.bf16.msra.mxu0 %v2473
    %6840 = vmatprep.subr.bf16.mxu0 %v2487
    %6841 = vmatpush1.bf16.msra.mxu0 %v2486
    %6842 = vmatprep.subr.bf16.mxu0 %v2500
    %6843 = vmatpush1.bf16.msra.mxu0 %v2499
    %6844 = vmatprep.subr.bf16.mxu0 %v2513
    %6845 = vmatpush1.bf16.msra.mxu0 %v2512
    %6846 = vmatprep.mubr.bf16.mxu0 %v6526
    %6847 = vmatmul.mubr.bf16.gmra.mrb[0].mxu0 %v6525
    %v6848 = vpop.f32.mrb[0].mxu0
    %v6849 = vadd.f32 %v6808, %v6848
    %v6850 = vpop.f32.mrb[0].mxu0
    %v6851 = vadd.f32 %v6810, %v6850
    %v6852 = vpop.f32.mrb[0].mxu0
    %v6853 = vpop.f32.mrb[0].mxu0
    %6854 = vdwg.mxu0
    %6855 = vmatprep.subr.bf16.mxu0 %v2112
    %6856 = vmatpush1.bf16.msra.mxu0 %v2111
    %6857 = vmatprep.subr.bf16.mxu0 %v2125
    %6858 = vmatpush1.bf16.msra.mxu0 %v2124
    %6859 = vmatprep.subr.bf16.mxu0 %v2138
    %6860 = vmatpush1.bf16.msra.mxu0 %v2137
    %6861 = vmatprep.subr.bf16.mxu0 %v2151
    %6862 = vmatpush1.bf16.msra.mxu0 %v2150
    %6863 = vmatprep.subr.bf16.mxu0 %v2164
    %6864 = vmatpush1.bf16.msra.mxu0 %v2163
    %6865 = vmatprep.subr.bf16.mxu0 %v2177
    %6866 = vmatpush1.bf16.msra.mxu0 %v2176
    %6867 = vmatprep.subr.bf16.mxu0 %v2190
    %6868 = vmatpush1.bf16.msra.mxu0 %v2189
    %6869 = vmatprep.subr.bf16.mxu0 %v2203
    %6870 = vmatpush1.bf16.msra.mxu0 %v2202
    %6871 = vmatprep.subr.bf16.mxu0 %v2216
    %6872 = vmatpush1.bf16.msra.mxu0 %v2215
    %6873 = vmatprep.subr.bf16.mxu0 %v2229
    %6874 = vmatpush1.bf16.msra.mxu0 %v2228
    %6875 = vmatprep.subr.bf16.mxu0 %v2242
    %6876 = vmatpush1.bf16.msra.mxu0 %v2241
    %6877 = vmatprep.subr.bf16.mxu0 %v2255
    %6878 = vmatpush1.bf16.msra.mxu0 %v2254
    %6879 = vmatprep.subr.bf16.mxu0 %v2268
    %6880 = vmatpush1.bf16.msra.mxu0 %v2267
    %6881 = vmatprep.subr.bf16.mxu0 %v2281
    %6882 = vmatpush1.bf16.msra.mxu0 %v2280
    %6883 = vmatprep.subr.bf16.mxu0 %v2294
    %6884 = vmatpush1.bf16.msra.mxu0 %v2293
    %6885 = vmatprep.subr.bf16.mxu0 %v2307
    %6886 = vmatpush1.bf16.msra.mxu0 %v2306
    %6887 = vmatprep.mubr.bf16.mxu0 %v6524
    %6888 = vmatmul.mubr.bf16.gmra.mrb[0].mxu0 %v6523
    %v6889 = vpop.f32.mrb[0].mxu0
    %v6890 = vadd.f32 0.0, %v6889
    %v6891 = vpop.f32.mrb[0].mxu0
    %v6892 = vadd.f32 0.0, %v6891
    %v6893 = vpop.f32.mrb[0].mxu0
    %v6894 = vpop.f32.mrb[0].mxu0
    %6895 = vdwg.mxu0
    %6896 = vmatprep.subr.bf16.mxu0 %v2320
    %6897 = vmatpush1.bf16.msra.mxu0 %v2319
    %6898 = vmatprep.subr.bf16.mxu0 %v2333
    %6899 = vmatpush1.bf16.msra.mxu0 %v2332
    %6900 = vmatprep.subr.bf16.mxu0 %v2346
    %6901 = vmatpush1.bf16.msra.mxu0 %v2345
    %6902 = vmatprep.subr.bf16.mxu0 %v2359
    %6903 = vmatpush1.bf16.msra.mxu0 %v2358
    %6904 = vmatprep.subr.bf16.mxu0 %v2372
    %6905 = vmatpush1.bf16.msra.mxu0 %v2371
    %6906 = vmatprep.subr.bf16.mxu0 %v2385
    %6907 = vmatpush1.bf16.msra.mxu0 %v2384
    %6908 = vmatprep.subr.bf16.mxu0 %v2398
    %6909 = vmatpush1.bf16.msra.mxu0 %v2397
    %6910 = vmatprep.subr.bf16.mxu0 %v2411
    %6911 = vmatpush1.bf16.msra.mxu0 %v2410
    %6912 = vmatprep.subr.bf16.mxu0 %v2424
    %6913 = vmatpush1.bf16.msra.mxu0 %v2423
    %6914 = vmatprep.subr.bf16.mxu0 %v2437
    %6915 = vmatpush1.bf16.msra.mxu0 %v2436
    %6916 = vmatprep.subr.bf16.mxu0 %v2450
    %6917 = vmatpush1.bf16.msra.mxu0 %v2449
    %6918 = vmatprep.subr.bf16.mxu0 %v2463
    %6919 = vmatpush1.bf16.msra.mxu0 %v2462
    %6920 = vmatprep.subr.bf16.mxu0 %v2476
    %6921 = vmatpush1.bf16.msra.mxu0 %v2475
    %6922 = vmatprep.subr.bf16.mxu0 %v2489
    %6923 = vmatpush1.bf16.msra.mxu0 %v2488
    %6924 = vmatprep.subr.bf16.mxu0 %v2502
    %6925 = vmatpush1.bf16.msra.mxu0 %v2501
    %6926 = vmatprep.subr.bf16.mxu0 %v2515
    %6927 = vmatpush1.bf16.msra.mxu0 %v2514
    %6928 = vmatprep.mubr.bf16.mxu0 %v6526
    %6929 = vmatmul.mubr.bf16.gmra.mrb[0].mxu0 %v6525
    %v6930 = vpop.f32.mrb[0].mxu0
    %v6931 = vadd.f32 %v6890, %v6930
    %v6932 = vpop.f32.mrb[0].mxu0
    %v6933 = vadd.f32 %v6892, %v6932
    %v6934 = vpop.f32.mrb[0].mxu0
    %v6935 = vpop.f32.mrb[0].mxu0
    %6936 = vdwg.mxu0
    %6937 = vmatprep.subr.bf16.mxu0 %v2114
    %6938 = vmatpush1.bf16.msra.mxu0 %v2113
    %6939 = vmatprep.subr.bf16.mxu0 %v2127
    %6940 = vmatpush1.bf16.msra.mxu0 %v2126
    %6941 = vmatprep.subr.bf16.mxu0 %v2140
    %6942 = vmatpush1.bf16.msra.mxu0 %v2139
    %6943 = vmatprep.subr.bf16.mxu0 %v2153
    %6944 = vmatpush1.bf16.msra.mxu0 %v2152
    %6945 = vmatprep.subr.bf16.mxu0 %v2166
    %6946 = vmatpush1.bf16.msra.mxu0 %v2165
    %6947 = vmatprep.subr.bf16.mxu0 %v2179
    %6948 = vmatpush1.bf16.msra.mxu0 %v2178
    %6949 = vmatprep.subr.bf16.mxu0 %v2192
    %6950 = vmatpush1.bf16.msra.mxu0 %v2191
    %6951 = vmatprep.subr.bf16.mxu0 %v2205
    %6952 = vmatpush1.bf16.msra.mxu0 %v2204
    %6953 = vmatprep.subr.bf16.mxu0 %v2218
    %6954 = vmatpush1.bf16.msra.mxu0 %v2217
    %6955 = vmatprep.subr.bf16.mxu0 %v2231
    %6956 = vmatpush1.bf16.msra.mxu0 %v2230
    %6957 = vmatprep.subr.bf16.mxu0 %v2244
    %6958 = vmatpush1.bf16.msra.mxu0 %v2243
    %6959 = vmatprep.subr.bf16.mxu0 %v2257
    %6960 = vmatpush1.bf16.msra.mxu0 %v2256
    %6961 = vmatprep.subr.bf16.mxu0 %v2270
    %6962 = vmatpush1.bf16.msra.mxu0 %v2269
    %6963 = vmatprep.subr.bf16.mxu0 %v2283
    %6964 = vmatpush1.bf16.msra.mxu0 %v2282
    %6965 = vmatprep.subr.bf16.mxu0 %v2296
    %6966 = vmatpush1.bf16.msra.mxu0 %v2295
    %6967 = vmatprep.subr.bf16.mxu0 %v2309
    %6968 = vmatpush1.bf16.msra.mxu0 %v2308
    %6969 = vmatprep.mubr.bf16.mxu0 %v6524
    %6970 = vmatmul.mubr.bf16.gmra.mrb[0].mxu0 %v6523
    %v6971 = vpop.f32.mrb[0].mxu0
    %v6972 = vadd.f32 0.0, %v6971
    %v6973 = vpop.f32.mrb[0].mxu0
    %v6974 = vadd.f32 0.0, %v6973
    %v6975 = vpop.f32.mrb[0].mxu0
    %v6976 = vpop.f32.mrb[0].mxu0
    %6977 = vdwg.mxu0
    %6978 = vmatprep.subr.bf16.mxu0 %v2322
    %6979 = vmatpush1.bf16.msra.mxu0 %v2321
    %6980 = vmatprep.subr.bf16.mxu0 %v2335
    %6981 = vmatpush1.bf16.msra.mxu0 %v2334
    %6982 = vmatprep.subr.bf16.mxu0 %v2348
    %6983 = vmatpush1.bf16.msra.mxu0 %v2347
    %6984 = vmatprep.subr.bf16.mxu0 %v2361
    %6985 = vmatpush1.bf16.msra.mxu0 %v2360
    %6986 = vmatprep.subr.bf16.mxu0 %v2374
    %6987 = vmatpush1.bf16.msra.mxu0 %v2373
    %6988 = vmatprep.subr.bf16.mxu0 %v2387
    %6989 = vmatpush1.bf16.msra.mxu0 %v2386
    %6990 = vmatprep.subr.bf16.mxu0 %v2400
    %6991 = vmatpush1.bf16.msra.mxu0 %v2399
    %6992 = vmatprep.subr.bf16.mxu0 %v2413
    %6993 = vmatpush1.bf16.msra.mxu0 %v2412
    %6994 = vmatprep.subr.bf16.mxu0 %v2426
    %6995 = vmatpush1.bf16.msra.mxu0 %v2425
    %6996 = vmatprep.subr.bf16.mxu0 %v2439
    %6997 = vmatpush1.bf16.msra.mxu0 %v2438
    %6998 = vmatprep.subr.bf16.mxu0 %v2452
    %6999 = vmatpush1.bf16.msra.mxu0 %v2451
    %7000 = vmatprep.subr.bf16.mxu0 %v2465
    %7001 = vmatpush1.bf16.msra.mxu0 %v2464
    %7002 = vmatprep.subr.bf16.mxu0 %v2478
    %7003 = vmatpush1.bf16.msra.mxu0 %v2477
    %7004 = vmatprep.subr.bf16.mxu0 %v2491
    %7005 = vmatpush1.bf16.msra.mxu0 %v2490
    %7006 = vmatprep.subr.bf16.mxu0 %v2504
    %7007 = vmatpush1.bf16.msra.mxu0 %v2503
    %7008 = vmatprep.subr.bf16.mxu0 %v2517
    %7009 = vmatpush1.bf16.msra.mxu0 %v2516
    %7010 = vmatprep.mubr.bf16.mxu0 %v6526
    %7011 = vmatmul.mubr.bf16.gmra.mrb[0].mxu0 %v6525
    %v7012 = vpop.f32.mrb[0].mxu0
    %v7013 = vadd.f32 %v6972, %v7012
    %v7014 = vpop.f32.mrb[0].mxu0
    %v7015 = vadd.f32 %v6974, %v7014
    %v7016 = vpop.f32.mrb[0].mxu0
    %v7017 = vpop.f32.mrb[0].mxu0
    %7018 = vdwg.mxu0
    %7019 = vmatprep.subr.bf16.mxu0 0
    %7020 = vmatpush1.bf16.msra.mxu0 %v2115
    %7021 = vmatprep.subr.bf16.mxu0 0
    %7022 = vmatpush1.bf16.msra.mxu0 %v2128
    %7023 = vmatprep.subr.bf16.mxu0 0
    %7024 = vmatpush1.bf16.msra.mxu0 %v2141
    %7025 = vmatprep.subr.bf16.mxu0 0
    %7026 = vmatpush1.bf16.msra.mxu0 %v2154
    %7027 = vmatprep.subr.bf16.mxu0 0
    %7028 = vmatpush1.bf16.msra.mxu0 %v2167
    %7029 = vmatprep.subr.bf16.mxu0 0
    %7030 = vmatpush1.bf16.msra.mxu0 %v2180
    %7031 = vmatprep.subr.bf16.mxu0 0
    %7032 = vmatpush1.bf16.msra.mxu0 %v2193
    %7033 = vmatprep.subr.bf16.mxu0 0
    %7034 = vmatpush1.bf16.msra.mxu0 %v2206
    %7035 = vmatprep.subr.bf16.mxu0 0
    %7036 = vmatpush1.bf16.msra.mxu0 %v2219
    %7037 = vmatprep.subr.bf16.mxu0 0
    %7038 = vmatpush1.bf16.msra.mxu0 %v2232
    %7039 = vmatprep.subr.bf16.mxu0 0
    %7040 = vmatpush1.bf16.msra.mxu0 %v2245
    %7041 = vmatprep.subr.bf16.mxu0 0
    %7042 = vmatpush1.bf16.msra.mxu0 %v2258
    %7043 = vmatprep.subr.bf16.mxu0 0
    %7044 = vmatpush1.bf16.msra.mxu0 %v2271
    %7045 = vmatprep.subr.bf16.mxu0 0
    %7046 = vmatpush1.bf16.msra.mxu0 %v2284
    %7047 = vmatprep.subr.bf16.mxu0 0
    %7048 = vmatpush1.bf16.msra.mxu0 %v2297
    %7049 = vmatprep.subr.bf16.mxu0 0
    %7050 = vmatpush1.bf16.msra.mxu0 %v2310
    %7051 = vmatprep.mubr.bf16.mxu0 %v6524
    %7052 = vmatmul.mubr.bf16.gmra.mrb[0].mxu0 %v6523
    %v7053 = vpop.f32.mrb[0].mxu0
    %v7054 = vadd.f32 0.0, %v7053
    %v7055 = vpop.f32.mrb[0].mxu0
    %v7056 = vpop.f32.mrb[0].mxu0
    %v7057 = vpop.f32.mrb[0].mxu0
    %7058 = vdwg.mxu0
    %7059 = vmatprep.subr.bf16.mxu0 0
    %7060 = vmatpush1.bf16.msra.mxu0 %v2323
    %7061 = vmatprep.subr.bf16.mxu0 0
    %7062 = vmatpush1.bf16.msra.mxu0 %v2336
    %7063 = vmatprep.subr.bf16.mxu0 0
    %7064 = vmatpush1.bf16.msra.mxu0 %v2349
    %7065 = vmatprep.subr.bf16.mxu0 0
    %7066 = vmatpush1.bf16.msra.mxu0 %v2362
    %7067 = vmatprep.subr.bf16.mxu0 0
    %7068 = vmatpush1.bf16.msra.mxu0 %v2375
    %7069 = vmatprep.subr.bf16.mxu0 0
    %7070 = vmatpush1.bf16.msra.mxu0 %v2388
    %7071 = vmatprep.subr.bf16.mxu0 0
    %7072 = vmatpush1.bf16.msra.mxu0 %v2401
    %7073 = vmatprep.subr.bf16.mxu0 0
    %7074 = vmatpush1.bf16.msra.mxu0 %v2414
    %7075 = vmatprep.subr.bf16.mxu0 0
    %7076 = vmatpush1.bf16.msra.mxu0 %v2427
    %7077 = vmatprep.subr.bf16.mxu0 0
    %7078 = vmatpush1.bf16.msra.mxu0 %v2440
    %7079 = vmatprep.subr.bf16.mxu0 0
    %7080 = vmatpush1.bf16.msra.mxu0 %v2453
    %7081 = vmatprep.subr.bf16.mxu0 0
    %7082 = vmatpush1.bf16.msra.mxu0 %v2466
    %7083 = vmatprep.subr.bf16.mxu0 0
    %7084 = vmatpush1.bf16.msra.mxu0 %v2479
    %7085 = vmatprep.subr.bf16.mxu0 0
    %7086 = vmatpush1.bf16.msra.mxu0 %v2492
    %7087 = vmatprep.subr.bf16.mxu0 0
    %7088 = vmatpush1.bf16.msra.mxu0 %v2505
    %7089 = vmatprep.subr.bf16.mxu0 0
    %7090 = vmatpush1.bf16.msra.mxu0 %v2518
    %7091 = vmatprep.mubr.bf16.mxu0 %v6526
    %7092 = vmatmul.mubr.bf16.gmra.mrb[0].mxu0 %v6525
    %v7093 = vpop.f32.mrb[0].mxu0
    %v7094 = vadd.f32 %v7054, %v7093
    %v7095 = vpop.f32.mrb[0].mxu0
    %v7096 = vpop.f32.mrb[0].mxu0
    %v7097 = vpop.f32.mrb[0].mxu0
    %7098 = vdwg.mxu0
    %v7099 = vld [vmem:[%s2084] sm:$0xff]
    %v7100 = vld [vmem:[%s2084 + $0x8] sm:$0xff]
    %v7101 = vld [vmem:[%s2084 + $0x10] sm:$0xff]
    %v7102 = vld [vmem:[%s2084 + $0x18] sm:$0xff]
    %v7103 = vld [vmem:[%s2084 + $0x20] sm:$0xff]
    %v7104 = vld [vmem:[%s2084 + $0x28] sm:$0xff]
    %v7105 = vld [vmem:[%s2084 + $0x30] sm:$0xff]
    %v7106 = vld [vmem:[%s2084 + $0x38] sm:$0xff]
    %v7107 = vld [vmem:[%s2084 + $0x40] sm:$0xff]
    %v7108 = vld [vmem:[%s2084 + $0x48] sm:$0xff]
    %v7109 = vld [vmem:[%s2084 + $0x50] sm:$0xff]
    %v7110 = vld [vmem:[%s2084 + $0x58] sm:$0xff]
    %v7111 = vld [vmem:[%s2084 + $0x60] sm:$0xff]
    %v7112 = vadd.f32 %v7099, %v6603
    %v7113 = vadd.f32 %v7100, %v6605
    %v7114 = vadd.f32 %v7101, %v6685
    %v7115 = vmul.f32 %v7112, 0.5
    %v7116 = vmul.f32 %v7113, 0.5
    %v7117 = vmul.f32 %v7114, 0.5
    %v7118 = vtanh.pop %v7115
    %v7119 = vtanh.pop %v7116
    %v7120 = vtanh.pop %v7117
    %v7121 = vmul.f32 %v7118, 0.5
    %v7122 = vmul.f32 %v7119, 0.5
    %v7123 = vmul.f32 %v7120, 0.5
    %v7124 = vadd.f32 %v7121, 0.5
    %v7125 = vadd.f32 %v7122, 0.5
    %v7126 = vadd.f32 %v7123, 0.5
    %v7127 = vadd.f32 %v7102, %v6687
    %v7128 = vadd.f32 %v7103, %v6767
    %v7129 = vadd.f32 %v7104, %v6769
    %v7130 = vmul.f32 %v7127, 0.5
    %v7131 = vmul.f32 %v7128, 0.5
    %v7132 = vmul.f32 %v7129, 0.5
    %v7133 = vtanh.pop %v7130
    %v7134 = vtanh.pop %v7131
    %v7135 = vtanh.pop %v7132
    %v7136 = vmul.f32 %v7133, 0.5
    %v7137 = vmul.f32 %v7134, 0.5
    %v7138 = vmul.f32 %v7135, 0.5
    %v7139 = vadd.f32 %v7136, 0.5
    %v7140 = vadd.f32 %v7137, 0.5
    %v7141 = vadd.f32 %v7138, 0.5
    %v7142 = vadd.f32 %v6849, %v3138
    %v7143 = vadd.f32 %v6851, %v3142
    %v7144 = vadd.f32 %v6931, %v3146
    %v7145 = vmul.f32 %v7124, %v7142
    %v7146 = vmul.f32 %v7125, %v7143
    %v7147 = vmul.f32 %v7126, %v7144
    %v7148 = vadd.f32 %v7105, %v7145
    %v7149 = vadd.f32 %v7106, %v7146
    %v7150 = vadd.f32 %v7107, %v7147
    %v7151 = vtanh.pop %v7148
    %v7152 = vtanh.pop %v7149
    %v7153 = vtanh.pop %v7150
    %v7154 = vsub.f32 %v6494, %v7151
    %v7155 = vsub.f32 %v6495, %v7152
    %v7156 = vsub.f32 %v6496, %v7153
    %v7157 = vmul.f32 %v7139, %v7154
    %v7158 = vmul.f32 %v7140, %v7155
    %v7159 = vmul.f32 %v7141, %v7156
    %v7160 = vadd.f32 %v7151, %v7157
    %v7161 = vadd.f32 %v7152, %v7158
    %v7162 = vadd.f32 %v7153, %v7159
    %v7163 = vadd.f32 %v7108, %v6933
    %v7164 = vadd.f32 %v7109, %v7013
    %v7165 = vadd.f32 %v7110, %v7015
    %v7166 = vadd.f32 %v7111, %v7094
    %v7167 = vmul.f32 %v7163, 0.5
    %v7168 = vtanh.pop %v7167
    %v7169 = vmul.f32 %v7168, 0.5
    %v7170 = vadd.f32 %v7169, 0.5
    %v7171 = vmul.f32 %v7164, 0.5
    %v7172 = vtanh.pop %v7171
    %v7173 = vmul.f32 %v7172, 0.5
    %v7174 = vadd.f32 %v7173, 0.5
    %v7175 = vtanh.pop %v7165
    %v7176 = vmul.f32 %v7166, 0.5
    %v7177 = vtanh.pop %v7176
    %v7178 = vmul.f32 %v7177, 0.5
    %v7179 = vadd.f32 %v7178, 0.5
    %v7180 = vmul.f32 %v7174, %v6516
    %v7181 = vmul.f32 %v7170, %v7175
    %v7182 = vadd.f32 %v7180, %v7181
    %v7183 = vtanh.pop %v7182
    %v7184 = vmul.f32 %v7179, %v7183
    %v7185 = vmax.f32 %v6519, %v7160
    %v7186 = vmax.f32 %v6520, %v7161
    %v7187 = vmax.f32 %v6521, %v7162
    %v7188 = vmax.f32 %v6522, %v7184
    %v7189 = vpack.c.bf16 %v7160, %v7160
    %v7190 = vpack.c.bf16 %v7161, %v7161
    %v7191 = vpack.c.bf16 %v7162, %v7162
    %v7192 = vpack.c.bf16 %v7184, %v7184
    %7193 = vmatprep.subr.bf16.mxu0 %v2104
    %7194 = vmatpush1.bf16.msra.mxu0 %v2103
    %7195 = vmatprep.subr.bf16.mxu0 %v2117
    %7196 = vmatpush1.bf16.msra.mxu0 %v2116
    %7197 = vmatprep.subr.bf16.mxu0 %v2130
    %7198 = vmatpush1.bf16.msra.mxu0 %v2129
    %7199 = vmatprep.subr.bf16.mxu0 %v2143
    %7200 = vmatpush1.bf16.msra.mxu0 %v2142
    %7201 = vmatprep.subr.bf16.mxu0 %v2156
    %7202 = vmatpush1.bf16.msra.mxu0 %v2155
    %7203 = vmatprep.subr.bf16.mxu0 %v2169
    %7204 = vmatpush1.bf16.msra.mxu0 %v2168
    %7205 = vmatprep.subr.bf16.mxu0 %v2182
    %7206 = vmatpush1.bf16.msra.mxu0 %v2181
    %7207 = vmatprep.subr.bf16.mxu0 %v2195
    %7208 = vmatpush1.bf16.msra.mxu0 %v2194
    %7209 = vmatprep.subr.bf16.mxu0 %v2208
    %7210 = vmatpush1.bf16.msra.mxu0 %v2207
    %7211 = vmatprep.subr.bf16.mxu0 %v2221
    %7212 = vmatpush1.bf16.msra.mxu0 %v2220
    %7213 = vmatprep.subr.bf16.mxu0 %v2234
    %7214 = vmatpush1.bf16.msra.mxu0 %v2233
    %7215 = vmatprep.subr.bf16.mxu0 %v2247
    %7216 = vmatpush1.bf16.msra.mxu0 %v2246
    %7217 = vmatprep.subr.bf16.mxu0 %v2260
    %7218 = vmatpush1.bf16.msra.mxu0 %v2259
    %7219 = vmatprep.subr.bf16.mxu0 %v2273
    %7220 = vmatpush1.bf16.msra.mxu0 %v2272
    %7221 = vmatprep.subr.bf16.mxu0 %v2286
    %7222 = vmatpush1.bf16.msra.mxu0 %v2285
    %7223 = vmatprep.subr.bf16.mxu0 %v2299
    %7224 = vmatpush1.bf16.msra.mxu0 %v2298
    %7225 = vmatprep.mubr.bf16.mxu0 %v7190
    %7226 = vmatmul.mubr.bf16.gmra.mrb[0].mxu0 %v7189
    %v7227 = vpop.f32.mrb[0].mxu0
    %v7228 = vadd.f32 0.0, %v7227
    %v7229 = vpop.f32.mrb[0].mxu0
    %v7230 = vadd.f32 0.0, %v7229
    %v7231 = vpop.f32.mrb[0].mxu0
    %v7232 = vpop.f32.mrb[0].mxu0
    %7233 = vdwg.mxu0
    %7234 = vmatprep.subr.bf16.mxu0 %v2312
    %7235 = vmatpush1.bf16.msra.mxu0 %v2311
    %7236 = vmatprep.subr.bf16.mxu0 %v2325
    %7237 = vmatpush1.bf16.msra.mxu0 %v2324
    %7238 = vmatprep.subr.bf16.mxu0 %v2338
    %7239 = vmatpush1.bf16.msra.mxu0 %v2337
    %7240 = vmatprep.subr.bf16.mxu0 %v2351
    %7241 = vmatpush1.bf16.msra.mxu0 %v2350
    %7242 = vmatprep.subr.bf16.mxu0 %v2364
    %7243 = vmatpush1.bf16.msra.mxu0 %v2363
    %7244 = vmatprep.subr.bf16.mxu0 %v2377
    %7245 = vmatpush1.bf16.msra.mxu0 %v2376
    %7246 = vmatprep.subr.bf16.mxu0 %v2390
    %7247 = vmatpush1.bf16.msra.mxu0 %v2389
    %7248 = vmatprep.subr.bf16.mxu0 %v2403
    %7249 = vmatpush1.bf16.msra.mxu0 %v2402
    %7250 = vmatprep.subr.bf16.mxu0 %v2416
    %7251 = vmatpush1.bf16.msra.mxu0 %v2415
    %7252 = vmatprep.subr.bf16.mxu0 %v2429
    %7253 = vmatpush1.bf16.msra.mxu0 %v2428
    %7254 = vmatprep.subr.bf16.mxu0 %v2442
    %7255 = vmatpush1.bf16.msra.mxu0 %v2441
    %7256 = vmatprep.subr.bf16.mxu0 %v2455
    %7257 = vmatpush1.bf16.msra.mxu0 %v2454
    %7258 = vmatprep.subr.bf16.mxu0 %v2468
    %7259 = vmatpush1.bf16.msra.mxu0 %v2467
    %7260 = vmatprep.subr.bf16.mxu0 %v2481
    %7261 = vmatpush1.bf16.msra.mxu0 %v2480
    %7262 = vmatprep.subr.bf16.mxu0 %v2494
    %7263 = vmatpush1.bf16.msra.mxu0 %v2493
    %7264 = vmatprep.subr.bf16.mxu0 %v2507
    %7265 = vmatpush1.bf16.msra.mxu0 %v2506
    %7266 = vmatprep.mubr.bf16.mxu0 %v7192
    %7267 = vmatmul.mubr.bf16.gmra.mrb[0].mxu0 %v7191
    %v7268 = vpop.f32.mrb[0].mxu0
    %v7269 = vadd.f32 %v7228, %v7268
    %v7270 = vpop.f32.mrb[0].mxu0
    %v7271 = vadd.f32 %v7230, %v7270
    %v7272 = vpop.f32.mrb[0].mxu0
    %v7273 = vpop.f32.mrb[0].mxu0
    %7274 = vdwg.mxu0
    %7275 = vmatprep.subr.bf16.mxu0 %v2106
    %7276 = vmatpush1.bf16.msra.mxu0 %v2105
    %7277 = vmatprep.subr.bf16.mxu0 %v2119
    %7278 = vmatpush1.bf16.msra.mxu0 %v2118
    %7279 = vmatprep.subr.bf16.mxu0 %v2132
    %7280 = vmatpush1.bf16.msra.mxu0 %v2131
    %7281 = vmatprep.subr.bf16.mxu0 %v2145
    %7282 = vmatpush1.bf16.msra.mxu0 %v2144
    %7283 = vmatprep.subr.bf16.mxu0 %v2158
    %7284 = vmatpush1.bf16.msra.mxu0 %v2157
    %7285 = vmatprep.subr.bf16.mxu0 %v2171
    %7286 = vmatpush1.bf16.msra.mxu0 %v2170
    %7287 = vmatprep.subr.bf16.mxu0 %v2184
    %7288 = vmatpush1.bf16.msra.mxu0 %v2183
    %7289 = vmatprep.subr.bf16.mxu0 %v2197
    %7290 = vmatpush1.bf16.msra.mxu0 %v2196
    %7291 = vmatprep.subr.bf16.mxu0 %v2210
    %7292 = vmatpush1.bf16.msra.mxu0 %v2209
    %7293 = vmatprep.subr.bf16.mxu0 %v2223
    %7294 = vmatpush1.bf16.msra.mxu0 %v2222
    %7295 = vmatprep.subr.bf16.mxu0 %v2236
    %7296 = vmatpush1.bf16.msra.mxu0 %v2235
    %7297 = vmatprep.subr.bf16.mxu0 %v2249
    %7298 = vmatpush1.bf16.msra.mxu0 %v2248
    %7299 = vmatprep.subr.bf16.mxu0 %v2262
    %7300 = vmatpush1.bf16.msra.mxu0 %v2261
    %7301 = vmatprep.subr.bf16.mxu0 %v2275
    %7302 = vmatpush1.bf16.msra.mxu0 %v2274
    %7303 = vmatprep.subr.bf16.mxu0 %v2288
    %7304 = vmatpush1.bf16.msra.mxu0 %v2287
    %7305 = vmatprep.subr.bf16.mxu0 %v2301
    %7306 = vmatpush1.bf16.msra.mxu0 %v2300
    %7307 = vmatprep.mubr.bf16.mxu0 %v7190
    %7308 = vmatmul.mubr.bf16.gmra.mrb[0].mxu0 %v7189
    %v7309 = vpop.f32.mrb[0].mxu0
    %v7310 = vadd.f32 0.0, %v7309
    %v7311 = vpop.f32.mrb[0].mxu0
    %v7312 = vadd.f32 0.0, %v7311
    %v7313 = vpop.f32.mrb[0].mxu0
    %v7314 = vpop.f32.mrb[0].mxu0
    %7315 = vdwg.mxu0
    %7316 = vmatprep.subr.bf16.mxu0 %v2314
    %7317 = vmatpush1.bf16.msra.mxu0 %v2313
    %7318 = vmatprep.subr.bf16.mxu0 %v2327
    %7319 = vmatpush1.bf16.msra.mxu0 %v2326
    %7320 = vmatprep.subr.bf16.mxu0 %v2340
    %7321 = vmatpush1.bf16.msra.mxu0 %v2339
    %7322 = vmatprep.subr.bf16.mxu0 %v2353
    %7323 = vmatpush1.bf16.msra.mxu0 %v2352
    %7324 = vmatprep.subr.bf16.mxu0 %v2366
    %7325 = vmatpush1.bf16.msra.mxu0 %v2365
    %7326 = vmatprep.subr.bf16.mxu0 %v2379
    %7327 = vmatpush1.bf16.msra.mxu0 %v2378
    %7328 = vmatprep.subr.bf16.mxu0 %v2392
    %7329 = vmatpush1.bf16.msra.mxu0 %v2391
    %7330 = vmatprep.subr.bf16.mxu0 %v2405
    %7331 = vmatpush1.bf16.msra.mxu0 %v2404
    %7332 = vmatprep.subr.bf16.mxu0 %v2418
    %7333 = vmatpush1.bf16.msra.mxu0 %v2417
    %7334 = vmatprep.subr.bf16.mxu0 %v2431
    %7335 = vmatpush1.bf16.msra.mxu0 %v2430
    %7336 = vmatprep.subr.bf16.mxu0 %v2444
    %7337 = vmatpush1.bf16.msra.mxu0 %v2443
    %7338 = vmatprep.subr.bf16.mxu0 %v2457
    %7339 = vmatpush1.bf16.msra.mxu0 %v2456
    %7340 = vmatprep.subr.bf16.mxu0 %v2470
    %7341 = vmatpush1.bf16.msra.mxu0 %v2469
    %7342 = vmatprep.subr.bf16.mxu0 %v2483
    %7343 = vmatpush1.bf16.msra.mxu0 %v2482
    %7344 = vmatprep.subr.bf16.mxu0 %v2496
    %7345 = vmatpush1.bf16.msra.mxu0 %v2495
    %7346 = vmatprep.subr.bf16.mxu0 %v2509
    %7347 = vmatpush1.bf16.msra.mxu0 %v2508
    %7348 = vmatprep.mubr.bf16.mxu0 %v7192
    %7349 = vmatmul.mubr.bf16.gmra.mrb[0].mxu0 %v7191
    %v7350 = vpop.f32.mrb[0].mxu0
    %v7351 = vadd.f32 %v7310, %v7350
    %v7352 = vpop.f32.mrb[0].mxu0
    %v7353 = vadd.f32 %v7312, %v7352
    %v7354 = vpop.f32.mrb[0].mxu0
    %v7355 = vpop.f32.mrb[0].mxu0
    %7356 = vdwg.mxu0
    %7357 = vmatprep.subr.bf16.mxu0 %v2108
    %7358 = vmatpush1.bf16.msra.mxu0 %v2107
    %7359 = vmatprep.subr.bf16.mxu0 %v2121
    %7360 = vmatpush1.bf16.msra.mxu0 %v2120
    %7361 = vmatprep.subr.bf16.mxu0 %v2134
    %7362 = vmatpush1.bf16.msra.mxu0 %v2133
    %7363 = vmatprep.subr.bf16.mxu0 %v2147
    %7364 = vmatpush1.bf16.msra.mxu0 %v2146
    %7365 = vmatprep.subr.bf16.mxu0 %v2160
    %7366 = vmatpush1.bf16.msra.mxu0 %v2159
    %7367 = vmatprep.subr.bf16.mxu0 %v2173
    %7368 = vmatpush1.bf16.msra.mxu0 %v2172
    %7369 = vmatprep.subr.bf16.mxu0 %v2186
    %7370 = vmatpush1.bf16.msra.mxu0 %v2185
    %7371 = vmatprep.subr.bf16.mxu0 %v2199
    %7372 = vmatpush1.bf16.msra.mxu0 %v2198
    %7373 = vmatprep.subr.bf16.mxu0 %v2212
    %7374 = vmatpush1.bf16.msra.mxu0 %v2211
    %7375 = vmatprep.subr.bf16.mxu0 %v2225
    %7376 = vmatpush1.bf16.msra.mxu0 %v2224
    %7377 = vmatprep.subr.bf16.mxu0 %v2238
    %7378 = vmatpush1.bf16.msra.mxu0 %v2237
    %7379 = vmatprep.subr.bf16.mxu0 %v2251
    %7380 = vmatpush1.bf16.msra.mxu0 %v2250
    %7381 = vmatprep.subr.bf16.mxu0 %v2264
    %7382 = vmatpush1.bf16.msra.mxu0 %v2263
    %7383 = vmatprep.subr.bf16.mxu0 %v2277
    %7384 = vmatpush1.bf16.msra.mxu0 %v2276
    %7385 = vmatprep.subr.bf16.mxu0 %v2290
    %7386 = vmatpush1.bf16.msra.mxu0 %v2289
    %7387 = vmatprep.subr.bf16.mxu0 %v2303
    %7388 = vmatpush1.bf16.msra.mxu0 %v2302
    %7389 = vmatprep.mubr.bf16.mxu0 %v7190
    %7390 = vmatmul.mubr.bf16.gmra.mrb[0].mxu0 %v7189
    %v7391 = vpop.f32.mrb[0].mxu0
    %v7392 = vadd.f32 0.0, %v7391
    %v7393 = vpop.f32.mrb[0].mxu0
    %v7394 = vadd.f32 0.0, %v7393
    %v7395 = vpop.f32.mrb[0].mxu0
    %v7396 = vpop.f32.mrb[0].mxu0
    %7397 = vdwg.mxu0
    %7398 = vmatprep.subr.bf16.mxu0 %v2316
    %7399 = vmatpush1.bf16.msra.mxu0 %v2315
    %7400 = vmatprep.subr.bf16.mxu0 %v2329
    %7401 = vmatpush1.bf16.msra.mxu0 %v2328
    %7402 = vmatprep.subr.bf16.mxu0 %v2342
    %7403 = vmatpush1.bf16.msra.mxu0 %v2341
    %7404 = vmatprep.subr.bf16.mxu0 %v2355
    %7405 = vmatpush1.bf16.msra.mxu0 %v2354
    %7406 = vmatprep.subr.bf16.mxu0 %v2368
    %7407 = vmatpush1.bf16.msra.mxu0 %v2367
    %7408 = vmatprep.subr.bf16.mxu0 %v2381
    %7409 = vmatpush1.bf16.msra.mxu0 %v2380
    %7410 = vmatprep.subr.bf16.mxu0 %v2394
    %7411 = vmatpush1.bf16.msra.mxu0 %v2393
    %7412 = vmatprep.subr.bf16.mxu0 %v2407
    %7413 = vmatpush1.bf16.msra.mxu0 %v2406
    %7414 = vmatprep.subr.bf16.mxu0 %v2420
    %7415 = vmatpush1.bf16.msra.mxu0 %v2419
    %7416 = vmatprep.subr.bf16.mxu0 %v2433
    %7417 = vmatpush1.bf16.msra.mxu0 %v2432
    %7418 = vmatprep.subr.bf16.mxu0 %v2446
    %7419 = vmatpush1.bf16.msra.mxu0 %v2445
    %7420 = vmatprep.subr.bf16.mxu0 %v2459
    %7421 = vmatpush1.bf16.msra.mxu0 %v2458
    %7422 = vmatprep.subr.bf16.mxu0 %v2472
    %7423 = vmatpush1.bf16.msra.mxu0 %v2471
    %7424 = vmatprep.subr.bf16.mxu0 %v2485
    %7425 = vmatpush1.bf16.msra.mxu0 %v2484
    %7426 = vmatprep.subr.bf16.mxu0 %v2498
    %7427 = vmatpush1.bf16.msra.mxu0 %v2497
    %7428 = vmatprep.subr.bf16.mxu0 %v2511
    %7429 = vmatpush1.bf16.msra.mxu0 %v2510
    %7430 = vmatprep.mubr.bf16.mxu0 %v7192
    %7431 = vmatmul.mubr.bf16.gmra.mrb[0].mxu0 %v7191
    %v7432 = vpop.f32.mrb[0].mxu0
    %v7433 = vadd.f32 %v7392, %v7432
    %v7434 = vpop.f32.mrb[0].mxu0
    %v7435 = vadd.f32 %v7394, %v7434
    %v7436 = vpop.f32.mrb[0].mxu0
    %v7437 = vpop.f32.mrb[0].mxu0
    %7438 = vdwg.mxu0
    %7439 = vmatprep.subr.bf16.mxu0 %v2110
    %7440 = vmatpush1.bf16.msra.mxu0 %v2109
    %7441 = vmatprep.subr.bf16.mxu0 %v2123
    %7442 = vmatpush1.bf16.msra.mxu0 %v2122
    %7443 = vmatprep.subr.bf16.mxu0 %v2136
    %7444 = vmatpush1.bf16.msra.mxu0 %v2135
    %7445 = vmatprep.subr.bf16.mxu0 %v2149
    %7446 = vmatpush1.bf16.msra.mxu0 %v2148
    %7447 = vmatprep.subr.bf16.mxu0 %v2162
    %7448 = vmatpush1.bf16.msra.mxu0 %v2161
    %7449 = vmatprep.subr.bf16.mxu0 %v2175
    %7450 = vmatpush1.bf16.msra.mxu0 %v2174
    %7451 = vmatprep.subr.bf16.mxu0 %v2188
    %7452 = vmatpush1.bf16.msra.mxu0 %v2187
    %7453 = vmatprep.subr.bf16.mxu0 %v2201
    %7454 = vmatpush1.bf16.msra.mxu0 %v2200
    %7455 = vmatprep.subr.bf16.mxu0 %v2214
    %7456 = vmatpush1.bf16.msra.mxu0 %v2213
    %7457 = vmatprep.subr.bf16.mxu0 %v2227
    %7458 = vmatpush1.bf16.msra.mxu0 %v2226
    %7459 = vmatprep.subr.bf16.mxu0 %v2240
    %7460 = vmatpush1.bf16.msra.mxu0 %v2239
    %7461 = vmatprep.subr.bf16.mxu0 %v2253
    %7462 = vmatpush1.bf16.msra.mxu0 %v2252
    %7463 = vmatprep.subr.bf16.mxu0 %v2266
    %7464 = vmatpush1.bf16.msra.mxu0 %v2265
    %7465 = vmatprep.subr.bf16.mxu0 %v2279
    %7466 = vmatpush1.bf16.msra.mxu0 %v2278
    %7467 = vmatprep.subr.bf16.mxu0 %v2292
    %7468 = vmatpush1.bf16.msra.mxu0 %v2291
    %7469 = vmatprep.subr.bf16.mxu0 %v2305
    %7470 = vmatpush1.bf16.msra.mxu0 %v2304
    %7471 = vmatprep.mubr.bf16.mxu0 %v7190
    %7472 = vmatmul.mubr.bf16.gmra.mrb[0].mxu0 %v7189
    %v7473 = vpop.f32.mrb[0].mxu0
    %v7474 = vadd.f32 0.0, %v7473
    %v7475 = vpop.f32.mrb[0].mxu0
    %v7476 = vadd.f32 0.0, %v7475
    %v7477 = vpop.f32.mrb[0].mxu0
    %v7478 = vpop.f32.mrb[0].mxu0
    %7479 = vdwg.mxu0
    %7480 = vmatprep.subr.bf16.mxu0 %v2318
    %7481 = vmatpush1.bf16.msra.mxu0 %v2317
    %7482 = vmatprep.subr.bf16.mxu0 %v2331
    %7483 = vmatpush1.bf16.msra.mxu0 %v2330
    %7484 = vmatprep.subr.bf16.mxu0 %v2344
    %7485 = vmatpush1.bf16.msra.mxu0 %v2343
    %7486 = vmatprep.subr.bf16.mxu0 %v2357
    %7487 = vmatpush1.bf16.msra.mxu0 %v2356
    %7488 = vmatprep.subr.bf16.mxu0 %v2370
    %7489 = vmatpush1.bf16.msra.mxu0 %v2369
    %7490 = vmatprep.subr.bf16.mxu0 %v2383
    %7491 = vmatpush1.bf16.msra.mxu0 %v2382
    %7492 = vmatprep.subr.bf16.mxu0 %v2396
    %7493 = vmatpush1.bf16.msra.mxu0 %v2395
    %7494 = vmatprep.subr.bf16.mxu0 %v2409
    %7495 = vmatpush1.bf16.msra.mxu0 %v2408
    %7496 = vmatprep.subr.bf16.mxu0 %v2422
    %7497 = vmatpush1.bf16.msra.mxu0 %v2421
    %7498 = vmatprep.subr.bf16.mxu0 %v2435
    %7499 = vmatpush1.bf16.msra.mxu0 %v2434
    %7500 = vmatprep.subr.bf16.mxu0 %v2448
    %7501 = vmatpush1.bf16.msra.mxu0 %v2447
    %7502 = vmatprep.subr.bf16.mxu0 %v2461
    %7503 = vmatpush1.bf16.msra.mxu0 %v2460
    %7504 = vmatprep.subr.bf16.mxu0 %v2474
    %7505 = vmatpush1.bf16.msra.mxu0 %v2473
    %7506 = vmatprep.subr.bf16.mxu0 %v2487
    %7507 = vmatpush1.bf16.msra.mxu0 %v2486
    %7508 = vmatprep.subr.bf16.mxu0 %v2500
    %7509 = vmatpush1.bf16.msra.mxu0 %v2499
    %7510 = vmatprep.subr.bf16.mxu0 %v2513
    %7511 = vmatpush1.bf16.msra.mxu0 %v2512
    %7512 = vmatprep.mubr.bf16.mxu0 %v7192
    %7513 = vmatmul.mubr.bf16.gmra.mrb[0].mxu0 %v7191
    %v7514 = vpop.f32.mrb[0].mxu0
    %v7515 = vadd.f32 %v7474, %v7514
    %v7516 = vpop.f32.mrb[0].mxu0
    %v7517 = vadd.f32 %v7476, %v7516
    %v7518 = vpop.f32.mrb[0].mxu0
    %v7519 = vpop.f32.mrb[0].mxu0
    %7520 = vdwg.mxu0
    %7521 = vmatprep.subr.bf16.mxu0 %v2112
    %7522 = vmatpush1.bf16.msra.mxu0 %v2111
    %7523 = vmatprep.subr.bf16.mxu0 %v2125
    %7524 = vmatpush1.bf16.msra.mxu0 %v2124
    %7525 = vmatprep.subr.bf16.mxu0 %v2138
    %7526 = vmatpush1.bf16.msra.mxu0 %v2137
    %7527 = vmatprep.subr.bf16.mxu0 %v2151
    %7528 = vmatpush1.bf16.msra.mxu0 %v2150
    %7529 = vmatprep.subr.bf16.mxu0 %v2164
    %7530 = vmatpush1.bf16.msra.mxu0 %v2163
    %7531 = vmatprep.subr.bf16.mxu0 %v2177
    %7532 = vmatpush1.bf16.msra.mxu0 %v2176
    %7533 = vmatprep.subr.bf16.mxu0 %v2190
    %7534 = vmatpush1.bf16.msra.mxu0 %v2189
    %7535 = vmatprep.subr.bf16.mxu0 %v2203
    %7536 = vmatpush1.bf16.msra.mxu0 %v2202
    %7537 = vmatprep.subr.bf16.mxu0 %v2216
    %7538 = vmatpush1.bf16.msra.mxu0 %v2215
    %7539 = vmatprep.subr.bf16.mxu0 %v2229
    %7540 = vmatpush1.bf16.msra.mxu0 %v2228
    %7541 = vmatprep.subr.bf16.mxu0 %v2242
    %7542 = vmatpush1.bf16.msra.mxu0 %v2241
    %7543 = vmatprep.subr.bf16.mxu0 %v2255
    %7544 = vmatpush1.bf16.msra.mxu0 %v2254
    %7545 = vmatprep.subr.bf16.mxu0 %v2268
    %7546 = vmatpush1.bf16.msra.mxu0 %v2267
    %7547 = vmatprep.subr.bf16.mxu0 %v2281
    %7548 = vmatpush1.bf16.msra.mxu0 %v2280
    %7549 = vmatprep.subr.bf16.mxu0 %v2294
    %7550 = vmatpush1.bf16.msra.mxu0 %v2293
    %7551 = vmatprep.subr.bf16.mxu0 %v2307
    %7552 = vmatpush1.bf16.msra.mxu0 %v2306
    %7553 = vmatprep.mubr.bf16.mxu0 %v7190
    %7554 = vmatmul.mubr.bf16.gmra.mrb[0].mxu0 %v7189
    %v7555 = vpop.f32.mrb[0].mxu0
    %v7556 = vadd.f32 0.0, %v7555
    %v7557 = vpop.f32.mrb[0].mxu0
    %v7558 = vadd.f32 0.0, %v7557
    %v7559 = vpop.f32.mrb[0].mxu0
    %v7560 = vpop.f32.mrb[0].mxu0
    %7561 = vdwg.mxu0
    %7562 = vmatprep.subr.bf16.mxu0 %v2320
    %7563 = vmatpush1.bf16.msra.mxu0 %v2319
    %7564 = vmatprep.subr.bf16.mxu0 %v2333
    %7565 = vmatpush1.bf16.msra.mxu0 %v2332
    %7566 = vmatprep.subr.bf16.mxu0 %v2346
    %7567 = vmatpush1.bf16.msra.mxu0 %v2345
    %7568 = vmatprep.subr.bf16.mxu0 %v2359
    %7569 = vmatpush1.bf16.msra.mxu0 %v2358
    %7570 = vmatprep.subr.bf16.mxu0 %v2372
    %7571 = vmatpush1.bf16.msra.mxu0 %v2371
    %7572 = vmatprep.subr.bf16.mxu0 %v2385
    %7573 = vmatpush1.bf16.msra.mxu0 %v2384
    %7574 = vmatprep.subr.bf16.mxu0 %v2398
    %7575 = vmatpush1.bf16.msra.mxu0 %v2397
    %7576 = vmatprep.subr.bf16.mxu0 %v2411
    %7577 = vmatpush1.bf16.msra.mxu0 %v2410
    %7578 = vmatprep.subr.bf16.mxu0 %v2424
    %7579 = vmatpush1.bf16.msra.mxu0 %v2423
    %7580 = vmatprep.subr.bf16.mxu0 %v2437
    %7581 = vmatpush1.bf16.msra.mxu0 %v2436
    %7582 = vmatprep.subr.bf16.mxu0 %v2450
    %7583 = vmatpush1.bf16.msra.mxu0 %v2449
    %7584 = vmatprep.subr.bf16.mxu0 %v2463
    %7585 = vmatpush1.bf16.msra.mxu0 %v2462
    %7586 = vmatprep.subr.bf16.mxu0 %v2476
    %7587 = vmatpush1.bf16.msra.mxu0 %v2475
    %7588 = vmatprep.subr.bf16.mxu0 %v2489
    %7589 = vmatpush1.bf16.msra.mxu0 %v2488
    %7590 = vmatprep.subr.bf16.mxu0 %v2502
    %7591 = vmatpush1.bf16.msra.mxu0 %v2501
    %7592 = vmatprep.subr.bf16.mxu0 %v2515
    %7593 = vmatpush1.bf16.msra.mxu0 %v2514
    %7594 = vmatprep.mubr.bf16.mxu0 %v7192
    %7595 = vmatmul.mubr.bf16.gmra.mrb[0].mxu0 %v7191
    %v7596 = vpop.f32.mrb[0].mxu0
    %v7597 = vadd.f32 %v7556, %v7596
    %v7598 = vpop.f32.mrb[0].mxu0
    %v7599 = vadd.f32 %v7558, %v7598
    %v7600 = vpop.f32.mrb[0].mxu0
    %v7601 = vpop.f32.mrb[0].mxu0
    %7602 = vdwg.mxu0
    %7603 = vmatprep.subr.bf16.mxu0 %v2114
    %7604 = vmatpush1.bf16.msra.mxu0 %v2113
    %7605 = vmatprep.subr.bf16.mxu0 %v2127
    %7606 = vmatpush1.bf16.msra.mxu0 %v2126
    %7607 = vmatprep.subr.bf16.mxu0 %v2140
    %7608 = vmatpush1.bf16.msra.mxu0 %v2139
    %7609 = vmatprep.subr.bf16.mxu0 %v2153
    %7610 = vmatpush1.bf16.msra.mxu0 %v2152
    %7611 = vmatprep.subr.bf16.mxu0 %v2166
    %7612 = vmatpush1.bf16.msra.mxu0 %v2165
    %7613 = vmatprep.subr.bf16.mxu0 %v2179
    %7614 = vmatpush1.bf16.msra.mxu0 %v2178
    %7615 = vmatprep.subr.bf16.mxu0 %v2192
    %7616 = vmatpush1.bf16.msra.mxu0 %v2191
    %7617 = vmatprep.subr.bf16.mxu0 %v2205
    %7618 = vmatpush1.bf16.msra.mxu0 %v2204
    %7619 = vmatprep.subr.bf16.mxu0 %v2218
    %7620 = vmatpush1.bf16.msra.mxu0 %v2217
    %7621 = vmatprep.subr.bf16.mxu0 %v2231
    %7622 = vmatpush1.bf16.msra.mxu0 %v2230
    %7623 = vmatprep.subr.bf16.mxu0 %v2244
    %7624 = vmatpush1.bf16.msra.mxu0 %v2243
    %7625 = vmatprep.subr.bf16.mxu0 %v2257
    %7626 = vmatpush1.bf16.msra.mxu0 %v2256
    %7627 = vmatprep.subr.bf16.mxu0 %v2270
    %7628 = vmatpush1.bf16.msra.mxu0 %v2269
    %7629 = vmatprep.subr.bf16.mxu0 %v2283
    %7630 = vmatpush1.bf16.msra.mxu0 %v2282
    %7631 = vmatprep.subr.bf16.mxu0 %v2296
    %7632 = vmatpush1.bf16.msra.mxu0 %v2295
    %7633 = vmatprep.subr.bf16.mxu0 %v2309
    %7634 = vmatpush1.bf16.msra.mxu0 %v2308
    %7635 = vmatprep.mubr.bf16.mxu0 %v7190
    %7636 = vmatmul.mubr.bf16.gmra.mrb[0].mxu0 %v7189
    %v7637 = vpop.f32.mrb[0].mxu0
    %v7638 = vadd.f32 0.0, %v7637
    %v7639 = vpop.f32.mrb[0].mxu0
    %v7640 = vadd.f32 0.0, %v7639
    %v7641 = vpop.f32.mrb[0].mxu0
    %v7642 = vpop.f32.mrb[0].mxu0
    %7643 = vdwg.mxu0
    %7644 = vmatprep.subr.bf16.mxu0 %v2322
    %7645 = vmatpush1.bf16.msra.mxu0 %v2321
    %7646 = vmatprep.subr.bf16.mxu0 %v2335
    %7647 = vmatpush1.bf16.msra.mxu0 %v2334
    %7648 = vmatprep.subr.bf16.mxu0 %v2348
    %7649 = vmatpush1.bf16.msra.mxu0 %v2347
    %7650 = vmatprep.subr.bf16.mxu0 %v2361
    %7651 = vmatpush1.bf16.msra.mxu0 %v2360
    %7652 = vmatprep.subr.bf16.mxu0 %v2374
    %7653 = vmatpush1.bf16.msra.mxu0 %v2373
    %7654 = vmatprep.subr.bf16.mxu0 %v2387
    %7655 = vmatpush1.bf16.msra.mxu0 %v2386
    %7656 = vmatprep.subr.bf16.mxu0 %v2400
    %7657 = vmatpush1.bf16.msra.mxu0 %v2399
    %7658 = vmatprep.subr.bf16.mxu0 %v2413
    %7659 = vmatpush1.bf16.msra.mxu0 %v2412
    %7660 = vmatprep.subr.bf16.mxu0 %v2426
    %7661 = vmatpush1.bf16.msra.mxu0 %v2425
    %7662 = vmatprep.subr.bf16.mxu0 %v2439
    %7663 = vmatpush1.bf16.msra.mxu0 %v2438
    %7664 = vmatprep.subr.bf16.mxu0 %v2452
    %7665 = vmatpush1.bf16.msra.mxu0 %v2451
    %7666 = vmatprep.subr.bf16.mxu0 %v2465
    %7667 = vmatpush1.bf16.msra.mxu0 %v2464
    %7668 = vmatprep.subr.bf16.mxu0 %v2478
    %7669 = vmatpush1.bf16.msra.mxu0 %v2477
    %7670 = vmatprep.subr.bf16.mxu0 %v2491
    %7671 = vmatpush1.bf16.msra.mxu0 %v2490
    %7672 = vmatprep.subr.bf16.mxu0 %v2504
    %7673 = vmatpush1.bf16.msra.mxu0 %v2503
    %7674 = vmatprep.subr.bf16.mxu0 %v2517
    %7675 = vmatpush1.bf16.msra.mxu0 %v2516
    %7676 = vmatprep.mubr.bf16.mxu0 %v7192
    %7677 = vmatmul.mubr.bf16.gmra.mrb[0].mxu0 %v7191
    %v7678 = vpop.f32.mrb[0].mxu0
    %v7679 = vadd.f32 %v7638, %v7678
    %v7680 = vpop.f32.mrb[0].mxu0
    %v7681 = vadd.f32 %v7640, %v7680
    %v7682 = vpop.f32.mrb[0].mxu0
    %v7683 = vpop.f32.mrb[0].mxu0
    %7684 = vdwg.mxu0
    %7685 = vmatprep.subr.bf16.mxu0 0
    %7686 = vmatpush1.bf16.msra.mxu0 %v2115
    %7687 = vmatprep.subr.bf16.mxu0 0
    %7688 = vmatpush1.bf16.msra.mxu0 %v2128
    %7689 = vmatprep.subr.bf16.mxu0 0
    %7690 = vmatpush1.bf16.msra.mxu0 %v2141
    %7691 = vmatprep.subr.bf16.mxu0 0
    %7692 = vmatpush1.bf16.msra.mxu0 %v2154
    %7693 = vmatprep.subr.bf16.mxu0 0
    %7694 = vmatpush1.bf16.msra.mxu0 %v2167
    %7695 = vmatprep.subr.bf16.mxu0 0
    %7696 = vmatpush1.bf16.msra.mxu0 %v2180
    %7697 = vmatprep.subr.bf16.mxu0 0
    %7698 = vmatpush1.bf16.msra.mxu0 %v2193
    %7699 = vmatprep.subr.bf16.mxu0 0
    %7700 = vmatpush1.bf16.msra.mxu0 %v2206
    %7701 = vmatprep.subr.bf16.mxu0 0
    %7702 = vmatpush1.bf16.msra.mxu0 %v2219
    %7703 = vmatprep.subr.bf16.mxu0 0
    %7704 = vmatpush1.bf16.msra.mxu0 %v2232
    %7705 = vmatprep.subr.bf16.mxu0 0
    %7706 = vmatpush1.bf16.msra.mxu0 %v2245
    %7707 = vmatprep.subr.bf16.mxu0 0
    %7708 = vmatpush1.bf16.msra.mxu0 %v2258
    %7709 = vmatprep.subr.bf16.mxu0 0
    %7710 = vmatpush1.bf16.msra.mxu0 %v2271
    %7711 = vmatprep.subr.bf16.mxu0 0
    %7712 = vmatpush1.bf16.msra.mxu0 %v2284
    %7713 = vmatprep.subr.bf16.mxu0 0
    %7714 = vmatpush1.bf16.msra.mxu0 %v2297
    %7715 = vmatprep.subr.bf16.mxu0 0
    %7716 = vmatpush1.bf16.msra.mxu0 %v2310
    %7717 = vmatprep.mubr.bf16.mxu0 %v7190
    %7718 = vmatmul.mubr.bf16.gmra.mrb[0].mxu0 %v7189
    %v7719 = vpop.f32.mrb[0].mxu0
    %v7720 = vadd.f32 0.0, %v7719
    %v7721 = vpop.f32.mrb[0].mxu0
    %v7722 = vpop.f32.mrb[0].mxu0
    %v7723 = vpop.f32.mrb[0].mxu0
    %7724 = vdwg.mxu0
    %7725 = vmatprep.subr.bf16.mxu0 0
    %7726 = vmatpush1.bf16.msra.mxu0 %v2323
    %7727 = vmatprep.subr.bf16.mxu0 0
    %7728 = vmatpush1.bf16.msra.mxu0 %v2336
    %7729 = vmatprep.subr.bf16.mxu0 0
    %7730 = vmatpush1.bf16.msra.mxu0 %v2349
    %7731 = vmatprep.subr.bf16.mxu0 0
    %7732 = vmatpush1.bf16.msra.mxu0 %v2362
    %7733 = vmatprep.subr.bf16.mxu0 0
    %7734 = vmatpush1.bf16.msra.mxu0 %v2375
    %7735 = vmatprep.subr.bf16.mxu0 0
    %7736 = vmatpush1.bf16.msra.mxu0 %v2388
    %7737 = vmatprep.subr.bf16.mxu0 0
    %7738 = vmatpush1.bf16.msra.mxu0 %v2401
    %7739 = vmatprep.subr.bf16.mxu0 0
    %7740 = vmatpush1.bf16.msra.mxu0 %v2414
    %7741 = vmatprep.subr.bf16.mxu0 0
    %7742 = vmatpush1.bf16.msra.mxu0 %v2427
    %7743 = vmatprep.subr.bf16.mxu0 0
    %7744 = vmatpush1.bf16.msra.mxu0 %v2440
    %7745 = vmatprep.subr.bf16.mxu0 0
    %7746 = vmatpush1.bf16.msra.mxu0 %v2453
    %7747 = vmatprep.subr.bf16.mxu0 0
    %7748 = vmatpush1.bf16.msra.mxu0 %v2466
    %7749 = vmatprep.subr.bf16.mxu0 0
    %7750 = vmatpush1.bf16.msra.mxu0 %v2479
    %7751 = vmatprep.subr.bf16.mxu0 0
    %7752 = vmatpush1.bf16.msra.mxu0 %v2492
    %7753 = vmatprep.subr.bf16.mxu0 0
    %7754 = vmatpush1.bf16.msra.mxu0 %v2505
    %7755 = vmatprep.subr.bf16.mxu0 0
    %7756 = vmatpush1.bf16.msra.mxu0 %v2518
    %7757 = vmatprep.mubr.bf16.mxu0 %v7192
    %7758 = vmatmul.mubr.bf16.gmra.mrb[0].mxu0 %v7191
    %v7759 = vpop.f32.mrb[0].mxu0
    %v7760 = vadd.f32 %v7720, %v7759
    %v7761 = vpop.f32.mrb[0].mxu0
    %v7762 = vpop.f32.mrb[0].mxu0
    %v7763 = vpop.f32.mrb[0].mxu0
    %7764 = vdwg.mxu0
    %v7765 = vld [vmem:[%s2093] sm:$0xff]
    %v7766 = vld [vmem:[%s2093 + $0x8] sm:$0xff]
    %v7767 = vld [vmem:[%s2093 + $0x10] sm:$0xff]
    %v7768 = vld [vmem:[%s2093 + $0x18] sm:$0xff]
    %v7769 = vld [vmem:[%s2093 + $0x20] sm:$0xff]
    %v7770 = vld [vmem:[%s2093 + $0x28] sm:$0xff]
    %v7771 = vld [vmem:[%s2093 + $0x30] sm:$0xff]
    %v7772 = vld [vmem:[%s2093 + $0x38] sm:$0xff]
    %v7773 = vld [vmem:[%s2093 + $0x40] sm:$0xff]
    %v7774 = vld [vmem:[%s2093 + $0x48] sm:$0xff]
    %v7775 = vld [vmem:[%s2093 + $0x50] sm:$0xff]
    %v7776 = vld [vmem:[%s2093 + $0x58] sm:$0xff]
    %v7777 = vld [vmem:[%s2093 + $0x60] sm:$0xff]
    %v7778 = vadd.f32 %v7765, %v7269
    %v7779 = vadd.f32 %v7766, %v7271
    %v7780 = vadd.f32 %v7767, %v7351
    %v7781 = vmul.f32 %v7778, 0.5
    %v7782 = vmul.f32 %v7779, 0.5
    %v7783 = vmul.f32 %v7780, 0.5
    %v7784 = vtanh.pop %v7781
    %v7785 = vtanh.pop %v7782
    %v7786 = vtanh.pop %v7783
    %v7787 = vmul.f32 %v7784, 0.5
    %v7788 = vmul.f32 %v7785, 0.5
    %v7789 = vmul.f32 %v7786, 0.5
    %v7790 = vadd.f32 %v7787, 0.5
    %v7791 = vadd.f32 %v7788, 0.5
    %v7792 = vadd.f32 %v7789, 0.5
    %v7793 = vadd.f32 %v7768, %v7353
    %v7794 = vadd.f32 %v7769, %v7433
    %v7795 = vadd.f32 %v7770, %v7435
    %v7796 = vmul.f32 %v7793, 0.5
    %v7797 = vmul.f32 %v7794, 0.5
    %v7798 = vmul.f32 %v7795, 0.5
    %v7799 = vtanh.pop %v7796
    %v7800 = vtanh.pop %v7797
    %v7801 = vtanh.pop %v7798
    %v7802 = vmul.f32 %v7799, 0.5
    %v7803 = vmul.f32 %v7800, 0.5
    %v7804 = vmul.f32 %v7801, 0.5
    %v7805 = vadd.f32 %v7802, 0.5
    %v7806 = vadd.f32 %v7803, 0.5
    %v7807 = vadd.f32 %v7804, 0.5
    %v7808 = vadd.f32 %v7515, %v3138
    %v7809 = vadd.f32 %v7517, %v3142
    %v7810 = vadd.f32 %v7597, %v3146
    %v7811 = vmul.f32 %v7790, %v7808
    %v7812 = vmul.f32 %v7791, %v7809
    %v7813 = vmul.f32 %v7792, %v7810
    %v7814 = vadd.f32 %v7771, %v7811
    %v7815 = vadd.f32 %v7772, %v7812
    %v7816 = vadd.f32 %v7773, %v7813
    %v7817 = vtanh.pop %v7814
    %v7818 = vtanh.pop %v7815
    %v7819 = vtanh.pop %v7816
    %v7820 = vsub.f32 %v7160, %v7817
    %v7821 = vsub.f32 %v7161, %v7818
    %v7822 = vsub.f32 %v7162, %v7819
    %v7823 = vmul.f32 %v7805, %v7820
    %v7824 = vmul.f32 %v7806, %v7821
    %v7825 = vmul.f32 %v7807, %v7822
    %v7826 = vadd.f32 %v7817, %v7823
    %v7827 = vadd.f32 %v7818, %v7824
    %v7828 = vadd.f32 %v7819, %v7825
    %v7829 = vadd.f32 %v7774, %v7599
    %v7830 = vadd.f32 %v7775, %v7679
    %v7831 = vadd.f32 %v7776, %v7681
    %v7832 = vadd.f32 %v7777, %v7760
    %v7833 = vmul.f32 %v7829, 0.5
    %v7834 = vtanh.pop %v7833
    %v7835 = vmul.f32 %v7834, 0.5
    %v7836 = vadd.f32 %v7835, 0.5
    %v7837 = vmul.f32 %v7830, 0.5
    %v7838 = vtanh.pop %v7837
    %v7839 = vmul.f32 %v7838, 0.5
    %v7840 = vadd.f32 %v7839, 0.5
    %v7841 = vtanh.pop %v7831
    %v7842 = vmul.f32 %v7832, 0.5
    %v7843 = vtanh.pop %v7842
    %v7844 = vmul.f32 %v7843, 0.5
    %v7845 = vadd.f32 %v7844, 0.5
    %v7846 = vmul.f32 %v7840, %v7182
    %v7847 = vmul.f32 %v7836, %v7841
    %v7848 = vadd.f32 %v7846, %v7847
    %v7849 = vtanh.pop %v7848
    %v7850 = vmul.f32 %v7845, %v7849
    %v7851 = vmax.f32 %v7185, %v7826
    %v7852 = vmax.f32 %v7186, %v7827
    %v7853 = vmax.f32 %v7187, %v7828
    %v7854 = vmax.f32 %v7188, %v7850
    %s7855 = smul.u32 %s2098, 4
    %s7856 = sshll.u32 %s7855, 4
    %7857 = dma.done %s173, %s7856
    %s7858 = smul.u32 %s2098, 1
    %s7859 = sshll.u32 %s7858, 4
    %7860 = dma.done %s208, %s7859
    %v7861 = vpack.c.bf16 %v7851, %v7851
    %v7862 = vpack.c.bf16 %v7852, %v7852
    %v7863 = vpack.c.bf16 %v7853, %v7853
    %v7864 = vpack.c.bf16 %v7854, %v7854
    %v7865 = vld [vmem:[#allocation4] sm:$0xff]
    %v7866 = vld [vmem:[#allocation4 + $0x8] sm:$0xff]
    %v7867 = vld [vmem:[#allocation4 + $0x10] sm:$0xff]
    %v7868 = vld [vmem:[#allocation4 + $0x18] sm:$0xff]
    %v7869 = vld [vmem:[#allocation4 + $0x20] sm:$0xff]
    %v7870 = vld [vmem:[#allocation4 + $0x28] sm:$0xff]
    %v7871 = vld [vmem:[#allocation4 + $0x30] sm:$0xff]
    %v7872 = vld [vmem:[#allocation4 + $0x38] sm:$0xff]
    %v7873 = vld [vmem:[#allocation4 + $0x40] sm:$0xff]
    %v7874 = vld [vmem:[#allocation4 + $0x48] sm:$0xff]
    %v7875 = vld [vmem:[#allocation4 + $0x50] sm:$0xff]
    %v7876 = vld [vmem:[#allocation4 + $0x58] sm:$0xff]
    %v7877 = vld [vmem:[#allocation4 + $0x60] sm:$0xff]
    %v7878 = vld [vmem:[#allocation4 + $0x68] sm:$0xff]
    %v7879 = vld [vmem:[#allocation4 + $0x70] sm:$0xff]
    %v7880 = vld [vmem:[#allocation4 + $0x78] sm:$0xff]
    %v7881 = vld [vmem:[#allocation4 + $0x80] sm:$0xff]
    %v7882 = vld [vmem:[#allocation4 + $0x88] sm:$0xff]
    %v7883 = vld [vmem:[#allocation4 + $0x90] sm:$0xff]
    %v7884 = vld [vmem:[#allocation4 + $0x98] sm:$0xff]
    %v7885 = vld [vmem:[#allocation4 + $0xa0] sm:$0xff]
    %v7886 = vld [vmem:[#allocation4 + $0xa8] sm:$0xff]
    %v7887 = vld [vmem:[#allocation4 + $0xb0] sm:$0xff]
    %v7888 = vld [vmem:[#allocation4 + $0xb8] sm:$0xff]
    %v7889 = vld [vmem:[#allocation4 + $0xc0] sm:$0xff]
    %v7890 = vld [vmem:[#allocation4 + $0xc8] sm:$0xff]
    %v7891 = vld [vmem:[#allocation4 + $0xd0] sm:$0xff]
    %v7892 = vld [vmem:[#allocation4 + $0xd8] sm:$0xff]
    %v7893 = vld [vmem:[#allocation4 + $0xe0] sm:$0xff]
    %v7894 = vld [vmem:[#allocation4 + $0xe8] sm:$0xff]
    %v7895 = vld [vmem:[#allocation4 + $0xf0] sm:$0xff]
    %v7896 = vld [vmem:[#allocation4 + $0xf8] sm:$0xff]
    %v7897 = vld [vmem:[#allocation4 + $0x100] sm:$0xff]
    %v7898 = vld [vmem:[#allocation4 + $0x108] sm:$0xff]
    %v7899 = vld [vmem:[#allocation4 + $0x110] sm:$0xff]
    %v7900 = vld [vmem:[#allocation4 + $0x118] sm:$0xff]
    %v7901 = vld [vmem:[#allocation4 + $0x120] sm:$0xff]
    %v7902 = vld [vmem:[#allocation4 + $0x128] sm:$0xff]
    %v7903 = vld [vmem:[#allocation4 + $0x130] sm:$0xff]
    %v7904 = vld [vmem:[#allocation4 + $0x138] sm:$0xff]
    %v7905 = vld [vmem:[#allocation4 + $0x140] sm:$0xff]
    %v7906 = vld [vmem:[#allocation4 + $0x148] sm:$0xff]
    %v7907 = vld [vmem:[#allocation4 + $0x150] sm:$0xff]
    %v7908 = vld [vmem:[#allocation4 + $0x158] sm:$0xff]
    %v7909 = vld [vmem:[#allocation4 + $0x160] sm:$0xff]
    %v7910 = vld [vmem:[#allocation4 + $0x168] sm:$0xff]
    %v7911 = vld [vmem:[#allocation4 + $0x170] sm:$0xff]
    %v7912 = vld [vmem:[#allocation4 + $0x178] sm:$0xff]
    %v7913 = vld [vmem:[#allocation4 + $0x180] sm:$0xff]
    %v7914 = vld [vmem:[#allocation4 + $0x188] sm:$0xff]
    %v7915 = vld [vmem:[#allocation4 + $0x190] sm:$0xff]
    %v7916 = vld [vmem:[#allocation4 + $0x198] sm:$0xff]
    %v7917 = vld [vmem:[#allocation4 + $0x1a0] sm:$0xff]
    %v7918 = vld [vmem:[#allocation4 + $0x1a8] sm:$0xff]
    %v7919 = vld [vmem:[#allocation4 + $0x1b0] sm:$0xff]
    %v7920 = vld [vmem:[#allocation4 + $0x1b8] sm:$0xff]
    %v7921 = vld [vmem:[#allocation4 + $0x1c0] sm:$0xff]
    %v7922 = vld [vmem:[#allocation4 + $0x1c8] sm:$0xff]
    %v7923 = vld [vmem:[#allocation4 + $0x1d0] sm:$0xff]
    %v7924 = vld [vmem:[#allocation4 + $0x1d8] sm:$0xff]
    %v7925 = vld [vmem:[#allocation4 + $0x1e0] sm:$0xff]
    %v7926 = vld [vmem:[#allocation4 + $0x1e8] sm:$0xff]
    %v7927 = vld [vmem:[#allocation4 + $0x1f0] sm:$0xff]
    %v7928 = vld [vmem:[#allocation4 + $0x1f8] sm:$0xff]
    %v7929 = vld [vmem:[#allocation4 + $0x200] sm:$0xff]
    %v7930 = vld [vmem:[#allocation4 + $0x208] sm:$0xff]
    %v7931 = vld [vmem:[#allocation4 + $0x210] sm:$0xff]
    %v7932 = vld [vmem:[#allocation4 + $0x218] sm:$0xff]
    %v7933 = vld [vmem:[#allocation4 + $0x220] sm:$0xff]
    %v7934 = vld [vmem:[#allocation4 + $0x228] sm:$0xff]
    %v7935 = vld [vmem:[#allocation4 + $0x230] sm:$0xff]
    %v7936 = vld [vmem:[#allocation4 + $0x238] sm:$0xff]
    %v7937 = vld [vmem:[#allocation4 + $0x240] sm:$0xff]
    %v7938 = vld [vmem:[#allocation4 + $0x248] sm:$0xff]
    %v7939 = vld [vmem:[#allocation4 + $0x250] sm:$0xff]
    %v7940 = vld [vmem:[#allocation4 + $0x258] sm:$0xff]
    %v7941 = vld [vmem:[#allocation4 + $0x260] sm:$0xff]
    %v7942 = vld [vmem:[#allocation4 + $0x268] sm:$0xff]
    %v7943 = vld [vmem:[#allocation4 + $0x270] sm:$0xff]
    %v7944 = vld [vmem:[#allocation4 + $0x278] sm:$0xff]
    %v7945 = vld [vmem:[#allocation4 + $0x280] sm:$0xff]
    %v7946 = vld [vmem:[#allocation4 + $0x288] sm:$0xff]
    %v7947 = vld [vmem:[#allocation4 + $0x290] sm:$0xff]
    %v7948 = vld [vmem:[#allocation4 + $0x298] sm:$0xff]
    %v7949 = vld [vmem:[#allocation4 + $0x2a0] sm:$0xff]
    %v7950 = vld [vmem:[#allocation4 + $0x2a8] sm:$0xff]
    %v7951 = vld [vmem:[#allocation4 + $0x2b0] sm:$0xff]
    %v7952 = vld [vmem:[#allocation4 + $0x2b8] sm:$0xff]
    %v7953 = vld [vmem:[#allocation4 + $0x2c0] sm:$0xff]
    %v7954 = vld [vmem:[#allocation4 + $0x2c8] sm:$0xff]
    %v7955 = vld [vmem:[#allocation4 + $0x2d0] sm:$0xff]
    %v7956 = vld [vmem:[#allocation4 + $0x2d8] sm:$0xff]
    %v7957 = vld [vmem:[#allocation4 + $0x2e0] sm:$0xff]
    %v7958 = vld [vmem:[#allocation4 + $0x2e8] sm:$0xff]
    %v7959 = vld [vmem:[#allocation4 + $0x2f0] sm:$0xff]
    %v7960 = vld [vmem:[#allocation4 + $0x2f8] sm:$0xff]
    %v7961 = vld [vmem:[#allocation4 + $0x300] sm:$0xff]
    %v7962 = vld [vmem:[#allocation4 + $0x308] sm:$0xff]
    %v7963 = vld [vmem:[#allocation4 + $0x310] sm:$0xff]
    %v7964 = vld [vmem:[#allocation4 + $0x318] sm:$0xff]
    %v7965 = vld [vmem:[#allocation4 + $0x320] sm:$0xff]
    %v7966 = vld [vmem:[#allocation4 + $0x328] sm:$0xff]
    %v7967 = vld [vmem:[#allocation4 + $0x330] sm:$0xff]
    %v7968 = vld [vmem:[#allocation4 + $0x338] sm:$0xff]
    %v7969 = vld [vmem:[#allocation4 + $0x340] sm:$0xff]
    %v7970 = vld [vmem:[#allocation4 + $0x348] sm:$0xff]
    %v7971 = vld [vmem:[#allocation4 + $0x350] sm:$0xff]
    %v7972 = vld [vmem:[#allocation4 + $0x358] sm:$0xff]
    %v7973 = vld [vmem:[#allocation4 + $0x360] sm:$0xff]
    %v7974 = vld [vmem:[#allocation4 + $0x368] sm:$0xff]
    %v7975 = vld [vmem:[#allocation4 + $0x370] sm:$0xff]
    %v7976 = vld [vmem:[#allocation4 + $0x378] sm:$0xff]
    %v7977 = vld [vmem:[#allocation4 + $0x380] sm:$0xff]
    %v7978 = vld [vmem:[#allocation4 + $0x388] sm:$0xff]
    %v7979 = vld [vmem:[#allocation4 + $0x390] sm:$0xff]
    %v7980 = vld [vmem:[#allocation4 + $0x398] sm:$0xff]
    %v7981 = vld [vmem:[#allocation4 + $0x3a0] sm:$0xff]
    %v7982 = vld [vmem:[#allocation4 + $0x3a8] sm:$0xff]
    %v7983 = vld [vmem:[#allocation4 + $0x3b0] sm:$0xff]
    %v7984 = vld [vmem:[#allocation4 + $0x3b8] sm:$0xff]
    %v7985 = vld [vmem:[#allocation4 + $0x3c0] sm:$0xff]
    %v7986 = vld [vmem:[#allocation4 + $0x3c8] sm:$0xff]
    %v7987 = vld [vmem:[#allocation4 + $0x3d0] sm:$0xff]
    %v7988 = vld [vmem:[#allocation4 + $0x3d8] sm:$0xff]
    %v7989 = vld [vmem:[#allocation4 + $0x3e0] sm:$0xff]
    %v7990 = vld [vmem:[#allocation4 + $0x3e8] sm:$0xff]
    %v7991 = vld [vmem:[#allocation4 + $0x3f0] sm:$0xff]
    %v7992 = vld [vmem:[#allocation4 + $0x3f8] sm:$0xff]
    %v7993 = vld [vmem:[#allocation18] sm:$0xf]
    %v7995 = vlaneseq
    %v7996 = vshrl.u32 %v7995, 7
    %v7997 = vsub.s32 0, %v7996
    %v7998 = vrot.slane %v7993, %v7997
    %v7999 = vlaneseq
    %v8000 = vshrl.u32 %v7999, 7
    %v8001 = vsub.s32 1, %v8000
    %v8002 = vrot.slane %v7993, %v8001
    %v8003 = vlaneseq
    %v8004 = vshrl.u32 %v8003, 7
    %v8005 = vsub.s32 2, %v8004
    %v8006 = vrot.slane %v7993, %v8005
    %v8007 = vlaneseq
    %v8008 = vshrl.u32 %v8007, 7
    %v8009 = vsub.s32 3, %v8008
    %v8010 = vrot.slane %v7993, %v8009
    %8015 = vmatprep.subr.bf16.mxu0 %v7866
    %8016 = vmatpush1.bf16.msra.mxu0 %v7865
    %8017 = vmatprep.subr.bf16.mxu0 %v7870
    %8018 = vmatpush1.bf16.msra.mxu0 %v7869
    %8019 = vmatprep.subr.bf16.mxu0 %v7874
    %8020 = vmatpush1.bf16.msra.mxu0 %v7873
    %8021 = vmatprep.subr.bf16.mxu0 %v7878
    %8022 = vmatpush1.bf16.msra.mxu0 %v7877
    %8023 = vmatprep.subr.bf16.mxu0 %v7882
    %8024 = vmatpush1.bf16.msra.mxu0 %v7881
    %8025 = vmatprep.subr.bf16.mxu0 %v7886
    %8026 = vmatpush1.bf16.msra.mxu0 %v7885
    %8027 = vmatprep.subr.bf16.mxu0 %v7890
    %8028 = vmatpush1.bf16.msra.mxu0 %v7889
    %8029 = vmatprep.subr.bf16.mxu0 %v7894
    %8030 = vmatpush1.bf16.msra.mxu0 %v7893
    %8031 = vmatprep.subr.bf16.mxu0 %v7898
    %8032 = vmatpush1.bf16.msra.mxu0 %v7897
    %8033 = vmatprep.subr.bf16.mxu0 %v7902
    %8034 = vmatpush1.bf16.msra.mxu0 %v7901
    %8035 = vmatprep.subr.bf16.mxu0 %v7906
    %8036 = vmatpush1.bf16.msra.mxu0 %v7905
    %8037 = vmatprep.subr.bf16.mxu0 %v7910
    %8038 = vmatpush1.bf16.msra.mxu0 %v7909
    %8039 = vmatprep.subr.bf16.mxu0 %v7914
    %8040 = vmatpush1.bf16.msra.mxu0 %v7913
    %8041 = vmatprep.subr.bf16.mxu0 %v7918
    %8042 = vmatpush1.bf16.msra.mxu0 %v7917
    %8043 = vmatprep.subr.bf16.mxu0 %v7922
    %8044 = vmatpush1.bf16.msra.mxu0 %v7921
    %8045 = vmatprep.subr.bf16.mxu0 %v7926
    %8046 = vmatpush1.bf16.msra.mxu0 %v7925
    %8047 = vmatprep.mubr.bf16.mxu0 %v7862
    %8048 = vmatmul.mubr.bf16.gmra.mrb[0].mxu0 %v7861
    %v8049 = vpop.f32.mrb[0].mxu0
    %v8050 = vadd.f32 %v7998, %v8049
    %v8051 = vpop.f32.mrb[0].mxu0
    %v8052 = vadd.f32 %v8002, %v8051
    %v8053 = vpop.f32.mrb[0].mxu0
    %v8054 = vpop.f32.mrb[0].mxu0
    %8055 = vdwg.mxu0
    %8056 = vmatprep.subr.bf16.mxu0 %v7930
    %8057 = vmatpush1.bf16.msra.mxu0 %v7929
    %8058 = vmatprep.subr.bf16.mxu0 %v7934
    %8059 = vmatpush1.bf16.msra.mxu0 %v7933
    %8060 = vmatprep.subr.bf16.mxu0 %v7938
    %8061 = vmatpush1.bf16.msra.mxu0 %v7937
    %8062 = vmatprep.subr.bf16.mxu0 %v7942
    %8063 = vmatpush1.bf16.msra.mxu0 %v7941
    %8064 = vmatprep.subr.bf16.mxu0 %v7946
    %8065 = vmatpush1.bf16.msra.mxu0 %v7945
    %8066 = vmatprep.subr.bf16.mxu0 %v7950
    %8067 = vmatpush1.bf16.msra.mxu0 %v7949
    %8068 = vmatprep.subr.bf16.mxu0 %v7954
    %8069 = vmatpush1.bf16.msra.mxu0 %v7953
    %8070 = vmatprep.subr.bf16.mxu0 %v7958
    %8071 = vmatpush1.bf16.msra.mxu0 %v7957
    %8072 = vmatprep.subr.bf16.mxu0 %v7962
    %8073 = vmatpush1.bf16.msra.mxu0 %v7961
    %8074 = vmatprep.subr.bf16.mxu0 %v7966
    %8075 = vmatpush1.bf16.msra.mxu0 %v7965
    %8076 = vmatprep.subr.bf16.mxu0 %v7970
    %8077 = vmatpush1.bf16.msra.mxu0 %v7969
    %8078 = vmatprep.subr.bf16.mxu0 %v7974
    %8079 = vmatpush1.bf16.msra.mxu0 %v7973
    %8080 = vmatprep.subr.bf16.mxu0 %v7978
    %8081 = vmatpush1.bf16.msra.mxu0 %v7977
    %8082 = vmatprep.subr.bf16.mxu0 %v7982
    %8083 = vmatpush1.bf16.msra.mxu0 %v7981
    %8084 = vmatprep.subr.bf16.mxu0 %v7986
    %8085 = vmatpush1.bf16.msra.mxu0 %v7985
    %8086 = vmatprep.subr.bf16.mxu0 %v7990
    %8087 = vmatpush1.bf16.msra.mxu0 %v7989
    %8088 = vmatprep.mubr.bf16.mxu0 %v7864
    %8089 = vmatmul.mubr.bf16.gmra.mrb[0].mxu0 %v7863
    %v8090 = vpop.f32.mrb[0].mxu0
    %v8091 = vadd.f32 %v8050, %v8090
    %v8092 = vpop.f32.mrb[0].mxu0
    %v8093 = vadd.f32 %v8052, %v8092
    %v8094 = vpop.f32.mrb[0].mxu0
    %v8095 = vpop.f32.mrb[0].mxu0
    %8096 = vdwg.mxu0
    %8097 = vmatprep.subr.bf16.mxu0 %v7868
    %8098 = vmatpush1.bf16.msra.mxu0 %v7867
    %8099 = vmatprep.subr.bf16.mxu0 %v7872
    %8100 = vmatpush1.bf16.msra.mxu0 %v7871
    %8101 = vmatprep.subr.bf16.mxu0 %v7876
    %8102 = vmatpush1.bf16.msra.mxu0 %v7875
    %8103 = vmatprep.subr.bf16.mxu0 %v7880
    %8104 = vmatpush1.bf16.msra.mxu0 %v7879
    %8105 = vmatprep.subr.bf16.mxu0 %v7884
    %8106 = vmatpush1.bf16.msra.mxu0 %v7883
    %8107 = vmatprep.subr.bf16.mxu0 %v7888
    %8108 = vmatpush1.bf16.msra.mxu0 %v7887
    %8109 = vmatprep.subr.bf16.mxu0 %v7892
    %8110 = vmatpush1.bf16.msra.mxu0 %v7891
    %8111 = vmatprep.subr.bf16.mxu0 %v7896
    %8112 = vmatpush1.bf16.msra.mxu0 %v7895
    %8113 = vmatprep.subr.bf16.mxu0 %v7900
    %8114 = vmatpush1.bf16.msra.mxu0 %v7899
    %8115 = vmatprep.subr.bf16.mxu0 %v7904
    %8116 = vmatpush1.bf16.msra.mxu0 %v7903
    %8117 = vmatprep.subr.bf16.mxu0 %v7908
    %8118 = vmatpush1.bf16.msra.mxu0 %v7907
    %8119 = vmatprep.subr.bf16.mxu0 %v7912
    %8120 = vmatpush1.bf16.msra.mxu0 %v7911
    %8121 = vmatprep.subr.bf16.mxu0 %v7916
    %8122 = vmatpush1.bf16.msra.mxu0 %v7915
    %8123 = vmatprep.subr.bf16.mxu0 %v7920
    %8124 = vmatpush1.bf16.msra.mxu0 %v7919
    %8125 = vmatprep.subr.bf16.mxu0 %v7924
    %8126 = vmatpush1.bf16.msra.mxu0 %v7923
    %8127 = vmatprep.subr.bf16.mxu0 %v7928
    %8128 = vmatpush1.bf16.msra.mxu0 %v7927
    %8129 = vmatprep.mubr.bf16.mxu0 %v7862
    %8130 = vmatmul.mubr.bf16.gmra.mrb[0].mxu0 %v7861
    %v8131 = vpop.f32.mrb[0].mxu0
    %v8132 = vadd.f32 %v8006, %v8131
    %v8133 = vpop.f32.mrb[0].mxu0
    %v8134 = vadd.f32 %v8010, %v8133
    %v8135 = vpop.f32.mrb[0].mxu0
    %v8136 = vpop.f32.mrb[0].mxu0
    %8137 = vdwg.mxu0
    %8138 = vmatprep.subr.bf16.mxu0 %v7932
    %8139 = vmatpush1.bf16.msra.mxu0 %v7931
    %8140 = vmatprep.subr.bf16.mxu0 %v7936
    %8141 = vmatpush1.bf16.msra.mxu0 %v7935
    %8142 = vmatprep.subr.bf16.mxu0 %v7940
    %8143 = vmatpush1.bf16.msra.mxu0 %v7939
    %8144 = vmatprep.subr.bf16.mxu0 %v7944
    %8145 = vmatpush1.bf16.msra.mxu0 %v7943
    %8146 = vmatprep.subr.bf16.mxu0 %v7948
    %8147 = vmatpush1.bf16.msra.mxu0 %v7947
    %8148 = vmatprep.subr.bf16.mxu0 %v7952
    %8149 = vmatpush1.bf16.msra.mxu0 %v7951
    %8150 = vmatprep.subr.bf16.mxu0 %v7956
    %8151 = vmatpush1.bf16.msra.mxu0 %v7955
    %8152 = vmatprep.subr.bf16.mxu0 %v7960
    %8153 = vmatpush1.bf16.msra.mxu0 %v7959
    %8154 = vmatprep.subr.bf16.mxu0 %v7964
    %8155 = vmatpush1.bf16.msra.mxu0 %v7963
    %8156 = vmatprep.subr.bf16.mxu0 %v7968
    %8157 = vmatpush1.bf16.msra.mxu0 %v7967
    %8158 = vmatprep.subr.bf16.mxu0 %v7972
    %8159 = vmatpush1.bf16.msra.mxu0 %v7971
    %8160 = vmatprep.subr.bf16.mxu0 %v7976
    %8161 = vmatpush1.bf16.msra.mxu0 %v7975
    %8162 = vmatprep.subr.bf16.mxu0 %v7980
    %8163 = vmatpush1.bf16.msra.mxu0 %v7979
    %8164 = vmatprep.subr.bf16.mxu0 %v7984
    %8165 = vmatpush1.bf16.msra.mxu0 %v7983
    %8166 = vmatprep.subr.bf16.mxu0 %v7988
    %8167 = vmatpush1.bf16.msra.mxu0 %v7987
    %8168 = vmatprep.subr.bf16.mxu0 %v7992
    %8169 = vmatpush1.bf16.msra.mxu0 %v7991
    %8170 = vmatprep.mubr.bf16.mxu0 %v7864
    %8171 = vmatmul.mubr.bf16.gmra.mrb[0].mxu0 %v7863
    %v8172 = vpop.f32.mrb[0].mxu0
    %v8173 = vadd.f32 %v8132, %v8172
    %v8174 = vpop.f32.mrb[0].mxu0
    %v8175 = vadd.f32 %v8134, %v8174
    %v8176 = vpop.f32.mrb[0].mxu0
    %v8177 = vpop.f32.mrb[0].mxu0
    %8178 = vdwg.mxu0
    %v8179 = vmax.f32 %v8091, 0.0
    %v8180 = vmax.f32 %v8093, 0.0
    %v8181 = vmax.f32 %v8173, 0.0
    %v8182 = vmax.f32 %v8175, 0.0
    %v8183 = vpack.c.bf16 %v8179, %v8179
    %v8184 = vpack.c.bf16 %v8180, %v8180
    %v8185 = vpack.c.bf16 %v8181, %v8181
    %v8186 = vpack.c.bf16 %v8182, %v8182
    %v8187 = vld [vmem:[#allocation5] sm:$0xff]
    %v8188 = vld [vmem:[#allocation5 + $0x8] sm:$0xff]
    %v8189 = vld [vmem:[#allocation5 + $0x10] sm:$0xff]
    %v8190 = vld [vmem:[#allocation5 + $0x18] sm:$0xff]
    %v8191 = vld [vmem:[#allocation5 + $0x20] sm:$0xff]
    %v8192 = vld [vmem:[#allocation5 + $0x28] sm:$0xff]
    %v8193 = vld [vmem:[#allocation5 + $0x30] sm:$0xff]
    %v8194 = vld [vmem:[#allocation5 + $0x38] sm:$0xff]
    %v8195 = vld [vmem:[#allocation5 + $0x40] sm:$0xff]
    %v8196 = vld [vmem:[#allocation5 + $0x48] sm:$0xff]
    %v8197 = vld [vmem:[#allocation5 + $0x50] sm:$0xff]
    %v8198 = vld [vmem:[#allocation5 + $0x58] sm:$0xff]
    %v8199 = vld [vmem:[#allocation5 + $0x60] sm:$0xff]
    %v8200 = vld [vmem:[#allocation5 + $0x68] sm:$0xff]
    %v8201 = vld [vmem:[#allocation5 + $0x70] sm:$0xff]
    %v8202 = vld [vmem:[#allocation5 + $0x78] sm:$0xff]
    %v8203 = vld [vmem:[#allocation5 + $0x80] sm:$0xff]
    %v8204 = vld [vmem:[#allocation5 + $0x88] sm:$0xff]
    %v8205 = vld [vmem:[#allocation5 + $0x90] sm:$0xff]
    %v8206 = vld [vmem:[#allocation5 + $0x98] sm:$0xff]
    %v8207 = vld [vmem:[#allocation5 + $0xa0] sm:$0xff]
    %v8208 = vld [vmem:[#allocation5 + $0xa8] sm:$0xff]
    %v8209 = vld [vmem:[#allocation5 + $0xb0] sm:$0xff]
    %v8210 = vld [vmem:[#allocation5 + $0xb8] sm:$0xff]
    %v8211 = vld [vmem:[#allocation5 + $0xc0] sm:$0xff]
    %v8212 = vld [vmem:[#allocation5 + $0xc8] sm:$0xff]
    %v8213 = vld [vmem:[#allocation5 + $0xd0] sm:$0xff]
    %v8214 = vld [vmem:[#allocation5 + $0xd8] sm:$0xff]
    %v8215 = vld [vmem:[#allocation5 + $0xe0] sm:$0xff]
    %v8216 = vld [vmem:[#allocation5 + $0xe8] sm:$0xff]
    %v8217 = vld [vmem:[#allocation5 + $0xf0] sm:$0xff]
    %v8218 = vld [vmem:[#allocation5 + $0xf8] sm:$0xff]
    %v8219 = vld [vmem:[#allocation19] sm:$0x1]
    %v8221 = vlaneseq
    %v8222 = vshrl.u32 %v8221, 7
    %v8223 = vsub.s32 0, %v8222
    %v8224 = vrot.slane %v8219, %v8223
    %8226 = vmatprep.subr.bf16.mxu0 0
    %8227 = vmatpush1.bf16.msra.mxu0 %v8187
    %8228 = vmatprep.subr.bf16.mxu0 0
    %8229 = vmatpush1.bf16.msra.mxu0 %v8188
    %8230 = vmatprep.subr.bf16.mxu0 0
    %8231 = vmatpush1.bf16.msra.mxu0 %v8189
    %8232 = vmatprep.subr.bf16.mxu0 0
    %8233 = vmatpush1.bf16.msra.mxu0 %v8190
    %8234 = vmatprep.subr.bf16.mxu0 0
    %8235 = vmatpush1.bf16.msra.mxu0 %v8191
    %8236 = vmatprep.subr.bf16.mxu0 0
    %8237 = vmatpush1.bf16.msra.mxu0 %v8192
    %8238 = vmatprep.subr.bf16.mxu0 0
    %8239 = vmatpush1.bf16.msra.mxu0 %v8193
    %8240 = vmatprep.subr.bf16.mxu0 0
    %8241 = vmatpush1.bf16.msra.mxu0 %v8194
    %8242 = vmatprep.subr.bf16.mxu0 0
    %8243 = vmatpush1.bf16.msra.mxu0 %v8195
    %8244 = vmatprep.subr.bf16.mxu0 0
    %8245 = vmatpush1.bf16.msra.mxu0 %v8196
    %8246 = vmatprep.subr.bf16.mxu0 0
    %8247 = vmatpush1.bf16.msra.mxu0 %v8197
    %8248 = vmatprep.subr.bf16.mxu0 0
    %8249 = vmatpush1.bf16.msra.mxu0 %v8198
    %8250 = vmatprep.subr.bf16.mxu0 0
    %8251 = vmatpush1.bf16.msra.mxu0 %v8199
    %8252 = vmatprep.subr.bf16.mxu0 0
    %8253 = vmatpush1.bf16.msra.mxu0 %v8200
    %8254 = vmatprep.subr.bf16.mxu0 0
    %8255 = vmatpush1.bf16.msra.mxu0 %v8201
    %8256 = vmatprep.subr.bf16.mxu0 0
    %8257 = vmatpush1.bf16.msra.mxu0 %v8202
    %8258 = vmatprep.mubr.bf16.mxu0 %v8184
    %8259 = vmatmul.mubr.bf16.gmra.mrb[0].mxu0 %v8183
    %v8260 = vpop.f32.mrb[0].mxu0
    %v8261 = vadd.f32 %v8224, %v8260
    %v8262 = vpop.f32.mrb[0].mxu0
    %v8263 = vpop.f32.mrb[0].mxu0
    %v8264 = vpop.f32.mrb[0].mxu0
    %8265 = vdwg.mxu0
    %8266 = vmatprep.subr.bf16.mxu0 0
    %8267 = vmatpush1.bf16.msra.mxu0 %v8203
    %8268 = vmatprep.subr.bf16.mxu0 0
    %8269 = vmatpush1.bf16.msra.mxu0 %v8204
    %8270 = vmatprep.subr.bf16.mxu0 0
    %8271 = vmatpush1.bf16.msra.mxu0 %v8205
    %8272 = vmatprep.subr.bf16.mxu0 0
    %8273 = vmatpush1.bf16.msra.mxu0 %v8206
    %8274 = vmatprep.subr.bf16.mxu0 0
    %8275 = vmatpush1.bf16.msra.mxu0 %v8207
    %8276 = vmatprep.subr.bf16.mxu0 0
    %8277 = vmatpush1.bf16.msra.mxu0 %v8208
    %8278 = vmatprep.subr.bf16.mxu0 0
    %8279 = vmatpush1.bf16.msra.mxu0 %v8209
    %8280 = vmatprep.subr.bf16.mxu0 0
    %8281 = vmatpush1.bf16.msra.mxu0 %v8210
    %8282 = vmatprep.subr.bf16.mxu0 0
    %8283 = vmatpush1.bf16.msra.mxu0 %v8211
    %8284 = vmatprep.subr.bf16.mxu0 0
    %8285 = vmatpush1.bf16.msra.mxu0 %v8212
    %8286 = vmatprep.subr.bf16.mxu0 0
    %8287 = vmatpush1.bf16.msra.mxu0 %v8213
    %8288 = vmatprep.subr.bf16.mxu0 0
    %8289 = vmatpush1.bf16.msra.mxu0 %v8214
    %8290 = vmatprep.subr.bf16.mxu0 0
    %8291 = vmatpush1.bf16.msra.mxu0 %v8215
    %8292 = vmatprep.subr.bf16.mxu0 0
    %8293 = vmatpush1.bf16.msra.mxu0 %v8216
    %8294 = vmatprep.subr.bf16.mxu0 0
    %8295 = vmatpush1.bf16.msra.mxu0 %v8217
    %8296 = vmatprep.subr.bf16.mxu0 0
    %8297 = vmatpush1.bf16.msra.mxu0 %v8218
    %8298 = vmatprep.mubr.bf16.mxu0 %v8186
    %8299 = vmatmul.mubr.bf16.gmra.mrb[0].mxu0 %v8185
    %v8300 = vpop.f32.mrb[0].mxu0
    %v8301 = vadd.f32 %v8261, %v8300
    %v8302 = vpop.f32.mrb[0].mxu0
    %v8303 = vpop.f32.mrb[0].mxu0
    %v8304 = vpop.f32.mrb[0].mxu0
    %8305 = vdwg.mxu0
    %v8306 = vmax.f32 %v8301, 0.0
    %v8307 = vmul.f32 %v8306, %v8306
    %8308 = vadd.xlane.f32.xlu0 %v8307
    %v8309 = vpop.xlane.xlu0 %8308
    %v8310 = vadd.f32 %v8309, 1e-12
    %v8311 = vrsqrt.pop %v8310
    %v8312 = vmul.f32 %v8306, %v8311
    %8313 = vst [vmem:[#allocation21] sm:$0xff] %v8312
    // Predicated region
    $region74: #{encoder_text_forward.1} parent=1 // pred_check
      _
    $region75: #{encoder_text_forward.1} parent=1 // pred_check_branch
      %8315 = sbr.rel (0) target = $region77
    $region76: #{encoder_text_forward.1} parent=1 // pred_region
      %s8317 = ssub.s32 128, 128
      %8318 = vsyncadd [#allocation9], %s8317
      %s8320 = sshll.u32 [#allocation21], 4
      %s8321 = int_to_ptr.vmem [resolvable:$true] %s8320
      %8323 = dma.vmem_to_hbm [thread:$0]  %s8321, 128, %s12, [#allocation9]
    $region77: #{encoder_text_forward.1} parent=1 // pred_fallthru
      _
    // Predicated region
    $region78: #{encoder_text_forward.1} parent=1 // pred_check
      _
    $region79: #{encoder_text_forward.1} parent=1 // pred_check_branch
      %8325 = sbr.rel (0) target = $region81
    $region80: #{encoder_text_forward.1} parent=1 // pred_region
      %8326 = dma.done [#allocation9], 128
    $region81: #{encoder_text_forward.1} parent=1 // pred_fallthru
      _
    %8327 = vsyncpa [#allocation8], 1
    %8328 = vsyncpa [#allocation11], 1
    %8329 = vsyncpa [#allocation14], 1
    %8330 = vsyncpa [#allocation17], 1
    %8331 = vsyncpa [#allocation20], 1
    %8332 = vsyncpa [#allocation9], 1
  %8333 = vsyncmov [#allocation6]
  %s8334 = vpop.sfrf %8333
  %p8335 = scmp.eq.s32.totalorder %s8334, 0
  %p8336 = pneg %p8335
  %8338 = shalt.err (%p8336)
  %s8339 = scalar_lea.sflag [#allocation6], 1
  %8340 = vsyncmov %s8339
  %s8341 = vpop.sfrf %8340
  %p8342 = scmp.eq.s32.totalorder %s8341, 0
  %p8343 = pneg %p8342
  %8345 = shalt.err (%p8343)
  %s8346 = scalar_lea.sflag [#allocation6], 2
  %8347 = vsyncmov %s8346
  %s8348 = vpop.sfrf %8347
  %p8349 = scmp.eq.s32.totalorder %s8348, 0
  %p8350 = pneg %p8349
  %8352 = shalt.err (%p8350)

</llo_original>
